<compile_context>
chip_gen: v7x
topology: tpu7x:2x2x1
jax: 0.10.0
libtpu: 0.0.40
codegen_flags: <defaults>
</compile_context>

<pallas_src>
import functools

import numpy as np
import jax
import jax.numpy as jnp
from jax.experimental import pallas as pl
from jax.experimental.pallas import tpu as pltpu


HEAD_PAD = 128            # each head's outputs padded to 128 lanes in the fused final matmul
WIDTH = 512
FEAT = 64 * 7 * 7         # 3136


# ----------------------------- Pallas kernel ------------------------------ #

def _matmul_bias_kernel(x_ref, w_ref, b_ref, o_ref, *, relu):
    y = jnp.dot(x_ref[...], w_ref[...], preferred_element_type=jnp.float32)
    y = y + b_ref[...]
    if relu:
        y = jnp.maximum(y, 0.0)
    o_ref[...] = y.astype(o_ref.dtype)


def matmul_bias(x, w, b, *, relu=False, out_dtype=jnp.float32, tm=256):
    """y = [relu](x @ w + b).  bf16 operands, f32 accumulation, M-tiled & pipelined."""
    M, K = x.shape
    K2, N = w.shape
    assert K == K2 and b.shape == (1, N)
    x = x.astype(jnp.bfloat16)
    w = w.astype(jnp.bfloat16)
    tm = min(tm, M)
    grid_m = pl.cdiv(M, tm)
    kernel = functools.partial(_matmul_bias_kernel, relu=relu)
    return pl.pallas_call(
        kernel,
        out_shape=jax.ShapeDtypeStruct((M, N), out_dtype),
        grid=(grid_m,),
        in_specs=[
            pl.BlockSpec((tm, K), lambda i: (i, 0)),   # row tile: double-buffered/pipelined
            pl.BlockSpec((K, N), lambda i: (0, 0)),    # weights stay resident in VMEM
            pl.BlockSpec((1, N), lambda i: (0, 0)),    # bias broadcast block
        ],
        out_specs=pl.BlockSpec((tm, N), lambda i: (i, 0)),
        compiler_params=pltpu.CompilerParams(
            dimension_semantics=("parallel",),         # v7x: shard row tiles over both TCs
            vmem_limit_bytes=32 << 20,                 # safe on v7x (64 MiB physical VMEM)
        ),
    )(x, w, b)


# ------------------------------- conv glue -------------------------------- #

def im2col_nhwc(x, kh, kw, stride):
    """x: (B, H, W, C) -> patches (B*OH*OW, kh*kw*C), feature order (kh, kw, C)."""
    B, H, W, C = x.shape
    OH = (H - kh) // stride + 1
    OW = (W - kw) // stride + 1
    cols = []
    for i in range(kh):
        for j in range(kw):
            cols.append(x[:, i:i + stride * OH:stride, j:j + stride * OW:stride, :])
    p = jnp.stack(cols, axis=3)                    # (B, OH, OW, kh*kw, C)
    p = p.reshape(B * OH * OW, kh * kw * C)        # no transpose needed in NHWC
    return p, (B, OH, OW)


def conv2d_relu(x_nhwc, w_mat, b, kh, kw, stride, cout):
    patches, (B, OH, OW) = im2col_nhwc(x_nhwc, kh, kw, stride)
    y = matmul_bias(patches, w_mat, b, relu=True, out_dtype=jnp.bfloat16)
    return y.reshape(B, OH, OW, cout)              # already NHWC


# ----------------------------- parameter init ----------------------------- #

def orthogonal_init(rng, rows, cols, gain):
    """Mimics torch.nn.init.orthogonal_ on a (rows, cols)-flattened weight."""
    if rows < cols:
        a = rng.standard_normal((cols, rows))
    else:
        a = rng.standard_normal((rows, cols))
    q, r = np.linalg.qr(a)
    q = q * np.sign(np.diag(r))
    if rows < cols:
        q = q.T
    return (gain * q).astype(np.float32)


def make_torch_params(n_outputs_1, n_outputs_2, width=WIDTH, seed=0):
    """Parameters in the PyTorch module's native layout (f32), for reference + packing."""
    rng = np.random.default_rng(seed)
    gain = float(np.sqrt(2.0))

    def conv_w(cout, cin, k):
        return orthogonal_init(rng, cout, cin * k * k, gain).reshape(cout, cin, k, k)

    def lin_w(out_f, in_f):
        return orthogonal_init(rng, out_f, in_f, gain)

    return {
        "c1_w": conv_w(32, 4, 8),   "c1_b": np.zeros(32, np.float32),
        "c2_w": conv_w(64, 32, 4),  "c2_b": np.zeros(64, np.float32),
        "c3_w": conv_w(64, 64, 3),  "c3_b": np.zeros(64, np.float32),
        "h1a_w": lin_w(width, FEAT),        "h1a_b": np.zeros(width, np.float32),
        "h1b_w": lin_w(n_outputs_1, width), "h1b_b": np.zeros(n_outputs_1, np.float32),
        "h2a_w": lin_w(width, FEAT),        "h2a_b": np.zeros(width, np.float32),
        "h2b_w": lin_w(n_outputs_2, width), "h2b_b": np.zeros(n_outputs_2, np.float32),
    }


def pack_params(tp, n_outputs_1, n_outputs_2, width=WIDTH):
    """Convert torch-layout params to the kernel layout (NHWC, fused heads, bf16, /255 folded)."""
    assert n_outputs_1 <= HEAD_PAD and n_outputs_2 <= HEAD_PAD

    def conv_mat(w, scale=1.0):          # (cout, cin, kh, kw) -> (kh*kw*cin, cout)
        cout, cin, kh, kw = w.shape
        m = np.transpose(w, (2, 3, 1, 0)).reshape(kh * kw * cin, cout) * scale
        return jnp.asarray(m, jnp.bfloat16)

    def head_a_mat(w):                   # (width, 3136 in (c,h,w)) -> (3136 in (h,w,c), width)
        m = w.reshape(-1, 64, 7, 7).transpose(0, 2, 3, 1).reshape(-1, FEAT).T
        return m.astype(np.float32)

    # fused hidden layer of both heads: (3136, 2*width)
    ha_w = np.concatenate([head_a_mat(tp["h1a_w"]), head_a_mat(tp["h2a_w"])], axis=1)
    ha_b = np.concatenate([tp["h1a_b"], tp["h2a_b"]])[None, :]

    # fused output layer: block-diagonal, each head padded to HEAD_PAD lanes
    hb_w = np.zeros((2 * width, 2 * HEAD_PAD), np.float32)
    hb_w[:width, :n_outputs_1] = tp["h1b_w"].T
    hb_w[width:, HEAD_PAD:HEAD_PAD + n_outputs_2] = tp["h2b_w"].T
    hb_b = np.zeros((1, 2 * HEAD_PAD), np.float32)
    hb_b[0, :n_outputs_1] = tp["h1b_b"]
    hb_b[0, HEAD_PAD:HEAD_PAD + n_outputs_2] = tp["h2b_b"]

    def bias_row(v):
        return jnp.asarray(v, jnp.float32)[None, :]

    return {
        "c1_w": conv_mat(tp["c1_w"], scale=1.0 / 255.0),  # fold obs/255 into conv1 weights
        "c1_b": bias_row(tp["c1_b"]),
        "c2_w": conv_mat(tp["c2_w"]), "c2_b": bias_row(tp["c2_b"]),
        "c3_w": conv_mat(tp["c3_w"]), "c3_b": bias_row(tp["c3_b"]),
        "ha_w": jnp.asarray(ha_w, jnp.bfloat16), "ha_b": jnp.asarray(ha_b, jnp.float32),
        "hb_w": jnp.asarray(hb_w, jnp.bfloat16), "hb_b": jnp.asarray(hb_b, jnp.float32),
    }


# -------------------------------- forward --------------------------------- #

def cnn_deepmind_multihead_forward(obs, params, *, n_outputs_1, n_outputs_2):
    if obs.ndim != 4:
        obs = obs[None]                               # unsqueeze(0)
    x = obs.astype(jnp.bfloat16)                      # NHWC throughout; /255 folded into c1_w
    x = conv2d_relu(x, params["c1_w"], params["c1_b"], 8, 8, 4, 32)
    x = conv2d_relu(x, params["c2_w"], params["c2_b"], 4, 4, 2, 64)
    x = conv2d_relu(x, params["c3_w"], params["c3_b"], 3, 3, 1, 64)
    B = x.shape[0]
    feat = x.reshape(B, FEAT)                         # (h, w, c) order; head weights permuted to match
    # fused heads: one hidden matmul (3136 -> 1024), one block-diagonal output matmul (1024 -> 256)
    h = matmul_bias(feat, params["ha_w"], params["ha_b"], relu=True, out_dtype=jnp.bfloat16)
    out = matmul_bias(h, params["hb_w"], params["hb_b"], relu=False, out_dtype=jnp.float32)
    o1 = out[:, :n_outputs_1]
    o2 = out[:, HEAD_PAD:HEAD_PAD + n_outputs_2]
    return o1, o2


# ---------------------- pure-JAX f32 reference (torch math) ---------------- #

def reference_forward(obs, tp, n_outputs_1, n_outputs_2):
    x = obs.astype(jnp.float32)
    if x.ndim != 4:
        x = x[None]
    x = jnp.transpose(x, (0, 3, 1, 2)) / 255.0        # NCHW, exactly like the torch module

    def conv(x, w, b, s):
        y = jax.lax.conv_general_dilated(
            x, jnp.asarray(w), (s, s), "VALID",
            dimension_numbers=("NCHW", "OIHW", "NCHW"),
            precision=jax.lax.Precision.HIGHEST)
        return jax.nn.relu(y + jnp.asarray(b)[None, :, None, None])

    x = conv(x, tp["c1_w"], tp["c1_b"], 4)
    x = conv(x, tp["c2_w"], tp["c2_b"], 2)
    x = conv(x, tp["c3_w"], tp["c3_b"], 1)
    f = x.reshape(x.shape[0], -1)                     # torch's (c, h, w) flatten

    def lin(v, w, b):
        return jnp.dot(v, jnp.asarray(w).T,
                       precision=jax.lax.Precision.HIGHEST) + jnp.asarray(b)

    o1 = lin(jax.nn.relu(lin(f, tp["h1a_w"], tp["h1a_b"])), tp["h1b_w"], tp["h1b_b"])
    o2 = lin(jax.nn.relu(lin(f, tp["h2a_w"], tp["h2a_b"])), tp["h2b_w"], tp["h2b_b"])
    return o1, o2


# ---------------------------------- main ----------------------------------- #

if __name__ == "__main__":
    n_outputs_1, n_outputs_2 = 6, 1
    torch_params = make_torch_params(n_outputs_1, n_outputs_2, width=WIDTH, seed=0)
    params = pack_params(torch_params, n_outputs_1, n_outputs_2, width=WIDTH)

    # The trunk hard-codes the 64*7*7 flatten, so observation_space is (84, 84, 4).
    key = jax.random.PRNGKey(0)
    obs = jax.random.uniform(key, (2, 84, 84, 4), jnp.float32, minval=0.0, maxval=255.0)

    fwd = jax.jit(functools.partial(cnn_deepmind_multihead_forward,
                                    n_outputs_1=n_outputs_1, n_outputs_2=n_outputs_2))
    o1, o2 = fwd(obs, params)
    jax.block_until_ready((o1, o2))

    assert o1.shape == (2, n_outputs_1) and o1.dtype == jnp.float32
    assert o2.shape == (2, n_outputs_2) and o2.dtype == jnp.float32
    assert bool(jnp.all(jnp.isfinite(o1))) and bool(jnp.all(jnp.isfinite(o2)))

    # numeric check vs. f32 reference of the original torch math (bf16 tolerance)
    r1, r2 = reference_forward(obs, torch_params, n_outputs_1, n_outputs_2)

    def rel_err(a, b):
        return float(jnp.max(jnp.abs(a - b)) / jnp.maximum(jnp.max(jnp.abs(b)), 1e-6))

    assert rel_err(o1, r1) < 0.1, f"head1 mismatch: {rel_err(o1, r1)}"
    assert rel_err(o2, r2) < 0.1, f"head2 mismatch: {rel_err(o2, r2)}"
    print("KERNEL_OK")
</pallas_src>

<mosaic_0001>
module attributes {stable_mosaic.version = 11 : i64} {
  func.func @_matmul_bias_kernel(%arg0: i32, %arg1: memref<256x256xbf16, #tpu.memory_space<vmem>>, %arg2: memref<256x32xbf16, #tpu.memory_space<vmem>>, %arg3: memref<1x32xf32, #tpu.memory_space<vmem>>, %arg4: memref<256x32xbf16, #tpu.memory_space<vmem>>) attributes {dimension_semantics = [#tpu.dimension_semantics<parallel>], iteration_bounds = array<i64: 4>, scalar_prefetch = 0 : i64, scratch_operands = 0 : i64, tpu.core_type = #tpu.core_type<tc>, window_params = [{transform_indices = @transform_0, window_bounds = array<i64: 256, 256>}, {pipeline_mode = #tpu.pipeline_mode<synchronous>, transform_indices = @transform_1, window_bounds = array<i64: 256, 32>}, {pipeline_mode = #tpu.pipeline_mode<synchronous>, transform_indices = @transform_2, window_bounds = array<i64: 1, 32>}, {transform_indices = @transform_3, window_bounds = array<i64: 256, 32>}]} {
    %c0 = arith.constant 0 : index
    %c0_0 = arith.constant 0 : index
    %0 = vector.load %arg1[%c0, %c0_0] : memref<256x256xbf16, #tpu.memory_space<vmem>>, vector<256x256xbf16>
    %c0_1 = arith.constant 0 : index
    %c0_2 = arith.constant 0 : index
    %1 = vector.load %arg2[%c0_1, %c0_2] : memref<256x32xbf16, #tpu.memory_space<vmem>>, vector<256x32xbf16>
    %cst = arith.constant dense<0.000000e+00> : vector<256x32xf32>
    %2 = tpu.matmul %0, %1, %cst {dimension_numbers = #tpu.dot_dimension_numbers<[1], [0], [0], [1], [0, 0, 1, 1], [], []>} : vector<256x256xbf16>, vector<256x32xbf16>, vector<256x32xf32> -> vector<256x32xf32>
    %c0_3 = arith.constant 0 : index
    %c0_4 = arith.constant 0 : index
    %3 = vector.load %arg3[%c0_3, %c0_4] : memref<1x32xf32, #tpu.memory_space<vmem>>, vector<1x32xf32>
    %4 = vector.broadcast %3 : vector<1x32xf32> to vector<256x32xf32>
    %5 = arith.addf %2, %4 : vector<256x32xf32>
    %cst_5 = arith.constant 0.000000e+00 : f32
    %6 = vector.broadcast %cst_5 : f32 to vector<256x32xf32>
    %7 = arith.maximumf %5, %6 : vector<256x32xf32>
    %8 = arith.truncf %7 : vector<256x32xf32> to vector<256x32xbf16>
    %c0_6 = arith.constant 0 : index
    %c0_7 = arith.constant 0 : index
    %9 = vector.load %arg4[%c0_6, %c0_7] : memref<256x32xbf16, #tpu.memory_space<vmem>>, vector<256x32xbf16>
    tpu.vector_store %arg4[%c0_6, %c0_7], %8 {strides = array<i32>} : memref<256x32xbf16, #tpu.memory_space<vmem>>, vector<256x32xbf16>,
    return
  }
  func.func @transform_0(%arg0: i32) -> (i32, i32) {
    %c0_i32 = arith.constant 0 : i32
    %c0_i32_0 = arith.constant 0 : i32
    return %arg0, %c0_i32 : i32, i32
  }
  func.func @transform_1(%arg0: i32) -> (i32, i32) {
    %c0_i32 = arith.constant 0 : i32
    %c0_i32_0 = arith.constant 0 : i32
    %c0_i32_1 = arith.constant 0 : i32
    return %c0_i32, %c0_i32_0 : i32, i32
  }
  func.func @transform_2(%arg0: i32) -> (i32, i32) {
    %c0_i32 = arith.constant 0 : i32
    %c0_i32_0 = arith.constant 0 : i32
    %c0_i32_1 = arith.constant 0 : i32
    return %c0_i32, %c0_i32_0 : i32, i32
  }
  func.func @transform_3(%arg0: i32) -> (i32, i32) {
    %c0_i32 = arith.constant 0 : i32
    %c0_i32_0 = arith.constant 0 : i32
    return %arg0, %c0_i32 : i32, i32
  }
}

module attributes {stable_mosaic.version = 11 : i64} {
  func.func @_matmul_bias_kernel(%arg0: i32, %arg1: memref<162x512xbf16, #tpu.memory_space<vmem>>, %arg2: memref<512x64xbf16, #tpu.memory_space<vmem>>, %arg3: memref<1x64xf32, #tpu.memory_space<vmem>>, %arg4: memref<162x64xbf16, #tpu.memory_space<vmem>>) attributes {dimension_semantics = [#tpu.dimension_semantics<parallel>], iteration_bounds = array<i64: 1>, scalar_prefetch = 0 : i64, scratch_operands = 0 : i64, tpu.core_type = #tpu.core_type<tc>, window_params = [{transform_indices = @transform_0, window_bounds = array<i64: 162, 512>}, {pipeline_mode = #tpu.pipeline_mode<synchronous>, transform_indices = @transform_1, window_bounds = array<i64: 512, 64>}, {pipeline_mode = #tpu.pipeline_mode<synchronous>, transform_indices = @transform_2, window_bounds = array<i64: 1, 64>}, {transform_indices = @transform_3, window_bounds = array<i64: 162, 64>}]} {
    %c0 = arith.constant 0 : index
    %c0_0 = arith.constant 0 : index
    %0 = vector.load %arg1[%c0, %c0_0] : memref<162x512xbf16, #tpu.memory_space<vmem>>, vector<162x512xbf16>
    %c0_1 = arith.constant 0 : index
    %c0_2 = arith.constant 0 : index
    %1 = vector.load %arg2[%c0_1, %c0_2] : memref<512x64xbf16, #tpu.memory_space<vmem>>, vector<512x64xbf16>
    %cst = arith.constant dense<0.000000e+00> : vector<162x64xf32>
    %2 = tpu.matmul %0, %1, %cst {dimension_numbers = #tpu.dot_dimension_numbers<[1], [0], [0], [1], [0, 0, 1, 1], [], []>} : vector<162x512xbf16>, vector<512x64xbf16>, vector<162x64xf32> -> vector<162x64xf32>
    %c0_3 = arith.constant 0 : index
    %c0_4 = arith.constant 0 : index
    %3 = vector.load %arg3[%c0_3, %c0_4] : memref<1x64xf32, #tpu.memory_space<vmem>>, vector<1x64xf32>
    %4 = vector.broadcast %3 : vector<1x64xf32> to vector<162x64xf32>
    %5 = arith.addf %2, %4 : vector<162x64xf32>
    %cst_5 = arith.constant 0.000000e+00 : f32
    %6 = vector.broadcast %cst_5 : f32 to vector<162x64xf32>
    %7 = arith.maximumf %5, %6 : vector<162x64xf32>
    %8 = arith.truncf %7 : vector<162x64xf32> to vector<162x64xbf16>
    %c0_6 = arith.constant 0 : index
    %c0_7 = arith.constant 0 : index
    %9 = vector.load %arg4[%c0_6, %c0_7] : memref<162x64xbf16, #tpu.memory_space<vmem>>, vector<162x64xbf16>
    tpu.vector_store %arg4[%c0_6, %c0_7], %8 {strides = array<i32>} : memref<162x64xbf16, #tpu.memory_space<vmem>>, vector<162x64xbf16>,
    return
  }
  func.func @transform_0(%arg0: i32) -> (i32, i32) {
    %c0_i32 = arith.constant 0 : i32
    %c0_i32_0 = arith.constant 0 : i32
    return %arg0, %c0_i32 : i32, i32
  }
  func.func @transform_1(%arg0: i32) -> (i32, i32) {
    %c0_i32 = arith.constant 0 : i32
    %c0_i32_0 = arith.constant 0 : i32
    %c0_i32_1 = arith.constant 0 : i32
    return %c0_i32, %c0_i32_0 : i32, i32
  }
  func.func @transform_2(%arg0: i32) -> (i32, i32) {
    %c0_i32 = arith.constant 0 : i32
    %c0_i32_0 = arith.constant 0 : i32
    %c0_i32_1 = arith.constant 0 : i32
    return %c0_i32, %c0_i32_0 : i32, i32
  }
  func.func @transform_3(%arg0: i32) -> (i32, i32) {
    %c0_i32 = arith.constant 0 : i32
    %c0_i32_0 = arith.constant 0 : i32
    return %arg0, %c0_i32 : i32, i32
  }
}

module attributes {stable_mosaic.version = 11 : i64} {
  func.func @_matmul_bias_kernel(%arg0: i32, %arg1: memref<98x576xbf16, #tpu.memory_space<vmem>>, %arg2: memref<576x64xbf16, #tpu.memory_space<vmem>>, %arg3: memref<1x64xf32, #tpu.memory_space<vmem>>, %arg4: memref<98x64xbf16, #tpu.memory_space<vmem>>) attributes {dimension_semantics = [#tpu.dimension_semantics<parallel>], iteration_bounds = array<i64: 1>, scalar_prefetch = 0 : i64, scratch_operands = 0 : i64, tpu.core_type = #tpu.core_type<tc>, window_params = [{transform_indices = @transform_0, window_bounds = array<i64: 98, 576>}, {pipeline_mode = #tpu.pipeline_mode<synchronous>, transform_indices = @transform_1, window_bounds = array<i64: 576, 64>}, {pipeline_mode = #tpu.pipeline_mode<synchronous>, transform_indices = @transform_2, window_bounds = array<i64: 1, 64>}, {transform_indices = @transform_3, window_bounds = array<i64: 98, 64>}]} {
    %c0 = arith.constant 0 : index
    %c0_0 = arith.constant 0 : index
    %0 = vector.load %arg1[%c0, %c0_0] : memref<98x576xbf16, #tpu.memory_space<vmem>>, vector<98x576xbf16>
    %c0_1 = arith.constant 0 : index
    %c0_2 = arith.constant 0 : index
    %1 = vector.load %arg2[%c0_1, %c0_2] : memref<576x64xbf16, #tpu.memory_space<vmem>>, vector<576x64xbf16>
    %cst = arith.constant dense<0.000000e+00> : vector<98x64xf32>
    %2 = tpu.matmul %0, %1, %cst {dimension_numbers = #tpu.dot_dimension_numbers<[1], [0], [0], [1], [0, 0, 1, 1], [], []>} : vector<98x576xbf16>, vector<576x64xbf16>, vector<98x64xf32> -> vector<98x64xf32>
    %c0_3 = arith.constant 0 : index
    %c0_4 = arith.constant 0 : index
    %3 = vector.load %arg3[%c0_3, %c0_4] : memref<1x64xf32, #tpu.memory_space<vmem>>, vector<1x64xf32>
    %4 = vector.broadcast %3 : vector<1x64xf32> to vector<98x64xf32>
    %5 = arith.addf %2, %4 : vector<98x64xf32>
    %cst_5 = arith.constant 0.000000e+00 : f32
    %6 = vector.broadcast %cst_5 : f32 to vector<98x64xf32>
    %7 = arith.maximumf %5, %6 : vector<98x64xf32>
    %8 = arith.truncf %7 : vector<98x64xf32> to vector<98x64xbf16>
    %c0_6 = arith.constant 0 : index
    %c0_7 = arith.constant 0 : index
    %9 = vector.load %arg4[%c0_6, %c0_7] : memref<98x64xbf16, #tpu.memory_space<vmem>>, vector<98x64xbf16>
    tpu.vector_store %arg4[%c0_6, %c0_7], %8 {strides = array<i32>} : memref<98x64xbf16, #tpu.memory_space<vmem>>, vector<98x64xbf16>,
    return
  }
  func.func @transform_0(%arg0: i32) -> (i32, i32) {
    %c0_i32 = arith.constant 0 : i32
    %c0_i32_0 = arith.constant 0 : i32
    return %arg0, %c0_i32 : i32, i32
  }
  func.func @transform_1(%arg0: i32) -> (i32, i32) {
    %c0_i32 = arith.constant 0 : i32
    %c0_i32_0 = arith.constant 0 : i32
    %c0_i32_1 = arith.constant 0 : i32
    return %c0_i32, %c0_i32_0 : i32, i32
  }
  func.func @transform_2(%arg0: i32) -> (i32, i32) {
    %c0_i32 = arith.constant 0 : i32
    %c0_i32_0 = arith.constant 0 : i32
    %c0_i32_1 = arith.constant 0 : i32
    return %c0_i32, %c0_i32_0 : i32, i32
  }
  func.func @transform_3(%arg0: i32) -> (i32, i32) {
    %c0_i32 = arith.constant 0 : i32
    %c0_i32_0 = arith.constant 0 : i32
    return %arg0, %c0_i32 : i32, i32
  }
}

module attributes {stable_mosaic.version = 11 : i64} {
  func.func @_matmul_bias_kernel(%arg0: i32, %arg1: memref<2x3136xbf16, #tpu.memory_space<vmem>>, %arg2: memref<3136x1024xbf16, #tpu.memory_space<vmem>>, %arg3: memref<1x1024xf32, #tpu.memory_space<vmem>>, %arg4: memref<2x1024xbf16, #tpu.memory_space<vmem>>) attributes {dimension_semantics = [#tpu.dimension_semantics<parallel>], iteration_bounds = array<i64: 1>, scalar_prefetch = 0 : i64, scratch_operands = 0 : i64, tpu.core_type = #tpu.core_type<tc>, window_params = [{transform_indices = @transform_0, window_bounds = array<i64: 2, 3136>}, {pipeline_mode = #tpu.pipeline_mode<synchronous>, transform_indices = @transform_1, window_bounds = array<i64: 3136, 1024>}, {pipeline_mode = #tpu.pipeline_mode<synchronous>, transform_indices = @transform_2, window_bounds = array<i64: 1, 1024>}, {transform_indices = @transform_3, window_bounds = array<i64: 2, 1024>}]} {
    %c0 = arith.constant 0 : index
    %c0_0 = arith.constant 0 : index
    %0 = vector.load %arg1[%c0, %c0_0] : memref<2x3136xbf16, #tpu.memory_space<vmem>>, vector<2x3136xbf16>
    %c0_1 = arith.constant 0 : index
    %c0_2 = arith.constant 0 : index
    %1 = vector.load %arg2[%c0_1, %c0_2] : memref<3136x1024xbf16, #tpu.memory_space<vmem>>, vector<3136x1024xbf16>
    %cst = arith.constant dense<0.000000e+00> : vector<2x1024xf32>
    %2 = tpu.matmul %0, %1, %cst {dimension_numbers = #tpu.dot_dimension_numbers<[1], [0], [0], [1], [0, 0, 1, 1], [], []>} : vector<2x3136xbf16>, vector<3136x1024xbf16>, vector<2x1024xf32> -> vector<2x1024xf32>
    %c0_3 = arith.constant 0 : index
    %c0_4 = arith.constant 0 : index
    %3 = vector.load %arg3[%c0_3, %c0_4] : memref<1x1024xf32, #tpu.memory_space<vmem>>, vector<1x1024xf32>
    %4 = vector.broadcast %3 : vector<1x1024xf32> to vector<2x1024xf32>
    %5 = arith.addf %2, %4 : vector<2x1024xf32>
    %cst_5 = arith.constant 0.000000e+00 : f32
    %6 = vector.broadcast %cst_5 : f32 to vector<2x1024xf32>
    %7 = arith.maximumf %5, %6 : vector<2x1024xf32>
    %8 = arith.truncf %7 : vector<2x1024xf32> to vector<2x1024xbf16>
    %c0_6 = arith.constant 0 : index
    %c0_7 = arith.constant 0 : index
    %9 = vector.load %arg4[%c0_6, %c0_7] : memref<2x1024xbf16, #tpu.memory_space<vmem>>, vector<2x1024xbf16>
    tpu.vector_store %arg4[%c0_6, %c0_7], %8 {strides = array<i32>} : memref<2x1024xbf16, #tpu.memory_space<vmem>>, vector<2x1024xbf16>,
    return
  }
  func.func @transform_0(%arg0: i32) -> (i32, i32) {
    %c0_i32 = arith.constant 0 : i32
    %c0_i32_0 = arith.constant 0 : i32
    return %arg0, %c0_i32 : i32, i32
  }
  func.func @transform_1(%arg0: i32) -> (i32, i32) {
    %c0_i32 = arith.constant 0 : i32
    %c0_i32_0 = arith.constant 0 : i32
    %c0_i32_1 = arith.constant 0 : i32
    return %c0_i32, %c0_i32_0 : i32, i32
  }
  func.func @transform_2(%arg0: i32) -> (i32, i32) {
    %c0_i32 = arith.constant 0 : i32
    %c0_i32_0 = arith.constant 0 : i32
    %c0_i32_1 = arith.constant 0 : i32
    return %c0_i32, %c0_i32_0 : i32, i32
  }
  func.func @transform_3(%arg0: i32) -> (i32, i32) {
    %c0_i32 = arith.constant 0 : i32
    %c0_i32_0 = arith.constant 0 : i32
    return %arg0, %c0_i32 : i32, i32
  }
}

module attributes {stable_mosaic.version = 11 : i64} {
  func.func @_matmul_bias_kernel(%arg0: i32, %arg1: memref<2x1024xbf16, #tpu.memory_space<vmem>>, %arg2: memref<1024x256xbf16, #tpu.memory_space<vmem>>, %arg3: memref<1x256xf32, #tpu.memory_space<vmem>>, %arg4: memref<2x256xf32, #tpu.memory_space<vmem>>) attributes {dimension_semantics = [#tpu.dimension_semantics<parallel>], iteration_bounds = array<i64: 1>, scalar_prefetch = 0 : i64, scratch_operands = 0 : i64, tpu.core_type = #tpu.core_type<tc>, window_params = [{transform_indices = @transform_0, window_bounds = array<i64: 2, 1024>}, {pipeline_mode = #tpu.pipeline_mode<synchronous>, transform_indices = @transform_1, window_bounds = array<i64: 1024, 256>}, {pipeline_mode = #tpu.pipeline_mode<synchronous>, transform_indices = @transform_2, window_bounds = array<i64: 1, 256>}, {transform_indices = @transform_3, window_bounds = array<i64: 2, 256>}]} {
    %c0 = arith.constant 0 : index
    %c0_0 = arith.constant 0 : index
    %0 = vector.load %arg1[%c0, %c0_0] : memref<2x1024xbf16, #tpu.memory_space<vmem>>, vector<2x1024xbf16>
    %c0_1 = arith.constant 0 : index
    %c0_2 = arith.constant 0 : index
    %1 = vector.load %arg2[%c0_1, %c0_2] : memref<1024x256xbf16, #tpu.memory_space<vmem>>, vector<1024x256xbf16>
    %cst = arith.constant dense<0.000000e+00> : vector<2x256xf32>
    %2 = tpu.matmul %0, %1, %cst {dimension_numbers = #tpu.dot_dimension_numbers<[1], [0], [0], [1], [0, 0, 1, 1], [], []>} : vector<2x1024xbf16>, vector<1024x256xbf16>, vector<2x256xf32> -> vector<2x256xf32>
    %c0_3 = arith.constant 0 : index
    %c0_4 = arith.constant 0 : index
    %3 = vector.load %arg3[%c0_3, %c0_4] : memref<1x256xf32, #tpu.memory_space<vmem>>, vector<1x256xf32>
    %4 = vector.broadcast %3 : vector<1x256xf32> to vector<2x256xf32>
    %5 = arith.addf %2, %4 : vector<2x256xf32>
    %c0_5 = arith.constant 0 : index
    %c0_6 = arith.constant 0 : index
    %6 = vector.load %arg4[%c0_5, %c0_6] : memref<2x256xf32, #tpu.memory_space<vmem>>, vector<2x256xf32>
    tpu.vector_store %arg4[%c0_5, %c0_6], %5 {strides = array<i32>} : memref<2x256xf32, #tpu.memory_space<vmem>>, vector<2x256xf32>,
    return
  }
  func.func @transform_0(%arg0: i32) -> (i32, i32) {
    %c0_i32 = arith.constant 0 : i32
    %c0_i32_0 = arith.constant 0 : i32
    return %arg0, %c0_i32 : i32, i32
  }
  func.func @transform_1(%arg0: i32) -> (i32, i32) {
    %c0_i32 = arith.constant 0 : i32
    %c0_i32_0 = arith.constant 0 : i32
    %c0_i32_1 = arith.constant 0 : i32
    return %c0_i32, %c0_i32_0 : i32, i32
  }
  func.func @transform_2(%arg0: i32) -> (i32, i32) {
    %c0_i32 = arith.constant 0 : i32
    %c0_i32_0 = arith.constant 0 : i32
    %c0_i32_1 = arith.constant 0 : i32
    return %c0_i32, %c0_i32_0 : i32, i32
  }
  func.func @transform_3(%arg0: i32) -> (i32, i32) {
    %c0_i32 = arith.constant 0 : i32
    %c0_i32_0 = arith.constant 0 : i32
    return %arg0, %c0_i32 : i32, i32
  }
}

</mosaic_0001>

<llo_original>
// kernel: cnn_deepmind_multihead_forward.5
$region0: #{cnn_deepmind_multihead_forward.5}
  #allocation0 [shape = 'u32[]', space=smem, size = 0x4, offset = 0x4, fixed_abs, tag = 'smem constant byte address 0x4 - core index']
  #allocation1 [shape = 'u32[144,128]{1,0:T(1,128)}', space=vmem, size = 0x12000, scoped, tag = 'internal scratch']
  %s0 = inlined_call_operand.vmem [shape: bf16[800,256], index: 0, kind: input, shape index: {}]
  %s1 = inlined_call_operand.vmem [shape: bf16[256,32], index: 1, kind: input, shape index: {}]
  %s2 = inlined_call_operand.vmem [shape: f32[1,32], index: 2, kind: input, shape index: {}]
  %s3 = inlined_call_operand.vmem [shape: bf16[800,32], index: 3, kind: output, shape index: {}]
  %s4 = sld [smem:[#allocation0]]
  $region89: #{cnn_deepmind_multihead_forward.5} parent=0
    _
  %s6 = ssub.s32 1, %s4
  %s7 = scalar_select 0, %s6, %s4
  $region1: #{cnn_deepmind_multihead_forward.5} parent=0
    #allocation2 [shape = 'u8[131072]{0}', space=vmem, size = 0x20000, scoped, tag = 'output window, operand 0']
    loop: start=0, step=1, limit=6
    $region2: #{cnn_deepmind_multihead_forward.5} parent=1 // loop_pre_header
      _
    $region3: #{cnn_deepmind_multihead_forward.5} parent=1 // loop_header
      %s9 = sphi 0, %s13
      %p10 = scmp.ge.s32.totalorder %s9, 6
      %s19 = sphi 0, %s21
      %s22 = sphi 0, %s19
      %s23 = sphi 0, %s22
      %s39 = sphi 0, %s23
      %s43 = sphi 0, %s43
      %s45 = sphi 0, %s43
      %s46 = sphi 0, %s45
      %s60 = sphi 0, %s46
      %s64 = sphi 0, %s64
      %s66 = sphi 0, %s64
      %s67 = sphi 0, %s66
      %s81 = sphi 0, %s67
      %s87 = sphi 0, %s89
      %s90 = sphi 0, %s87
      %s91 = sphi 0, %s90
      %s107 = sphi 0, %s91
    $region4: #{cnn_deepmind_multihead_forward.5} parent=1 // loop_header_branch
      %12 = sbr.rel (%p10) target = $region8
    $region5: #{cnn_deepmind_multihead_forward.5} parent=1 // loop_body
      %s14 = ssub.s32 %s9, 1
      %s15 = ssub.s32 %s9, 2
      %s16 = sadd.s32 %s9, 1
      %s17 = ssub.s32 %s9, %s16
      %p18 = scmp.eq.s32.totalorder %s17, 0
      %s20 = sadd.s32 %s19, 1
      %s21 = scalar_select %p18, %s19, %s20
      %p24 = pneg %p18
      %p25 = scmp.eq.s32.totalorder %s9, 3
      %p26 = por %p24, %p25
      %p27 = scmp.ne.s32.totalorder %s19, %s22
      %p28 = scmp.eq.s32.totalorder %s9, 0
      %p29 = por %p27, %p28
      %p30 = scmp.ne.s32.totalorder %s19, %s22
      %p31 = scmp.eq.s32.totalorder %s14, 3
      %p32 = por %p30, %p31
      %p33 = scmp.ne.s32.totalorder %s22, %s23
      %p34 = scmp.eq.s32.totalorder %s14, 0
      %p35 = por %p33, %p34
      %p36 = scmp.ne.s32.totalorder %s22, %s23
      %p37 = scmp.eq.s32.totalorder %s15, 3
      %p38 = por %p36, %p37
      %p40 = scmp.ne.s32.totalorder %s23, %s39
      %p41 = scmp.eq.s32.totalorder %s15, 0
      %p42 = por %p40, %p41
      %s44 = sadd.s32 %s43, 1
      %p47 = scmp.eq.s32.totalorder %s9, 3
      %p48 = scmp.ne.s32.totalorder %s43, %s45
      %p49 = scmp.eq.s32.totalorder %s9, 0
      %p50 = por %p48, %p49
      %p51 = scmp.ne.s32.totalorder %s43, %s45
      %p52 = scmp.eq.s32.totalorder %s14, 3
      %p53 = por %p51, %p52
      %p54 = scmp.ne.s32.totalorder %s45, %s46
      %p55 = scmp.eq.s32.totalorder %s14, 0
      %p56 = por %p54, %p55
      %p57 = scmp.ne.s32.totalorder %s45, %s46
      %p58 = scmp.eq.s32.totalorder %s15, 3
      %p59 = por %p57, %p58
      %p61 = scmp.ne.s32.totalorder %s46, %s60
      %p62 = scmp.eq.s32.totalorder %s15, 0
      %p63 = por %p61, %p62
      %s65 = sadd.s32 %s64, 1
      %p68 = scmp.eq.s32.totalorder %s9, 3
      %p69 = scmp.ne.s32.totalorder %s64, %s66
      %p70 = scmp.eq.s32.totalorder %s9, 0
      %p71 = por %p69, %p70
      %p72 = scmp.ne.s32.totalorder %s64, %s66
      %p73 = scmp.eq.s32.totalorder %s14, 3
      %p74 = por %p72, %p73
      %p75 = scmp.ne.s32.totalorder %s66, %s67
      %p76 = scmp.eq.s32.totalorder %s14, 0
      %p77 = por %p75, %p76
      %p78 = scmp.ne.s32.totalorder %s66, %s67
      %p79 = scmp.eq.s32.totalorder %s15, 3
      %p80 = por %p78, %p79
      %p82 = scmp.ne.s32.totalorder %s67, %s81
      %p83 = scmp.eq.s32.totalorder %s15, 0
      %p84 = por %p82, %p83
      %s85 = ssub.s32 %s9, %s16
      %p86 = scmp.eq.s32.totalorder %s85, 0
      %s88 = sadd.s32 %s87, 1
      %s89 = scalar_select %p86, %s87, %s88
      %p92 = pneg %p86
      %p93 = scmp.eq.s32.totalorder %s9, 3
      %p94 = por %p92, %p93
      %p95 = scmp.ne.s32.totalorder %s87, %s90
      %p96 = scmp.eq.s32.totalorder %s9, 0
      %p97 = por %p95, %p96
      %p98 = scmp.ne.s32.totalorder %s87, %s90
      %p99 = scmp.eq.s32.totalorder %s14, 3
      %p100 = por %p98, %p99
      %p101 = scmp.ne.s32.totalorder %s90, %s91
      %p102 = scmp.eq.s32.totalorder %s14, 0
      %p103 = por %p101, %p102
      %p104 = scmp.ne.s32.totalorder %s90, %s91
      %p105 = scmp.eq.s32.totalorder %s15, 3
      %p106 = por %p104, %p105
      %p108 = scmp.ne.s32.totalorder %s91, %s107
      %p109 = scmp.eq.s32.totalorder %s15, 0
      %p110 = por %p108, %p109
      %p111 = scmp.le.s32.totalorder 1, %s9
      %p112 = scmp.lt.s32.totalorder %s9, 5
      %p113 = pnand %p111, %p112
      %p114 = pneg %p113
      // Predicated region
      $region9: #{cnn_deepmind_multihead_forward.5} parent=5 // pred_check
        _
      $region10: #{cnn_deepmind_multihead_forward.5} parent=5 // pred_check_branch
        %116 = sbr.rel (%p113) target = $region12
      $region11: #{cnn_deepmind_multihead_forward.5} parent=5 // pred_region
        %s117 = ssub.s32 %s9, 1
        // Predicated region
        $region13: #{cnn_deepmind_multihead_forward.5} parent=11 // pred_check
          %p118 = pneg %p56
        $region14: #{cnn_deepmind_multihead_forward.5} parent=11 // pred_check_branch
          %120 = sbr.rel (%p118) target = $region16
        $region15: #{cnn_deepmind_multihead_forward.5} parent=11 // pred_region
          _
        $region16: #{cnn_deepmind_multihead_forward.5} parent=11 // pred_fallthru
          _
        // Predicated region
        $region17: #{cnn_deepmind_multihead_forward.5} parent=11 // pred_check
          %p121 = pneg %p77
        $region18: #{cnn_deepmind_multihead_forward.5} parent=11 // pred_check_branch
          %123 = sbr.rel (%p121) target = $region20
        $region19: #{cnn_deepmind_multihead_forward.5} parent=11 // pred_region
          _
        $region20: #{cnn_deepmind_multihead_forward.5} parent=11 // pred_fallthru
          _
      $region12: #{cnn_deepmind_multihead_forward.5} parent=5 // pred_fallthru
        _
      %p124 = scmp.lt.s32.totalorder %s9, 4
      // Predicated region
      $region21: #{cnn_deepmind_multihead_forward.5} parent=5 // pred_check
        %p125 = pneg %p124
      $region22: #{cnn_deepmind_multihead_forward.5} parent=5 // pred_check_branch
        %127 = sbr.rel (%p125) target = $region24
      $region23: #{cnn_deepmind_multihead_forward.5} parent=5 // pred_region
        // Predicated region
        $region25: #{cnn_deepmind_multihead_forward.5} parent=23 // pred_check
          %p128 = pneg %p29
        $region26: #{cnn_deepmind_multihead_forward.5} parent=23 // pred_check_branch
          %130 = sbr.rel (%p128) target = $region28
        $region27: #{cnn_deepmind_multihead_forward.5} parent=23 // pred_region
          %s131 = smul.u32 32, %s9
          %s132 = ssub.s32 100, %s131
          %p133 = scmp.lt.s32.totalorder %s132, 32
          %s134 = scalar_select %p133, %s132, 32
          %s135 = smul.u32 64, %s134
          %s136 = smul.u32 %s135, 2
          %p137 = scmp.lt.s32.totalorder %s131, 99
          %s138 = scalar_select %p137, %s131, 99
          %s139 = smul.addr %s138, 2
          %s140 = smul.addr %s139, 4
          %s141 = scalar_lea.vmem %s0, %s140
          %s142 = smul.u32 32, %s9
          %s143 = ssub.s32 100, %s142
          %p144 = scmp.lt.s32.totalorder %s143, 32
          %s145 = scalar_select %p144, %s143, 32
          %s146 = smul.u32 64, %s145
          %s147 = smul.u32 %s146, 2
        $region28: #{cnn_deepmind_multihead_forward.5} parent=23 // pred_fallthru
          _
      $region24: #{cnn_deepmind_multihead_forward.5} parent=5 // pred_fallthru
        _
      %p148 = scmp.le.s32.totalorder 1, %s9
      %p149 = scmp.lt.s32.totalorder %s9, 5
      %p150 = pnand %p148, %p149
      %p151 = pneg %p150
      // Predicated region
      $region29: #{cnn_deepmind_multihead_forward.5} parent=5 // pred_check
        _
      $region30: #{cnn_deepmind_multihead_forward.5} parent=5 // pred_check_branch
        %153 = sbr.rel (%p150) target = $region32
      $region31: #{cnn_deepmind_multihead_forward.5} parent=5 // pred_region
        %s154 = ssub.s32 %s9, 1
        %s155 = smul.u32 32, %s14
        %s156 = ssub.s32 100, %s155
        %p157 = scmp.lt.s32.totalorder %s156, 32
        %s158 = scalar_select %p157, %s156, 32
        %s159 = smul.u32 64, %s158
        %s160 = smul.u32 %s159, 2
        %p161 = scmp.lt.s32.totalorder %s155, 99
        %s162 = scalar_select %p161, %s155, 99
        %s163 = smul.addr %s162, 2
        %s164 = smul.addr %s163, 4
        %s165 = scalar_lea.vmem %s0, %s164
        %p166 = pneg %p35
        %p167 = pneg %p32
        %p168 = pneg %p56
        %p169 = pneg %p53
        %p170 = pneg %p77
        %p171 = pneg %p74
        %p172 = pneg %p103
        %p173 = pneg %p100
        %s174 = sand.u32 %s90, 1
        %s175 = sand.u32 %s90, 1
        %s176 = smul.addr %s175, 128
        %s177 = scalar_lea.vmem [#allocation2], %s176
        %s178 = smul.u32 32, %s14
        %s179 = ssub.s32 100, %s178
        %p180 = scmp.lt.s32.totalorder %s179, 32
        %s181 = scalar_select %p180, %s179, 32
        %s182 = smul.u32 64, %s181
        %s183 = smul.u32 %s182, 2
        %p184 = scmp.lt.s32.totalorder %s178, 99
        %s185 = scalar_select %p184, %s178, 99
        %s186 = smul.addr %s185, 2
        %s187 = smul.addr %s186, 4
        %s188 = scalar_lea.vmem %s0, %s187
        %s189 = smul.u32 32, %s14
        %s190 = ssub.s32 100, %s189
        %p191 = scmp.lt.s32.totalorder %s190, 32
        %s192 = scalar_select %p191, %s190, 32
        %s193 = smul.u32 64, %s192
        %s194 = smul.u32 %s193, 2
        %s195 = smul.u32 32, %s14
        %s196 = ssub.s32 100, %s195
        %p197 = scmp.lt.s32.totalorder %s196, 32
        %s198 = scalar_select %p197, %s196, 32
        %s199 = smul.u32 64, %s198
        %v201 = vld [vmem:[%s188] sm:$0xff]
        %v202 = vld [vmem:[%s188 + $0x8] sm:$0xff]
        %v203 = vld [vmem:[%s188 + $0x10] sm:$0xff]
        %v204 = vld [vmem:[%s188 + $0x18] sm:$0xff]
        %v205 = vld [vmem:[%s188 + $0x20] sm:$0xff]
        %v206 = vld [vmem:[%s188 + $0x28] sm:$0xff]
        %v207 = vld [vmem:[%s188 + $0x30] sm:$0xff]
        %v208 = vld [vmem:[%s188 + $0x38] sm:$0xff]
        %v209 = vld [vmem:[%s188 + $0x40] sm:$0xff]
        %v210 = vld [vmem:[%s188 + $0x48] sm:$0xff]
        %v211 = vld [vmem:[%s188 + $0x50] sm:$0xff]
        %v212 = vld [vmem:[%s188 + $0x58] sm:$0xff]
        %v213 = vld [vmem:[%s188 + $0x60] sm:$0xff]
        %v214 = vld [vmem:[%s188 + $0x68] sm:$0xff]
        %v215 = vld [vmem:[%s188 + $0x70] sm:$0xff]
        %v216 = vld [vmem:[%s188 + $0x78] sm:$0xff]
        %v217 = vld [vmem:[%s188 + $0x80] sm:$0xff]
        %v218 = vld [vmem:[%s188 + $0x88] sm:$0xff]
        %v219 = vld [vmem:[%s188 + $0x90] sm:$0xff]
        %v220 = vld [vmem:[%s188 + $0x98] sm:$0xff]
        %v221 = vld [vmem:[%s188 + $0xa0] sm:$0xff]
        %v222 = vld [vmem:[%s188 + $0xa8] sm:$0xff]
        %v223 = vld [vmem:[%s188 + $0xb0] sm:$0xff]
        %v224 = vld [vmem:[%s188 + $0xb8] sm:$0xff]
        %v225 = vld [vmem:[%s188 + $0xc0] sm:$0xff]
        %v226 = vld [vmem:[%s188 + $0xc8] sm:$0xff]
        %v227 = vld [vmem:[%s188 + $0xd0] sm:$0xff]
        %v228 = vld [vmem:[%s188 + $0xd8] sm:$0xff]
        %v229 = vld [vmem:[%s188 + $0xe0] sm:$0xff]
        %v230 = vld [vmem:[%s188 + $0xe8] sm:$0xff]
        %v231 = vld [vmem:[%s188 + $0xf0] sm:$0xff]
        %v232 = vld [vmem:[%s188 + $0xf8] sm:$0xff]
        %v233 = vld [vmem:[%s1] sm:$0xf]
        %v234 = vld [vmem:[%s1 + $0x4] sm:$0xf]
        %v235 = vld [vmem:[%s1 + $0x8] sm:$0xf]
        %v236 = vld [vmem:[%s1 + $0xc] sm:$0xf]
        %v237 = vld [vmem:[%s1 + $0x10] sm:$0xf]
        %v238 = vld [vmem:[%s1 + $0x14] sm:$0xf]
        %v239 = vld [vmem:[%s1 + $0x18] sm:$0xf]
        %v240 = vld [vmem:[%s1 + $0x1c] sm:$0xf]
        %v241 = vld [vmem:[%s1 + $0x20] sm:$0xf]
        %v242 = vld [vmem:[%s1 + $0x24] sm:$0xf]
        %v243 = vld [vmem:[%s1 + $0x28] sm:$0xf]
        %v244 = vld [vmem:[%s1 + $0x2c] sm:$0xf]
        %v245 = vld [vmem:[%s1 + $0x30] sm:$0xf]
        %v246 = vld [vmem:[%s1 + $0x34] sm:$0xf]
        %v247 = vld [vmem:[%s1 + $0x38] sm:$0xf]
        %v248 = vld [vmem:[%s1 + $0x3c] sm:$0xf]
        %v249 = vld [vmem:[%s1 + $0x40] sm:$0xf]
        %v250 = vld [vmem:[%s1 + $0x44] sm:$0xf]
        %v251 = vld [vmem:[%s1 + $0x48] sm:$0xf]
        %v252 = vld [vmem:[%s1 + $0x4c] sm:$0xf]
        %v253 = vld [vmem:[%s1 + $0x50] sm:$0xf]
        %v254 = vld [vmem:[%s1 + $0x54] sm:$0xf]
        %v255 = vld [vmem:[%s1 + $0x58] sm:$0xf]
        %v256 = vld [vmem:[%s1 + $0x5c] sm:$0xf]
        %v257 = vld [vmem:[%s1 + $0x60] sm:$0xf]
        %v258 = vld [vmem:[%s1 + $0x64] sm:$0xf]
        %v259 = vld [vmem:[%s1 + $0x68] sm:$0xf]
        %v260 = vld [vmem:[%s1 + $0x6c] sm:$0xf]
        %v261 = vld [vmem:[%s1 + $0x70] sm:$0xf]
        %v262 = vld [vmem:[%s1 + $0x74] sm:$0xf]
        %v263 = vld [vmem:[%s1 + $0x78] sm:$0xf]
        %v264 = vld [vmem:[%s1 + $0x7c] sm:$0xf]
        %v265 = vld [vmem:[%s2] sm:$0x1]
        %v267 = vlaneseq
        %v268 = vshrl.u32 %v267, 7
        %v269 = vsub.s32 0, %v268
        %v270 = vrot.slane %v265, %v269
        %v304 = vunpack.c.l.b16 %v201
        %v305 = vunpack.c.h.b16 %v201
        %v306 = vunpack.c.l.b16 %v202
        %v307 = vunpack.c.h.b16 %v202
        %v308 = vunpack.c.l.b16 %v203
        %v309 = vunpack.c.h.b16 %v203
        %v310 = vunpack.c.l.b16 %v204
        %v311 = vunpack.c.h.b16 %v204
        %v312 = vunpack.c.l.b16 %v205
        %v313 = vunpack.c.h.b16 %v205
        %v314 = vunpack.c.l.b16 %v206
        %v315 = vunpack.c.h.b16 %v206
        %v316 = vunpack.c.l.b16 %v207
        %v317 = vunpack.c.h.b16 %v207
        %v318 = vunpack.c.l.b16 %v208
        %v319 = vunpack.c.h.b16 %v208
        %v320 = vunpack.c.l.b16 %v209
        %v321 = vunpack.c.h.b16 %v209
        %v322 = vunpack.c.l.b16 %v210
        %v323 = vunpack.c.h.b16 %v210
        %v324 = vunpack.c.l.b16 %v211
        %v325 = vunpack.c.h.b16 %v211
        %v326 = vunpack.c.l.b16 %v212
        %v327 = vunpack.c.h.b16 %v212
        %v328 = vunpack.c.l.b16 %v213
        %v329 = vunpack.c.h.b16 %v213
        %v330 = vunpack.c.l.b16 %v214
        %v331 = vunpack.c.h.b16 %v214
        %v332 = vunpack.c.l.b16 %v215
        %v333 = vunpack.c.h.b16 %v215
        %v334 = vunpack.c.l.b16 %v216
        %v335 = vunpack.c.h.b16 %v216
        %v336 = vunpack.c.l.b16 %v217
        %v337 = vunpack.c.h.b16 %v217
        %v338 = vunpack.c.l.b16 %v218
        %v339 = vunpack.c.h.b16 %v218
        %v340 = vunpack.c.l.b16 %v219
        %v341 = vunpack.c.h.b16 %v219
        %v342 = vunpack.c.l.b16 %v220
        %v343 = vunpack.c.h.b16 %v220
        %v344 = vunpack.c.l.b16 %v221
        %v345 = vunpack.c.h.b16 %v221
        %v346 = vunpack.c.l.b16 %v222
        %v347 = vunpack.c.h.b16 %v222
        %v348 = vunpack.c.l.b16 %v223
        %v349 = vunpack.c.h.b16 %v223
        %v350 = vunpack.c.l.b16 %v224
        %v351 = vunpack.c.h.b16 %v224
        %v352 = vunpack.c.l.b16 %v225
        %v353 = vunpack.c.h.b16 %v225
        %v354 = vunpack.c.l.b16 %v226
        %v355 = vunpack.c.h.b16 %v226
        %v356 = vunpack.c.l.b16 %v227
        %v357 = vunpack.c.h.b16 %v227
        %v358 = vunpack.c.l.b16 %v228
        %v359 = vunpack.c.h.b16 %v228
        %v360 = vunpack.c.l.b16 %v229
        %v361 = vunpack.c.h.b16 %v229
        %v362 = vunpack.c.l.b16 %v230
        %v363 = vunpack.c.h.b16 %v230
        %v364 = vunpack.c.l.b16 %v231
        %v365 = vunpack.c.h.b16 %v231
        %v366 = vunpack.c.l.b16 %v232
        %v367 = vunpack.c.h.b16 %v232
        %v368 = vpack.c.b16 %v306, %v304
        %v369 = vpack.c.b16 %v307, %v305
        %v370 = vpack.c.b16 %v310, %v308
        %v371 = vpack.c.b16 %v311, %v309
        %v372 = vpack.c.b16 %v314, %v312
        %v373 = vpack.c.b16 %v315, %v313
        %v374 = vpack.c.b16 %v318, %v316
        %v375 = vpack.c.b16 %v319, %v317
        %v376 = vpack.c.b16 %v322, %v320
        %v377 = vpack.c.b16 %v323, %v321
        %v378 = vpack.c.b16 %v326, %v324
        %v379 = vpack.c.b16 %v327, %v325
        %v380 = vpack.c.b16 %v330, %v328
        %v381 = vpack.c.b16 %v331, %v329
        %v382 = vpack.c.b16 %v334, %v332
        %v383 = vpack.c.b16 %v335, %v333
        %v384 = vpack.c.b16 %v338, %v336
        %v385 = vpack.c.b16 %v339, %v337
        %v386 = vpack.c.b16 %v342, %v340
        %v387 = vpack.c.b16 %v343, %v341
        %v388 = vpack.c.b16 %v346, %v344
        %v389 = vpack.c.b16 %v347, %v345
        %v390 = vpack.c.b16 %v350, %v348
        %v391 = vpack.c.b16 %v351, %v349
        %v392 = vpack.c.b16 %v354, %v352
        %v393 = vpack.c.b16 %v355, %v353
        %v394 = vpack.c.b16 %v358, %v356
        %v395 = vpack.c.b16 %v359, %v357
        %v396 = vpack.c.b16 %v362, %v360
        %v397 = vpack.c.b16 %v363, %v361
        %v398 = vpack.c.b16 %v366, %v364
        %v399 = vpack.c.b16 %v367, %v365
        %v464 = vunpack.c.l.b16 %v233
        %v465 = vunpack.c.l.b16 %v234
        %v466 = vunpack.c.l.b16 %v235
        %v467 = vunpack.c.l.b16 %v236
        %v468 = vunpack.c.l.b16 %v237
        %v469 = vunpack.c.l.b16 %v238
        %v470 = vunpack.c.l.b16 %v239
        %v471 = vunpack.c.l.b16 %v240
        %v472 = vunpack.c.l.b16 %v241
        %v473 = vunpack.c.l.b16 %v242
        %v474 = vunpack.c.l.b16 %v243
        %v475 = vunpack.c.l.b16 %v244
        %v476 = vunpack.c.l.b16 %v245
        %v477 = vunpack.c.l.b16 %v246
        %v478 = vunpack.c.l.b16 %v247
        %v479 = vunpack.c.l.b16 %v248
        %v480 = vunpack.c.l.b16 %v249
        %v481 = vunpack.c.l.b16 %v250
        %v482 = vunpack.c.l.b16 %v251
        %v483 = vunpack.c.l.b16 %v252
        %v484 = vunpack.c.l.b16 %v253
        %v485 = vunpack.c.l.b16 %v254
        %v486 = vunpack.c.l.b16 %v255
        %v487 = vunpack.c.l.b16 %v256
        %v488 = vunpack.c.l.b16 %v257
        %v489 = vunpack.c.l.b16 %v258
        %v490 = vunpack.c.l.b16 %v259
        %v491 = vunpack.c.l.b16 %v260
        %v492 = vunpack.c.l.b16 %v261
        %v493 = vunpack.c.l.b16 %v262
        %v494 = vunpack.c.l.b16 %v263
        %v495 = vunpack.c.l.b16 %v264
        %v496 = vpack.c.b16 %v465, %v464
        %v497 = vpack.c.b16 %v467, %v466
        %v498 = vpack.c.b16 %v469, %v468
        %v499 = vpack.c.b16 %v471, %v470
        %v500 = vpack.c.b16 %v473, %v472
        %v501 = vpack.c.b16 %v475, %v474
        %v502 = vpack.c.b16 %v477, %v476
        %v503 = vpack.c.b16 %v479, %v478
        %v504 = vpack.c.b16 %v481, %v480
        %v505 = vpack.c.b16 %v483, %v482
        %v506 = vpack.c.b16 %v485, %v484
        %v507 = vpack.c.b16 %v487, %v486
        %v508 = vpack.c.b16 %v489, %v488
        %v509 = vpack.c.b16 %v491, %v490
        %v510 = vpack.c.b16 %v493, %v492
        %v511 = vpack.c.b16 %v495, %v494
        %528 = vmatprep.subr.bf16.mxu0 0
        %529 = vmatpush1.bf16.msra.mxu0 %v496
        %530 = vmatprep.subr.bf16.mxu0 0
        %531 = vmatpush1.bf16.msra.mxu0 %v497
        %532 = vmatprep.subr.bf16.mxu0 0
        %533 = vmatpush1.bf16.msra.mxu0 %v498
        %534 = vmatprep.subr.bf16.mxu0 0
        %535 = vmatpush1.bf16.msra.mxu0 %v499
        %536 = vmatprep.subr.bf16.mxu0 0
        %537 = vmatpush1.bf16.msra.mxu0 %v500
        %538 = vmatprep.subr.bf16.mxu0 0
        %539 = vmatpush1.bf16.msra.mxu0 %v501
        %540 = vmatprep.subr.bf16.mxu0 0
        %541 = vmatpush1.bf16.msra.mxu0 %v502
        %542 = vmatprep.subr.bf16.mxu0 0
        %543 = vmatpush1.bf16.msra.mxu0 %v503
        %544 = vmatprep.subr.bf16.mxu0 0
        %545 = vmatpush1.bf16.msra.mxu0 %v504
        %546 = vmatprep.subr.bf16.mxu0 0
        %547 = vmatpush1.bf16.msra.mxu0 %v505
        %548 = vmatprep.subr.bf16.mxu0 0
        %549 = vmatpush1.bf16.msra.mxu0 %v506
        %550 = vmatprep.subr.bf16.mxu0 0
        %551 = vmatpush1.bf16.msra.mxu0 %v507
        %552 = vmatprep.subr.bf16.mxu0 0
        %553 = vmatpush1.bf16.msra.mxu0 %v508
        %554 = vmatprep.subr.bf16.mxu0 0
        %555 = vmatpush1.bf16.msra.mxu0 %v509
        %556 = vmatprep.subr.bf16.mxu0 0
        %557 = vmatpush1.bf16.msra.mxu0 %v510
        %558 = vmatprep.subr.bf16.mxu0 0
        %559 = vmatpush1.bf16.msra.mxu0 %v511
        %560 = vmatprep.mubr.bf16.mxu0 %v369
        %561 = vmatmul.mubr.bf16.gmra.mrb[0].mxu0 %v368
        %v562 = vpop.f32.mrb[0].mxu0
        %v563 = vadd.f32 %v270, %v562
        %v564 = vpop.f32.mrb[0].mxu0
        %v565 = vpop.f32.mrb[0].mxu0
        %v566 = vadd.f32 %v270, %v565
        %v567 = vpop.f32.mrb[0].mxu0
        %568 = vmatprep.mubr.bf16.mxu0 %v371
        %569 = vmatmul.mubr.bf16.gmra.mrb[0].mxu0 %v370
        %v570 = vpop.f32.mrb[0].mxu0
        %v571 = vadd.f32 %v270, %v570
        %v572 = vpop.f32.mrb[0].mxu0
        %v573 = vpop.f32.mrb[0].mxu0
        %v574 = vadd.f32 %v270, %v573
        %v575 = vpop.f32.mrb[0].mxu0
        %576 = vmatprep.mubr.bf16.mxu0 %v373
        %577 = vmatmul.mubr.bf16.gmra.mrb[0].mxu0 %v372
        %v578 = vpop.f32.mrb[0].mxu0
        %v579 = vadd.f32 %v270, %v578
        %v580 = vpop.f32.mrb[0].mxu0
        %v581 = vpop.f32.mrb[0].mxu0
        %v582 = vadd.f32 %v270, %v581
        %v583 = vpop.f32.mrb[0].mxu0
        %584 = vmatprep.mubr.bf16.mxu0 %v375
        %585 = vmatmul.mubr.bf16.gmra.mrb[0].mxu0 %v374
        %v586 = vpop.f32.mrb[0].mxu0
        %v587 = vadd.f32 %v270, %v586
        %v588 = vpop.f32.mrb[0].mxu0
        %v589 = vpop.f32.mrb[0].mxu0
        %v590 = vadd.f32 %v270, %v589
        %v591 = vpop.f32.mrb[0].mxu0
        %592 = vmatprep.mubr.bf16.mxu0 %v377
        %593 = vmatmul.mubr.bf16.gmra.mrb[0].mxu0 %v376
        %v594 = vpop.f32.mrb[0].mxu0
        %v595 = vadd.f32 %v270, %v594
        %v596 = vpop.f32.mrb[0].mxu0
        %v597 = vpop.f32.mrb[0].mxu0
        %v598 = vadd.f32 %v270, %v597
        %v599 = vpop.f32.mrb[0].mxu0
        %600 = vmatprep.mubr.bf16.mxu0 %v379
        %601 = vmatmul.mubr.bf16.gmra.mrb[0].mxu0 %v378
        %v602 = vpop.f32.mrb[0].mxu0
        %v603 = vadd.f32 %v270, %v602
        %v604 = vpop.f32.mrb[0].mxu0
        %v605 = vpop.f32.mrb[0].mxu0
        %v606 = vadd.f32 %v270, %v605
        %v607 = vpop.f32.mrb[0].mxu0
        %608 = vmatprep.mubr.bf16.mxu0 %v381
        %609 = vmatmul.mubr.bf16.gmra.mrb[0].mxu0 %v380
        %v610 = vpop.f32.mrb[0].mxu0
        %v611 = vadd.f32 %v270, %v610
        %v612 = vpop.f32.mrb[0].mxu0
        %v613 = vpop.f32.mrb[0].mxu0
        %v614 = vadd.f32 %v270, %v613
        %v615 = vpop.f32.mrb[0].mxu0
        %616 = vmatprep.mubr.bf16.mxu0 %v383
        %617 = vmatmul.mubr.bf16.gmra.mrb[0].mxu0 %v382
        %v618 = vpop.f32.mrb[0].mxu0
        %v619 = vadd.f32 %v270, %v618
        %v620 = vpop.f32.mrb[0].mxu0
        %v621 = vpop.f32.mrb[0].mxu0
        %v622 = vadd.f32 %v270, %v621
        %v623 = vpop.f32.mrb[0].mxu0
        %624 = vmatprep.mubr.bf16.mxu0 %v385
        %625 = vmatmul.mubr.bf16.gmra.mrb[0].mxu0 %v384
        %v626 = vpop.f32.mrb[0].mxu0
        %v627 = vadd.f32 %v270, %v626
        %v628 = vpop.f32.mrb[0].mxu0
        %v629 = vpop.f32.mrb[0].mxu0
        %v630 = vadd.f32 %v270, %v629
        %v631 = vpop.f32.mrb[0].mxu0
        %632 = vmatprep.mubr.bf16.mxu0 %v387
        %633 = vmatmul.mubr.bf16.gmra.mrb[0].mxu0 %v386
        %v634 = vpop.f32.mrb[0].mxu0
        %v635 = vadd.f32 %v270, %v634
        %v636 = vpop.f32.mrb[0].mxu0
        %v637 = vpop.f32.mrb[0].mxu0
        %v638 = vadd.f32 %v270, %v637
        %v639 = vpop.f32.mrb[0].mxu0
        %640 = vmatprep.mubr.bf16.mxu0 %v389
        %641 = vmatmul.mubr.bf16.gmra.mrb[0].mxu0 %v388
        %v642 = vpop.f32.mrb[0].mxu0
        %v643 = vadd.f32 %v270, %v642
        %v644 = vpop.f32.mrb[0].mxu0
        %v645 = vpop.f32.mrb[0].mxu0
        %v646 = vadd.f32 %v270, %v645
        %v647 = vpop.f32.mrb[0].mxu0
        %648 = vmatprep.mubr.bf16.mxu0 %v391
        %649 = vmatmul.mubr.bf16.gmra.mrb[0].mxu0 %v390
        %v650 = vpop.f32.mrb[0].mxu0
        %v651 = vadd.f32 %v270, %v650
        %v652 = vpop.f32.mrb[0].mxu0
        %v653 = vpop.f32.mrb[0].mxu0
        %v654 = vadd.f32 %v270, %v653
        %v655 = vpop.f32.mrb[0].mxu0
        %656 = vmatprep.mubr.bf16.mxu0 %v393
        %657 = vmatmul.mubr.bf16.gmra.mrb[0].mxu0 %v392
        %v658 = vpop.f32.mrb[0].mxu0
        %v659 = vadd.f32 %v270, %v658
        %v660 = vpop.f32.mrb[0].mxu0
        %v661 = vpop.f32.mrb[0].mxu0
        %v662 = vadd.f32 %v270, %v661
        %v663 = vpop.f32.mrb[0].mxu0
        %664 = vmatprep.mubr.bf16.mxu0 %v395
        %665 = vmatmul.mubr.bf16.gmra.mrb[0].mxu0 %v394
        %v666 = vpop.f32.mrb[0].mxu0
        %v667 = vadd.f32 %v270, %v666
        %v668 = vpop.f32.mrb[0].mxu0
        %v669 = vpop.f32.mrb[0].mxu0
        %v670 = vadd.f32 %v270, %v669
        %v671 = vpop.f32.mrb[0].mxu0
        %672 = vmatprep.mubr.bf16.mxu0 %v397
        %673 = vmatmul.mubr.bf16.gmra.mrb[0].mxu0 %v396
        %v674 = vpop.f32.mrb[0].mxu0
        %v675 = vadd.f32 %v270, %v674
        %v676 = vpop.f32.mrb[0].mxu0
        %v677 = vpop.f32.mrb[0].mxu0
        %v678 = vadd.f32 %v270, %v677
        %v679 = vpop.f32.mrb[0].mxu0
        %680 = vmatprep.mubr.bf16.mxu0 %v399
        %681 = vmatmul.mubr.bf16.gmra.mrb[0].mxu0 %v398
        %v682 = vpop.f32.mrb[0].mxu0
        %v683 = vadd.f32 %v270, %v682
        %v684 = vpop.f32.mrb[0].mxu0
        %v685 = vpop.f32.mrb[0].mxu0
        %v686 = vadd.f32 %v270, %v685
        %v687 = vpop.f32.mrb[0].mxu0
        %688 = vdwg.mxu0
        %v689 = vmax.f32 %v563, 0.0
        %v690 = vmax.f32 %v566, 0.0
        %v691 = vmax.f32 %v571, 0.0
        %v692 = vmax.f32 %v574, 0.0
        %v693 = vmax.f32 %v579, 0.0
        %v694 = vmax.f32 %v582, 0.0
        %v695 = vmax.f32 %v587, 0.0
        %v696 = vmax.f32 %v590, 0.0
        %v697 = vmax.f32 %v595, 0.0
        %v698 = vmax.f32 %v598, 0.0
        %v699 = vmax.f32 %v603, 0.0
        %v700 = vmax.f32 %v606, 0.0
        %v701 = vmax.f32 %v611, 0.0
        %v702 = vmax.f32 %v614, 0.0
        %v703 = vmax.f32 %v619, 0.0
        %v704 = vmax.f32 %v622, 0.0
        %v705 = vmax.f32 %v627, 0.0
        %v706 = vmax.f32 %v630, 0.0
        %v707 = vmax.f32 %v635, 0.0
        %v708 = vmax.f32 %v638, 0.0
        %v709 = vmax.f32 %v643, 0.0
        %v710 = vmax.f32 %v646, 0.0
        %v711 = vmax.f32 %v651, 0.0
        %v712 = vmax.f32 %v654, 0.0
        %v713 = vmax.f32 %v659, 0.0
        %v714 = vmax.f32 %v662, 0.0
        %v715 = vmax.f32 %v667, 0.0
        %v716 = vmax.f32 %v670, 0.0
        %v717 = vmax.f32 %v675, 0.0
        %v718 = vmax.f32 %v678, 0.0
        %v719 = vmax.f32 %v683, 0.0
        %v720 = vmax.f32 %v686, 0.0
        %v721 = vpack.c.bf16 %v690, %v689
        %v722 = vpack.c.bf16 %v692, %v691
        %v723 = vpack.c.bf16 %v694, %v693
        %v724 = vpack.c.bf16 %v696, %v695
        %v725 = vpack.c.bf16 %v698, %v697
        %v726 = vpack.c.bf16 %v700, %v699
        %v727 = vpack.c.bf16 %v702, %v701
        %v728 = vpack.c.bf16 %v704, %v703
        %v729 = vpack.c.bf16 %v706, %v705
        %v730 = vpack.c.bf16 %v708, %v707
        %v731 = vpack.c.bf16 %v710, %v709
        %v732 = vpack.c.bf16 %v712, %v711
        %v733 = vpack.c.bf16 %v714, %v713
        %v734 = vpack.c.bf16 %v716, %v715
        %v735 = vpack.c.bf16 %v718, %v717
        %v736 = vpack.c.bf16 %v720, %v719
        %v753 = vunpack.c.l.b16 %v721
        %v754 = vunpack.c.h.b16 %v721
        %v755 = vunpack.c.l.b16 %v722
        %v756 = vunpack.c.h.b16 %v722
        %v757 = vunpack.c.l.b16 %v723
        %v758 = vunpack.c.h.b16 %v723
        %v759 = vunpack.c.l.b16 %v724
        %v760 = vunpack.c.h.b16 %v724
        %v761 = vunpack.c.l.b16 %v725
        %v762 = vunpack.c.h.b16 %v725
        %v763 = vunpack.c.l.b16 %v726
        %v764 = vunpack.c.h.b16 %v726
        %v765 = vunpack.c.l.b16 %v727
        %v766 = vunpack.c.h.b16 %v727
        %v767 = vunpack.c.l.b16 %v728
        %v768 = vunpack.c.h.b16 %v728
        %v769 = vunpack.c.l.b16 %v729
        %v770 = vunpack.c.h.b16 %v729
        %v771 = vunpack.c.l.b16 %v730
        %v772 = vunpack.c.h.b16 %v730
        %v773 = vunpack.c.l.b16 %v731
        %v774 = vunpack.c.h.b16 %v731
        %v775 = vunpack.c.l.b16 %v732
        %v776 = vunpack.c.h.b16 %v732
        %v777 = vunpack.c.l.b16 %v733
        %v778 = vunpack.c.h.b16 %v733
        %v779 = vunpack.c.l.b16 %v734
        %v780 = vunpack.c.h.b16 %v734
        %v781 = vunpack.c.l.b16 %v735
        %v782 = vunpack.c.h.b16 %v735
        %v783 = vunpack.c.l.b16 %v736
        %v784 = vunpack.c.h.b16 %v736
        %v785 = vpack.c.b16 %v753, %v753
        %v786 = vpack.c.b16 %v754, %v754
        %v787 = vpack.c.b16 %v755, %v755
        %v788 = vpack.c.b16 %v756, %v756
        %v789 = vpack.c.b16 %v757, %v757
        %v790 = vpack.c.b16 %v758, %v758
        %v791 = vpack.c.b16 %v759, %v759
        %v792 = vpack.c.b16 %v760, %v760
        %v793 = vpack.c.b16 %v761, %v761
        %v794 = vpack.c.b16 %v762, %v762
        %v795 = vpack.c.b16 %v763, %v763
        %v796 = vpack.c.b16 %v764, %v764
        %v797 = vpack.c.b16 %v765, %v765
        %v798 = vpack.c.b16 %v766, %v766
        %v799 = vpack.c.b16 %v767, %v767
        %v800 = vpack.c.b16 %v768, %v768
        %v801 = vpack.c.b16 %v769, %v769
        %v802 = vpack.c.b16 %v770, %v770
        %v803 = vpack.c.b16 %v771, %v771
        %v804 = vpack.c.b16 %v772, %v772
        %v805 = vpack.c.b16 %v773, %v773
        %v806 = vpack.c.b16 %v774, %v774
        %v807 = vpack.c.b16 %v775, %v775
        %v808 = vpack.c.b16 %v776, %v776
        %v809 = vpack.c.b16 %v777, %v777
        %v810 = vpack.c.b16 %v778, %v778
        %v811 = vpack.c.b16 %v779, %v779
        %v812 = vpack.c.b16 %v780, %v780
        %v813 = vpack.c.b16 %v781, %v781
        %v814 = vpack.c.b16 %v782, %v782
        %v815 = vpack.c.b16 %v783, %v783
        %v816 = vpack.c.b16 %v784, %v784
        %vm849 = vcmask 257024
        %850 = vst.msk [vmem:[%s177] sm:$0xf] %vm849, %v785
        %851 = vst.msk [vmem:[%s177 + $0x4] sm:$0xf] %vm849, %v786
        %852 = vst.msk [vmem:[%s177 + $0x8] sm:$0xf] %vm849, %v787
        %853 = vst.msk [vmem:[%s177 + $0xc] sm:$0xf] %vm849, %v788
        %854 = vst.msk [vmem:[%s177 + $0x10] sm:$0xf] %vm849, %v789
        %855 = vst.msk [vmem:[%s177 + $0x14] sm:$0xf] %vm849, %v790
        %856 = vst.msk [vmem:[%s177 + $0x18] sm:$0xf] %vm849, %v791
        %857 = vst.msk [vmem:[%s177 + $0x1c] sm:$0xf] %vm849, %v792
        %858 = vst.msk [vmem:[%s177 + $0x20] sm:$0xf] %vm849, %v793
        %859 = vst.msk [vmem:[%s177 + $0x24] sm:$0xf] %vm849, %v794
        %860 = vst.msk [vmem:[%s177 + $0x28] sm:$0xf] %vm849, %v795
        %861 = vst.msk [vmem:[%s177 + $0x2c] sm:$0xf] %vm849, %v796
        %862 = vst.msk [vmem:[%s177 + $0x30] sm:$0xf] %vm849, %v797
        %863 = vst.msk [vmem:[%s177 + $0x34] sm:$0xf] %vm849, %v798
        %864 = vst.msk [vmem:[%s177 + $0x38] sm:$0xf] %vm849, %v799
        %865 = vst.msk [vmem:[%s177 + $0x3c] sm:$0xf] %vm849, %v800
        %866 = vst.msk [vmem:[%s177 + $0x40] sm:$0xf] %vm849, %v801
        %867 = vst.msk [vmem:[%s177 + $0x44] sm:$0xf] %vm849, %v802
        %868 = vst.msk [vmem:[%s177 + $0x48] sm:$0xf] %vm849, %v803
        %869 = vst.msk [vmem:[%s177 + $0x4c] sm:$0xf] %vm849, %v804
        %870 = vst.msk [vmem:[%s177 + $0x50] sm:$0xf] %vm849, %v805
        %871 = vst.msk [vmem:[%s177 + $0x54] sm:$0xf] %vm849, %v806
        %872 = vst.msk [vmem:[%s177 + $0x58] sm:$0xf] %vm849, %v807
        %873 = vst.msk [vmem:[%s177 + $0x5c] sm:$0xf] %vm849, %v808
        %874 = vst.msk [vmem:[%s177 + $0x60] sm:$0xf] %vm849, %v809
        %875 = vst.msk [vmem:[%s177 + $0x64] sm:$0xf] %vm849, %v810
        %876 = vst.msk [vmem:[%s177 + $0x68] sm:$0xf] %vm849, %v811
        %877 = vst.msk [vmem:[%s177 + $0x6c] sm:$0xf] %vm849, %v812
        %878 = vst.msk [vmem:[%s177 + $0x70] sm:$0xf] %vm849, %v813
        %879 = vst.msk [vmem:[%s177 + $0x74] sm:$0xf] %vm849, %v814
        %880 = vst.msk [vmem:[%s177 + $0x78] sm:$0xf] %vm849, %v815
        %881 = vst.msk [vmem:[%s177 + $0x7c] sm:$0xf] %vm849, %v816
        %s882 = sand.u32 %s90, 1
        %s883 = sand.u32 %s90, 1
        %s884 = smul.addr %s883, 128
        %s885 = scalar_lea.vmem [#allocation2], %s884
        // Predicated region
        $region33: #{cnn_deepmind_multihead_forward.5} parent=31 // pred_check
          %p886 = pneg %p100
        $region34: #{cnn_deepmind_multihead_forward.5} parent=31 // pred_check_branch
          %888 = sbr.rel (%p886) target = $region36
        $region35: #{cnn_deepmind_multihead_forward.5} parent=31 // pred_region
          %s889 = smul.u32 32, %s14
          %s890 = ssub.s32 100, %s889
          %p891 = scmp.lt.s32.totalorder %s890, 32
          %s892 = scalar_select %p891, %s890, 32
          %s893 = smul.u32 64, %s892
          %p894 = scmp.ne.s32.totalorder 0, %s893
          %s895 = smul.addr %s889, 4
          %s896 = scalar_lea.vmem %s3, %s895
          // Predicated region
          $region37: #{cnn_deepmind_multihead_forward.5} parent=35 // pred_check
            %p897 = pneg %p894
          $region38: #{cnn_deepmind_multihead_forward.5} parent=35 // pred_check_branch
            %899 = sbr.rel (%p897) target = $region40
          $region39: #{cnn_deepmind_multihead_forward.5} parent=35 // pred_region
            // Predicated region
            $region41: #{cnn_deepmind_multihead_forward.5} parent=39 // pred_check
              _
            $region42: #{cnn_deepmind_multihead_forward.5} parent=39 // pred_check_branch
              %901 = sbr.rel target = $region44
            $region43: #{cnn_deepmind_multihead_forward.5} parent=39 // pred_region
              // Predicated region
              $region63: #{cnn_deepmind_multihead_forward.5} parent=43 // pred_check
                _
              $region64: #{cnn_deepmind_multihead_forward.5} parent=43 // pred_check_branch
                %1012 = sbr.rel (0) target = $region66
              $region65: #{cnn_deepmind_multihead_forward.5} parent=43 // pred_region
                %s1014 = sshrl.u32 %s892, 5
                // While loop
                $region67: #{cnn_deepmind_multihead_forward.5} parent=65 // loop_pre_header
                  _
                $region68: #{cnn_deepmind_multihead_forward.5} parent=65 // loop_header
                  %s1016 = sphi 0, %s1018
                  %p1017 = scmp.ge.s32.totalorder %s1016, %s1014
                  %s1021 = sphi 0, %s1090
                  %s1022 = sphi %s885, %s1093
                  %s1023 = sphi %s896, %s1094
                $region69: #{cnn_deepmind_multihead_forward.5} parent=65 // loop_header_branch
                  %1020 = sbr.rel (%p1017) target = $region73
                $region70: #{cnn_deepmind_multihead_forward.5} parent=65 // loop_body
                  %v1024 = vld [vmem:[%s1022] sm:$0xf]
                  %1025 = vst [vmem:[%s1023] sm:$0xf] %v1024
                  %v1026 = vld [vmem:[%s1022 + $0x4] sm:$0xf]
                  %1027 = vst [vmem:[%s1023 + $0x4] sm:$0xf] %v1026
                  %v1028 = vld [vmem:[%s1022 + $0x8] sm:$0xf]
                  %1029 = vst [vmem:[%s1023 + $0x8] sm:$0xf] %v1028
                  %v1030 = vld [vmem:[%s1022 + $0xc] sm:$0xf]
                  %1031 = vst [vmem:[%s1023 + $0xc] sm:$0xf] %v1030
                  %v1032 = vld [vmem:[%s1022 + $0x10] sm:$0xf]
                  %1033 = vst [vmem:[%s1023 + $0x10] sm:$0xf] %v1032
                  %v1034 = vld [vmem:[%s1022 + $0x14] sm:$0xf]
                  %1035 = vst [vmem:[%s1023 + $0x14] sm:$0xf] %v1034
                  %v1036 = vld [vmem:[%s1022 + $0x18] sm:$0xf]
                  %1037 = vst [vmem:[%s1023 + $0x18] sm:$0xf] %v1036
                  %v1038 = vld [vmem:[%s1022 + $0x1c] sm:$0xf]
                  %1039 = vst [vmem:[%s1023 + $0x1c] sm:$0xf] %v1038
                  %v1040 = vld [vmem:[%s1022 + $0x20] sm:$0xf]
                  %1041 = vst [vmem:[%s1023 + $0x20] sm:$0xf] %v1040
                  %v1042 = vld [vmem:[%s1022 + $0x24] sm:$0xf]
                  %1043 = vst [vmem:[%s1023 + $0x24] sm:$0xf] %v1042
                  %v1044 = vld [vmem:[%s1022 + $0x28] sm:$0xf]
                  %1045 = vst [vmem:[%s1023 + $0x28] sm:$0xf] %v1044
                  %v1046 = vld [vmem:[%s1022 + $0x2c] sm:$0xf]
                  %1047 = vst [vmem:[%s1023 + $0x2c] sm:$0xf] %v1046
                  %v1048 = vld [vmem:[%s1022 + $0x30] sm:$0xf]
                  %1049 = vst [vmem:[%s1023 + $0x30] sm:$0xf] %v1048
                  %v1050 = vld [vmem:[%s1022 + $0x34] sm:$0xf]
                  %1051 = vst [vmem:[%s1023 + $0x34] sm:$0xf] %v1050
                  %v1052 = vld [vmem:[%s1022 + $0x38] sm:$0xf]
                  %1053 = vst [vmem:[%s1023 + $0x38] sm:$0xf] %v1052
                  %v1054 = vld [vmem:[%s1022 + $0x3c] sm:$0xf]
                  %1055 = vst [vmem:[%s1023 + $0x3c] sm:$0xf] %v1054
                  %v1056 = vld [vmem:[%s1022 + $0x40] sm:$0xf]
                  %1057 = vst [vmem:[%s1023 + $0x40] sm:$0xf] %v1056
                  %v1058 = vld [vmem:[%s1022 + $0x44] sm:$0xf]
                  %1059 = vst [vmem:[%s1023 + $0x44] sm:$0xf] %v1058
                  %v1060 = vld [vmem:[%s1022 + $0x48] sm:$0xf]
                  %1061 = vst [vmem:[%s1023 + $0x48] sm:$0xf] %v1060
                  %v1062 = vld [vmem:[%s1022 + $0x4c] sm:$0xf]
                  %1063 = vst [vmem:[%s1023 + $0x4c] sm:$0xf] %v1062
                  %v1064 = vld [vmem:[%s1022 + $0x50] sm:$0xf]
                  %1065 = vst [vmem:[%s1023 + $0x50] sm:$0xf] %v1064
                  %v1066 = vld [vmem:[%s1022 + $0x54] sm:$0xf]
                  %1067 = vst [vmem:[%s1023 + $0x54] sm:$0xf] %v1066
                  %v1068 = vld [vmem:[%s1022 + $0x58] sm:$0xf]
                  %1069 = vst [vmem:[%s1023 + $0x58] sm:$0xf] %v1068
                  %v1070 = vld [vmem:[%s1022 + $0x5c] sm:$0xf]
                  %1071 = vst [vmem:[%s1023 + $0x5c] sm:$0xf] %v1070
                  %v1072 = vld [vmem:[%s1022 + $0x60] sm:$0xf]
                  %1073 = vst [vmem:[%s1023 + $0x60] sm:$0xf] %v1072
                  %v1074 = vld [vmem:[%s1022 + $0x64] sm:$0xf]
                  %1075 = vst [vmem:[%s1023 + $0x64] sm:$0xf] %v1074
                  %v1076 = vld [vmem:[%s1022 + $0x68] sm:$0xf]
                  %1077 = vst [vmem:[%s1023 + $0x68] sm:$0xf] %v1076
                  %v1078 = vld [vmem:[%s1022 + $0x6c] sm:$0xf]
                  %1079 = vst [vmem:[%s1023 + $0x6c] sm:$0xf] %v1078
                  %v1080 = vld [vmem:[%s1022 + $0x70] sm:$0xf]
                  %1081 = vst [vmem:[%s1023 + $0x70] sm:$0xf] %v1080
                  %v1082 = vld [vmem:[%s1022 + $0x74] sm:$0xf]
                  %1083 = vst [vmem:[%s1023 + $0x74] sm:$0xf] %v1082
                  %v1084 = vld [vmem:[%s1022 + $0x78] sm:$0xf]
                  %1085 = vst [vmem:[%s1023 + $0x78] sm:$0xf] %v1084
                  %v1086 = vld [vmem:[%s1022 + $0x7c] sm:$0xf]
                  %1087 = vst [vmem:[%s1023 + $0x7c] sm:$0xf] %v1086
                  %s1088 = sadd.s32 1, %s1021
                  %p1089 = scmp.ge.s32.totalorder %s1088, %s1014
                  %s1090 = scalar_select %p1089, 0, %s1088
                  %s1091 = smul.u32 %s1090, 128
                  %s1092 = smul.u32 %s1090, 128
                  %s1093 = scalar_lea.vmem %s885, %s1091 [#allocation2]
                  %s1094 = scalar_lea.vmem %s896, %s1092
                $region71: #{cnn_deepmind_multihead_forward.5} parent=65 // loop_footer
                  %s1018 = sadd.s32 %s1016, 1
                $region72: #{cnn_deepmind_multihead_forward.5} parent=65 // loop_footer_branch
                  %1015 = sbr.rel target = $region68
                $region73: #{cnn_deepmind_multihead_forward.5} parent=65 // loop_exit
                  _
                %s1095 = sshrl.u32 %s892, 5
                %s1096 = sand.u32 %s892, 31
                %s1097 = smul.u32 %s1095, 32
                %s1098 = smul.u32 4, %s1097
                %s1099 = scalar_lea.vmem %s885, %s1098 [#allocation2]
                %s1100 = smul.u32 4, %s1097
                %s1101 = scalar_lea.vmem %s896, %s1100
                // While loop
                $region74: #{cnn_deepmind_multihead_forward.5} parent=65 // loop_pre_header
                  _
                $region75: #{cnn_deepmind_multihead_forward.5} parent=65 // loop_header
                  %s1103 = sphi 0, %s1105
                  %p1104 = scmp.ge.s32.totalorder %s1103, %s1096
                  %s1108 = sphi 0, %s1115
                  %s1109 = sphi %s1099, %s1118
                  %s1110 = sphi %s1101, %s1119
                $region76: #{cnn_deepmind_multihead_forward.5} parent=65 // loop_header_branch
                  %1107 = sbr.rel (%p1104) target = $region80
                $region77: #{cnn_deepmind_multihead_forward.5} parent=65 // loop_body
                  %v1111 = vld [vmem:[%s1109] sm:$0xf]
                  %1112 = vst [vmem:[%s1110] sm:$0xf] %v1111
                  %s1113 = sadd.s32 1, %s1108
                  %p1114 = scmp.ge.s32.totalorder %s1113, %s1096
                  %s1115 = scalar_select %p1114, 0, %s1113
                  %s1116 = smul.u32 %s1115, 4
                  %s1117 = smul.u32 %s1115, 4
                  %s1118 = scalar_lea.vmem %s1099, %s1116 [#allocation2]
                  %s1119 = scalar_lea.vmem %s1101, %s1117
                $region78: #{cnn_deepmind_multihead_forward.5} parent=65 // loop_footer
                  %s1105 = sadd.s32 %s1103, 1
                $region79: #{cnn_deepmind_multihead_forward.5} parent=65 // loop_footer_branch
                  %1102 = sbr.rel target = $region75
                $region80: #{cnn_deepmind_multihead_forward.5} parent=65 // loop_exit
                  _
              $region66: #{cnn_deepmind_multihead_forward.5} parent=43 // pred_fallthru
                _
            $region44: #{cnn_deepmind_multihead_forward.5} parent=39 // pred_fallthru
              _
            // Predicated region
            $region45: #{cnn_deepmind_multihead_forward.5} parent=39 // pred_check
              _
            $region46: #{cnn_deepmind_multihead_forward.5} parent=39 // pred_check_branch
              %903 = sbr.rel (0) target = $region48
            $region47: #{cnn_deepmind_multihead_forward.5} parent=39 // pred_region
              %s905 = sshrl.u32 %s892, 5
              // While loop
              $region49: #{cnn_deepmind_multihead_forward.5} parent=47 // loop_pre_header
                _
              $region50: #{cnn_deepmind_multihead_forward.5} parent=47 // loop_header
                %s907 = sphi 0, %s909
                %p908 = scmp.ge.s32.totalorder %s907, %s905
                %s912 = sphi 0, %s981
                %s913 = sphi %s885, %s984
                %s914 = sphi %s896, %s985
              $region51: #{cnn_deepmind_multihead_forward.5} parent=47 // loop_header_branch
                %911 = sbr.rel (%p908) target = $region55
              $region52: #{cnn_deepmind_multihead_forward.5} parent=47 // loop_body
                %v915 = vld [vmem:[%s913] sm:$0xf]
                %916 = vst [vmem:[%s914] sm:$0xf] %v915
                %v917 = vld [vmem:[%s913 + $0x4] sm:$0xf]
                %918 = vst [vmem:[%s914 + $0x4] sm:$0xf] %v917
                %v919 = vld [vmem:[%s913 + $0x8] sm:$0xf]
                %920 = vst [vmem:[%s914 + $0x8] sm:$0xf] %v919
                %v921 = vld [vmem:[%s913 + $0xc] sm:$0xf]
                %922 = vst [vmem:[%s914 + $0xc] sm:$0xf] %v921
                %v923 = vld [vmem:[%s913 + $0x10] sm:$0xf]
                %924 = vst [vmem:[%s914 + $0x10] sm:$0xf] %v923
                %v925 = vld [vmem:[%s913 + $0x14] sm:$0xf]
                %926 = vst [vmem:[%s914 + $0x14] sm:$0xf] %v925
                %v927 = vld [vmem:[%s913 + $0x18] sm:$0xf]
                %928 = vst [vmem:[%s914 + $0x18] sm:$0xf] %v927
                %v929 = vld [vmem:[%s913 + $0x1c] sm:$0xf]
                %930 = vst [vmem:[%s914 + $0x1c] sm:$0xf] %v929
                %v931 = vld [vmem:[%s913 + $0x20] sm:$0xf]
                %932 = vst [vmem:[%s914 + $0x20] sm:$0xf] %v931
                %v933 = vld [vmem:[%s913 + $0x24] sm:$0xf]
                %934 = vst [vmem:[%s914 + $0x24] sm:$0xf] %v933
                %v935 = vld [vmem:[%s913 + $0x28] sm:$0xf]
                %936 = vst [vmem:[%s914 + $0x28] sm:$0xf] %v935
                %v937 = vld [vmem:[%s913 + $0x2c] sm:$0xf]
                %938 = vst [vmem:[%s914 + $0x2c] sm:$0xf] %v937
                %v939 = vld [vmem:[%s913 + $0x30] sm:$0xf]
                %940 = vst [vmem:[%s914 + $0x30] sm:$0xf] %v939
                %v941 = vld [vmem:[%s913 + $0x34] sm:$0xf]
                %942 = vst [vmem:[%s914 + $0x34] sm:$0xf] %v941
                %v943 = vld [vmem:[%s913 + $0x38] sm:$0xf]
                %944 = vst [vmem:[%s914 + $0x38] sm:$0xf] %v943
                %v945 = vld [vmem:[%s913 + $0x3c] sm:$0xf]
                %946 = vst [vmem:[%s914 + $0x3c] sm:$0xf] %v945
                %v947 = vld [vmem:[%s913 + $0x40] sm:$0xf]
                %948 = vst [vmem:[%s914 + $0x40] sm:$0xf] %v947
                %v949 = vld [vmem:[%s913 + $0x44] sm:$0xf]
                %950 = vst [vmem:[%s914 + $0x44] sm:$0xf] %v949
                %v951 = vld [vmem:[%s913 + $0x48] sm:$0xf]
                %952 = vst [vmem:[%s914 + $0x48] sm:$0xf] %v951
                %v953 = vld [vmem:[%s913 + $0x4c] sm:$0xf]
                %954 = vst [vmem:[%s914 + $0x4c] sm:$0xf] %v953
                %v955 = vld [vmem:[%s913 + $0x50] sm:$0xf]
                %956 = vst [vmem:[%s914 + $0x50] sm:$0xf] %v955
                %v957 = vld [vmem:[%s913 + $0x54] sm:$0xf]
                %958 = vst [vmem:[%s914 + $0x54] sm:$0xf] %v957
                %v959 = vld [vmem:[%s913 + $0x58] sm:$0xf]
                %960 = vst [vmem:[%s914 + $0x58] sm:$0xf] %v959
                %v961 = vld [vmem:[%s913 + $0x5c] sm:$0xf]
                %962 = vst [vmem:[%s914 + $0x5c] sm:$0xf] %v961
                %v963 = vld [vmem:[%s913 + $0x60] sm:$0xf]
                %964 = vst [vmem:[%s914 + $0x60] sm:$0xf] %v963
                %v965 = vld [vmem:[%s913 + $0x64] sm:$0xf]
                %966 = vst [vmem:[%s914 + $0x64] sm:$0xf] %v965
                %v967 = vld [vmem:[%s913 + $0x68] sm:$0xf]
                %968 = vst [vmem:[%s914 + $0x68] sm:$0xf] %v967
                %v969 = vld [vmem:[%s913 + $0x6c] sm:$0xf]
                %970 = vst [vmem:[%s914 + $0x6c] sm:$0xf] %v969
                %v971 = vld [vmem:[%s913 + $0x70] sm:$0xf]
                %972 = vst [vmem:[%s914 + $0x70] sm:$0xf] %v971
                %v973 = vld [vmem:[%s913 + $0x74] sm:$0xf]
                %974 = vst [vmem:[%s914 + $0x74] sm:$0xf] %v973
                %v975 = vld [vmem:[%s913 + $0x78] sm:$0xf]
                %976 = vst [vmem:[%s914 + $0x78] sm:$0xf] %v975
                %v977 = vld [vmem:[%s913 + $0x7c] sm:$0xf]
                %978 = vst [vmem:[%s914 + $0x7c] sm:$0xf] %v977
                %s979 = sadd.s32 1, %s912
                %p980 = scmp.ge.s32.totalorder %s979, %s905
                %s981 = scalar_select %p980, 0, %s979
                %s982 = smul.u32 %s981, 128
                %s983 = smul.u32 %s981, 128
                %s984 = scalar_lea.vmem %s885, %s982 [#allocation2]
                %s985 = scalar_lea.vmem %s896, %s983
              $region53: #{cnn_deepmind_multihead_forward.5} parent=47 // loop_footer
                %s909 = sadd.s32 %s907, 1
              $region54: #{cnn_deepmind_multihead_forward.5} parent=47 // loop_footer_branch
                %906 = sbr.rel target = $region50
              $region55: #{cnn_deepmind_multihead_forward.5} parent=47 // loop_exit
                _
              %s986 = sshrl.u32 %s892, 5
              %s987 = sand.u32 %s892, 31
              %s988 = smul.u32 %s986, 32
              %s989 = smul.u32 4, %s988
              %s990 = scalar_lea.vmem %s885, %s989 [#allocation2]
              %s991 = smul.u32 4, %s988
              %s992 = scalar_lea.vmem %s896, %s991
              // While loop
              $region56: #{cnn_deepmind_multihead_forward.5} parent=47 // loop_pre_header
                _
              $region57: #{cnn_deepmind_multihead_forward.5} parent=47 // loop_header
                %s994 = sphi 0, %s996
                %p995 = scmp.ge.s32.totalorder %s994, %s987
                %s999 = sphi 0, %s1006
                %s1000 = sphi %s990, %s1009
                %s1001 = sphi %s992, %s1010
              $region58: #{cnn_deepmind_multihead_forward.5} parent=47 // loop_header_branch
                %998 = sbr.rel (%p995) target = $region62
              $region59: #{cnn_deepmind_multihead_forward.5} parent=47 // loop_body
                %v1002 = vld [vmem:[%s1000] sm:$0xf]
                %1003 = vst [vmem:[%s1001] sm:$0xf] %v1002
                %s1004 = sadd.s32 1, %s999
                %p1005 = scmp.ge.s32.totalorder %s1004, %s987
                %s1006 = scalar_select %p1005, 0, %s1004
                %s1007 = smul.u32 %s1006, 4
                %s1008 = smul.u32 %s1006, 4
                %s1009 = scalar_lea.vmem %s990, %s1007 [#allocation2]
                %s1010 = scalar_lea.vmem %s992, %s1008
              $region60: #{cnn_deepmind_multihead_forward.5} parent=47 // loop_footer
                %s996 = sadd.s32 %s994, 1
              $region61: #{cnn_deepmind_multihead_forward.5} parent=47 // loop_footer_branch
                %993 = sbr.rel target = $region57
              $region62: #{cnn_deepmind_multihead_forward.5} parent=47 // loop_exit
                _
            $region48: #{cnn_deepmind_multihead_forward.5} parent=39 // pred_fallthru
              _
          $region40: #{cnn_deepmind_multihead_forward.5} parent=35 // pred_fallthru
            _
          %1120 = vnop
        $region36: #{cnn_deepmind_multihead_forward.5} parent=31 // pred_fallthru
          _
      $region32: #{cnn_deepmind_multihead_forward.5} parent=5 // pred_fallthru
        _
      %p1121 = scmp.le.s32.totalorder 2, %s9
      // Predicated region
      $region81: #{cnn_deepmind_multihead_forward.5} parent=5 // pred_check
        %p1122 = pneg %p1121
      $region82: #{cnn_deepmind_multihead_forward.5} parent=5 // pred_check_branch
        %1124 = sbr.rel (%p1122) target = $region84
      $region83: #{cnn_deepmind_multihead_forward.5} parent=5 // pred_region
        %s1125 = ssub.s32 %s9, 2
        // Predicated region
        $region85: #{cnn_deepmind_multihead_forward.5} parent=83 // pred_check
          %p1126 = pneg %p106
        $region86: #{cnn_deepmind_multihead_forward.5} parent=83 // pred_check_branch
          %1128 = sbr.rel (%p1126) target = $region88
        $region87: #{cnn_deepmind_multihead_forward.5} parent=83 // pred_region
          %s1129 = sand.u32 %s91, 1
          %s1130 = sand.u32 %s91, 1
          %s1131 = smul.addr %s1130, 128
          %s1132 = scalar_lea.vmem [#allocation2], %s1131
        $region88: #{cnn_deepmind_multihead_forward.5} parent=83 // pred_fallthru
          _
      $region84: #{cnn_deepmind_multihead_forward.5} parent=5 // pred_fallthru
        _
    $region6: #{cnn_deepmind_multihead_forward.5} parent=1 // loop_footer
      %s13 = sadd.s32 1, %s9
    $region7: #{cnn_deepmind_multihead_forward.5} parent=1 // loop_footer_branch
      %8 = sbr.rel target = $region3
    $region8: #{cnn_deepmind_multihead_forward.5} parent=1 // loop_exit
      _

// kernel: cnn_deepmind_multihead_forward.6
$region0: #{cnn_deepmind_multihead_forward.6}
  #allocation0 [shape = 'u32[]', space=smem, size = 0x4, offset = 0x4, fixed_abs, tag = 'smem constant byte address 0x4 - core index']
  #allocation1 [shape = 'u32[144,128]{1,0:T(1,128)}', space=vmem, size = 0x12000, scoped, tag = 'internal scratch']
  %s0 = inlined_call_operand.vmem [shape: bf16[162,512], index: 0, kind: input, shape index: {}]
  %s1 = inlined_call_operand.vmem [shape: bf16[512,64], index: 1, kind: input, shape index: {}]
  %s2 = inlined_call_operand.vmem [shape: f32[1,64], index: 2, kind: input, shape index: {}]
  %s3 = inlined_call_operand.vmem [shape: bf16[162,64], index: 3, kind: output, shape index: {}]
  %s4 = sld [smem:[#allocation0]]
  $region22: #{cnn_deepmind_multihead_forward.6} parent=0
    _
  %s6 = ssub.s32 1, %s4
  %s7 = scalar_select 0, %s6, %s4
  // Predicated region
  $region2: #{cnn_deepmind_multihead_forward.6} parent=0 // pred_check
    _
  $region3: #{cnn_deepmind_multihead_forward.6} parent=0 // pred_check_branch
    %9 = sbr.rel (0) target = $region5
  $region4: #{cnn_deepmind_multihead_forward.6} parent=0 // pred_region
    _
  $region5: #{cnn_deepmind_multihead_forward.6} parent=0 // pred_fallthru
    _
  // Predicated region
  $region6: #{cnn_deepmind_multihead_forward.6} parent=0 // pred_check
    _
  $region7: #{cnn_deepmind_multihead_forward.6} parent=0 // pred_check_branch
    %11 = sbr.rel (0) target = $region9
  $region8: #{cnn_deepmind_multihead_forward.6} parent=0 // pred_region
    _
  $region9: #{cnn_deepmind_multihead_forward.6} parent=0 // pred_fallthru
    _
  // Predicated region
  $region10: #{cnn_deepmind_multihead_forward.6} parent=0 // pred_check
    _
  $region11: #{cnn_deepmind_multihead_forward.6} parent=0 // pred_check_branch
    %13 = sbr.rel (0) target = $region13
  $region12: #{cnn_deepmind_multihead_forward.6} parent=0 // pred_region
    _
  $region13: #{cnn_deepmind_multihead_forward.6} parent=0 // pred_fallthru
    _
  %v15 = vld [vmem:[%s0] sm:$0xff]
  %v16 = vld [vmem:[%s0 + $0x8] sm:$0xff]
  %v17 = vld [vmem:[%s0 + $0x10] sm:$0xff]
  %v18 = vld [vmem:[%s0 + $0x18] sm:$0xff]
  %v19 = vld [vmem:[%s0 + $0x20] sm:$0xff]
  %v20 = vld [vmem:[%s0 + $0x28] sm:$0xff]
  %v21 = vld [vmem:[%s0 + $0x30] sm:$0xff]
  %v22 = vld [vmem:[%s0 + $0x38] sm:$0xff]
  %v23 = vld [vmem:[%s0 + $0x40] sm:$0xff]
  %v24 = vld [vmem:[%s0 + $0x48] sm:$0xff]
  %v25 = vld [vmem:[%s0 + $0x50] sm:$0xff]
  %v26 = vld [vmem:[%s0 + $0x58] sm:$0xff]
  %v27 = vld [vmem:[%s0 + $0x60] sm:$0xff]
  %v28 = vld [vmem:[%s0 + $0x68] sm:$0xff]
  %v29 = vld [vmem:[%s0 + $0x70] sm:$0xff]
  %v30 = vld [vmem:[%s0 + $0x78] sm:$0xff]
  %v31 = vld [vmem:[%s0 + $0x80] sm:$0xff]
  %v32 = vld [vmem:[%s0 + $0x88] sm:$0xff]
  %v33 = vld [vmem:[%s0 + $0x90] sm:$0xff]
  %v34 = vld [vmem:[%s0 + $0x98] sm:$0xff]
  %v35 = vld [vmem:[%s0 + $0xa0] sm:$0xff]
  %v36 = vld [vmem:[%s0 + $0xa8] sm:$0xff]
  %v37 = vld [vmem:[%s0 + $0xb0] sm:$0xff]
  %v38 = vld [vmem:[%s0 + $0xb8] sm:$0xff]
  %v39 = vld [vmem:[%s0 + $0xc0] sm:$0xff]
  %v40 = vld [vmem:[%s0 + $0xc8] sm:$0xff]
  %v41 = vld [vmem:[%s0 + $0xd0] sm:$0xff]
  %v42 = vld [vmem:[%s0 + $0xd8] sm:$0xff]
  %v43 = vld [vmem:[%s0 + $0xe0] sm:$0xff]
  %v44 = vld [vmem:[%s0 + $0xe8] sm:$0xff]
  %v45 = vld [vmem:[%s0 + $0xf0] sm:$0xff]
  %v46 = vld [vmem:[%s0 + $0xf8] sm:$0xff]
  %v47 = vld [vmem:[%s0 + $0x100] sm:$0xff]
  %v48 = vld [vmem:[%s0 + $0x108] sm:$0xff]
  %v49 = vld [vmem:[%s0 + $0x110] sm:$0xff]
  %v50 = vld [vmem:[%s0 + $0x118] sm:$0xff]
  %v51 = vld [vmem:[%s0 + $0x120] sm:$0xff]
  %v52 = vld [vmem:[%s0 + $0x128] sm:$0xff]
  %v53 = vld [vmem:[%s0 + $0x130] sm:$0xff]
  %v54 = vld [vmem:[%s0 + $0x138] sm:$0xff]
  %v55 = vld [vmem:[%s0 + $0x140] sm:$0x11]
  %v56 = vld [vmem:[%s0 + $0x148] sm:$0x11]
  %v57 = vld [vmem:[%s1] sm:$0xf]
  %v58 = vld [vmem:[%s1 + $0x4] sm:$0xf]
  %v59 = vld [vmem:[%s1 + $0x8] sm:$0xf]
  %v60 = vld [vmem:[%s1 + $0xc] sm:$0xf]
  %v61 = vld [vmem:[%s1 + $0x10] sm:$0xf]
  %v62 = vld [vmem:[%s1 + $0x14] sm:$0xf]
  %v63 = vld [vmem:[%s1 + $0x18] sm:$0xf]
  %v64 = vld [vmem:[%s1 + $0x1c] sm:$0xf]
  %v65 = vld [vmem:[%s1 + $0x20] sm:$0xf]
  %v66 = vld [vmem:[%s1 + $0x24] sm:$0xf]
  %v67 = vld [vmem:[%s1 + $0x28] sm:$0xf]
  %v68 = vld [vmem:[%s1 + $0x2c] sm:$0xf]
  %v69 = vld [vmem:[%s1 + $0x30] sm:$0xf]
  %v70 = vld [vmem:[%s1 + $0x34] sm:$0xf]
  %v71 = vld [vmem:[%s1 + $0x38] sm:$0xf]
  %v72 = vld [vmem:[%s1 + $0x3c] sm:$0xf]
  %v73 = vld [vmem:[%s1 + $0x40] sm:$0xf]
  %v74 = vld [vmem:[%s1 + $0x44] sm:$0xf]
  %v75 = vld [vmem:[%s1 + $0x48] sm:$0xf]
  %v76 = vld [vmem:[%s1 + $0x4c] sm:$0xf]
  %v77 = vld [vmem:[%s1 + $0x50] sm:$0xf]
  %v78 = vld [vmem:[%s1 + $0x54] sm:$0xf]
  %v79 = vld [vmem:[%s1 + $0x58] sm:$0xf]
  %v80 = vld [vmem:[%s1 + $0x5c] sm:$0xf]
  %v81 = vld [vmem:[%s1 + $0x60] sm:$0xf]
  %v82 = vld [vmem:[%s1 + $0x64] sm:$0xf]
  %v83 = vld [vmem:[%s1 + $0x68] sm:$0xf]
  %v84 = vld [vmem:[%s1 + $0x6c] sm:$0xf]
  %v85 = vld [vmem:[%s1 + $0x70] sm:$0xf]
  %v86 = vld [vmem:[%s1 + $0x74] sm:$0xf]
  %v87 = vld [vmem:[%s1 + $0x78] sm:$0xf]
  %v88 = vld [vmem:[%s1 + $0x7c] sm:$0xf]
  %v89 = vld [vmem:[%s1 + $0x80] sm:$0xf]
  %v90 = vld [vmem:[%s1 + $0x84] sm:$0xf]
  %v91 = vld [vmem:[%s1 + $0x88] sm:$0xf]
  %v92 = vld [vmem:[%s1 + $0x8c] sm:$0xf]
  %v93 = vld [vmem:[%s1 + $0x90] sm:$0xf]
  %v94 = vld [vmem:[%s1 + $0x94] sm:$0xf]
  %v95 = vld [vmem:[%s1 + $0x98] sm:$0xf]
  %v96 = vld [vmem:[%s1 + $0x9c] sm:$0xf]
  %v97 = vld [vmem:[%s1 + $0xa0] sm:$0xf]
  %v98 = vld [vmem:[%s1 + $0xa4] sm:$0xf]
  %v99 = vld [vmem:[%s1 + $0xa8] sm:$0xf]
  %v100 = vld [vmem:[%s1 + $0xac] sm:$0xf]
  %v101 = vld [vmem:[%s1 + $0xb0] sm:$0xf]
  %v102 = vld [vmem:[%s1 + $0xb4] sm:$0xf]
  %v103 = vld [vmem:[%s1 + $0xb8] sm:$0xf]
  %v104 = vld [vmem:[%s1 + $0xbc] sm:$0xf]
  %v105 = vld [vmem:[%s1 + $0xc0] sm:$0xf]
  %v106 = vld [vmem:[%s1 + $0xc4] sm:$0xf]
  %v107 = vld [vmem:[%s1 + $0xc8] sm:$0xf]
  %v108 = vld [vmem:[%s1 + $0xcc] sm:$0xf]
  %v109 = vld [vmem:[%s1 + $0xd0] sm:$0xf]
  %v110 = vld [vmem:[%s1 + $0xd4] sm:$0xf]
  %v111 = vld [vmem:[%s1 + $0xd8] sm:$0xf]
  %v112 = vld [vmem:[%s1 + $0xdc] sm:$0xf]
  %v113 = vld [vmem:[%s1 + $0xe0] sm:$0xf]
  %v114 = vld [vmem:[%s1 + $0xe4] sm:$0xf]
  %v115 = vld [vmem:[%s1 + $0xe8] sm:$0xf]
  %v116 = vld [vmem:[%s1 + $0xec] sm:$0xf]
  %v117 = vld [vmem:[%s1 + $0xf0] sm:$0xf]
  %v118 = vld [vmem:[%s1 + $0xf4] sm:$0xf]
  %v119 = vld [vmem:[%s1 + $0xf8] sm:$0xf]
  %v120 = vld [vmem:[%s1 + $0xfc] sm:$0xf]
  %v121 = vld [vmem:[%s2] sm:$0x1]
  %v123 = vlaneseq
  %v124 = vshrl.u32 %v123, 7
  %v125 = vsub.s32 0, %v124
  %v126 = vrot.slane %v121, %v125
  %v170 = vunpack.c.l.b16 %v15
  %v171 = vunpack.c.h.b16 %v15
  %v172 = vunpack.c.l.b16 %v16
  %v173 = vunpack.c.h.b16 %v16
  %v174 = vunpack.c.l.b16 %v17
  %v175 = vunpack.c.h.b16 %v17
  %v176 = vunpack.c.l.b16 %v18
  %v177 = vunpack.c.h.b16 %v18
  %v178 = vunpack.c.l.b16 %v19
  %v179 = vunpack.c.h.b16 %v19
  %v180 = vunpack.c.l.b16 %v20
  %v181 = vunpack.c.h.b16 %v20
  %v182 = vunpack.c.l.b16 %v21
  %v183 = vunpack.c.h.b16 %v21
  %v184 = vunpack.c.l.b16 %v22
  %v185 = vunpack.c.h.b16 %v22
  %v186 = vunpack.c.l.b16 %v23
  %v187 = vunpack.c.h.b16 %v23
  %v188 = vunpack.c.l.b16 %v24
  %v189 = vunpack.c.h.b16 %v24
  %v190 = vunpack.c.l.b16 %v25
  %v191 = vunpack.c.h.b16 %v25
  %v192 = vunpack.c.l.b16 %v26
  %v193 = vunpack.c.h.b16 %v26
  %v194 = vunpack.c.l.b16 %v27
  %v195 = vunpack.c.h.b16 %v27
  %v196 = vunpack.c.l.b16 %v28
  %v197 = vunpack.c.h.b16 %v28
  %v198 = vunpack.c.l.b16 %v29
  %v199 = vunpack.c.h.b16 %v29
  %v200 = vunpack.c.l.b16 %v30
  %v201 = vunpack.c.h.b16 %v30
  %v202 = vunpack.c.l.b16 %v31
  %v203 = vunpack.c.h.b16 %v31
  %v204 = vunpack.c.l.b16 %v32
  %v205 = vunpack.c.h.b16 %v32
  %v206 = vunpack.c.l.b16 %v33
  %v207 = vunpack.c.h.b16 %v33
  %v208 = vunpack.c.l.b16 %v34
  %v209 = vunpack.c.h.b16 %v34
  %v210 = vunpack.c.l.b16 %v35
  %v211 = vunpack.c.h.b16 %v35
  %v212 = vunpack.c.l.b16 %v36
  %v213 = vunpack.c.h.b16 %v36
  %v214 = vunpack.c.l.b16 %v37
  %v215 = vunpack.c.h.b16 %v37
  %v216 = vunpack.c.l.b16 %v38
  %v217 = vunpack.c.h.b16 %v38
  %v218 = vunpack.c.l.b16 %v39
  %v219 = vunpack.c.h.b16 %v39
  %v220 = vunpack.c.l.b16 %v40
  %v221 = vunpack.c.h.b16 %v40
  %v222 = vunpack.c.l.b16 %v41
  %v223 = vunpack.c.h.b16 %v41
  %v224 = vunpack.c.l.b16 %v42
  %v225 = vunpack.c.h.b16 %v42
  %v226 = vunpack.c.l.b16 %v43
  %v227 = vunpack.c.h.b16 %v43
  %v228 = vunpack.c.l.b16 %v44
  %v229 = vunpack.c.h.b16 %v44
  %v230 = vunpack.c.l.b16 %v45
  %v231 = vunpack.c.h.b16 %v45
  %v232 = vunpack.c.l.b16 %v46
  %v233 = vunpack.c.h.b16 %v46
  %v234 = vunpack.c.l.b16 %v47
  %v235 = vunpack.c.h.b16 %v47
  %v236 = vunpack.c.l.b16 %v48
  %v237 = vunpack.c.h.b16 %v48
  %v238 = vunpack.c.l.b16 %v49
  %v239 = vunpack.c.h.b16 %v49
  %v240 = vunpack.c.l.b16 %v50
  %v241 = vunpack.c.h.b16 %v50
  %v242 = vunpack.c.l.b16 %v51
  %v243 = vunpack.c.h.b16 %v51
  %v244 = vunpack.c.l.b16 %v52
  %v245 = vunpack.c.h.b16 %v52
  %v246 = vunpack.c.l.b16 %v53
  %v247 = vunpack.c.h.b16 %v53
  %v248 = vunpack.c.l.b16 %v54
  %v249 = vunpack.c.h.b16 %v54
  %v250 = vunpack.c.l.b16 %v55
  %v251 = vunpack.c.h.b16 %v55
  %v252 = vunpack.c.l.b16 %v56
  %v253 = vunpack.c.h.b16 %v56
  %v254 = vpack.c.b16 %v174, %v170
  %v255 = vpack.c.b16 %v175, %v171
  %v256 = vpack.c.b16 %v176, %v172
  %v257 = vpack.c.b16 %v177, %v173
  %v258 = vpack.c.b16 %v182, %v178
  %v259 = vpack.c.b16 %v183, %v179
  %v260 = vpack.c.b16 %v184, %v180
  %v261 = vpack.c.b16 %v185, %v181
  %v262 = vpack.c.b16 %v190, %v186
  %v263 = vpack.c.b16 %v191, %v187
  %v264 = vpack.c.b16 %v192, %v188
  %v265 = vpack.c.b16 %v193, %v189
  %v266 = vpack.c.b16 %v198, %v194
  %v267 = vpack.c.b16 %v199, %v195
  %v268 = vpack.c.b16 %v200, %v196
  %v269 = vpack.c.b16 %v201, %v197
  %v270 = vpack.c.b16 %v206, %v202
  %v271 = vpack.c.b16 %v207, %v203
  %v272 = vpack.c.b16 %v208, %v204
  %v273 = vpack.c.b16 %v209, %v205
  %v274 = vpack.c.b16 %v214, %v210
  %v275 = vpack.c.b16 %v215, %v211
  %v276 = vpack.c.b16 %v216, %v212
  %v277 = vpack.c.b16 %v217, %v213
  %v278 = vpack.c.b16 %v222, %v218
  %v279 = vpack.c.b16 %v223, %v219
  %v280 = vpack.c.b16 %v224, %v220
  %v281 = vpack.c.b16 %v225, %v221
  %v282 = vpack.c.b16 %v230, %v226
  %v283 = vpack.c.b16 %v231, %v227
  %v284 = vpack.c.b16 %v232, %v228
  %v285 = vpack.c.b16 %v233, %v229
  %v286 = vpack.c.b16 %v238, %v234
  %v287 = vpack.c.b16 %v239, %v235
  %v288 = vpack.c.b16 %v240, %v236
  %v289 = vpack.c.b16 %v241, %v237
  %v290 = vpack.c.b16 %v246, %v242
  %v291 = vpack.c.b16 %v247, %v243
  %v292 = vpack.c.b16 %v248, %v244
  %v293 = vpack.c.b16 %v249, %v245
  %v294 = vpack.c.b16 %v250, %v250
  %v295 = vpack.c.b16 %v251, %v251
  %v296 = vpack.c.b16 %v252, %v252
  %v297 = vpack.c.b16 %v253, %v253
  %v406 = vunpack.c.l.b16 %v57
  %v407 = vunpack.c.l.b16 %v58
  %v408 = vunpack.c.l.b16 %v59
  %v409 = vunpack.c.l.b16 %v60
  %v410 = vunpack.c.l.b16 %v61
  %v411 = vunpack.c.l.b16 %v62
  %v412 = vunpack.c.l.b16 %v63
  %v413 = vunpack.c.l.b16 %v64
  %v414 = vunpack.c.l.b16 %v65
  %v415 = vunpack.c.l.b16 %v66
  %v416 = vunpack.c.l.b16 %v67
  %v417 = vunpack.c.l.b16 %v68
  %v418 = vunpack.c.l.b16 %v69
  %v419 = vunpack.c.l.b16 %v70
  %v420 = vunpack.c.l.b16 %v71
  %v421 = vunpack.c.l.b16 %v72
  %v422 = vunpack.c.l.b16 %v73
  %v423 = vunpack.c.l.b16 %v74
  %v424 = vunpack.c.l.b16 %v75
  %v425 = vunpack.c.l.b16 %v76
  %v426 = vunpack.c.l.b16 %v77
  %v427 = vunpack.c.l.b16 %v78
  %v428 = vunpack.c.l.b16 %v79
  %v429 = vunpack.c.l.b16 %v80
  %v430 = vunpack.c.l.b16 %v81
  %v431 = vunpack.c.l.b16 %v82
  %v432 = vunpack.c.l.b16 %v83
  %v433 = vunpack.c.l.b16 %v84
  %v434 = vunpack.c.l.b16 %v85
  %v435 = vunpack.c.l.b16 %v86
  %v436 = vunpack.c.l.b16 %v87
  %v437 = vunpack.c.l.b16 %v88
  %v438 = vunpack.c.l.b16 %v89
  %v439 = vunpack.c.l.b16 %v90
  %v440 = vunpack.c.l.b16 %v91
  %v441 = vunpack.c.l.b16 %v92
  %v442 = vunpack.c.l.b16 %v93
  %v443 = vunpack.c.l.b16 %v94
  %v444 = vunpack.c.l.b16 %v95
  %v445 = vunpack.c.l.b16 %v96
  %v446 = vunpack.c.l.b16 %v97
  %v447 = vunpack.c.l.b16 %v98
  %v448 = vunpack.c.l.b16 %v99
  %v449 = vunpack.c.l.b16 %v100
  %v450 = vunpack.c.l.b16 %v101
  %v451 = vunpack.c.l.b16 %v102
  %v452 = vunpack.c.l.b16 %v103
  %v453 = vunpack.c.l.b16 %v104
  %v454 = vunpack.c.l.b16 %v105
  %v455 = vunpack.c.l.b16 %v106
  %v456 = vunpack.c.l.b16 %v107
  %v457 = vunpack.c.l.b16 %v108
  %v458 = vunpack.c.l.b16 %v109
  %v459 = vunpack.c.l.b16 %v110
  %v460 = vunpack.c.l.b16 %v111
  %v461 = vunpack.c.l.b16 %v112
  %v462 = vunpack.c.l.b16 %v113
  %v463 = vunpack.c.l.b16 %v114
  %v464 = vunpack.c.l.b16 %v115
  %v465 = vunpack.c.l.b16 %v116
  %v466 = vunpack.c.l.b16 %v117
  %v467 = vunpack.c.l.b16 %v118
  %v468 = vunpack.c.l.b16 %v119
  %v469 = vunpack.c.l.b16 %v120
  %v470 = vpack.c.b16 %v407, %v406
  %v471 = vpack.c.b16 %v409, %v408
  %v472 = vpack.c.b16 %v411, %v410
  %v473 = vpack.c.b16 %v413, %v412
  %v474 = vpack.c.b16 %v415, %v414
  %v475 = vpack.c.b16 %v417, %v416
  %v476 = vpack.c.b16 %v419, %v418
  %v477 = vpack.c.b16 %v421, %v420
  %v478 = vpack.c.b16 %v423, %v422
  %v479 = vpack.c.b16 %v425, %v424
  %v480 = vpack.c.b16 %v427, %v426
  %v481 = vpack.c.b16 %v429, %v428
  %v482 = vpack.c.b16 %v431, %v430
  %v483 = vpack.c.b16 %v433, %v432
  %v484 = vpack.c.b16 %v435, %v434
  %v485 = vpack.c.b16 %v437, %v436
  %v486 = vpack.c.b16 %v439, %v438
  %v487 = vpack.c.b16 %v441, %v440
  %v488 = vpack.c.b16 %v443, %v442
  %v489 = vpack.c.b16 %v445, %v444
  %v490 = vpack.c.b16 %v447, %v446
  %v491 = vpack.c.b16 %v449, %v448
  %v492 = vpack.c.b16 %v451, %v450
  %v493 = vpack.c.b16 %v453, %v452
  %v494 = vpack.c.b16 %v455, %v454
  %v495 = vpack.c.b16 %v457, %v456
  %v496 = vpack.c.b16 %v459, %v458
  %v497 = vpack.c.b16 %v461, %v460
  %v498 = vpack.c.b16 %v463, %v462
  %v499 = vpack.c.b16 %v465, %v464
  %v500 = vpack.c.b16 %v467, %v466
  %v501 = vpack.c.b16 %v469, %v468
  %534 = vmatprep.subr.bf16.mxu0 0
  %535 = vmatpush1.bf16.msra.mxu0 %v470
  %536 = vmatprep.subr.bf16.mxu0 0
  %537 = vmatpush1.bf16.msra.mxu0 %v471
  %538 = vmatprep.subr.bf16.mxu0 0
  %539 = vmatpush1.bf16.msra.mxu0 %v472
  %540 = vmatprep.subr.bf16.mxu0 0
  %541 = vmatpush1.bf16.msra.mxu0 %v473
  %542 = vmatprep.subr.bf16.mxu0 0
  %543 = vmatpush1.bf16.msra.mxu0 %v474
  %544 = vmatprep.subr.bf16.mxu0 0
  %545 = vmatpush1.bf16.msra.mxu0 %v475
  %546 = vmatprep.subr.bf16.mxu0 0
  %547 = vmatpush1.bf16.msra.mxu0 %v476
  %548 = vmatprep.subr.bf16.mxu0 0
  %549 = vmatpush1.bf16.msra.mxu0 %v477
  %550 = vmatprep.subr.bf16.mxu0 0
  %551 = vmatpush1.bf16.msra.mxu0 %v478
  %552 = vmatprep.subr.bf16.mxu0 0
  %553 = vmatpush1.bf16.msra.mxu0 %v479
  %554 = vmatprep.subr.bf16.mxu0 0
  %555 = vmatpush1.bf16.msra.mxu0 %v480
  %556 = vmatprep.subr.bf16.mxu0 0
  %557 = vmatpush1.bf16.msra.mxu0 %v481
  %558 = vmatprep.subr.bf16.mxu0 0
  %559 = vmatpush1.bf16.msra.mxu0 %v482
  %560 = vmatprep.subr.bf16.mxu0 0
  %561 = vmatpush1.bf16.msra.mxu0 %v483
  %562 = vmatprep.subr.bf16.mxu0 0
  %563 = vmatpush1.bf16.msra.mxu0 %v484
  %564 = vmatprep.subr.bf16.mxu0 0
  %565 = vmatpush1.bf16.msra.mxu0 %v485
  %566 = vmatprep.mubr.bf16.mxu0 %v255
  %567 = vmatmul.mubr.bf16.gmra.mrb[0].mxu0 %v254
  %v568 = vpop.f32.mrb[0].mxu0
  %v569 = vadd.f32 %v126, %v568
  %v570 = vpop.f32.mrb[0].mxu0
  %v571 = vpop.f32.mrb[0].mxu0
  %v572 = vadd.f32 %v126, %v571
  %v573 = vpop.f32.mrb[0].mxu0
  %574 = vmatprep.mubr.bf16.mxu0 %v259
  %575 = vmatmul.mubr.bf16.gmra.mrb[0].mxu0 %v258
  %v576 = vpop.f32.mrb[0].mxu0
  %v577 = vadd.f32 %v126, %v576
  %v578 = vpop.f32.mrb[0].mxu0
  %v579 = vpop.f32.mrb[0].mxu0
  %v580 = vadd.f32 %v126, %v579
  %v581 = vpop.f32.mrb[0].mxu0
  %582 = vmatprep.mubr.bf16.mxu0 %v263
  %583 = vmatmul.mubr.bf16.gmra.mrb[0].mxu0 %v262
  %v584 = vpop.f32.mrb[0].mxu0
  %v585 = vadd.f32 %v126, %v584
  %v586 = vpop.f32.mrb[0].mxu0
  %v587 = vpop.f32.mrb[0].mxu0
  %v588 = vadd.f32 %v126, %v587
  %v589 = vpop.f32.mrb[0].mxu0
  %590 = vmatprep.mubr.bf16.mxu0 %v267
  %591 = vmatmul.mubr.bf16.gmra.mrb[0].mxu0 %v266
  %v592 = vpop.f32.mrb[0].mxu0
  %v593 = vadd.f32 %v126, %v592
  %v594 = vpop.f32.mrb[0].mxu0
  %v595 = vpop.f32.mrb[0].mxu0
  %v596 = vadd.f32 %v126, %v595
  %v597 = vpop.f32.mrb[0].mxu0
  %598 = vmatprep.mubr.bf16.mxu0 %v271
  %599 = vmatmul.mubr.bf16.gmra.mrb[0].mxu0 %v270
  %v600 = vpop.f32.mrb[0].mxu0
  %v601 = vadd.f32 %v126, %v600
  %v602 = vpop.f32.mrb[0].mxu0
  %v603 = vpop.f32.mrb[0].mxu0
  %v604 = vadd.f32 %v126, %v603
  %v605 = vpop.f32.mrb[0].mxu0
  %606 = vmatprep.mubr.bf16.mxu0 %v275
  %607 = vmatmul.mubr.bf16.gmra.mrb[0].mxu0 %v274
  %v608 = vpop.f32.mrb[0].mxu0
  %v609 = vadd.f32 %v126, %v608
  %v610 = vpop.f32.mrb[0].mxu0
  %v611 = vpop.f32.mrb[0].mxu0
  %v612 = vadd.f32 %v126, %v611
  %v613 = vpop.f32.mrb[0].mxu0
  %614 = vmatprep.mubr.bf16.mxu0 %v279
  %615 = vmatmul.mubr.bf16.gmra.mrb[0].mxu0 %v278
  %v616 = vpop.f32.mrb[0].mxu0
  %v617 = vadd.f32 %v126, %v616
  %v618 = vpop.f32.mrb[0].mxu0
  %v619 = vpop.f32.mrb[0].mxu0
  %v620 = vadd.f32 %v126, %v619
  %v621 = vpop.f32.mrb[0].mxu0
  %622 = vmatprep.mubr.bf16.mxu0 %v283
  %623 = vmatmul.mubr.bf16.gmra.mrb[0].mxu0 %v282
  %v624 = vpop.f32.mrb[0].mxu0
  %v625 = vadd.f32 %v126, %v624
  %v626 = vpop.f32.mrb[0].mxu0
  %v627 = vpop.f32.mrb[0].mxu0
  %v628 = vadd.f32 %v126, %v627
  %v629 = vpop.f32.mrb[0].mxu0
  %630 = vmatprep.mubr.bf16.mxu0 %v287
  %631 = vmatmul.mubr.bf16.gmra.mrb[0].mxu0 %v286
  %v632 = vpop.f32.mrb[0].mxu0
  %v633 = vadd.f32 %v126, %v632
  %v634 = vpop.f32.mrb[0].mxu0
  %v635 = vpop.f32.mrb[0].mxu0
  %v636 = vadd.f32 %v126, %v635
  %v637 = vpop.f32.mrb[0].mxu0
  %638 = vmatprep.mubr.bf16.mxu0 %v291
  %639 = vmatmul.mubr.bf16.gmra.mrb[0].mxu0 %v290
  %v640 = vpop.f32.mrb[0].mxu0
  %v641 = vadd.f32 %v126, %v640
  %v642 = vpop.f32.mrb[0].mxu0
  %v643 = vpop.f32.mrb[0].mxu0
  %v644 = vadd.f32 %v126, %v643
  %v645 = vpop.f32.mrb[0].mxu0
  %646 = vmatprep.mubr.bf16.mxu0 %v295
  %647 = vmatmul.mubr.bf16.gmra.mrb[0].mxu0 %v294
  %v648 = vpop.f32.mrb[0].mxu0
  %v649 = vadd.f32 %v126, %v648
  %v650 = vpop.f32.mrb[0].mxu0
  %v651 = vpop.f32.mrb[0].mxu0
  %v652 = vpop.f32.mrb[0].mxu0
  %653 = vdwg.mxu0
  %654 = vmatprep.subr.bf16.mxu0 0
  %655 = vmatpush1.bf16.msra.mxu0 %v486
  %656 = vmatprep.subr.bf16.mxu0 0
  %657 = vmatpush1.bf16.msra.mxu0 %v487
  %658 = vmatprep.subr.bf16.mxu0 0
  %659 = vmatpush1.bf16.msra.mxu0 %v488
  %660 = vmatprep.subr.bf16.mxu0 0
  %661 = vmatpush1.bf16.msra.mxu0 %v489
  %662 = vmatprep.subr.bf16.mxu0 0
  %663 = vmatpush1.bf16.msra.mxu0 %v490
  %664 = vmatprep.subr.bf16.mxu0 0
  %665 = vmatpush1.bf16.msra.mxu0 %v491
  %666 = vmatprep.subr.bf16.mxu0 0
  %667 = vmatpush1.bf16.msra.mxu0 %v492
  %668 = vmatprep.subr.bf16.mxu0 0
  %669 = vmatpush1.bf16.msra.mxu0 %v493
  %670 = vmatprep.subr.bf16.mxu0 0
  %671 = vmatpush1.bf16.msra.mxu0 %v494
  %672 = vmatprep.subr.bf16.mxu0 0
  %673 = vmatpush1.bf16.msra.mxu0 %v495
  %674 = vmatprep.subr.bf16.mxu0 0
  %675 = vmatpush1.bf16.msra.mxu0 %v496
  %676 = vmatprep.subr.bf16.mxu0 0
  %677 = vmatpush1.bf16.msra.mxu0 %v497
  %678 = vmatprep.subr.bf16.mxu0 0
  %679 = vmatpush1.bf16.msra.mxu0 %v498
  %680 = vmatprep.subr.bf16.mxu0 0
  %681 = vmatpush1.bf16.msra.mxu0 %v499
  %682 = vmatprep.subr.bf16.mxu0 0
  %683 = vmatpush1.bf16.msra.mxu0 %v500
  %684 = vmatprep.subr.bf16.mxu0 0
  %685 = vmatpush1.bf16.msra.mxu0 %v501
  %686 = vmatprep.mubr.bf16.mxu0 %v257
  %687 = vmatmul.mubr.bf16.gmra.mrb[0].mxu0 %v256
  %v688 = vpop.f32.mrb[0].mxu0
  %v689 = vadd.f32 %v569, %v688
  %v690 = vpop.f32.mrb[0].mxu0
  %v691 = vpop.f32.mrb[0].mxu0
  %v692 = vadd.f32 %v572, %v691
  %v693 = vpop.f32.mrb[0].mxu0
  %694 = vmatprep.mubr.bf16.mxu0 %v261
  %695 = vmatmul.mubr.bf16.gmra.mrb[0].mxu0 %v260
  %v696 = vpop.f32.mrb[0].mxu0
  %v697 = vadd.f32 %v577, %v696
  %v698 = vpop.f32.mrb[0].mxu0
  %v699 = vpop.f32.mrb[0].mxu0
  %v700 = vadd.f32 %v580, %v699
  %v701 = vpop.f32.mrb[0].mxu0
  %702 = vmatprep.mubr.bf16.mxu0 %v265
  %703 = vmatmul.mubr.bf16.gmra.mrb[0].mxu0 %v264
  %v704 = vpop.f32.mrb[0].mxu0
  %v705 = vadd.f32 %v585, %v704
  %v706 = vpop.f32.mrb[0].mxu0
  %v707 = vpop.f32.mrb[0].mxu0
  %v708 = vadd.f32 %v588, %v707
  %v709 = vpop.f32.mrb[0].mxu0
  %710 = vmatprep.mubr.bf16.mxu0 %v269
  %711 = vmatmul.mubr.bf16.gmra.mrb[0].mxu0 %v268
  %v712 = vpop.f32.mrb[0].mxu0
  %v713 = vadd.f32 %v593, %v712
  %v714 = vpop.f32.mrb[0].mxu0
  %v715 = vpop.f32.mrb[0].mxu0
  %v716 = vadd.f32 %v596, %v715
  %v717 = vpop.f32.mrb[0].mxu0
  %718 = vmatprep.mubr.bf16.mxu0 %v273
  %719 = vmatmul.mubr.bf16.gmra.mrb[0].mxu0 %v272
  %v720 = vpop.f32.mrb[0].mxu0
  %v721 = vadd.f32 %v601, %v720
  %v722 = vpop.f32.mrb[0].mxu0
  %v723 = vpop.f32.mrb[0].mxu0
  %v724 = vadd.f32 %v604, %v723
  %v725 = vpop.f32.mrb[0].mxu0
  %726 = vmatprep.mubr.bf16.mxu0 %v277
  %727 = vmatmul.mubr.bf16.gmra.mrb[0].mxu0 %v276
  %v728 = vpop.f32.mrb[0].mxu0
  %v729 = vadd.f32 %v609, %v728
  %v730 = vpop.f32.mrb[0].mxu0
  %v731 = vpop.f32.mrb[0].mxu0
  %v732 = vadd.f32 %v612, %v731
  %v733 = vpop.f32.mrb[0].mxu0
  %734 = vmatprep.mubr.bf16.mxu0 %v281
  %735 = vmatmul.mubr.bf16.gmra.mrb[0].mxu0 %v280
  %v736 = vpop.f32.mrb[0].mxu0
  %v737 = vadd.f32 %v617, %v736
  %v738 = vpop.f32.mrb[0].mxu0
  %v739 = vpop.f32.mrb[0].mxu0
  %v740 = vadd.f32 %v620, %v739
  %v741 = vpop.f32.mrb[0].mxu0
  %742 = vmatprep.mubr.bf16.mxu0 %v285
  %743 = vmatmul.mubr.bf16.gmra.mrb[0].mxu0 %v284
  %v744 = vpop.f32.mrb[0].mxu0
  %v745 = vadd.f32 %v625, %v744
  %v746 = vpop.f32.mrb[0].mxu0
  %v747 = vpop.f32.mrb[0].mxu0
  %v748 = vadd.f32 %v628, %v747
  %v749 = vpop.f32.mrb[0].mxu0
  %750 = vmatprep.mubr.bf16.mxu0 %v289
  %751 = vmatmul.mubr.bf16.gmra.mrb[0].mxu0 %v288
  %v752 = vpop.f32.mrb[0].mxu0
  %v753 = vadd.f32 %v633, %v752
  %v754 = vpop.f32.mrb[0].mxu0
  %v755 = vpop.f32.mrb[0].mxu0
  %v756 = vadd.f32 %v636, %v755
  %v757 = vpop.f32.mrb[0].mxu0
  %758 = vmatprep.mubr.bf16.mxu0 %v293
  %759 = vmatmul.mubr.bf16.gmra.mrb[0].mxu0 %v292
  %v760 = vpop.f32.mrb[0].mxu0
  %v761 = vadd.f32 %v641, %v760
  %v762 = vpop.f32.mrb[0].mxu0
  %v763 = vpop.f32.mrb[0].mxu0
  %v764 = vadd.f32 %v644, %v763
  %v765 = vpop.f32.mrb[0].mxu0
  %766 = vmatprep.mubr.bf16.mxu0 %v297
  %767 = vmatmul.mubr.bf16.gmra.mrb[0].mxu0 %v296
  %v768 = vpop.f32.mrb[0].mxu0
  %v769 = vadd.f32 %v649, %v768
  %v770 = vpop.f32.mrb[0].mxu0
  %v771 = vpop.f32.mrb[0].mxu0
  %v772 = vpop.f32.mrb[0].mxu0
  %773 = vdwg.mxu0
  %v774 = vmax.f32 %v689, 0.0
  %v775 = vmax.f32 %v692, 0.0
  %v776 = vmax.f32 %v697, 0.0
  %v777 = vmax.f32 %v700, 0.0
  %v778 = vmax.f32 %v705, 0.0
  %v779 = vmax.f32 %v708, 0.0
  %v780 = vmax.f32 %v713, 0.0
  %v781 = vmax.f32 %v716, 0.0
  %v782 = vmax.f32 %v721, 0.0
  %v783 = vmax.f32 %v724, 0.0
  %v784 = vmax.f32 %v729, 0.0
  %v785 = vmax.f32 %v732, 0.0
  %v786 = vmax.f32 %v737, 0.0
  %v787 = vmax.f32 %v740, 0.0
  %v788 = vmax.f32 %v745, 0.0
  %v789 = vmax.f32 %v748, 0.0
  %v790 = vmax.f32 %v753, 0.0
  %v791 = vmax.f32 %v756, 0.0
  %v792 = vmax.f32 %v761, 0.0
  %v793 = vmax.f32 %v764, 0.0
  %v794 = vmax.f32 %v769, 0.0
  %v795 = vpack.c.bf16 %v775, %v774
  %v796 = vpack.c.bf16 %v777, %v776
  %v797 = vpack.c.bf16 %v779, %v778
  %v798 = vpack.c.bf16 %v781, %v780
  %v799 = vpack.c.bf16 %v783, %v782
  %v800 = vpack.c.bf16 %v785, %v784
  %v801 = vpack.c.bf16 %v787, %v786
  %v802 = vpack.c.bf16 %v789, %v788
  %v803 = vpack.c.bf16 %v791, %v790
  %v804 = vpack.c.bf16 %v793, %v792
  %v805 = vpack.c.bf16 %v794, %v794
  %v817 = vunpack.c.l.b16 %v795
  %v818 = vunpack.c.h.b16 %v795
  %v819 = vunpack.c.l.b16 %v796
  %v820 = vunpack.c.h.b16 %v796
  %v821 = vunpack.c.l.b16 %v797
  %v822 = vunpack.c.h.b16 %v797
  %v823 = vunpack.c.l.b16 %v798
  %v824 = vunpack.c.h.b16 %v798
  %v825 = vunpack.c.l.b16 %v799
  %v826 = vunpack.c.h.b16 %v799
  %v827 = vunpack.c.l.b16 %v800
  %v828 = vunpack.c.h.b16 %v800
  %v829 = vunpack.c.l.b16 %v801
  %v830 = vunpack.c.h.b16 %v801
  %v831 = vunpack.c.l.b16 %v802
  %v832 = vunpack.c.h.b16 %v802
  %v833 = vunpack.c.l.b16 %v803
  %v834 = vunpack.c.h.b16 %v803
  %v835 = vunpack.c.l.b16 %v804
  %v836 = vunpack.c.h.b16 %v804
  %v837 = vunpack.c.l.b16 %v805
  %v838 = vpack.c.b16 %v817, %v817
  %v839 = vpack.c.b16 %v818, %v818
  %v840 = vpack.c.b16 %v819, %v819
  %v841 = vpack.c.b16 %v820, %v820
  %v842 = vpack.c.b16 %v821, %v821
  %v843 = vpack.c.b16 %v822, %v822
  %v844 = vpack.c.b16 %v823, %v823
  %v845 = vpack.c.b16 %v824, %v824
  %v846 = vpack.c.b16 %v825, %v825
  %v847 = vpack.c.b16 %v826, %v826
  %v848 = vpack.c.b16 %v827, %v827
  %v849 = vpack.c.b16 %v828, %v828
  %v850 = vpack.c.b16 %v829, %v829
  %v851 = vpack.c.b16 %v830, %v830
  %v852 = vpack.c.b16 %v831, %v831
  %v853 = vpack.c.b16 %v832, %v832
  %v854 = vpack.c.b16 %v833, %v833
  %v855 = vpack.c.b16 %v834, %v834
  %v856 = vpack.c.b16 %v835, %v835
  %v857 = vpack.c.b16 %v836, %v836
  %v858 = vpack.c.b16 %v837, %v837
  %vm880 = vcmask 519168
  %881 = vst.msk [vmem:[%s3] sm:$0xf] %vm880, %v838
  %882 = vst.msk [vmem:[%s3 + $0x4] sm:$0xf] %vm880, %v839
  %883 = vst.msk [vmem:[%s3 + $0x8] sm:$0xf] %vm880, %v840
  %884 = vst.msk [vmem:[%s3 + $0xc] sm:$0xf] %vm880, %v841
  %885 = vst.msk [vmem:[%s3 + $0x10] sm:$0xf] %vm880, %v842
  %886 = vst.msk [vmem:[%s3 + $0x14] sm:$0xf] %vm880, %v843
  %887 = vst.msk [vmem:[%s3 + $0x18] sm:$0xf] %vm880, %v844
  %888 = vst.msk [vmem:[%s3 + $0x1c] sm:$0xf] %vm880, %v845
  %889 = vst.msk [vmem:[%s3 + $0x20] sm:$0xf] %vm880, %v846
  %890 = vst.msk [vmem:[%s3 + $0x24] sm:$0xf] %vm880, %v847
  %891 = vst.msk [vmem:[%s3 + $0x28] sm:$0xf] %vm880, %v848
  %892 = vst.msk [vmem:[%s3 + $0x2c] sm:$0xf] %vm880, %v849
  %893 = vst.msk [vmem:[%s3 + $0x30] sm:$0xf] %vm880, %v850
  %894 = vst.msk [vmem:[%s3 + $0x34] sm:$0xf] %vm880, %v851
  %895 = vst.msk [vmem:[%s3 + $0x38] sm:$0xf] %vm880, %v852
  %896 = vst.msk [vmem:[%s3 + $0x3c] sm:$0xf] %vm880, %v853
  %897 = vst.msk [vmem:[%s3 + $0x40] sm:$0xf] %vm880, %v854
  %898 = vst.msk [vmem:[%s3 + $0x44] sm:$0xf] %vm880, %v855
  %899 = vst.msk [vmem:[%s3 + $0x48] sm:$0xf] %vm880, %v856
  %900 = vst.msk [vmem:[%s3 + $0x4c] sm:$0xf] %vm880, %v857
  %vm901 = vcmask 516096
  %902 = vst.msk [vmem:[%s3 + $0x50] sm:$0x1] %vm901, %v858
  // Predicated region
  $region14: #{cnn_deepmind_multihead_forward.6} parent=0 // pred_check
    _
  $region15: #{cnn_deepmind_multihead_forward.6} parent=0 // pred_check_branch
    %904 = sbr.rel (0) target = $region17
  $region16: #{cnn_deepmind_multihead_forward.6} parent=0 // pred_region
    _
  $region17: #{cnn_deepmind_multihead_forward.6} parent=0 // pred_fallthru
    _
  // Predicated region
  $region18: #{cnn_deepmind_multihead_forward.6} parent=0 // pred_check
    _
  $region19: #{cnn_deepmind_multihead_forward.6} parent=0 // pred_check_branch
    %906 = sbr.rel (0) target = $region21
  $region20: #{cnn_deepmind_multihead_forward.6} parent=0 // pred_region
    _
  $region21: #{cnn_deepmind_multihead_forward.6} parent=0 // pred_fallthru
    _

// kernel: cnn_deepmind_multihead_forward.7
$region0: #{cnn_deepmind_multihead_forward.7}
  #allocation0 [shape = 'u32[]', space=smem, size = 0x4, offset = 0x4, fixed_abs, tag = 'smem constant byte address 0x4 - core index']
  #allocation1 [shape = 'u32[144,128]{1,0:T(1,128)}', space=vmem, size = 0x12000, scoped, tag = 'internal scratch']
  %s0 = inlined_call_operand.vmem [shape: bf16[98,576], index: 0, kind: input, shape index: {}]
  %s1 = inlined_call_operand.vmem [shape: bf16[576,64], index: 1, kind: input, shape index: {}]
  %s2 = inlined_call_operand.vmem [shape: f32[1,64], index: 2, kind: input, shape index: {}]
  %s3 = inlined_call_operand.vmem [shape: bf16[98,64], index: 3, kind: output, shape index: {}]
  %s4 = sld [smem:[#allocation0]]
  $region22: #{cnn_deepmind_multihead_forward.7} parent=0
    _
  %s6 = ssub.s32 1, %s4
  %s7 = scalar_select 0, %s6, %s4
  // Predicated region
  $region2: #{cnn_deepmind_multihead_forward.7} parent=0 // pred_check
    _
  $region3: #{cnn_deepmind_multihead_forward.7} parent=0 // pred_check_branch
    %9 = sbr.rel (0) target = $region5
  $region4: #{cnn_deepmind_multihead_forward.7} parent=0 // pred_region
    _
  $region5: #{cnn_deepmind_multihead_forward.7} parent=0 // pred_fallthru
    _
  // Predicated region
  $region6: #{cnn_deepmind_multihead_forward.7} parent=0 // pred_check
    _
  $region7: #{cnn_deepmind_multihead_forward.7} parent=0 // pred_check_branch
    %11 = sbr.rel (0) target = $region9
  $region8: #{cnn_deepmind_multihead_forward.7} parent=0 // pred_region
    _
  $region9: #{cnn_deepmind_multihead_forward.7} parent=0 // pred_fallthru
    _
  // Predicated region
  $region10: #{cnn_deepmind_multihead_forward.7} parent=0 // pred_check
    _
  $region11: #{cnn_deepmind_multihead_forward.7} parent=0 // pred_check_branch
    %13 = sbr.rel (0) target = $region13
  $region12: #{cnn_deepmind_multihead_forward.7} parent=0 // pred_region
    _
  $region13: #{cnn_deepmind_multihead_forward.7} parent=0 // pred_fallthru
    _
  %v15 = vld [vmem:[%s0] sm:$0xff]
  %v16 = vld [vmem:[%s0 + $0x8] sm:$0xff]
  %v17 = vld [vmem:[%s0 + $0x10] sm:$0xf]
  %v18 = vld [vmem:[%s0 + $0x14] sm:$0xff]
  %v19 = vld [vmem:[%s0 + $0x1c] sm:$0xff]
  %v20 = vld [vmem:[%s0 + $0x24] sm:$0xf]
  %v21 = vld [vmem:[%s0 + $0x28] sm:$0xff]
  %v22 = vld [vmem:[%s0 + $0x30] sm:$0xff]
  %v23 = vld [vmem:[%s0 + $0x38] sm:$0xf]
  %v24 = vld [vmem:[%s0 + $0x3c] sm:$0xff]
  %v25 = vld [vmem:[%s0 + $0x44] sm:$0xff]
  %v26 = vld [vmem:[%s0 + $0x4c] sm:$0xf]
  %v27 = vld [vmem:[%s0 + $0x50] sm:$0xff]
  %v28 = vld [vmem:[%s0 + $0x58] sm:$0xff]
  %v29 = vld [vmem:[%s0 + $0x60] sm:$0xf]
  %v30 = vld [vmem:[%s0 + $0x64] sm:$0xff]
  %v31 = vld [vmem:[%s0 + $0x6c] sm:$0xff]
  %v32 = vld [vmem:[%s0 + $0x74] sm:$0xf]
  %v33 = vld [vmem:[%s0 + $0x78] sm:$0xff]
  %v34 = vld [vmem:[%s0 + $0x80] sm:$0xff]
  %v35 = vld [vmem:[%s0 + $0x88] sm:$0xf]
  %v36 = vld [vmem:[%s0 + $0x8c] sm:$0xff]
  %v37 = vld [vmem:[%s0 + $0x94] sm:$0xff]
  %v38 = vld [vmem:[%s0 + $0x9c] sm:$0xf]
  %v39 = vld [vmem:[%s0 + $0xa0] sm:$0xff]
  %v40 = vld [vmem:[%s0 + $0xa8] sm:$0xff]
  %v41 = vld [vmem:[%s0 + $0xb0] sm:$0xf]
  %v42 = vld [vmem:[%s0 + $0xb4] sm:$0xff]
  %v43 = vld [vmem:[%s0 + $0xbc] sm:$0xff]
  %v44 = vld [vmem:[%s0 + $0xc4] sm:$0xf]
  %v45 = vld [vmem:[%s0 + $0xc8] sm:$0xff]
  %v46 = vld [vmem:[%s0 + $0xd0] sm:$0xff]
  %v47 = vld [vmem:[%s0 + $0xd8] sm:$0xf]
  %v48 = vld [vmem:[%s0 + $0xdc] sm:$0xff]
  %v49 = vld [vmem:[%s0 + $0xe4] sm:$0xff]
  %v50 = vld [vmem:[%s0 + $0xec] sm:$0xf]
  %v51 = vld [vmem:[%s0 + $0xf0] sm:$0x11]
  %v52 = vld [vmem:[%s0 + $0xf8] sm:$0x11]
  %v53 = vld [vmem:[%s0 + $0x100] sm:$0x1]
  %v54 = vld [vmem:[%s1] sm:$0xf]
  %v55 = vld [vmem:[%s1 + $0x4] sm:$0xf]
  %v56 = vld [vmem:[%s1 + $0x8] sm:$0xf]
  %v57 = vld [vmem:[%s1 + $0xc] sm:$0xf]
  %v58 = vld [vmem:[%s1 + $0x10] sm:$0xf]
  %v59 = vld [vmem:[%s1 + $0x14] sm:$0xf]
  %v60 = vld [vmem:[%s1 + $0x18] sm:$0xf]
  %v61 = vld [vmem:[%s1 + $0x1c] sm:$0xf]
  %v62 = vld [vmem:[%s1 + $0x20] sm:$0xf]
  %v63 = vld [vmem:[%s1 + $0x24] sm:$0xf]
  %v64 = vld [vmem:[%s1 + $0x28] sm:$0xf]
  %v65 = vld [vmem:[%s1 + $0x2c] sm:$0xf]
  %v66 = vld [vmem:[%s1 + $0x30] sm:$0xf]
  %v67 = vld [vmem:[%s1 + $0x34] sm:$0xf]
  %v68 = vld [vmem:[%s1 + $0x38] sm:$0xf]
  %v69 = vld [vmem:[%s1 + $0x3c] sm:$0xf]
  %v70 = vld [vmem:[%s1 + $0x40] sm:$0xf]
  %v71 = vld [vmem:[%s1 + $0x44] sm:$0xf]
  %v72 = vld [vmem:[%s1 + $0x48] sm:$0xf]
  %v73 = vld [vmem:[%s1 + $0x4c] sm:$0xf]
  %v74 = vld [vmem:[%s1 + $0x50] sm:$0xf]
  %v75 = vld [vmem:[%s1 + $0x54] sm:$0xf]
  %v76 = vld [vmem:[%s1 + $0x58] sm:$0xf]
  %v77 = vld [vmem:[%s1 + $0x5c] sm:$0xf]
  %v78 = vld [vmem:[%s1 + $0x60] sm:$0xf]
  %v79 = vld [vmem:[%s1 + $0x64] sm:$0xf]
  %v80 = vld [vmem:[%s1 + $0x68] sm:$0xf]
  %v81 = vld [vmem:[%s1 + $0x6c] sm:$0xf]
  %v82 = vld [vmem:[%s1 + $0x70] sm:$0xf]
  %v83 = vld [vmem:[%s1 + $0x74] sm:$0xf]
  %v84 = vld [vmem:[%s1 + $0x78] sm:$0xf]
  %v85 = vld [vmem:[%s1 + $0x7c] sm:$0xf]
  %v86 = vld [vmem:[%s1 + $0x80] sm:$0xf]
  %v87 = vld [vmem:[%s1 + $0x84] sm:$0xf]
  %v88 = vld [vmem:[%s1 + $0x88] sm:$0xf]
  %v89 = vld [vmem:[%s1 + $0x8c] sm:$0xf]
  %v90 = vld [vmem:[%s1 + $0x90] sm:$0xf]
  %v91 = vld [vmem:[%s1 + $0x94] sm:$0xf]
  %v92 = vld [vmem:[%s1 + $0x98] sm:$0xf]
  %v93 = vld [vmem:[%s1 + $0x9c] sm:$0xf]
  %v94 = vld [vmem:[%s1 + $0xa0] sm:$0xf]
  %v95 = vld [vmem:[%s1 + $0xa4] sm:$0xf]
  %v96 = vld [vmem:[%s1 + $0xa8] sm:$0xf]
  %v97 = vld [vmem:[%s1 + $0xac] sm:$0xf]
  %v98 = vld [vmem:[%s1 + $0xb0] sm:$0xf]
  %v99 = vld [vmem:[%s1 + $0xb4] sm:$0xf]
  %v100 = vld [vmem:[%s1 + $0xb8] sm:$0xf]
  %v101 = vld [vmem:[%s1 + $0xbc] sm:$0xf]
  %v102 = vld [vmem:[%s1 + $0xc0] sm:$0xf]
  %v103 = vld [vmem:[%s1 + $0xc4] sm:$0xf]
  %v104 = vld [vmem:[%s1 + $0xc8] sm:$0xf]
  %v105 = vld [vmem:[%s1 + $0xcc] sm:$0xf]
  %v106 = vld [vmem:[%s1 + $0xd0] sm:$0xf]
  %v107 = vld [vmem:[%s1 + $0xd4] sm:$0xf]
  %v108 = vld [vmem:[%s1 + $0xd8] sm:$0xf]
  %v109 = vld [vmem:[%s1 + $0xdc] sm:$0xf]
  %v110 = vld [vmem:[%s1 + $0xe0] sm:$0xf]
  %v111 = vld [vmem:[%s1 + $0xe4] sm:$0xf]
  %v112 = vld [vmem:[%s1 + $0xe8] sm:$0xf]
  %v113 = vld [vmem:[%s1 + $0xec] sm:$0xf]
  %v114 = vld [vmem:[%s1 + $0xf0] sm:$0xf]
  %v115 = vld [vmem:[%s1 + $0xf4] sm:$0xf]
  %v116 = vld [vmem:[%s1 + $0xf8] sm:$0xf]
  %v117 = vld [vmem:[%s1 + $0xfc] sm:$0xf]
  %v118 = vld [vmem:[%s1 + $0x100] sm:$0xf]
  %v119 = vld [vmem:[%s1 + $0x104] sm:$0xf]
  %v120 = vld [vmem:[%s1 + $0x108] sm:$0xf]
  %v121 = vld [vmem:[%s1 + $0x10c] sm:$0xf]
  %v122 = vld [vmem:[%s1 + $0x110] sm:$0xf]
  %v123 = vld [vmem:[%s1 + $0x114] sm:$0xf]
  %v124 = vld [vmem:[%s1 + $0x118] sm:$0xf]
  %v125 = vld [vmem:[%s1 + $0x11c] sm:$0xf]
  %v126 = vld [vmem:[%s2] sm:$0x1]
  %v128 = vlaneseq
  %v129 = vshrl.u32 %v128, 7
  %v130 = vsub.s32 0, %v129
  %v131 = vrot.slane %v126, %v130
  %v172 = vunpack.c.l.b16 %v15
  %v173 = vunpack.c.h.b16 %v15
  %v174 = vunpack.c.l.b16 %v16
  %v175 = vunpack.c.h.b16 %v16
  %v176 = vunpack.c.l.b16 %v17
  %v177 = vunpack.c.l.b16 %v18
  %v178 = vunpack.c.h.b16 %v18
  %v179 = vunpack.c.l.b16 %v19
  %v180 = vunpack.c.h.b16 %v19
  %v181 = vunpack.c.l.b16 %v20
  %v182 = vunpack.c.l.b16 %v21
  %v183 = vunpack.c.h.b16 %v21
  %v184 = vunpack.c.l.b16 %v22
  %v185 = vunpack.c.h.b16 %v22
  %v186 = vunpack.c.l.b16 %v23
  %v187 = vunpack.c.l.b16 %v24
  %v188 = vunpack.c.h.b16 %v24
  %v189 = vunpack.c.l.b16 %v25
  %v190 = vunpack.c.h.b16 %v25
  %v191 = vunpack.c.l.b16 %v26
  %v192 = vunpack.c.l.b16 %v27
  %v193 = vunpack.c.h.b16 %v27
  %v194 = vunpack.c.l.b16 %v28
  %v195 = vunpack.c.h.b16 %v28
  %v196 = vunpack.c.l.b16 %v29
  %v197 = vunpack.c.l.b16 %v30
  %v198 = vunpack.c.h.b16 %v30
  %v199 = vunpack.c.l.b16 %v31
  %v200 = vunpack.c.h.b16 %v31
  %v201 = vunpack.c.l.b16 %v32
  %v202 = vunpack.c.l.b16 %v33
  %v203 = vunpack.c.h.b16 %v33
  %v204 = vunpack.c.l.b16 %v34
  %v205 = vunpack.c.h.b16 %v34
  %v206 = vunpack.c.l.b16 %v35
  %v207 = vunpack.c.l.b16 %v36
  %v208 = vunpack.c.h.b16 %v36
  %v209 = vunpack.c.l.b16 %v37
  %v210 = vunpack.c.h.b16 %v37
  %v211 = vunpack.c.l.b16 %v38
  %v212 = vunpack.c.l.b16 %v39
  %v213 = vunpack.c.h.b16 %v39
  %v214 = vunpack.c.l.b16 %v40
  %v215 = vunpack.c.h.b16 %v40
  %v216 = vunpack.c.l.b16 %v41
  %v217 = vunpack.c.l.b16 %v42
  %v218 = vunpack.c.h.b16 %v42
  %v219 = vunpack.c.l.b16 %v43
  %v220 = vunpack.c.h.b16 %v43
  %v221 = vunpack.c.l.b16 %v44
  %v222 = vunpack.c.l.b16 %v45
  %v223 = vunpack.c.h.b16 %v45
  %v224 = vunpack.c.l.b16 %v46
  %v225 = vunpack.c.h.b16 %v46
  %v226 = vunpack.c.l.b16 %v47
  %v227 = vunpack.c.l.b16 %v48
  %v228 = vunpack.c.h.b16 %v48
  %v229 = vunpack.c.l.b16 %v49
  %v230 = vunpack.c.h.b16 %v49
  %v231 = vunpack.c.l.b16 %v50
  %v232 = vunpack.c.l.b16 %v51
  %v233 = vunpack.c.h.b16 %v51
  %v234 = vunpack.c.l.b16 %v52
  %v235 = vunpack.c.h.b16 %v52
  %v236 = vunpack.c.l.b16 %v53
  %v237 = vpack.c.b16 %v177, %v172
  %v238 = vpack.c.b16 %v178, %v173
  %v239 = vpack.c.b16 %v179, %v174
  %v240 = vpack.c.b16 %v180, %v175
  %v241 = vpack.c.b16 %v181, %v176
  %v242 = vpack.c.b16 %v187, %v182
  %v243 = vpack.c.b16 %v188, %v183
  %v244 = vpack.c.b16 %v189, %v184
  %v245 = vpack.c.b16 %v190, %v185
  %v246 = vpack.c.b16 %v191, %v186
  %v247 = vpack.c.b16 %v197, %v192
  %v248 = vpack.c.b16 %v198, %v193
  %v249 = vpack.c.b16 %v199, %v194
  %v250 = vpack.c.b16 %v200, %v195
  %v251 = vpack.c.b16 %v201, %v196
  %v252 = vpack.c.b16 %v207, %v202
  %v253 = vpack.c.b16 %v208, %v203
  %v254 = vpack.c.b16 %v209, %v204
  %v255 = vpack.c.b16 %v210, %v205
  %v256 = vpack.c.b16 %v211, %v206
  %v257 = vpack.c.b16 %v217, %v212
  %v258 = vpack.c.b16 %v218, %v213
  %v259 = vpack.c.b16 %v219, %v214
  %v260 = vpack.c.b16 %v220, %v215
  %v261 = vpack.c.b16 %v221, %v216
  %v262 = vpack.c.b16 %v227, %v222
  %v263 = vpack.c.b16 %v228, %v223
  %v264 = vpack.c.b16 %v229, %v224
  %v265 = vpack.c.b16 %v230, %v225
  %v266 = vpack.c.b16 %v231, %v226
  %v267 = vpack.c.b16 %v232, %v232
  %v268 = vpack.c.b16 %v233, %v233
  %v269 = vpack.c.b16 %v234, %v234
  %v270 = vpack.c.b16 %v235, %v235
  %v271 = vpack.c.b16 %v236, %v236
  %v372 = vunpack.c.l.b16 %v54
  %v373 = vunpack.c.l.b16 %v55
  %v374 = vunpack.c.l.b16 %v56
  %v375 = vunpack.c.l.b16 %v57
  %v376 = vunpack.c.l.b16 %v58
  %v377 = vunpack.c.l.b16 %v59
  %v378 = vunpack.c.l.b16 %v60
  %v379 = vunpack.c.l.b16 %v61
  %v380 = vunpack.c.l.b16 %v62
  %v381 = vunpack.c.l.b16 %v63
  %v382 = vunpack.c.l.b16 %v64
  %v383 = vunpack.c.l.b16 %v65
  %v384 = vunpack.c.l.b16 %v66
  %v385 = vunpack.c.l.b16 %v67
  %v386 = vunpack.c.l.b16 %v68
  %v387 = vunpack.c.l.b16 %v69
  %v388 = vunpack.c.l.b16 %v70
  %v389 = vunpack.c.l.b16 %v71
  %v390 = vunpack.c.l.b16 %v72
  %v391 = vunpack.c.l.b16 %v73
  %v392 = vunpack.c.l.b16 %v74
  %v393 = vunpack.c.l.b16 %v75
  %v394 = vunpack.c.l.b16 %v76
  %v395 = vunpack.c.l.b16 %v77
  %v396 = vunpack.c.l.b16 %v78
  %v397 = vunpack.c.l.b16 %v79
  %v398 = vunpack.c.l.b16 %v80
  %v399 = vunpack.c.l.b16 %v81
  %v400 = vunpack.c.l.b16 %v82
  %v401 = vunpack.c.l.b16 %v83
  %v402 = vunpack.c.l.b16 %v84
  %v403 = vunpack.c.l.b16 %v85
  %v404 = vunpack.c.l.b16 %v86
  %v405 = vunpack.c.l.b16 %v87
  %v406 = vunpack.c.l.b16 %v88
  %v407 = vunpack.c.l.b16 %v89
  %v408 = vunpack.c.l.b16 %v90
  %v409 = vunpack.c.l.b16 %v91
  %v410 = vunpack.c.l.b16 %v92
  %v411 = vunpack.c.l.b16 %v93
  %v412 = vunpack.c.l.b16 %v94
  %v413 = vunpack.c.l.b16 %v95
  %v414 = vunpack.c.l.b16 %v96
  %v415 = vunpack.c.l.b16 %v97
  %v416 = vunpack.c.l.b16 %v98
  %v417 = vunpack.c.l.b16 %v99
  %v418 = vunpack.c.l.b16 %v100
  %v419 = vunpack.c.l.b16 %v101
  %v420 = vunpack.c.l.b16 %v102
  %v421 = vunpack.c.l.b16 %v103
  %v422 = vunpack.c.l.b16 %v104
  %v423 = vunpack.c.l.b16 %v105
  %v424 = vunpack.c.l.b16 %v106
  %v425 = vunpack.c.l.b16 %v107
  %v426 = vunpack.c.l.b16 %v108
  %v427 = vunpack.c.l.b16 %v109
  %v428 = vunpack.c.l.b16 %v110
  %v429 = vunpack.c.l.b16 %v111
  %v430 = vunpack.c.l.b16 %v112
  %v431 = vunpack.c.l.b16 %v113
  %v432 = vunpack.c.l.b16 %v114
  %v433 = vunpack.c.l.b16 %v115
  %v434 = vunpack.c.l.b16 %v116
  %v435 = vunpack.c.l.b16 %v117
  %v436 = vunpack.c.l.b16 %v118
  %v437 = vunpack.c.l.b16 %v119
  %v438 = vunpack.c.l.b16 %v120
  %v439 = vunpack.c.l.b16 %v121
  %v440 = vunpack.c.l.b16 %v122
  %v441 = vunpack.c.l.b16 %v123
  %v442 = vunpack.c.l.b16 %v124
  %v443 = vunpack.c.l.b16 %v125
  %v444 = vpack.c.b16 %v373, %v372
  %v445 = vpack.c.b16 %v375, %v374
  %v446 = vpack.c.b16 %v377, %v376
  %v447 = vpack.c.b16 %v379, %v378
  %v448 = vpack.c.b16 %v381, %v380
  %v449 = vpack.c.b16 %v383, %v382
  %v450 = vpack.c.b16 %v385, %v384
  %v451 = vpack.c.b16 %v387, %v386
  %v452 = vpack.c.b16 %v389, %v388
  %v453 = vpack.c.b16 %v391, %v390
  %v454 = vpack.c.b16 %v393, %v392
  %v455 = vpack.c.b16 %v395, %v394
  %v456 = vpack.c.b16 %v397, %v396
  %v457 = vpack.c.b16 %v399, %v398
  %v458 = vpack.c.b16 %v401, %v400
  %v459 = vpack.c.b16 %v403, %v402
  %v460 = vpack.c.b16 %v405, %v404
  %v461 = vpack.c.b16 %v407, %v406
  %v462 = vpack.c.b16 %v409, %v408
  %v463 = vpack.c.b16 %v411, %v410
  %v464 = vpack.c.b16 %v413, %v412
  %v465 = vpack.c.b16 %v415, %v414
  %v466 = vpack.c.b16 %v417, %v416
  %v467 = vpack.c.b16 %v419, %v418
  %v468 = vpack.c.b16 %v421, %v420
  %v469 = vpack.c.b16 %v423, %v422
  %v470 = vpack.c.b16 %v425, %v424
  %v471 = vpack.c.b16 %v427, %v426
  %v472 = vpack.c.b16 %v429, %v428
  %v473 = vpack.c.b16 %v431, %v430
  %v474 = vpack.c.b16 %v433, %v432
  %v475 = vpack.c.b16 %v435, %v434
  %v476 = vpack.c.b16 %v437, %v436
  %v477 = vpack.c.b16 %v439, %v438
  %v478 = vpack.c.b16 %v441, %v440
  %v479 = vpack.c.b16 %v443, %v442
  %vm516 = vcmask 523264
  %v518 = vsel %vm516, %v241, 0
  %v521 = vsel %vm516, %v246, 0
  %v524 = vsel %vm516, %v251, 0
  %v527 = vsel %vm516, %v256, 0
  %v530 = vsel %vm516, %v261, 0
  %v533 = vsel %vm516, %v266, 0
  %v536 = vsel %vm516, %v271, 0
  %538 = vmatprep.subr.bf16.mxu0 0
  %539 = vmatpush1.bf16.msra.mxu0 %v444
  %540 = vmatprep.subr.bf16.mxu0 0
  %541 = vmatpush1.bf16.msra.mxu0 %v445
  %542 = vmatprep.subr.bf16.mxu0 0
  %543 = vmatpush1.bf16.msra.mxu0 %v446
  %544 = vmatprep.subr.bf16.mxu0 0
  %545 = vmatpush1.bf16.msra.mxu0 %v447
  %546 = vmatprep.subr.bf16.mxu0 0
  %547 = vmatpush1.bf16.msra.mxu0 %v448
  %548 = vmatprep.subr.bf16.mxu0 0
  %549 = vmatpush1.bf16.msra.mxu0 %v449
  %550 = vmatprep.subr.bf16.mxu0 0
  %551 = vmatpush1.bf16.msra.mxu0 %v450
  %552 = vmatprep.subr.bf16.mxu0 0
  %553 = vmatpush1.bf16.msra.mxu0 %v451
  %554 = vmatprep.subr.bf16.mxu0 0
  %555 = vmatpush1.bf16.msra.mxu0 %v452
  %556 = vmatprep.subr.bf16.mxu0 0
  %557 = vmatpush1.bf16.msra.mxu0 %v453
  %558 = vmatprep.subr.bf16.mxu0 0
  %559 = vmatpush1.bf16.msra.mxu0 %v454
  %560 = vmatprep.subr.bf16.mxu0 0
  %561 = vmatpush1.bf16.msra.mxu0 %v455
  %562 = vmatprep.subr.bf16.mxu0 0
  %563 = vmatpush1.bf16.msra.mxu0 %v456
  %564 = vmatprep.subr.bf16.mxu0 0
  %565 = vmatpush1.bf16.msra.mxu0 %v457
  %566 = vmatprep.subr.bf16.mxu0 0
  %567 = vmatpush1.bf16.msra.mxu0 %v458
  %568 = vmatprep.subr.bf16.mxu0 0
  %569 = vmatpush1.bf16.msra.mxu0 %v459
  %570 = vmatprep.mubr.bf16.mxu0 %v238
  %571 = vmatmul.mubr.bf16.gmra.mrb[0].mxu0 %v237
  %v572 = vpop.f32.mrb[0].mxu0
  %v573 = vadd.f32 %v131, %v572
  %v574 = vpop.f32.mrb[0].mxu0
  %v575 = vpop.f32.mrb[0].mxu0
  %v576 = vadd.f32 %v131, %v575
  %v577 = vpop.f32.mrb[0].mxu0
  %578 = vmatprep.mubr.bf16.mxu0 %v243
  %579 = vmatmul.mubr.bf16.gmra.mrb[0].mxu0 %v242
  %v580 = vpop.f32.mrb[0].mxu0
  %v581 = vadd.f32 %v131, %v580
  %v582 = vpop.f32.mrb[0].mxu0
  %v583 = vpop.f32.mrb[0].mxu0
  %v584 = vadd.f32 %v131, %v583
  %v585 = vpop.f32.mrb[0].mxu0
  %586 = vmatprep.mubr.bf16.mxu0 %v248
  %587 = vmatmul.mubr.bf16.gmra.mrb[0].mxu0 %v247
  %v588 = vpop.f32.mrb[0].mxu0
  %v589 = vadd.f32 %v131, %v588
  %v590 = vpop.f32.mrb[0].mxu0
  %v591 = vpop.f32.mrb[0].mxu0
  %v592 = vadd.f32 %v131, %v591
  %v593 = vpop.f32.mrb[0].mxu0
  %594 = vmatprep.mubr.bf16.mxu0 %v253
  %595 = vmatmul.mubr.bf16.gmra.mrb[0].mxu0 %v252
  %v596 = vpop.f32.mrb[0].mxu0
  %v597 = vadd.f32 %v131, %v596
  %v598 = vpop.f32.mrb[0].mxu0
  %v599 = vpop.f32.mrb[0].mxu0
  %v600 = vadd.f32 %v131, %v599
  %v601 = vpop.f32.mrb[0].mxu0
  %602 = vmatprep.mubr.bf16.mxu0 %v258
  %603 = vmatmul.mubr.bf16.gmra.mrb[0].mxu0 %v257
  %v604 = vpop.f32.mrb[0].mxu0
  %v605 = vadd.f32 %v131, %v604
  %v606 = vpop.f32.mrb[0].mxu0
  %v607 = vpop.f32.mrb[0].mxu0
  %v608 = vadd.f32 %v131, %v607
  %v609 = vpop.f32.mrb[0].mxu0
  %610 = vmatprep.mubr.bf16.mxu0 %v263
  %611 = vmatmul.mubr.bf16.gmra.mrb[0].mxu0 %v262
  %v612 = vpop.f32.mrb[0].mxu0
  %v613 = vadd.f32 %v131, %v612
  %v614 = vpop.f32.mrb[0].mxu0
  %v615 = vpop.f32.mrb[0].mxu0
  %v616 = vadd.f32 %v131, %v615
  %v617 = vpop.f32.mrb[0].mxu0
  %618 = vmatprep.mubr.bf16.mxu0 %v268
  %619 = vmatmul.mubr.bf16.gmra.mrb[0].mxu0 %v267
  %v620 = vpop.f32.mrb[0].mxu0
  %v621 = vadd.f32 %v131, %v620
  %v622 = vpop.f32.mrb[0].mxu0
  %v623 = vpop.f32.mrb[0].mxu0
  %v624 = vpop.f32.mrb[0].mxu0
  %625 = vdwg.mxu0
  %626 = vmatprep.subr.bf16.mxu0 0
  %627 = vmatpush1.bf16.msra.mxu0 %v460
  %628 = vmatprep.subr.bf16.mxu0 0
  %629 = vmatpush1.bf16.msra.mxu0 %v461
  %630 = vmatprep.subr.bf16.mxu0 0
  %631 = vmatpush1.bf16.msra.mxu0 %v462
  %632 = vmatprep.subr.bf16.mxu0 0
  %633 = vmatpush1.bf16.msra.mxu0 %v463
  %634 = vmatprep.subr.bf16.mxu0 0
  %635 = vmatpush1.bf16.msra.mxu0 %v464
  %636 = vmatprep.subr.bf16.mxu0 0
  %637 = vmatpush1.bf16.msra.mxu0 %v465
  %638 = vmatprep.subr.bf16.mxu0 0
  %639 = vmatpush1.bf16.msra.mxu0 %v466
  %640 = vmatprep.subr.bf16.mxu0 0
  %641 = vmatpush1.bf16.msra.mxu0 %v467
  %642 = vmatprep.subr.bf16.mxu0 0
  %643 = vmatpush1.bf16.msra.mxu0 %v468
  %644 = vmatprep.subr.bf16.mxu0 0
  %645 = vmatpush1.bf16.msra.mxu0 %v469
  %646 = vmatprep.subr.bf16.mxu0 0
  %647 = vmatpush1.bf16.msra.mxu0 %v470
  %648 = vmatprep.subr.bf16.mxu0 0
  %649 = vmatpush1.bf16.msra.mxu0 %v471
  %650 = vmatprep.subr.bf16.mxu0 0
  %651 = vmatpush1.bf16.msra.mxu0 %v472
  %652 = vmatprep.subr.bf16.mxu0 0
  %653 = vmatpush1.bf16.msra.mxu0 %v473
  %654 = vmatprep.subr.bf16.mxu0 0
  %655 = vmatpush1.bf16.msra.mxu0 %v474
  %656 = vmatprep.subr.bf16.mxu0 0
  %657 = vmatpush1.bf16.msra.mxu0 %v475
  %658 = vmatprep.mubr.bf16.mxu0 %v240
  %659 = vmatmul.mubr.bf16.gmra.mrb[0].mxu0 %v239
  %v660 = vpop.f32.mrb[0].mxu0
  %v661 = vadd.f32 %v573, %v660
  %v662 = vpop.f32.mrb[0].mxu0
  %v663 = vpop.f32.mrb[0].mxu0
  %v664 = vadd.f32 %v576, %v663
  %v665 = vpop.f32.mrb[0].mxu0
  %666 = vmatprep.mubr.bf16.mxu0 %v245
  %667 = vmatmul.mubr.bf16.gmra.mrb[0].mxu0 %v244
  %v668 = vpop.f32.mrb[0].mxu0
  %v669 = vadd.f32 %v581, %v668
  %v670 = vpop.f32.mrb[0].mxu0
  %v671 = vpop.f32.mrb[0].mxu0
  %v672 = vadd.f32 %v584, %v671
  %v673 = vpop.f32.mrb[0].mxu0
  %674 = vmatprep.mubr.bf16.mxu0 %v250
  %675 = vmatmul.mubr.bf16.gmra.mrb[0].mxu0 %v249
  %v676 = vpop.f32.mrb[0].mxu0
  %v677 = vadd.f32 %v589, %v676
  %v678 = vpop.f32.mrb[0].mxu0
  %v679 = vpop.f32.mrb[0].mxu0
  %v680 = vadd.f32 %v592, %v679
  %v681 = vpop.f32.mrb[0].mxu0
  %682 = vmatprep.mubr.bf16.mxu0 %v255
  %683 = vmatmul.mubr.bf16.gmra.mrb[0].mxu0 %v254
  %v684 = vpop.f32.mrb[0].mxu0
  %v685 = vadd.f32 %v597, %v684
  %v686 = vpop.f32.mrb[0].mxu0
  %v687 = vpop.f32.mrb[0].mxu0
  %v688 = vadd.f32 %v600, %v687
  %v689 = vpop.f32.mrb[0].mxu0
  %690 = vmatprep.mubr.bf16.mxu0 %v260
  %691 = vmatmul.mubr.bf16.gmra.mrb[0].mxu0 %v259
  %v692 = vpop.f32.mrb[0].mxu0
  %v693 = vadd.f32 %v605, %v692
  %v694 = vpop.f32.mrb[0].mxu0
  %v695 = vpop.f32.mrb[0].mxu0
  %v696 = vadd.f32 %v608, %v695
  %v697 = vpop.f32.mrb[0].mxu0
  %698 = vmatprep.mubr.bf16.mxu0 %v265
  %699 = vmatmul.mubr.bf16.gmra.mrb[0].mxu0 %v264
  %v700 = vpop.f32.mrb[0].mxu0
  %v701 = vadd.f32 %v613, %v700
  %v702 = vpop.f32.mrb[0].mxu0
  %v703 = vpop.f32.mrb[0].mxu0
  %v704 = vadd.f32 %v616, %v703
  %v705 = vpop.f32.mrb[0].mxu0
  %706 = vmatprep.mubr.bf16.mxu0 %v270
  %707 = vmatmul.mubr.bf16.gmra.mrb[0].mxu0 %v269
  %v708 = vpop.f32.mrb[0].mxu0
  %v709 = vadd.f32 %v621, %v708
  %v710 = vpop.f32.mrb[0].mxu0
  %v711 = vpop.f32.mrb[0].mxu0
  %v712 = vpop.f32.mrb[0].mxu0
  %713 = vdwg.mxu0
  %714 = vmatprep.subr.bf16.mxu0 0
  %715 = vmatpush1.bf16.msra.mxu0 %v476
  %716 = vmatprep.subr.bf16.mxu0 0
  %717 = vmatpush1.bf16.msra.mxu0 %v477
  %718 = vmatprep.subr.bf16.mxu0 0
  %719 = vmatpush1.bf16.msra.mxu0 %v478
  %720 = vmatprep.subr.bf16.mxu0 0
  %721 = vmatpush1.bf16.msra.mxu0 %v479
  %722 = vmatprep.subr.bf16.mxu0 0
  %723 = vmatpush1.bf16.msra.mxu0 0
  %724 = vmatprep.subr.bf16.mxu0 0
  %725 = vmatpush1.bf16.msra.mxu0 0
  %726 = vmatprep.subr.bf16.mxu0 0
  %727 = vmatpush1.bf16.msra.mxu0 0
  %728 = vmatprep.subr.bf16.mxu0 0
  %729 = vmatpush1.bf16.msra.mxu0 0
  %730 = vmatprep.subr.bf16.mxu0 0
  %731 = vmatpush1.bf16.msra.mxu0 0
  %732 = vmatprep.subr.bf16.mxu0 0
  %733 = vmatpush1.bf16.msra.mxu0 0
  %734 = vmatprep.subr.bf16.mxu0 0
  %735 = vmatpush1.bf16.msra.mxu0 0
  %736 = vmatprep.subr.bf16.mxu0 0
  %737 = vmatpush1.bf16.msra.mxu0 0
  %738 = vmatprep.subr.bf16.mxu0 0
  %739 = vmatpush1.bf16.msra.mxu0 0
  %740 = vmatprep.subr.bf16.mxu0 0
  %741 = vmatpush1.bf16.msra.mxu0 0
  %742 = vmatprep.subr.bf16.mxu0 0
  %743 = vmatpush1.bf16.msra.mxu0 0
  %744 = vmatprep.subr.bf16.mxu0 0
  %745 = vmatpush1.bf16.msra.mxu0 0
  %746 = vmatprep.mubr.bf16.mxu0 0
  %747 = vmatmul.mubr.bf16.gmra.mrb[0].mxu0 %v518
  %v748 = vpop.f32.mrb[0].mxu0
  %v749 = vadd.f32 %v661, %v748
  %v750 = vpop.f32.mrb[0].mxu0
  %v751 = vpop.f32.mrb[0].mxu0
  %v752 = vadd.f32 %v664, %v751
  %v753 = vpop.f32.mrb[0].mxu0
  %754 = vmatprep.mubr.bf16.mxu0 0
  %755 = vmatmul.mubr.bf16.gmra.mrb[0].mxu0 %v521
  %v756 = vpop.f32.mrb[0].mxu0
  %v757 = vadd.f32 %v669, %v756
  %v758 = vpop.f32.mrb[0].mxu0
  %v759 = vpop.f32.mrb[0].mxu0
  %v760 = vadd.f32 %v672, %v759
  %v761 = vpop.f32.mrb[0].mxu0
  %762 = vmatprep.mubr.bf16.mxu0 0
  %763 = vmatmul.mubr.bf16.gmra.mrb[0].mxu0 %v524
  %v764 = vpop.f32.mrb[0].mxu0
  %v765 = vadd.f32 %v677, %v764
  %v766 = vpop.f32.mrb[0].mxu0
  %v767 = vpop.f32.mrb[0].mxu0
  %v768 = vadd.f32 %v680, %v767
  %v769 = vpop.f32.mrb[0].mxu0
  %770 = vmatprep.mubr.bf16.mxu0 0
  %771 = vmatmul.mubr.bf16.gmra.mrb[0].mxu0 %v527
  %v772 = vpop.f32.mrb[0].mxu0
  %v773 = vadd.f32 %v685, %v772
  %v774 = vpop.f32.mrb[0].mxu0
  %v775 = vpop.f32.mrb[0].mxu0
  %v776 = vadd.f32 %v688, %v775
  %v777 = vpop.f32.mrb[0].mxu0
  %778 = vmatprep.mubr.bf16.mxu0 0
  %779 = vmatmul.mubr.bf16.gmra.mrb[0].mxu0 %v530
  %v780 = vpop.f32.mrb[0].mxu0
  %v781 = vadd.f32 %v693, %v780
  %v782 = vpop.f32.mrb[0].mxu0
  %v783 = vpop.f32.mrb[0].mxu0
  %v784 = vadd.f32 %v696, %v783
  %v785 = vpop.f32.mrb[0].mxu0
  %786 = vmatprep.mubr.bf16.mxu0 0
  %787 = vmatmul.mubr.bf16.gmra.mrb[0].mxu0 %v533
  %v788 = vpop.f32.mrb[0].mxu0
  %v789 = vadd.f32 %v701, %v788
  %v790 = vpop.f32.mrb[0].mxu0
  %v791 = vpop.f32.mrb[0].mxu0
  %v792 = vadd.f32 %v704, %v791
  %v793 = vpop.f32.mrb[0].mxu0
  %794 = vmatprep.mubr.bf16.mxu0 0
  %795 = vmatmul.mubr.bf16.gmra.mrb[0].mxu0 %v536
  %v796 = vpop.f32.mrb[0].mxu0
  %v797 = vadd.f32 %v709, %v796
  %v798 = vpop.f32.mrb[0].mxu0
  %v799 = vpop.f32.mrb[0].mxu0
  %v800 = vpop.f32.mrb[0].mxu0
  %801 = vdwg.mxu0
  %v802 = vmax.f32 %v749, 0.0
  %v803 = vmax.f32 %v752, 0.0
  %v804 = vmax.f32 %v757, 0.0
  %v805 = vmax.f32 %v760, 0.0
  %v806 = vmax.f32 %v765, 0.0
  %v807 = vmax.f32 %v768, 0.0
  %v808 = vmax.f32 %v773, 0.0
  %v809 = vmax.f32 %v776, 0.0
  %v810 = vmax.f32 %v781, 0.0
  %v811 = vmax.f32 %v784, 0.0
  %v812 = vmax.f32 %v789, 0.0
  %v813 = vmax.f32 %v792, 0.0
  %v814 = vmax.f32 %v797, 0.0
  %v815 = vpack.c.bf16 %v803, %v802
  %v816 = vpack.c.bf16 %v805, %v804
  %v817 = vpack.c.bf16 %v807, %v806
  %v818 = vpack.c.bf16 %v809, %v808
  %v819 = vpack.c.bf16 %v811, %v810
  %v820 = vpack.c.bf16 %v813, %v812
  %v821 = vpack.c.bf16 %v814, %v814
  %v829 = vunpack.c.l.b16 %v815
  %v830 = vunpack.c.h.b16 %v815
  %v831 = vunpack.c.l.b16 %v816
  %v832 = vunpack.c.h.b16 %v816
  %v833 = vunpack.c.l.b16 %v817
  %v834 = vunpack.c.h.b16 %v817
  %v835 = vunpack.c.l.b16 %v818
  %v836 = vunpack.c.h.b16 %v818
  %v837 = vunpack.c.l.b16 %v819
  %v838 = vunpack.c.h.b16 %v819
  %v839 = vunpack.c.l.b16 %v820
  %v840 = vunpack.c.h.b16 %v820
  %v841 = vunpack.c.l.b16 %v821
  %v842 = vpack.c.b16 %v829, %v829
  %v843 = vpack.c.b16 %v830, %v830
  %v844 = vpack.c.b16 %v831, %v831
  %v845 = vpack.c.b16 %v832, %v832
  %v846 = vpack.c.b16 %v833, %v833
  %v847 = vpack.c.b16 %v834, %v834
  %v848 = vpack.c.b16 %v835, %v835
  %v849 = vpack.c.b16 %v836, %v836
  %v850 = vpack.c.b16 %v837, %v837
  %v851 = vpack.c.b16 %v838, %v838
  %v852 = vpack.c.b16 %v839, %v839
  %v853 = vpack.c.b16 %v840, %v840
  %v854 = vpack.c.b16 %v841, %v841
  %vm868 = vcmask 519168
  %869 = vst.msk [vmem:[%s3] sm:$0xf] %vm868, %v842
  %870 = vst.msk [vmem:[%s3 + $0x4] sm:$0xf] %vm868, %v843
  %871 = vst.msk [vmem:[%s3 + $0x8] sm:$0xf] %vm868, %v844
  %872 = vst.msk [vmem:[%s3 + $0xc] sm:$0xf] %vm868, %v845
  %873 = vst.msk [vmem:[%s3 + $0x10] sm:$0xf] %vm868, %v846
  %874 = vst.msk [vmem:[%s3 + $0x14] sm:$0xf] %vm868, %v847
  %875 = vst.msk [vmem:[%s3 + $0x18] sm:$0xf] %vm868, %v848
  %876 = vst.msk [vmem:[%s3 + $0x1c] sm:$0xf] %vm868, %v849
  %877 = vst.msk [vmem:[%s3 + $0x20] sm:$0xf] %vm868, %v850
  %878 = vst.msk [vmem:[%s3 + $0x24] sm:$0xf] %vm868, %v851
  %879 = vst.msk [vmem:[%s3 + $0x28] sm:$0xf] %vm868, %v852
  %880 = vst.msk [vmem:[%s3 + $0x2c] sm:$0xf] %vm868, %v853
  %vm881 = vcmask 516096
  %882 = vst.msk [vmem:[%s3 + $0x30] sm:$0x1] %vm881, %v854
  // Predicated region
  $region14: #{cnn_deepmind_multihead_forward.7} parent=0 // pred_check
    _
  $region15: #{cnn_deepmind_multihead_forward.7} parent=0 // pred_check_branch
    %884 = sbr.rel (0) target = $region17
  $region16: #{cnn_deepmind_multihead_forward.7} parent=0 // pred_region
    _
  $region17: #{cnn_deepmind_multihead_forward.7} parent=0 // pred_fallthru
    _
  // Predicated region
  $region18: #{cnn_deepmind_multihead_forward.7} parent=0 // pred_check
    _
  $region19: #{cnn_deepmind_multihead_forward.7} parent=0 // pred_check_branch
    %886 = sbr.rel (0) target = $region21
  $region20: #{cnn_deepmind_multihead_forward.7} parent=0 // pred_region
    _
  $region21: #{cnn_deepmind_multihead_forward.7} parent=0 // pred_fallthru
    _

// kernel: cnn_deepmind_multihead_forward.9
$region0: #{cnn_deepmind_multihead_forward.9}
  #allocation0 [shape = 'u32[]', space=smem, size = 0x4, offset = 0x4, fixed_abs, tag = 'smem constant byte address 0x4 - core index']
  #allocation1 [shape = 'u32[144,128]{1,0:T(1,128)}', space=vmem, size = 0x12000, scoped, tag = 'internal scratch']
  %s0 = inlined_call_operand.vmem [shape: bf16[2,1024], index: 0, kind: input, shape index: {}]
  %s1 = inlined_call_operand.vmem [shape: bf16[1024,256], index: 1, kind: input, shape index: {}]
  %s2 = inlined_call_operand.vmem [shape: f32[1,256], index: 2, kind: input, shape index: {}]
  %s3 = inlined_call_operand.vmem [shape: f32[2,256], index: 3, kind: output, shape index: {}]
  %s4 = sld [smem:[#allocation0]]
  $region22: #{cnn_deepmind_multihead_forward.9} parent=0
    _
  %s6 = ssub.s32 1, %s4
  %s7 = scalar_select 0, %s6, %s4
  // Predicated region
  $region2: #{cnn_deepmind_multihead_forward.9} parent=0 // pred_check
    _
  $region3: #{cnn_deepmind_multihead_forward.9} parent=0 // pred_check_branch
    %9 = sbr.rel (0) target = $region5
  $region4: #{cnn_deepmind_multihead_forward.9} parent=0 // pred_region
    _
  $region5: #{cnn_deepmind_multihead_forward.9} parent=0 // pred_fallthru
    _
  // Predicated region
  $region6: #{cnn_deepmind_multihead_forward.9} parent=0 // pred_check
    _
  $region7: #{cnn_deepmind_multihead_forward.9} parent=0 // pred_check_branch
    %11 = sbr.rel (0) target = $region9
  $region8: #{cnn_deepmind_multihead_forward.9} parent=0 // pred_region
    _
  $region9: #{cnn_deepmind_multihead_forward.9} parent=0 // pred_fallthru
    _
  // Predicated region
  $region10: #{cnn_deepmind_multihead_forward.9} parent=0 // pred_check
    _
  $region11: #{cnn_deepmind_multihead_forward.9} parent=0 // pred_check_branch
    %13 = sbr.rel (0) target = $region13
  $region12: #{cnn_deepmind_multihead_forward.9} parent=0 // pred_region
    _
  $region13: #{cnn_deepmind_multihead_forward.9} parent=0 // pred_fallthru
    _
  %v14 = vld [vmem:[%s0] sm:$0xff]
  %v15 = vld [vmem:[%s1] sm:$0xff]
  %v16 = vld [vmem:[%s1 + $0x8] sm:$0xff]
  %v17 = vld [vmem:[%s1 + $0x10] sm:$0xff]
  %v18 = vld [vmem:[%s1 + $0x18] sm:$0xff]
  %v19 = vld [vmem:[%s1 + $0x20] sm:$0xff]
  %v20 = vld [vmem:[%s1 + $0x28] sm:$0xff]
  %v21 = vld [vmem:[%s1 + $0x30] sm:$0xff]
  %v22 = vld [vmem:[%s1 + $0x38] sm:$0xff]
  %v23 = vld [vmem:[%s1 + $0x40] sm:$0xff]
  %v24 = vld [vmem:[%s1 + $0x48] sm:$0xff]
  %v25 = vld [vmem:[%s1 + $0x50] sm:$0xff]
  %v26 = vld [vmem:[%s1 + $0x58] sm:$0xff]
  %v27 = vld [vmem:[%s1 + $0x60] sm:$0xff]
  %v28 = vld [vmem:[%s1 + $0x68] sm:$0xff]
  %v29 = vld [vmem:[%s1 + $0x70] sm:$0xff]
  %v30 = vld [vmem:[%s1 + $0x78] sm:$0xff]
  %v31 = vld [vmem:[%s1 + $0x80] sm:$0xff]
  %v32 = vld [vmem:[%s1 + $0x88] sm:$0xff]
  %v33 = vld [vmem:[%s1 + $0x90] sm:$0xff]
  %v34 = vld [vmem:[%s1 + $0x98] sm:$0xff]
  %v35 = vld [vmem:[%s1 + $0xa0] sm:$0xff]
  %v36 = vld [vmem:[%s1 + $0xa8] sm:$0xff]
  %v37 = vld [vmem:[%s1 + $0xb0] sm:$0xff]
  %v38 = vld [vmem:[%s1 + $0xb8] sm:$0xff]
  %v39 = vld [vmem:[%s1 + $0xc0] sm:$0xff]
  %v40 = vld [vmem:[%s1 + $0xc8] sm:$0xff]
  %v41 = vld [vmem:[%s1 + $0xd0] sm:$0xff]
  %v42 = vld [vmem:[%s1 + $0xd8] sm:$0xff]
  %v43 = vld [vmem:[%s1 + $0xe0] sm:$0xff]
  %v44 = vld [vmem:[%s1 + $0xe8] sm:$0xff]
  %v45 = vld [vmem:[%s1 + $0xf0] sm:$0xff]
  %v46 = vld [vmem:[%s1 + $0xf8] sm:$0xff]
  %v47 = vld [vmem:[%s1 + $0x100] sm:$0xff]
  %v48 = vld [vmem:[%s1 + $0x108] sm:$0xff]
  %v49 = vld [vmem:[%s1 + $0x110] sm:$0xff]
  %v50 = vld [vmem:[%s1 + $0x118] sm:$0xff]
  %v51 = vld [vmem:[%s1 + $0x120] sm:$0xff]
  %v52 = vld [vmem:[%s1 + $0x128] sm:$0xff]
  %v53 = vld [vmem:[%s1 + $0x130] sm:$0xff]
  %v54 = vld [vmem:[%s1 + $0x138] sm:$0xff]
  %v55 = vld [vmem:[%s1 + $0x140] sm:$0xff]
  %v56 = vld [vmem:[%s1 + $0x148] sm:$0xff]
  %v57 = vld [vmem:[%s1 + $0x150] sm:$0xff]
  %v58 = vld [vmem:[%s1 + $0x158] sm:$0xff]
  %v59 = vld [vmem:[%s1 + $0x160] sm:$0xff]
  %v60 = vld [vmem:[%s1 + $0x168] sm:$0xff]
  %v61 = vld [vmem:[%s1 + $0x170] sm:$0xff]
  %v62 = vld [vmem:[%s1 + $0x178] sm:$0xff]
  %v63 = vld [vmem:[%s1 + $0x180] sm:$0xff]
  %v64 = vld [vmem:[%s1 + $0x188] sm:$0xff]
  %v65 = vld [vmem:[%s1 + $0x190] sm:$0xff]
  %v66 = vld [vmem:[%s1 + $0x198] sm:$0xff]
  %v67 = vld [vmem:[%s1 + $0x1a0] sm:$0xff]
  %v68 = vld [vmem:[%s1 + $0x1a8] sm:$0xff]
  %v69 = vld [vmem:[%s1 + $0x1b0] sm:$0xff]
  %v70 = vld [vmem:[%s1 + $0x1b8] sm:$0xff]
  %v71 = vld [vmem:[%s1 + $0x1c0] sm:$0xff]
  %v72 = vld [vmem:[%s1 + $0x1c8] sm:$0xff]
  %v73 = vld [vmem:[%s1 + $0x1d0] sm:$0xff]
  %v74 = vld [vmem:[%s1 + $0x1d8] sm:$0xff]
  %v75 = vld [vmem:[%s1 + $0x1e0] sm:$0xff]
  %v76 = vld [vmem:[%s1 + $0x1e8] sm:$0xff]
  %v77 = vld [vmem:[%s1 + $0x1f0] sm:$0xff]
  %v78 = vld [vmem:[%s1 + $0x1f8] sm:$0xff]
  %v79 = vld [vmem:[%s1 + $0x200] sm:$0xff]
  %v80 = vld [vmem:[%s1 + $0x208] sm:$0xff]
  %v81 = vld [vmem:[%s1 + $0x210] sm:$0xff]
  %v82 = vld [vmem:[%s1 + $0x218] sm:$0xff]
  %v83 = vld [vmem:[%s1 + $0x220] sm:$0xff]
  %v84 = vld [vmem:[%s1 + $0x228] sm:$0xff]
  %v85 = vld [vmem:[%s1 + $0x230] sm:$0xff]
  %v86 = vld [vmem:[%s1 + $0x238] sm:$0xff]
  %v87 = vld [vmem:[%s1 + $0x240] sm:$0xff]
  %v88 = vld [vmem:[%s1 + $0x248] sm:$0xff]
  %v89 = vld [vmem:[%s1 + $0x250] sm:$0xff]
  %v90 = vld [vmem:[%s1 + $0x258] sm:$0xff]
  %v91 = vld [vmem:[%s1 + $0x260] sm:$0xff]
  %v92 = vld [vmem:[%s1 + $0x268] sm:$0xff]
  %v93 = vld [vmem:[%s1 + $0x270] sm:$0xff]
  %v94 = vld [vmem:[%s1 + $0x278] sm:$0xff]
  %v95 = vld [vmem:[%s1 + $0x280] sm:$0xff]
  %v96 = vld [vmem:[%s1 + $0x288] sm:$0xff]
  %v97 = vld [vmem:[%s1 + $0x290] sm:$0xff]
  %v98 = vld [vmem:[%s1 + $0x298] sm:$0xff]
  %v99 = vld [vmem:[%s1 + $0x2a0] sm:$0xff]
  %v100 = vld [vmem:[%s1 + $0x2a8] sm:$0xff]
  %v101 = vld [vmem:[%s1 + $0x2b0] sm:$0xff]
  %v102 = vld [vmem:[%s1 + $0x2b8] sm:$0xff]
  %v103 = vld [vmem:[%s1 + $0x2c0] sm:$0xff]
  %v104 = vld [vmem:[%s1 + $0x2c8] sm:$0xff]
  %v105 = vld [vmem:[%s1 + $0x2d0] sm:$0xff]
  %v106 = vld [vmem:[%s1 + $0x2d8] sm:$0xff]
  %v107 = vld [vmem:[%s1 + $0x2e0] sm:$0xff]
  %v108 = vld [vmem:[%s1 + $0x2e8] sm:$0xff]
  %v109 = vld [vmem:[%s1 + $0x2f0] sm:$0xff]
  %v110 = vld [vmem:[%s1 + $0x2f8] sm:$0xff]
  %v111 = vld [vmem:[%s1 + $0x300] sm:$0xff]
  %v112 = vld [vmem:[%s1 + $0x308] sm:$0xff]
  %v113 = vld [vmem:[%s1 + $0x310] sm:$0xff]
  %v114 = vld [vmem:[%s1 + $0x318] sm:$0xff]
  %v115 = vld [vmem:[%s1 + $0x320] sm:$0xff]
  %v116 = vld [vmem:[%s1 + $0x328] sm:$0xff]
  %v117 = vld [vmem:[%s1 + $0x330] sm:$0xff]
  %v118 = vld [vmem:[%s1 + $0x338] sm:$0xff]
  %v119 = vld [vmem:[%s1 + $0x340] sm:$0xff]
  %v120 = vld [vmem:[%s1 + $0x348] sm:$0xff]
  %v121 = vld [vmem:[%s1 + $0x350] sm:$0xff]
  %v122 = vld [vmem:[%s1 + $0x358] sm:$0xff]
  %v123 = vld [vmem:[%s1 + $0x360] sm:$0xff]
  %v124 = vld [vmem:[%s1 + $0x368] sm:$0xff]
  %v125 = vld [vmem:[%s1 + $0x370] sm:$0xff]
  %v126 = vld [vmem:[%s1 + $0x378] sm:$0xff]
  %v127 = vld [vmem:[%s1 + $0x380] sm:$0xff]
  %v128 = vld [vmem:[%s1 + $0x388] sm:$0xff]
  %v129 = vld [vmem:[%s1 + $0x390] sm:$0xff]
  %v130 = vld [vmem:[%s1 + $0x398] sm:$0xff]
  %v131 = vld [vmem:[%s1 + $0x3a0] sm:$0xff]
  %v132 = vld [vmem:[%s1 + $0x3a8] sm:$0xff]
  %v133 = vld [vmem:[%s1 + $0x3b0] sm:$0xff]
  %v134 = vld [vmem:[%s1 + $0x3b8] sm:$0xff]
  %v135 = vld [vmem:[%s1 + $0x3c0] sm:$0xff]
  %v136 = vld [vmem:[%s1 + $0x3c8] sm:$0xff]
  %v137 = vld [vmem:[%s1 + $0x3d0] sm:$0xff]
  %v138 = vld [vmem:[%s1 + $0x3d8] sm:$0xff]
  %v139 = vld [vmem:[%s1 + $0x3e0] sm:$0xff]
  %v140 = vld [vmem:[%s1 + $0x3e8] sm:$0xff]
  %v141 = vld [vmem:[%s1 + $0x3f0] sm:$0xff]
  %v142 = vld [vmem:[%s1 + $0x3f8] sm:$0xff]
  %v143 = vld [vmem:[%s2] sm:$0x3]
  %v145 = vlaneseq
  %v146 = vshrl.u32 %v145, 7
  %v147 = vsub.s32 0, %v146
  %v148 = vrot.slane %v143, %v147
  %v149 = vlaneseq
  %v150 = vshrl.u32 %v149, 7
  %v151 = vsub.s32 1, %v150
  %v152 = vrot.slane %v143, %v151
  %v156 = vcombine.high %v14, %v14
  %v158 = vunpack.c.l.s4 1966171168
  %v159 = vunpack.c.0.s8 %v158
  %v160 = vlaneseq
  %v161 = vshrl.u32 %v160, 7
  %v162 = vsub.s32 %v159, %v161
  %v163 = vrot.slane %v14, %v162
  %v165 = vunpack.c.l.s4 1966171168
  %v166 = vunpack.c.0.s8 %v165
  %v167 = vlaneseq
  %v168 = vshrl.u32 %v167, 7
  %v169 = vsub.s32 %v166, %v168
  %v170 = vrot.slane %v156, %v169
  %v171 = vcombine.high %v163, %v163
  %v172 = vcombine.high %v170, %v170
  %v174 = vunpack.c.l.s4 1966171168
  %v175 = vunpack.c.0.s8 %v174
  %v176 = vlaneseq
  %v177 = vshrl.u32 %v176, 7
  %v178 = vsub.s32 %v175, %v177
  %v179 = vrot.slane %v163, %v178
  %v181 = vunpack.c.l.s4 1966171168
  %v182 = vunpack.c.0.s8 %v181
  %v183 = vlaneseq
  %v184 = vshrl.u32 %v183, 7
  %v185 = vsub.s32 %v182, %v184
  %v186 = vrot.slane %v170, %v185
  %v188 = vunpack.c.l.s4 1966171168
  %v189 = vunpack.c.0.s8 %v188
  %v190 = vlaneseq
  %v191 = vshrl.u32 %v190, 7
  %v192 = vsub.s32 %v189, %v191
  %v193 = vrot.slane %v171, %v192
  %v195 = vunpack.c.l.s4 1966171168
  %v196 = vunpack.c.0.s8 %v195
  %v197 = vlaneseq
  %v198 = vshrl.u32 %v197, 7
  %v199 = vsub.s32 %v196, %v198
  %v200 = vrot.slane %v172, %v199
  %v201 = vcombine.high %v179, %v179
  %v202 = vcombine.high %v186, %v186
  %v203 = vcombine.high %v193, %v193
  %v204 = vcombine.high %v200, %v200
  %v341 = vunpack.c.l.b16 %v15
  %v342 = vunpack.c.h.b16 %v15
  %v343 = vunpack.c.l.b16 %v16
  %v344 = vunpack.c.h.b16 %v16
  %v345 = vunpack.c.l.b16 %v17
  %v346 = vunpack.c.h.b16 %v17
  %v347 = vunpack.c.l.b16 %v18
  %v348 = vunpack.c.h.b16 %v18
  %v349 = vunpack.c.l.b16 %v19
  %v350 = vunpack.c.h.b16 %v19
  %v351 = vunpack.c.l.b16 %v20
  %v352 = vunpack.c.h.b16 %v20
  %v353 = vunpack.c.l.b16 %v21
  %v354 = vunpack.c.h.b16 %v21
  %v355 = vunpack.c.l.b16 %v22
  %v356 = vunpack.c.h.b16 %v22
  %v357 = vunpack.c.l.b16 %v23
  %v358 = vunpack.c.h.b16 %v23
  %v359 = vunpack.c.l.b16 %v24
  %v360 = vunpack.c.h.b16 %v24
  %v361 = vunpack.c.l.b16 %v25
  %v362 = vunpack.c.h.b16 %v25
  %v363 = vunpack.c.l.b16 %v26
  %v364 = vunpack.c.h.b16 %v26
  %v365 = vunpack.c.l.b16 %v27
  %v366 = vunpack.c.h.b16 %v27
  %v367 = vunpack.c.l.b16 %v28
  %v368 = vunpack.c.h.b16 %v28
  %v369 = vunpack.c.l.b16 %v29
  %v370 = vunpack.c.h.b16 %v29
  %v371 = vunpack.c.l.b16 %v30
  %v372 = vunpack.c.h.b16 %v30
  %v373 = vunpack.c.l.b16 %v31
  %v374 = vunpack.c.h.b16 %v31
  %v375 = vunpack.c.l.b16 %v32
  %v376 = vunpack.c.h.b16 %v32
  %v377 = vunpack.c.l.b16 %v33
  %v378 = vunpack.c.h.b16 %v33
  %v379 = vunpack.c.l.b16 %v34
  %v380 = vunpack.c.h.b16 %v34
  %v381 = vunpack.c.l.b16 %v35
  %v382 = vunpack.c.h.b16 %v35
  %v383 = vunpack.c.l.b16 %v36
  %v384 = vunpack.c.h.b16 %v36
  %v385 = vunpack.c.l.b16 %v37
  %v386 = vunpack.c.h.b16 %v37
  %v387 = vunpack.c.l.b16 %v38
  %v388 = vunpack.c.h.b16 %v38
  %v389 = vunpack.c.l.b16 %v39
  %v390 = vunpack.c.h.b16 %v39
  %v391 = vunpack.c.l.b16 %v40
  %v392 = vunpack.c.h.b16 %v40
  %v393 = vunpack.c.l.b16 %v41
  %v394 = vunpack.c.h.b16 %v41
  %v395 = vunpack.c.l.b16 %v42
  %v396 = vunpack.c.h.b16 %v42
  %v397 = vunpack.c.l.b16 %v43
  %v398 = vunpack.c.h.b16 %v43
  %v399 = vunpack.c.l.b16 %v44
  %v400 = vunpack.c.h.b16 %v44
  %v401 = vunpack.c.l.b16 %v45
  %v402 = vunpack.c.h.b16 %v45
  %v403 = vunpack.c.l.b16 %v46
  %v404 = vunpack.c.h.b16 %v46
  %v405 = vunpack.c.l.b16 %v47
  %v406 = vunpack.c.h.b16 %v47
  %v407 = vunpack.c.l.b16 %v48
  %v408 = vunpack.c.h.b16 %v48
  %v409 = vunpack.c.l.b16 %v49
  %v410 = vunpack.c.h.b16 %v49
  %v411 = vunpack.c.l.b16 %v50
  %v412 = vunpack.c.h.b16 %v50
  %v413 = vunpack.c.l.b16 %v51
  %v414 = vunpack.c.h.b16 %v51
  %v415 = vunpack.c.l.b16 %v52
  %v416 = vunpack.c.h.b16 %v52
  %v417 = vunpack.c.l.b16 %v53
  %v418 = vunpack.c.h.b16 %v53
  %v419 = vunpack.c.l.b16 %v54
  %v420 = vunpack.c.h.b16 %v54
  %v421 = vunpack.c.l.b16 %v55
  %v422 = vunpack.c.h.b16 %v55
  %v423 = vunpack.c.l.b16 %v56
  %v424 = vunpack.c.h.b16 %v56
  %v425 = vunpack.c.l.b16 %v57
  %v426 = vunpack.c.h.b16 %v57
  %v427 = vunpack.c.l.b16 %v58
  %v428 = vunpack.c.h.b16 %v58
  %v429 = vunpack.c.l.b16 %v59
  %v430 = vunpack.c.h.b16 %v59
  %v431 = vunpack.c.l.b16 %v60
  %v432 = vunpack.c.h.b16 %v60
  %v433 = vunpack.c.l.b16 %v61
  %v434 = vunpack.c.h.b16 %v61
  %v435 = vunpack.c.l.b16 %v62
  %v436 = vunpack.c.h.b16 %v62
  %v437 = vunpack.c.l.b16 %v63
  %v438 = vunpack.c.h.b16 %v63
  %v439 = vunpack.c.l.b16 %v64
  %v440 = vunpack.c.h.b16 %v64
  %v441 = vunpack.c.l.b16 %v65
  %v442 = vunpack.c.h.b16 %v65
  %v443 = vunpack.c.l.b16 %v66
  %v444 = vunpack.c.h.b16 %v66
  %v445 = vunpack.c.l.b16 %v67
  %v446 = vunpack.c.h.b16 %v67
  %v447 = vunpack.c.l.b16 %v68
  %v448 = vunpack.c.h.b16 %v68
  %v449 = vunpack.c.l.b16 %v69
  %v450 = vunpack.c.h.b16 %v69
  %v451 = vunpack.c.l.b16 %v70
  %v452 = vunpack.c.h.b16 %v70
  %v453 = vunpack.c.l.b16 %v71
  %v454 = vunpack.c.h.b16 %v71
  %v455 = vunpack.c.l.b16 %v72
  %v456 = vunpack.c.h.b16 %v72
  %v457 = vunpack.c.l.b16 %v73
  %v458 = vunpack.c.h.b16 %v73
  %v459 = vunpack.c.l.b16 %v74
  %v460 = vunpack.c.h.b16 %v74
  %v461 = vunpack.c.l.b16 %v75
  %v462 = vunpack.c.h.b16 %v75
  %v463 = vunpack.c.l.b16 %v76
  %v464 = vunpack.c.h.b16 %v76
  %v465 = vunpack.c.l.b16 %v77
  %v466 = vunpack.c.h.b16 %v77
  %v467 = vunpack.c.l.b16 %v78
  %v468 = vunpack.c.h.b16 %v78
  %v469 = vunpack.c.l.b16 %v79
  %v470 = vunpack.c.h.b16 %v79
  %v471 = vunpack.c.l.b16 %v80
  %v472 = vunpack.c.h.b16 %v80
  %v473 = vunpack.c.l.b16 %v81
  %v474 = vunpack.c.h.b16 %v81
  %v475 = vunpack.c.l.b16 %v82
  %v476 = vunpack.c.h.b16 %v82
  %v477 = vunpack.c.l.b16 %v83
  %v478 = vunpack.c.h.b16 %v83
  %v479 = vunpack.c.l.b16 %v84
  %v480 = vunpack.c.h.b16 %v84
  %v481 = vunpack.c.l.b16 %v85
  %v482 = vunpack.c.h.b16 %v85
  %v483 = vunpack.c.l.b16 %v86
  %v484 = vunpack.c.h.b16 %v86
  %v485 = vunpack.c.l.b16 %v87
  %v486 = vunpack.c.h.b16 %v87
  %v487 = vunpack.c.l.b16 %v88
  %v488 = vunpack.c.h.b16 %v88
  %v489 = vunpack.c.l.b16 %v89
  %v490 = vunpack.c.h.b16 %v89
  %v491 = vunpack.c.l.b16 %v90
  %v492 = vunpack.c.h.b16 %v90
  %v493 = vunpack.c.l.b16 %v91
  %v494 = vunpack.c.h.b16 %v91
  %v495 = vunpack.c.l.b16 %v92
  %v496 = vunpack.c.h.b16 %v92
  %v497 = vunpack.c.l.b16 %v93
  %v498 = vunpack.c.h.b16 %v93
  %v499 = vunpack.c.l.b16 %v94
  %v500 = vunpack.c.h.b16 %v94
  %v501 = vunpack.c.l.b16 %v95
  %v502 = vunpack.c.h.b16 %v95
  %v503 = vunpack.c.l.b16 %v96
  %v504 = vunpack.c.h.b16 %v96
  %v505 = vunpack.c.l.b16 %v97
  %v506 = vunpack.c.h.b16 %v97
  %v507 = vunpack.c.l.b16 %v98
  %v508 = vunpack.c.h.b16 %v98
  %v509 = vunpack.c.l.b16 %v99
  %v510 = vunpack.c.h.b16 %v99
  %v511 = vunpack.c.l.b16 %v100
  %v512 = vunpack.c.h.b16 %v100
  %v513 = vunpack.c.l.b16 %v101
  %v514 = vunpack.c.h.b16 %v101
  %v515 = vunpack.c.l.b16 %v102
  %v516 = vunpack.c.h.b16 %v102
  %v517 = vunpack.c.l.b16 %v103
  %v518 = vunpack.c.h.b16 %v103
  %v519 = vunpack.c.l.b16 %v104
  %v520 = vunpack.c.h.b16 %v104
  %v521 = vunpack.c.l.b16 %v105
  %v522 = vunpack.c.h.b16 %v105
  %v523 = vunpack.c.l.b16 %v106
  %v524 = vunpack.c.h.b16 %v106
  %v525 = vunpack.c.l.b16 %v107
  %v526 = vunpack.c.h.b16 %v107
  %v527 = vunpack.c.l.b16 %v108
  %v528 = vunpack.c.h.b16 %v108
  %v529 = vunpack.c.l.b16 %v109
  %v530 = vunpack.c.h.b16 %v109
  %v531 = vunpack.c.l.b16 %v110
  %v532 = vunpack.c.h.b16 %v110
  %v533 = vunpack.c.l.b16 %v111
  %v534 = vunpack.c.h.b16 %v111
  %v535 = vunpack.c.l.b16 %v112
  %v536 = vunpack.c.h.b16 %v112
  %v537 = vunpack.c.l.b16 %v113
  %v538 = vunpack.c.h.b16 %v113
  %v539 = vunpack.c.l.b16 %v114
  %v540 = vunpack.c.h.b16 %v114
  %v541 = vunpack.c.l.b16 %v115
  %v542 = vunpack.c.h.b16 %v115
  %v543 = vunpack.c.l.b16 %v116
  %v544 = vunpack.c.h.b16 %v116
  %v545 = vunpack.c.l.b16 %v117
  %v546 = vunpack.c.h.b16 %v117
  %v547 = vunpack.c.l.b16 %v118
  %v548 = vunpack.c.h.b16 %v118
  %v549 = vunpack.c.l.b16 %v119
  %v550 = vunpack.c.h.b16 %v119
  %v551 = vunpack.c.l.b16 %v120
  %v552 = vunpack.c.h.b16 %v120
  %v553 = vunpack.c.l.b16 %v121
  %v554 = vunpack.c.h.b16 %v121
  %v555 = vunpack.c.l.b16 %v122
  %v556 = vunpack.c.h.b16 %v122
  %v557 = vunpack.c.l.b16 %v123
  %v558 = vunpack.c.h.b16 %v123
  %v559 = vunpack.c.l.b16 %v124
  %v560 = vunpack.c.h.b16 %v124
  %v561 = vunpack.c.l.b16 %v125
  %v562 = vunpack.c.h.b16 %v125
  %v563 = vunpack.c.l.b16 %v126
  %v564 = vunpack.c.h.b16 %v126
  %v565 = vunpack.c.l.b16 %v127
  %v566 = vunpack.c.h.b16 %v127
  %v567 = vunpack.c.l.b16 %v128
  %v568 = vunpack.c.h.b16 %v128
  %v569 = vunpack.c.l.b16 %v129
  %v570 = vunpack.c.h.b16 %v129
  %v571 = vunpack.c.l.b16 %v130
  %v572 = vunpack.c.h.b16 %v130
  %v573 = vunpack.c.l.b16 %v131
  %v574 = vunpack.c.h.b16 %v131
  %v575 = vunpack.c.l.b16 %v132
  %v576 = vunpack.c.h.b16 %v132
  %v577 = vunpack.c.l.b16 %v133
  %v578 = vunpack.c.h.b16 %v133
  %v579 = vunpack.c.l.b16 %v134
  %v580 = vunpack.c.h.b16 %v134
  %v581 = vunpack.c.l.b16 %v135
  %v582 = vunpack.c.h.b16 %v135
  %v583 = vunpack.c.l.b16 %v136
  %v584 = vunpack.c.h.b16 %v136
  %v585 = vunpack.c.l.b16 %v137
  %v586 = vunpack.c.h.b16 %v137
  %v587 = vunpack.c.l.b16 %v138
  %v588 = vunpack.c.h.b16 %v138
  %v589 = vunpack.c.l.b16 %v139
  %v590 = vunpack.c.h.b16 %v139
  %v591 = vunpack.c.l.b16 %v140
  %v592 = vunpack.c.h.b16 %v140
  %v593 = vunpack.c.l.b16 %v141
  %v594 = vunpack.c.h.b16 %v141
  %v595 = vunpack.c.l.b16 %v142
  %v596 = vunpack.c.h.b16 %v142
  %v597 = vpack.c.b16 %v343, %v341
  %v598 = vpack.c.b16 %v344, %v342
  %v599 = vpack.c.b16 %v347, %v345
  %v600 = vpack.c.b16 %v348, %v346
  %v601 = vpack.c.b16 %v351, %v349
  %v602 = vpack.c.b16 %v352, %v350
  %v603 = vpack.c.b16 %v355, %v353
  %v604 = vpack.c.b16 %v356, %v354
  %v605 = vpack.c.b16 %v359, %v357
  %v606 = vpack.c.b16 %v360, %v358
  %v607 = vpack.c.b16 %v363, %v361
  %v608 = vpack.c.b16 %v364, %v362
  %v609 = vpack.c.b16 %v367, %v365
  %v610 = vpack.c.b16 %v368, %v366
  %v611 = vpack.c.b16 %v371, %v369
  %v612 = vpack.c.b16 %v372, %v370
  %v613 = vpack.c.b16 %v375, %v373
  %v614 = vpack.c.b16 %v376, %v374
  %v615 = vpack.c.b16 %v379, %v377
  %v616 = vpack.c.b16 %v380, %v378
  %v617 = vpack.c.b16 %v383, %v381
  %v618 = vpack.c.b16 %v384, %v382
  %v619 = vpack.c.b16 %v387, %v385
  %v620 = vpack.c.b16 %v388, %v386
  %v621 = vpack.c.b16 %v391, %v389
  %v622 = vpack.c.b16 %v392, %v390
  %v623 = vpack.c.b16 %v395, %v393
  %v624 = vpack.c.b16 %v396, %v394
  %v625 = vpack.c.b16 %v399, %v397
  %v626 = vpack.c.b16 %v400, %v398
  %v627 = vpack.c.b16 %v403, %v401
  %v628 = vpack.c.b16 %v404, %v402
  %v629 = vpack.c.b16 %v407, %v405
  %v630 = vpack.c.b16 %v408, %v406
  %v631 = vpack.c.b16 %v411, %v409
  %v632 = vpack.c.b16 %v412, %v410
  %v633 = vpack.c.b16 %v415, %v413
  %v634 = vpack.c.b16 %v416, %v414
  %v635 = vpack.c.b16 %v419, %v417
  %v636 = vpack.c.b16 %v420, %v418
  %v637 = vpack.c.b16 %v423, %v421
  %v638 = vpack.c.b16 %v424, %v422
  %v639 = vpack.c.b16 %v427, %v425
  %v640 = vpack.c.b16 %v428, %v426
  %v641 = vpack.c.b16 %v431, %v429
  %v642 = vpack.c.b16 %v432, %v430
  %v643 = vpack.c.b16 %v435, %v433
  %v644 = vpack.c.b16 %v436, %v434
  %v645 = vpack.c.b16 %v439, %v437
  %v646 = vpack.c.b16 %v440, %v438
  %v647 = vpack.c.b16 %v443, %v441
  %v648 = vpack.c.b16 %v444, %v442
  %v649 = vpack.c.b16 %v447, %v445
  %v650 = vpack.c.b16 %v448, %v446
  %v651 = vpack.c.b16 %v451, %v449
  %v652 = vpack.c.b16 %v452, %v450
  %v653 = vpack.c.b16 %v455, %v453
  %v654 = vpack.c.b16 %v456, %v454
  %v655 = vpack.c.b16 %v459, %v457
  %v656 = vpack.c.b16 %v460, %v458
  %v657 = vpack.c.b16 %v463, %v461
  %v658 = vpack.c.b16 %v464, %v462
  %v659 = vpack.c.b16 %v467, %v465
  %v660 = vpack.c.b16 %v468, %v466
  %v661 = vpack.c.b16 %v471, %v469
  %v662 = vpack.c.b16 %v472, %v470
  %v663 = vpack.c.b16 %v475, %v473
  %v664 = vpack.c.b16 %v476, %v474
  %v665 = vpack.c.b16 %v479, %v477
  %v666 = vpack.c.b16 %v480, %v478
  %v667 = vpack.c.b16 %v483, %v481
  %v668 = vpack.c.b16 %v484, %v482
  %v669 = vpack.c.b16 %v487, %v485
  %v670 = vpack.c.b16 %v488, %v486
  %v671 = vpack.c.b16 %v491, %v489
  %v672 = vpack.c.b16 %v492, %v490
  %v673 = vpack.c.b16 %v495, %v493
  %v674 = vpack.c.b16 %v496, %v494
  %v675 = vpack.c.b16 %v499, %v497
  %v676 = vpack.c.b16 %v500, %v498
  %v677 = vpack.c.b16 %v503, %v501
  %v678 = vpack.c.b16 %v504, %v502
  %v679 = vpack.c.b16 %v507, %v505
  %v680 = vpack.c.b16 %v508, %v506
  %v681 = vpack.c.b16 %v511, %v509
  %v682 = vpack.c.b16 %v512, %v510
  %v683 = vpack.c.b16 %v515, %v513
  %v684 = vpack.c.b16 %v516, %v514
  %v685 = vpack.c.b16 %v519, %v517
  %v686 = vpack.c.b16 %v520, %v518
  %v687 = vpack.c.b16 %v523, %v521
  %v688 = vpack.c.b16 %v524, %v522
  %v689 = vpack.c.b16 %v527, %v525
  %v690 = vpack.c.b16 %v528, %v526
  %v691 = vpack.c.b16 %v531, %v529
  %v692 = vpack.c.b16 %v532, %v530
  %v693 = vpack.c.b16 %v535, %v533
  %v694 = vpack.c.b16 %v536, %v534
  %v695 = vpack.c.b16 %v539, %v537
  %v696 = vpack.c.b16 %v540, %v538
  %v697 = vpack.c.b16 %v543, %v541
  %v698 = vpack.c.b16 %v544, %v542
  %v699 = vpack.c.b16 %v547, %v545
  %v700 = vpack.c.b16 %v548, %v546
  %v701 = vpack.c.b16 %v551, %v549
  %v702 = vpack.c.b16 %v552, %v550
  %v703 = vpack.c.b16 %v555, %v553
  %v704 = vpack.c.b16 %v556, %v554
  %v705 = vpack.c.b16 %v559, %v557
  %v706 = vpack.c.b16 %v560, %v558
  %v707 = vpack.c.b16 %v563, %v561
  %v708 = vpack.c.b16 %v564, %v562
  %v709 = vpack.c.b16 %v567, %v565
  %v710 = vpack.c.b16 %v568, %v566
  %v711 = vpack.c.b16 %v571, %v569
  %v712 = vpack.c.b16 %v572, %v570
  %v713 = vpack.c.b16 %v575, %v573
  %v714 = vpack.c.b16 %v576, %v574
  %v715 = vpack.c.b16 %v579, %v577
  %v716 = vpack.c.b16 %v580, %v578
  %v717 = vpack.c.b16 %v583, %v581
  %v718 = vpack.c.b16 %v584, %v582
  %v719 = vpack.c.b16 %v587, %v585
  %v720 = vpack.c.b16 %v588, %v586
  %v721 = vpack.c.b16 %v591, %v589
  %v722 = vpack.c.b16 %v592, %v590
  %v723 = vpack.c.b16 %v595, %v593
  %v724 = vpack.c.b16 %v596, %v594
  %853 = vmatprep.subr.bf16.mxu0 %v598
  %854 = vmatpush1.bf16.msra.mxu0 %v597
  %855 = vmatprep.subr.bf16.mxu0 %v600
  %856 = vmatpush1.bf16.msra.mxu0 %v599
  %857 = vmatprep.subr.bf16.mxu0 %v602
  %858 = vmatpush1.bf16.msra.mxu0 %v601
  %859 = vmatprep.subr.bf16.mxu0 %v604
  %860 = vmatpush1.bf16.msra.mxu0 %v603
  %861 = vmatprep.subr.bf16.mxu0 %v606
  %862 = vmatpush1.bf16.msra.mxu0 %v605
  %863 = vmatprep.subr.bf16.mxu0 %v608
  %864 = vmatpush1.bf16.msra.mxu0 %v607
  %865 = vmatprep.subr.bf16.mxu0 %v610
  %866 = vmatpush1.bf16.msra.mxu0 %v609
  %867 = vmatprep.subr.bf16.mxu0 %v612
  %868 = vmatpush1.bf16.msra.mxu0 %v611
  %869 = vmatprep.subr.bf16.mxu0 %v614
  %870 = vmatpush1.bf16.msra.mxu0 %v613
  %871 = vmatprep.subr.bf16.mxu0 %v616
  %872 = vmatpush1.bf16.msra.mxu0 %v615
  %873 = vmatprep.subr.bf16.mxu0 %v618
  %874 = vmatpush1.bf16.msra.mxu0 %v617
  %875 = vmatprep.subr.bf16.mxu0 %v620
  %876 = vmatpush1.bf16.msra.mxu0 %v619
  %877 = vmatprep.subr.bf16.mxu0 %v622
  %878 = vmatpush1.bf16.msra.mxu0 %v621
  %879 = vmatprep.subr.bf16.mxu0 %v624
  %880 = vmatpush1.bf16.msra.mxu0 %v623
  %881 = vmatprep.subr.bf16.mxu0 %v626
  %882 = vmatpush1.bf16.msra.mxu0 %v625
  %883 = vmatprep.subr.bf16.mxu0 %v628
  %884 = vmatpush1.bf16.msra.mxu0 %v627
  %885 = vmatprep.mubr.bf16.mxu0 %v193
  %886 = vmatmul.mubr.bf16.gmra.mrb[0].mxu0 %v179
  %v887 = vpop.f32.mrb[0].mxu0
  %v888 = vadd.f32 %v148, %v887
  %v889 = vpop.f32.mrb[0].mxu0
  %v890 = vadd.f32 %v152, %v889
  %v891 = vpop.f32.mrb[0].mxu0
  %v892 = vpop.f32.mrb[0].mxu0
  %893 = vdwg.mxu0
  %894 = vmatprep.subr.bf16.mxu0 %v630
  %895 = vmatpush1.bf16.msra.mxu0 %v629
  %896 = vmatprep.subr.bf16.mxu0 %v632
  %897 = vmatpush1.bf16.msra.mxu0 %v631
  %898 = vmatprep.subr.bf16.mxu0 %v634
  %899 = vmatpush1.bf16.msra.mxu0 %v633
  %900 = vmatprep.subr.bf16.mxu0 %v636
  %901 = vmatpush1.bf16.msra.mxu0 %v635
  %902 = vmatprep.subr.bf16.mxu0 %v638
  %903 = vmatpush1.bf16.msra.mxu0 %v637
  %904 = vmatprep.subr.bf16.mxu0 %v640
  %905 = vmatpush1.bf16.msra.mxu0 %v639
  %906 = vmatprep.subr.bf16.mxu0 %v642
  %907 = vmatpush1.bf16.msra.mxu0 %v641
  %908 = vmatprep.subr.bf16.mxu0 %v644
  %909 = vmatpush1.bf16.msra.mxu0 %v643
  %910 = vmatprep.subr.bf16.mxu0 %v646
  %911 = vmatpush1.bf16.msra.mxu0 %v645
  %912 = vmatprep.subr.bf16.mxu0 %v648
  %913 = vmatpush1.bf16.msra.mxu0 %v647
  %914 = vmatprep.subr.bf16.mxu0 %v650
  %915 = vmatpush1.bf16.msra.mxu0 %v649
  %916 = vmatprep.subr.bf16.mxu0 %v652
  %917 = vmatpush1.bf16.msra.mxu0 %v651
  %918 = vmatprep.subr.bf16.mxu0 %v654
  %919 = vmatpush1.bf16.msra.mxu0 %v653
  %920 = vmatprep.subr.bf16.mxu0 %v656
  %921 = vmatpush1.bf16.msra.mxu0 %v655
  %922 = vmatprep.subr.bf16.mxu0 %v658
  %923 = vmatpush1.bf16.msra.mxu0 %v657
  %924 = vmatprep.subr.bf16.mxu0 %v660
  %925 = vmatpush1.bf16.msra.mxu0 %v659
  %926 = vmatprep.mubr.bf16.mxu0 %v203
  %927 = vmatmul.mubr.bf16.gmra.mrb[0].mxu0 %v201
  %v928 = vpop.f32.mrb[0].mxu0
  %v929 = vadd.f32 %v888, %v928
  %v930 = vpop.f32.mrb[0].mxu0
  %v931 = vadd.f32 %v890, %v930
  %v932 = vpop.f32.mrb[0].mxu0
  %v933 = vpop.f32.mrb[0].mxu0
  %934 = vdwg.mxu0
  %935 = vmatprep.subr.bf16.mxu0 %v662
  %936 = vmatpush1.bf16.msra.mxu0 %v661
  %937 = vmatprep.subr.bf16.mxu0 %v664
  %938 = vmatpush1.bf16.msra.mxu0 %v663
  %939 = vmatprep.subr.bf16.mxu0 %v666
  %940 = vmatpush1.bf16.msra.mxu0 %v665
  %941 = vmatprep.subr.bf16.mxu0 %v668
  %942 = vmatpush1.bf16.msra.mxu0 %v667
  %943 = vmatprep.subr.bf16.mxu0 %v670
  %944 = vmatpush1.bf16.msra.mxu0 %v669
  %945 = vmatprep.subr.bf16.mxu0 %v672
  %946 = vmatpush1.bf16.msra.mxu0 %v671
  %947 = vmatprep.subr.bf16.mxu0 %v674
  %948 = vmatpush1.bf16.msra.mxu0 %v673
  %949 = vmatprep.subr.bf16.mxu0 %v676
  %950 = vmatpush1.bf16.msra.mxu0 %v675
  %951 = vmatprep.subr.bf16.mxu0 %v678
  %952 = vmatpush1.bf16.msra.mxu0 %v677
  %953 = vmatprep.subr.bf16.mxu0 %v680
  %954 = vmatpush1.bf16.msra.mxu0 %v679
  %955 = vmatprep.subr.bf16.mxu0 %v682
  %956 = vmatpush1.bf16.msra.mxu0 %v681
  %957 = vmatprep.subr.bf16.mxu0 %v684
  %958 = vmatpush1.bf16.msra.mxu0 %v683
  %959 = vmatprep.subr.bf16.mxu0 %v686
  %960 = vmatpush1.bf16.msra.mxu0 %v685
  %961 = vmatprep.subr.bf16.mxu0 %v688
  %962 = vmatpush1.bf16.msra.mxu0 %v687
  %963 = vmatprep.subr.bf16.mxu0 %v690
  %964 = vmatpush1.bf16.msra.mxu0 %v689
  %965 = vmatprep.subr.bf16.mxu0 %v692
  %966 = vmatpush1.bf16.msra.mxu0 %v691
  %967 = vmatprep.mubr.bf16.mxu0 %v200
  %968 = vmatmul.mubr.bf16.gmra.mrb[0].mxu0 %v186
  %v969 = vpop.f32.mrb[0].mxu0
  %v970 = vadd.f32 %v929, %v969
  %v971 = vpop.f32.mrb[0].mxu0
  %v972 = vadd.f32 %v931, %v971
  %v973 = vpop.f32.mrb[0].mxu0
  %v974 = vpop.f32.mrb[0].mxu0
  %975 = vdwg.mxu0
  %976 = vmatprep.subr.bf16.mxu0 %v694
  %977 = vmatpush1.bf16.msra.mxu0 %v693
  %978 = vmatprep.subr.bf16.mxu0 %v696
  %979 = vmatpush1.bf16.msra.mxu0 %v695
  %980 = vmatprep.subr.bf16.mxu0 %v698
  %981 = vmatpush1.bf16.msra.mxu0 %v697
  %982 = vmatprep.subr.bf16.mxu0 %v700
  %983 = vmatpush1.bf16.msra.mxu0 %v699
  %984 = vmatprep.subr.bf16.mxu0 %v702
  %985 = vmatpush1.bf16.msra.mxu0 %v701
  %986 = vmatprep.subr.bf16.mxu0 %v704
  %987 = vmatpush1.bf16.msra.mxu0 %v703
  %988 = vmatprep.subr.bf16.mxu0 %v706
  %989 = vmatpush1.bf16.msra.mxu0 %v705
  %990 = vmatprep.subr.bf16.mxu0 %v708
  %991 = vmatpush1.bf16.msra.mxu0 %v707
  %992 = vmatprep.subr.bf16.mxu0 %v710
  %993 = vmatpush1.bf16.msra.mxu0 %v709
  %994 = vmatprep.subr.bf16.mxu0 %v712
  %995 = vmatpush1.bf16.msra.mxu0 %v711
  %996 = vmatprep.subr.bf16.mxu0 %v714
  %997 = vmatpush1.bf16.msra.mxu0 %v713
  %998 = vmatprep.subr.bf16.mxu0 %v716
  %999 = vmatpush1.bf16.msra.mxu0 %v715
  %1000 = vmatprep.subr.bf16.mxu0 %v718
  %1001 = vmatpush1.bf16.msra.mxu0 %v717
  %1002 = vmatprep.subr.bf16.mxu0 %v720
  %1003 = vmatpush1.bf16.msra.mxu0 %v719
  %1004 = vmatprep.subr.bf16.mxu0 %v722
  %1005 = vmatpush1.bf16.msra.mxu0 %v721
  %1006 = vmatprep.subr.bf16.mxu0 %v724
  %1007 = vmatpush1.bf16.msra.mxu0 %v723
  %1008 = vmatprep.mubr.bf16.mxu0 %v204
  %1009 = vmatmul.mubr.bf16.gmra.mrb[0].mxu0 %v202
  %v1010 = vpop.f32.mrb[0].mxu0
  %v1011 = vadd.f32 %v970, %v1010
  %v1012 = vpop.f32.mrb[0].mxu0
  %v1013 = vadd.f32 %v972, %v1012
  %v1014 = vpop.f32.mrb[0].mxu0
  %v1015 = vpop.f32.mrb[0].mxu0
  %1016 = vdwg.mxu0
  %v1019 = vcombine.low %v1011, %v1013
  %v1021 = vunpack.c.l.s4 1983009808
  %v1022 = vunpack.c.0.s8 %v1021
  %v1023 = vlaneseq
  %v1024 = vshrl.u32 %v1023, 7
  %v1025 = vsub.s32 %v1022, %v1024
  %v1026 = vrot.slane %v1019, %v1025
  %1028 = vst [vmem:[%s3] sm:$0xf] %v1026
  // Predicated region
  $region14: #{cnn_deepmind_multihead_forward.9} parent=0 // pred_check
    _
  $region15: #{cnn_deepmind_multihead_forward.9} parent=0 // pred_check_branch
    %1030 = sbr.rel (0) target = $region17
  $region16: #{cnn_deepmind_multihead_forward.9} parent=0 // pred_region
    _
  $region17: #{cnn_deepmind_multihead_forward.9} parent=0 // pred_fallthru
    _
  // Predicated region
  $region18: #{cnn_deepmind_multihead_forward.9} parent=0 // pred_check
    _
  $region19: #{cnn_deepmind_multihead_forward.9} parent=0 // pred_check_branch
    %1032 = sbr.rel (0) target = $region21
  $region20: #{cnn_deepmind_multihead_forward.9} parent=0 // pred_region
    _
  $region21: #{cnn_deepmind_multihead_forward.9} parent=0 // pred_fallthru
    _

// kernel: cnn_deepmind_multihead_forward.8
$region0: #{cnn_deepmind_multihead_forward.8}
  #allocation0 [shape = 'u32[]', space=smem, size = 0x4, offset = 0x4, fixed_abs, tag = 'smem constant byte address 0x4 - core index']
  #allocation1 [shape = 'u32[144,128]{1,0:T(1,128)}', space=vmem, size = 0x12000, scoped, tag = 'internal scratch']
  %s0 = inlined_call_operand.vmem [shape: bf16[2,3136], index: 0, kind: input, shape index: {}]
  %s1 = inlined_call_operand.vmem [shape: bf16[3136,1024], index: 1, kind: input, shape index: {}]
  %s2 = inlined_call_operand.vmem [shape: f32[1,1024], index: 2, kind: input, shape index: {}]
  %s3 = inlined_call_operand.vmem [shape: bf16[2,1024], index: 3, kind: output, shape index: {}]
  %s4 = sld [smem:[#allocation0]]
  $region22: #{cnn_deepmind_multihead_forward.8} parent=0
    _
  %s6 = ssub.s32 1, %s4
  %s7 = scalar_select 0, %s6, %s4
  // Predicated region
  $region2: #{cnn_deepmind_multihead_forward.8} parent=0 // pred_check
    _
  $region3: #{cnn_deepmind_multihead_forward.8} parent=0 // pred_check_branch
    %9 = sbr.rel (0) target = $region5
  $region4: #{cnn_deepmind_multihead_forward.8} parent=0 // pred_region
    _
  $region5: #{cnn_deepmind_multihead_forward.8} parent=0 // pred_fallthru
    _
  // Predicated region
  $region6: #{cnn_deepmind_multihead_forward.8} parent=0 // pred_check
    _
  $region7: #{cnn_deepmind_multihead_forward.8} parent=0 // pred_check_branch
    %11 = sbr.rel (0) target = $region9
  $region8: #{cnn_deepmind_multihead_forward.8} parent=0 // pred_region
    _
  $region9: #{cnn_deepmind_multihead_forward.8} parent=0 // pred_fallthru
    _
  // Predicated region
  $region10: #{cnn_deepmind_multihead_forward.8} parent=0 // pred_check
    _
  $region11: #{cnn_deepmind_multihead_forward.8} parent=0 // pred_check_branch
    %13 = sbr.rel (0) target = $region13
  $region12: #{cnn_deepmind_multihead_forward.8} parent=0 // pred_region
    _
  $region13: #{cnn_deepmind_multihead_forward.8} parent=0 // pred_fallthru
    _
  %v15 = vld [vmem:[%s0] sm:$0xff]
  %v16 = vld [vmem:[%s0 + $0x8] sm:$0xff]
  %v17 = vld [vmem:[%s0 + $0x10] sm:$0xff]
  %v18 = vld [vmem:[%s0 + $0x18] sm:$0x1]
  %v19 = vld [vmem:[%s1] sm:$0xff]
  %v20 = vld [vmem:[%s1 + $0x8] sm:$0xff]
  %v21 = vld [vmem:[%s1 + $0x10] sm:$0xff]
  %v22 = vld [vmem:[%s1 + $0x18] sm:$0xff]
  %v23 = vld [vmem:[%s1 + $0x20] sm:$0xff]
  %v24 = vld [vmem:[%s1 + $0x28] sm:$0xff]
  %v25 = vld [vmem:[%s1 + $0x30] sm:$0xff]
  %v26 = vld [vmem:[%s1 + $0x38] sm:$0xff]
  %v27 = vld [vmem:[%s1 + $0x40] sm:$0xff]
  %v28 = vld [vmem:[%s1 + $0x48] sm:$0xff]
  %v29 = vld [vmem:[%s1 + $0x50] sm:$0xff]
  %v30 = vld [vmem:[%s1 + $0x58] sm:$0xff]
  %v31 = vld [vmem:[%s1 + $0x60] sm:$0xff]
  %v32 = vld [vmem:[%s1 + $0x68] sm:$0xff]
  %v33 = vld [vmem:[%s1 + $0x70] sm:$0xff]
  %v34 = vld [vmem:[%s1 + $0x78] sm:$0xff]
  %v35 = vld [vmem:[%s1 + $0x80] sm:$0xff]
  %v36 = vld [vmem:[%s1 + $0x88] sm:$0xff]
  %v37 = vld [vmem:[%s1 + $0x90] sm:$0xff]
  %v38 = vld [vmem:[%s1 + $0x98] sm:$0xff]
  %v39 = vld [vmem:[%s1 + $0xa0] sm:$0xff]
  %v40 = vld [vmem:[%s1 + $0xa8] sm:$0xff]
  %v41 = vld [vmem:[%s1 + $0xb0] sm:$0xff]
  %v42 = vld [vmem:[%s1 + $0xb8] sm:$0xff]
  %v43 = vld [vmem:[%s1 + $0xc0] sm:$0xff]
  %v44 = vld [vmem:[%s1 + $0xc8] sm:$0xff]
  %v45 = vld [vmem:[%s1 + $0xd0] sm:$0xff]
  %v46 = vld [vmem:[%s1 + $0xd8] sm:$0xff]
  %v47 = vld [vmem:[%s1 + $0xe0] sm:$0xff]
  %v48 = vld [vmem:[%s1 + $0xe8] sm:$0xff]
  %v49 = vld [vmem:[%s1 + $0xf0] sm:$0xff]
  %v50 = vld [vmem:[%s1 + $0xf8] sm:$0xff]
  %v51 = vld [vmem:[%s1 + $0x100] sm:$0xff]
  %v52 = vld [vmem:[%s1 + $0x108] sm:$0xff]
  %v53 = vld [vmem:[%s1 + $0x110] sm:$0xff]
  %v54 = vld [vmem:[%s1 + $0x118] sm:$0xff]
  %v55 = vld [vmem:[%s1 + $0x120] sm:$0xff]
  %v56 = vld [vmem:[%s1 + $0x128] sm:$0xff]
  %v57 = vld [vmem:[%s1 + $0x130] sm:$0xff]
  %v58 = vld [vmem:[%s1 + $0x138] sm:$0xff]
  %v59 = vld [vmem:[%s1 + $0x140] sm:$0xff]
  %v60 = vld [vmem:[%s1 + $0x148] sm:$0xff]
  %v61 = vld [vmem:[%s1 + $0x150] sm:$0xff]
  %v62 = vld [vmem:[%s1 + $0x158] sm:$0xff]
  %v63 = vld [vmem:[%s1 + $0x160] sm:$0xff]
  %v64 = vld [vmem:[%s1 + $0x168] sm:$0xff]
  %v65 = vld [vmem:[%s1 + $0x170] sm:$0xff]
  %v66 = vld [vmem:[%s1 + $0x178] sm:$0xff]
  %v67 = vld [vmem:[%s1 + $0x180] sm:$0xff]
  %v68 = vld [vmem:[%s1 + $0x188] sm:$0xff]
  %v69 = vld [vmem:[%s1 + $0x190] sm:$0xff]
  %v70 = vld [vmem:[%s1 + $0x198] sm:$0xff]
  %v71 = vld [vmem:[%s1 + $0x1a0] sm:$0xff]
  %v72 = vld [vmem:[%s1 + $0x1a8] sm:$0xff]
  %v73 = vld [vmem:[%s1 + $0x1b0] sm:$0xff]
  %v74 = vld [vmem:[%s1 + $0x1b8] sm:$0xff]
  %v75 = vld [vmem:[%s1 + $0x1c0] sm:$0xff]
  %v76 = vld [vmem:[%s1 + $0x1c8] sm:$0xff]
  %v77 = vld [vmem:[%s1 + $0x1d0] sm:$0xff]
  %v78 = vld [vmem:[%s1 + $0x1d8] sm:$0xff]
  %v79 = vld [vmem:[%s1 + $0x1e0] sm:$0xff]
  %v80 = vld [vmem:[%s1 + $0x1e8] sm:$0xff]
  %v81 = vld [vmem:[%s1 + $0x1f0] sm:$0xff]
  %v82 = vld [vmem:[%s1 + $0x1f8] sm:$0xff]
  %v83 = vld [vmem:[%s1 + $0x200] sm:$0xff]
  %v84 = vld [vmem:[%s1 + $0x208] sm:$0xff]
  %v85 = vld [vmem:[%s1 + $0x210] sm:$0xff]
  %v86 = vld [vmem:[%s1 + $0x218] sm:$0xff]
  %v87 = vld [vmem:[%s1 + $0x220] sm:$0xff]
  %v88 = vld [vmem:[%s1 + $0x228] sm:$0xff]
  %v89 = vld [vmem:[%s1 + $0x230] sm:$0xff]
  %v90 = vld [vmem:[%s1 + $0x238] sm:$0xff]
  %v91 = vld [vmem:[%s1 + $0x240] sm:$0xff]
  %v92 = vld [vmem:[%s1 + $0x248] sm:$0xff]
  %v93 = vld [vmem:[%s1 + $0x250] sm:$0xff]
  %v94 = vld [vmem:[%s1 + $0x258] sm:$0xff]
  %v95 = vld [vmem:[%s1 + $0x260] sm:$0xff]
  %v96 = vld [vmem:[%s1 + $0x268] sm:$0xff]
  %v97 = vld [vmem:[%s1 + $0x270] sm:$0xff]
  %v98 = vld [vmem:[%s1 + $0x278] sm:$0xff]
  %v99 = vld [vmem:[%s1 + $0x280] sm:$0xff]
  %v100 = vld [vmem:[%s1 + $0x288] sm:$0xff]
  %v101 = vld [vmem:[%s1 + $0x290] sm:$0xff]
  %v102 = vld [vmem:[%s1 + $0x298] sm:$0xff]
  %v103 = vld [vmem:[%s1 + $0x2a0] sm:$0xff]
  %v104 = vld [vmem:[%s1 + $0x2a8] sm:$0xff]
  %v105 = vld [vmem:[%s1 + $0x2b0] sm:$0xff]
  %v106 = vld [vmem:[%s1 + $0x2b8] sm:$0xff]
  %v107 = vld [vmem:[%s1 + $0x2c0] sm:$0xff]
  %v108 = vld [vmem:[%s1 + $0x2c8] sm:$0xff]
  %v109 = vld [vmem:[%s1 + $0x2d0] sm:$0xff]
  %v110 = vld [vmem:[%s1 + $0x2d8] sm:$0xff]
  %v111 = vld [vmem:[%s1 + $0x2e0] sm:$0xff]
  %v112 = vld [vmem:[%s1 + $0x2e8] sm:$0xff]
  %v113 = vld [vmem:[%s1 + $0x2f0] sm:$0xff]
  %v114 = vld [vmem:[%s1 + $0x2f8] sm:$0xff]
  %v115 = vld [vmem:[%s1 + $0x300] sm:$0xff]
  %v116 = vld [vmem:[%s1 + $0x308] sm:$0xff]
  %v117 = vld [vmem:[%s1 + $0x310] sm:$0xff]
  %v118 = vld [vmem:[%s1 + $0x318] sm:$0xff]
  %v119 = vld [vmem:[%s1 + $0x320] sm:$0xff]
  %v120 = vld [vmem:[%s1 + $0x328] sm:$0xff]
  %v121 = vld [vmem:[%s1 + $0x330] sm:$0xff]
  %v122 = vld [vmem:[%s1 + $0x338] sm:$0xff]
  %v123 = vld [vmem:[%s1 + $0x340] sm:$0xff]
  %v124 = vld [vmem:[%s1 + $0x348] sm:$0xff]
  %v125 = vld [vmem:[%s1 + $0x350] sm:$0xff]
  %v126 = vld [vmem:[%s1 + $0x358] sm:$0xff]
  %v127 = vld [vmem:[%s1 + $0x360] sm:$0xff]
  %v128 = vld [vmem:[%s1 + $0x368] sm:$0xff]
  %v129 = vld [vmem:[%s1 + $0x370] sm:$0xff]
  %v130 = vld [vmem:[%s1 + $0x378] sm:$0xff]
  %v131 = vld [vmem:[%s1 + $0x380] sm:$0xff]
  %v132 = vld [vmem:[%s1 + $0x388] sm:$0xff]
  %v133 = vld [vmem:[%s1 + $0x390] sm:$0xff]
  %v134 = vld [vmem:[%s1 + $0x398] sm:$0xff]
  %v135 = vld [vmem:[%s1 + $0x3a0] sm:$0xff]
  %v136 = vld [vmem:[%s1 + $0x3a8] sm:$0xff]
  %v137 = vld [vmem:[%s1 + $0x3b0] sm:$0xff]
  %v138 = vld [vmem:[%s1 + $0x3b8] sm:$0xff]
  %v139 = vld [vmem:[%s1 + $0x3c0] sm:$0xff]
  %v140 = vld [vmem:[%s1 + $0x3c8] sm:$0xff]
  %v141 = vld [vmem:[%s1 + $0x3d0] sm:$0xff]
  %v142 = vld [vmem:[%s1 + $0x3d8] sm:$0xff]
  %v143 = vld [vmem:[%s1 + $0x3e0] sm:$0xff]
  %v144 = vld [vmem:[%s1 + $0x3e8] sm:$0xff]
  %v145 = vld [vmem:[%s1 + $0x3f0] sm:$0xff]
  %v146 = vld [vmem:[%s1 + $0x3f8] sm:$0xff]
  %v147 = vld [vmem:[%s1 + $0x400] sm:$0xff]
  %v148 = vld [vmem:[%s1 + $0x408] sm:$0xff]
  %v149 = vld [vmem:[%s1 + $0x410] sm:$0xff]
  %v150 = vld [vmem:[%s1 + $0x418] sm:$0xff]
  %v151 = vld [vmem:[%s1 + $0x420] sm:$0xff]
  %v152 = vld [vmem:[%s1 + $0x428] sm:$0xff]
  %v153 = vld [vmem:[%s1 + $0x430] sm:$0xff]
  %v154 = vld [vmem:[%s1 + $0x438] sm:$0xff]
  %v155 = vld [vmem:[%s1 + $0x440] sm:$0xff]
  %v156 = vld [vmem:[%s1 + $0x448] sm:$0xff]
  %v157 = vld [vmem:[%s1 + $0x450] sm:$0xff]
  %v158 = vld [vmem:[%s1 + $0x458] sm:$0xff]
  %v159 = vld [vmem:[%s1 + $0x460] sm:$0xff]
  %v160 = vld [vmem:[%s1 + $0x468] sm:$0xff]
  %v161 = vld [vmem:[%s1 + $0x470] sm:$0xff]
  %v162 = vld [vmem:[%s1 + $0x478] sm:$0xff]
  %v163 = vld [vmem:[%s1 + $0x480] sm:$0xff]
  %v164 = vld [vmem:[%s1 + $0x488] sm:$0xff]
  %v165 = vld [vmem:[%s1 + $0x490] sm:$0xff]
  %v166 = vld [vmem:[%s1 + $0x498] sm:$0xff]
  %v167 = vld [vmem:[%s1 + $0x4a0] sm:$0xff]
  %v168 = vld [vmem:[%s1 + $0x4a8] sm:$0xff]
  %v169 = vld [vmem:[%s1 + $0x4b0] sm:$0xff]
  %v170 = vld [vmem:[%s1 + $0x4b8] sm:$0xff]
  %v171 = vld [vmem:[%s1 + $0x4c0] sm:$0xff]
  %v172 = vld [vmem:[%s1 + $0x4c8] sm:$0xff]
  %v173 = vld [vmem:[%s1 + $0x4d0] sm:$0xff]
  %v174 = vld [vmem:[%s1 + $0x4d8] sm:$0xff]
  %v175 = vld [vmem:[%s1 + $0x4e0] sm:$0xff]
  %v176 = vld [vmem:[%s1 + $0x4e8] sm:$0xff]
  %v177 = vld [vmem:[%s1 + $0x4f0] sm:$0xff]
  %v178 = vld [vmem:[%s1 + $0x4f8] sm:$0xff]
  %v179 = vld [vmem:[%s1 + $0x500] sm:$0xff]
  %v180 = vld [vmem:[%s1 + $0x508] sm:$0xff]
  %v181 = vld [vmem:[%s1 + $0x510] sm:$0xff]
  %v182 = vld [vmem:[%s1 + $0x518] sm:$0xff]
  %v183 = vld [vmem:[%s1 + $0x520] sm:$0xff]
  %v184 = vld [vmem:[%s1 + $0x528] sm:$0xff]
  %v185 = vld [vmem:[%s1 + $0x530] sm:$0xff]
  %v186 = vld [vmem:[%s1 + $0x538] sm:$0xff]
  %v187 = vld [vmem:[%s1 + $0x540] sm:$0xff]
  %v188 = vld [vmem:[%s1 + $0x548] sm:$0xff]
  %v189 = vld [vmem:[%s1 + $0x550] sm:$0xff]
  %v190 = vld [vmem:[%s1 + $0x558] sm:$0xff]
  %v191 = vld [vmem:[%s1 + $0x560] sm:$0xff]
  %v192 = vld [vmem:[%s1 + $0x568] sm:$0xff]
  %v193 = vld [vmem:[%s1 + $0x570] sm:$0xff]
  %v194 = vld [vmem:[%s1 + $0x578] sm:$0xff]
  %v195 = vld [vmem:[%s1 + $0x580] sm:$0xff]
  %v196 = vld [vmem:[%s1 + $0x588] sm:$0xff]
  %v197 = vld [vmem:[%s1 + $0x590] sm:$0xff]
  %v198 = vld [vmem:[%s1 + $0x598] sm:$0xff]
  %v199 = vld [vmem:[%s1 + $0x5a0] sm:$0xff]
  %v200 = vld [vmem:[%s1 + $0x5a8] sm:$0xff]
  %v201 = vld [vmem:[%s1 + $0x5b0] sm:$0xff]
  %v202 = vld [vmem:[%s1 + $0x5b8] sm:$0xff]
  %v203 = vld [vmem:[%s1 + $0x5c0] sm:$0xff]
  %v204 = vld [vmem:[%s1 + $0x5c8] sm:$0xff]
  %v205 = vld [vmem:[%s1 + $0x5d0] sm:$0xff]
  %v206 = vld [vmem:[%s1 + $0x5d8] sm:$0xff]
  %v207 = vld [vmem:[%s1 + $0x5e0] sm:$0xff]
  %v208 = vld [vmem:[%s1 + $0x5e8] sm:$0xff]
  %v209 = vld [vmem:[%s1 + $0x5f0] sm:$0xff]
  %v210 = vld [vmem:[%s1 + $0x5f8] sm:$0xff]
  %v211 = vld [vmem:[%s1 + $0x600] sm:$0xff]
  %v212 = vld [vmem:[%s1 + $0x608] sm:$0xff]
  %v213 = vld [vmem:[%s1 + $0x610] sm:$0xff]
  %v214 = vld [vmem:[%s1 + $0x618] sm:$0xff]
  %v215 = vld [vmem:[%s1 + $0x620] sm:$0xff]
  %v216 = vld [vmem:[%s1 + $0x628] sm:$0xff]
  %v217 = vld [vmem:[%s1 + $0x630] sm:$0xff]
  %v218 = vld [vmem:[%s1 + $0x638] sm:$0xff]
  %v219 = vld [vmem:[%s1 + $0x640] sm:$0xff]
  %v220 = vld [vmem:[%s1 + $0x648] sm:$0xff]
  %v221 = vld [vmem:[%s1 + $0x650] sm:$0xff]
  %v222 = vld [vmem:[%s1 + $0x658] sm:$0xff]
  %v223 = vld [vmem:[%s1 + $0x660] sm:$0xff]
  %v224 = vld [vmem:[%s1 + $0x668] sm:$0xff]
  %v225 = vld [vmem:[%s1 + $0x670] sm:$0xff]
  %v226 = vld [vmem:[%s1 + $0x678] sm:$0xff]
  %v227 = vld [vmem:[%s1 + $0x680] sm:$0xff]
  %v228 = vld [vmem:[%s1 + $0x688] sm:$0xff]
  %v229 = vld [vmem:[%s1 + $0x690] sm:$0xff]
  %v230 = vld [vmem:[%s1 + $0x698] sm:$0xff]
  %v231 = vld [vmem:[%s1 + $0x6a0] sm:$0xff]
  %v232 = vld [vmem:[%s1 + $0x6a8] sm:$0xff]
  %v233 = vld [vmem:[%s1 + $0x6b0] sm:$0xff]
  %v234 = vld [vmem:[%s1 + $0x6b8] sm:$0xff]
  %v235 = vld [vmem:[%s1 + $0x6c0] sm:$0xff]
  %v236 = vld [vmem:[%s1 + $0x6c8] sm:$0xff]
  %v237 = vld [vmem:[%s1 + $0x6d0] sm:$0xff]
  %v238 = vld [vmem:[%s1 + $0x6d8] sm:$0xff]
  %v239 = vld [vmem:[%s1 + $0x6e0] sm:$0xff]
  %v240 = vld [vmem:[%s1 + $0x6e8] sm:$0xff]
  %v241 = vld [vmem:[%s1 + $0x6f0] sm:$0xff]
  %v242 = vld [vmem:[%s1 + $0x6f8] sm:$0xff]
  %v243 = vld [vmem:[%s1 + $0x700] sm:$0xff]
  %v244 = vld [vmem:[%s1 + $0x708] sm:$0xff]
  %v245 = vld [vmem:[%s1 + $0x710] sm:$0xff]
  %v246 = vld [vmem:[%s1 + $0x718] sm:$0xff]
  %v247 = vld [vmem:[%s1 + $0x720] sm:$0xff]
  %v248 = vld [vmem:[%s1 + $0x728] sm:$0xff]
  %v249 = vld [vmem:[%s1 + $0x730] sm:$0xff]
  %v250 = vld [vmem:[%s1 + $0x738] sm:$0xff]
  %v251 = vld [vmem:[%s1 + $0x740] sm:$0xff]
  %v252 = vld [vmem:[%s1 + $0x748] sm:$0xff]
  %v253 = vld [vmem:[%s1 + $0x750] sm:$0xff]
  %v254 = vld [vmem:[%s1 + $0x758] sm:$0xff]
  %v255 = vld [vmem:[%s1 + $0x760] sm:$0xff]
  %v256 = vld [vmem:[%s1 + $0x768] sm:$0xff]
  %v257 = vld [vmem:[%s1 + $0x770] sm:$0xff]
  %v258 = vld [vmem:[%s1 + $0x778] sm:$0xff]
  %v259 = vld [vmem:[%s1 + $0x780] sm:$0xff]
  %v260 = vld [vmem:[%s1 + $0x788] sm:$0xff]
  %v261 = vld [vmem:[%s1 + $0x790] sm:$0xff]
  %v262 = vld [vmem:[%s1 + $0x798] sm:$0xff]
  %v263 = vld [vmem:[%s1 + $0x7a0] sm:$0xff]
  %v264 = vld [vmem:[%s1 + $0x7a8] sm:$0xff]
  %v265 = vld [vmem:[%s1 + $0x7b0] sm:$0xff]
  %v266 = vld [vmem:[%s1 + $0x7b8] sm:$0xff]
  %v267 = vld [vmem:[%s1 + $0x7c0] sm:$0xff]
  %v268 = vld [vmem:[%s1 + $0x7c8] sm:$0xff]
  %v269 = vld [vmem:[%s1 + $0x7d0] sm:$0xff]
  %v270 = vld [vmem:[%s1 + $0x7d8] sm:$0xff]
  %v271 = vld [vmem:[%s1 + $0x7e0] sm:$0xff]
  %v272 = vld [vmem:[%s1 + $0x7e8] sm:$0xff]
  %v273 = vld [vmem:[%s1 + $0x7f0] sm:$0xff]
  %v274 = vld [vmem:[%s1 + $0x7f8] sm:$0xff]
  %v275 = vld [vmem:[%s1 + $0x800] sm:$0xff]
  %v276 = vld [vmem:[%s1 + $0x808] sm:$0xff]
  %v277 = vld [vmem:[%s1 + $0x810] sm:$0xff]
  %v278 = vld [vmem:[%s1 + $0x818] sm:$0xff]
  %v279 = vld [vmem:[%s1 + $0x820] sm:$0xff]
  %v280 = vld [vmem:[%s1 + $0x828] sm:$0xff]
  %v281 = vld [vmem:[%s1 + $0x830] sm:$0xff]
  %v282 = vld [vmem:[%s1 + $0x838] sm:$0xff]
  %v283 = vld [vmem:[%s1 + $0x840] sm:$0xff]
  %v284 = vld [vmem:[%s1 + $0x848] sm:$0xff]
  %v285 = vld [vmem:[%s1 + $0x850] sm:$0xff]
  %v286 = vld [vmem:[%s1 + $0x858] sm:$0xff]
  %v287 = vld [vmem:[%s1 + $0x860] sm:$0xff]
  %v288 = vld [vmem:[%s1 + $0x868] sm:$0xff]
  %v289 = vld [vmem:[%s1 + $0x870] sm:$0xff]
  %v290 = vld [vmem:[%s1 + $0x878] sm:$0xff]
  %v291 = vld [vmem:[%s1 + $0x880] sm:$0xff]
  %v292 = vld [vmem:[%s1 + $0x888] sm:$0xff]
  %v293 = vld [vmem:[%s1 + $0x890] sm:$0xff]
  %v294 = vld [vmem:[%s1 + $0x898] sm:$0xff]
  %v295 = vld [vmem:[%s1 + $0x8a0] sm:$0xff]
  %v296 = vld [vmem:[%s1 + $0x8a8] sm:$0xff]
  %v297 = vld [vmem:[%s1 + $0x8b0] sm:$0xff]
  %v298 = vld [vmem:[%s1 + $0x8b8] sm:$0xff]
  %v299 = vld [vmem:[%s1 + $0x8c0] sm:$0xff]
  %v300 = vld [vmem:[%s1 + $0x8c8] sm:$0xff]
  %v301 = vld [vmem:[%s1 + $0x8d0] sm:$0xff]
  %v302 = vld [vmem:[%s1 + $0x8d8] sm:$0xff]
  %v303 = vld [vmem:[%s1 + $0x8e0] sm:$0xff]
  %v304 = vld [vmem:[%s1 + $0x8e8] sm:$0xff]
  %v305 = vld [vmem:[%s1 + $0x8f0] sm:$0xff]
  %v306 = vld [vmem:[%s1 + $0x8f8] sm:$0xff]
  %v307 = vld [vmem:[%s1 + $0x900] sm:$0xff]
  %v308 = vld [vmem:[%s1 + $0x908] sm:$0xff]
  %v309 = vld [vmem:[%s1 + $0x910] sm:$0xff]
  %v310 = vld [vmem:[%s1 + $0x918] sm:$0xff]
  %v311 = vld [vmem:[%s1 + $0x920] sm:$0xff]
  %v312 = vld [vmem:[%s1 + $0x928] sm:$0xff]
  %v313 = vld [vmem:[%s1 + $0x930] sm:$0xff]
  %v314 = vld [vmem:[%s1 + $0x938] sm:$0xff]
  %v315 = vld [vmem:[%s1 + $0x940] sm:$0xff]
  %v316 = vld [vmem:[%s1 + $0x948] sm:$0xff]
  %v317 = vld [vmem:[%s1 + $0x950] sm:$0xff]
  %v318 = vld [vmem:[%s1 + $0x958] sm:$0xff]
  %v319 = vld [vmem:[%s1 + $0x960] sm:$0xff]
  %v320 = vld [vmem:[%s1 + $0x968] sm:$0xff]
  %v321 = vld [vmem:[%s1 + $0x970] sm:$0xff]
  %v322 = vld [vmem:[%s1 + $0x978] sm:$0xff]
  %v323 = vld [vmem:[%s1 + $0x980] sm:$0xff]
  %v324 = vld [vmem:[%s1 + $0x988] sm:$0xff]
  %v325 = vld [vmem:[%s1 + $0x990] sm:$0xff]
  %v326 = vld [vmem:[%s1 + $0x998] sm:$0xff]
  %v327 = vld [vmem:[%s1 + $0x9a0] sm:$0xff]
  %v328 = vld [vmem:[%s1 + $0x9a8] sm:$0xff]
  %v329 = vld [vmem:[%s1 + $0x9b0] sm:$0xff]
  %v330 = vld [vmem:[%s1 + $0x9b8] sm:$0xff]
  %v331 = vld [vmem:[%s1 + $0x9c0] sm:$0xff]
  %v332 = vld [vmem:[%s1 + $0x9c8] sm:$0xff]
  %v333 = vld [vmem:[%s1 + $0x9d0] sm:$0xff]
  %v334 = vld [vmem:[%s1 + $0x9d8] sm:$0xff]
  %v335 = vld [vmem:[%s1 + $0x9e0] sm:$0xff]
  %v336 = vld [vmem:[%s1 + $0x9e8] sm:$0xff]
  %v337 = vld [vmem:[%s1 + $0x9f0] sm:$0xff]
  %v338 = vld [vmem:[%s1 + $0x9f8] sm:$0xff]
  %v339 = vld [vmem:[%s1 + $0xa00] sm:$0xff]
  %v340 = vld [vmem:[%s1 + $0xa08] sm:$0xff]
  %v341 = vld [vmem:[%s1 + $0xa10] sm:$0xff]
  %v342 = vld [vmem:[%s1 + $0xa18] sm:$0xff]
  %v343 = vld [vmem:[%s1 + $0xa20] sm:$0xff]
  %v344 = vld [vmem:[%s1 + $0xa28] sm:$0xff]
  %v345 = vld [vmem:[%s1 + $0xa30] sm:$0xff]
  %v346 = vld [vmem:[%s1 + $0xa38] sm:$0xff]
  %v347 = vld [vmem:[%s1 + $0xa40] sm:$0xff]
  %v348 = vld [vmem:[%s1 + $0xa48] sm:$0xff]
  %v349 = vld [vmem:[%s1 + $0xa50] sm:$0xff]
  %v350 = vld [vmem:[%s1 + $0xa58] sm:$0xff]
  %v351 = vld [vmem:[%s1 + $0xa60] sm:$0xff]
  %v352 = vld [vmem:[%s1 + $0xa68] sm:$0xff]
  %v353 = vld [vmem:[%s1 + $0xa70] sm:$0xff]
  %v354 = vld [vmem:[%s1 + $0xa78] sm:$0xff]
  %v355 = vld [vmem:[%s1 + $0xa80] sm:$0xff]
  %v356 = vld [vmem:[%s1 + $0xa88] sm:$0xff]
  %v357 = vld [vmem:[%s1 + $0xa90] sm:$0xff]
  %v358 = vld [vmem:[%s1 + $0xa98] sm:$0xff]
  %v359 = vld [vmem:[%s1 + $0xaa0] sm:$0xff]
  %v360 = vld [vmem:[%s1 + $0xaa8] sm:$0xff]
  %v361 = vld [vmem:[%s1 + $0xab0] sm:$0xff]
  %v362 = vld [vmem:[%s1 + $0xab8] sm:$0xff]
  %v363 = vld [vmem:[%s1 + $0xac0] sm:$0xff]
  %v364 = vld [vmem:[%s1 + $0xac8] sm:$0xff]
  %v365 = vld [vmem:[%s1 + $0xad0] sm:$0xff]
  %v366 = vld [vmem:[%s1 + $0xad8] sm:$0xff]
  %v367 = vld [vmem:[%s1 + $0xae0] sm:$0xff]
  %v368 = vld [vmem:[%s1 + $0xae8] sm:$0xff]
  %v369 = vld [vmem:[%s1 + $0xaf0] sm:$0xff]
  %v370 = vld [vmem:[%s1 + $0xaf8] sm:$0xff]
  %v371 = vld [vmem:[%s1 + $0xb00] sm:$0xff]
  %v372 = vld [vmem:[%s1 + $0xb08] sm:$0xff]
  %v373 = vld [vmem:[%s1 + $0xb10] sm:$0xff]
  %v374 = vld [vmem:[%s1 + $0xb18] sm:$0xff]
  %v375 = vld [vmem:[%s1 + $0xb20] sm:$0xff]
  %v376 = vld [vmem:[%s1 + $0xb28] sm:$0xff]
  %v377 = vld [vmem:[%s1 + $0xb30] sm:$0xff]
  %v378 = vld [vmem:[%s1 + $0xb38] sm:$0xff]
  %v379 = vld [vmem:[%s1 + $0xb40] sm:$0xff]
  %v380 = vld [vmem:[%s1 + $0xb48] sm:$0xff]
  %v381 = vld [vmem:[%s1 + $0xb50] sm:$0xff]
  %v382 = vld [vmem:[%s1 + $0xb58] sm:$0xff]
  %v383 = vld [vmem:[%s1 + $0xb60] sm:$0xff]
  %v384 = vld [vmem:[%s1 + $0xb68] sm:$0xff]
  %v385 = vld [vmem:[%s1 + $0xb70] sm:$0xff]
  %v386 = vld [vmem:[%s1 + $0xb78] sm:$0xff]
  %v387 = vld [vmem:[%s1 + $0xb80] sm:$0xff]
  %v388 = vld [vmem:[%s1 + $0xb88] sm:$0xff]
  %v389 = vld [vmem:[%s1 + $0xb90] sm:$0xff]
  %v390 = vld [vmem:[%s1 + $0xb98] sm:$0xff]
  %v391 = vld [vmem:[%s1 + $0xba0] sm:$0xff]
  %v392 = vld [vmem:[%s1 + $0xba8] sm:$0xff]
  %v393 = vld [vmem:[%s1 + $0xbb0] sm:$0xff]
  %v394 = vld [vmem:[%s1 + $0xbb8] sm:$0xff]
  %v395 = vld [vmem:[%s1 + $0xbc0] sm:$0xff]
  %v396 = vld [vmem:[%s1 + $0xbc8] sm:$0xff]
  %v397 = vld [vmem:[%s1 + $0xbd0] sm:$0xff]
  %v398 = vld [vmem:[%s1 + $0xbd8] sm:$0xff]
  %v399 = vld [vmem:[%s1 + $0xbe0] sm:$0xff]
  %v400 = vld [vmem:[%s1 + $0xbe8] sm:$0xff]
  %v401 = vld [vmem:[%s1 + $0xbf0] sm:$0xff]
  %v402 = vld [vmem:[%s1 + $0xbf8] sm:$0xff]
  %v403 = vld [vmem:[%s1 + $0xc00] sm:$0xff]
  %v404 = vld [vmem:[%s1 + $0xc08] sm:$0xff]
  %v405 = vld [vmem:[%s1 + $0xc10] sm:$0xff]
  %v406 = vld [vmem:[%s1 + $0xc18] sm:$0xff]
  %v407 = vld [vmem:[%s1 + $0xc20] sm:$0xff]
  %v408 = vld [vmem:[%s1 + $0xc28] sm:$0xff]
  %v409 = vld [vmem:[%s1 + $0xc30] sm:$0xff]
  %v410 = vld [vmem:[%s1 + $0xc38] sm:$0xff]
  %v411 = vld [vmem:[%s1 + $0xc40] sm:$0xff]
  %v412 = vld [vmem:[%s1 + $0xc48] sm:$0xff]
  %v413 = vld [vmem:[%s1 + $0xc50] sm:$0xff]
  %v414 = vld [vmem:[%s1 + $0xc58] sm:$0xff]
  %v415 = vld [vmem:[%s1 + $0xc60] sm:$0xff]
  %v416 = vld [vmem:[%s1 + $0xc68] sm:$0xff]
  %v417 = vld [vmem:[%s1 + $0xc70] sm:$0xff]
  %v418 = vld [vmem:[%s1 + $0xc78] sm:$0xff]
  %v419 = vld [vmem:[%s1 + $0xc80] sm:$0xff]
  %v420 = vld [vmem:[%s1 + $0xc88] sm:$0xff]
  %v421 = vld [vmem:[%s1 + $0xc90] sm:$0xff]
  %v422 = vld [vmem:[%s1 + $0xc98] sm:$0xff]
  %v423 = vld [vmem:[%s1 + $0xca0] sm:$0xff]
  %v424 = vld [vmem:[%s1 + $0xca8] sm:$0xff]
  %v425 = vld [vmem:[%s1 + $0xcb0] sm:$0xff]
  %v426 = vld [vmem:[%s1 + $0xcb8] sm:$0xff]
  %v427 = vld [vmem:[%s1 + $0xcc0] sm:$0xff]
  %v428 = vld [vmem:[%s1 + $0xcc8] sm:$0xff]
  %v429 = vld [vmem:[%s1 + $0xcd0] sm:$0xff]
  %v430 = vld [vmem:[%s1 + $0xcd8] sm:$0xff]
  %v431 = vld [vmem:[%s1 + $0xce0] sm:$0xff]
  %v432 = vld [vmem:[%s1 + $0xce8] sm:$0xff]
  %v433 = vld [vmem:[%s1 + $0xcf0] sm:$0xff]
  %v434 = vld [vmem:[%s1 + $0xcf8] sm:$0xff]
  %v435 = vld [vmem:[%s1 + $0xd00] sm:$0xff]
  %v436 = vld [vmem:[%s1 + $0xd08] sm:$0xff]
  %v437 = vld [vmem:[%s1 + $0xd10] sm:$0xff]
  %v438 = vld [vmem:[%s1 + $0xd18] sm:$0xff]
  %v439 = vld [vmem:[%s1 + $0xd20] sm:$0xff]
  %v440 = vld [vmem:[%s1 + $0xd28] sm:$0xff]
  %v441 = vld [vmem:[%s1 + $0xd30] sm:$0xff]
  %v442 = vld [vmem:[%s1 + $0xd38] sm:$0xff]
  %v443 = vld [vmem:[%s1 + $0xd40] sm:$0xff]
  %v444 = vld [vmem:[%s1 + $0xd48] sm:$0xff]
  %v445 = vld [vmem:[%s1 + $0xd50] sm:$0xff]
  %v446 = vld [vmem:[%s1 + $0xd58] sm:$0xff]
  %v447 = vld [vmem:[%s1 + $0xd60] sm:$0xff]
  %v448 = vld [vmem:[%s1 + $0xd68] sm:$0xff]
  %v449 = vld [vmem:[%s1 + $0xd70] sm:$0xff]
  %v450 = vld [vmem:[%s1 + $0xd78] sm:$0xff]
  %v451 = vld [vmem:[%s1 + $0xd80] sm:$0xff]
  %v452 = vld [vmem:[%s1 + $0xd88] sm:$0xff]
  %v453 = vld [vmem:[%s1 + $0xd90] sm:$0xff]
  %v454 = vld [vmem:[%s1 + $0xd98] sm:$0xff]
  %v455 = vld [vmem:[%s1 + $0xda0] sm:$0xff]
  %v456 = vld [vmem:[%s1 + $0xda8] sm:$0xff]
  %v457 = vld [vmem:[%s1 + $0xdb0] sm:$0xff]
  %v458 = vld [vmem:[%s1 + $0xdb8] sm:$0xff]
  %v459 = vld [vmem:[%s1 + $0xdc0] sm:$0xff]
  %v460 = vld [vmem:[%s1 + $0xdc8] sm:$0xff]
  %v461 = vld [vmem:[%s1 + $0xdd0] sm:$0xff]
  %v462 = vld [vmem:[%s1 + $0xdd8] sm:$0xff]
  %v463 = vld [vmem:[%s1 + $0xde0] sm:$0xff]
  %v464 = vld [vmem:[%s1 + $0xde8] sm:$0xff]
  %v465 = vld [vmem:[%s1 + $0xdf0] sm:$0xff]
  %v466 = vld [vmem:[%s1 + $0xdf8] sm:$0xff]
  %v467 = vld [vmem:[%s1 + $0xe00] sm:$0xff]
  %v468 = vld [vmem:[%s1 + $0xe08] sm:$0xff]
  %v469 = vld [vmem:[%s1 + $0xe10] sm:$0xff]
  %v470 = vld [vmem:[%s1 + $0xe18] sm:$0xff]
  %v471 = vld [vmem:[%s1 + $0xe20] sm:$0xff]
  %v472 = vld [vmem:[%s1 + $0xe28] sm:$0xff]
  %v473 = vld [vmem:[%s1 + $0xe30] sm:$0xff]
  %v474 = vld [vmem:[%s1 + $0xe38] sm:$0xff]
  %v475 = vld [vmem:[%s1 + $0xe40] sm:$0xff]
  %v476 = vld [vmem:[%s1 + $0xe48] sm:$0xff]
  %v477 = vld [vmem:[%s1 + $0xe50] sm:$0xff]
  %v478 = vld [vmem:[%s1 + $0xe58] sm:$0xff]
  %v479 = vld [vmem:[%s1 + $0xe60] sm:$0xff]
  %v480 = vld [vmem:[%s1 + $0xe68] sm:$0xff]
  %v481 = vld [vmem:[%s1 + $0xe70] sm:$0xff]
  %v482 = vld [vmem:[%s1 + $0xe78] sm:$0xff]
  %v483 = vld [vmem:[%s1 + $0xe80] sm:$0xff]
  %v484 = vld [vmem:[%s1 + $0xe88] sm:$0xff]
  %v485 = vld [vmem:[%s1 + $0xe90] sm:$0xff]
  %v486 = vld [vmem:[%s1 + $0xe98] sm:$0xff]
  %v487 = vld [vmem:[%s1 + $0xea0] sm:$0xff]
  %v488 = vld [vmem:[%s1 + $0xea8] sm:$0xff]
  %v489 = vld [vmem:[%s1 + $0xeb0] sm:$0xff]
  %v490 = vld [vmem:[%s1 + $0xeb8] sm:$0xff]
  %v491 = vld [vmem:[%s1 + $0xec0] sm:$0xff]
  %v492 = vld [vmem:[%s1 + $0xec8] sm:$0xff]
  %v493 = vld [vmem:[%s1 + $0xed0] sm:$0xff]
  %v494 = vld [vmem:[%s1 + $0xed8] sm:$0xff]
  %v495 = vld [vmem:[%s1 + $0xee0] sm:$0xff]
  %v496 = vld [vmem:[%s1 + $0xee8] sm:$0xff]
  %v497 = vld [vmem:[%s1 + $0xef0] sm:$0xff]
  %v498 = vld [vmem:[%s1 + $0xef8] sm:$0xff]
  %v499 = vld [vmem:[%s1 + $0xf00] sm:$0xff]
  %v500 = vld [vmem:[%s1 + $0xf08] sm:$0xff]
  %v501 = vld [vmem:[%s1 + $0xf10] sm:$0xff]
  %v502 = vld [vmem:[%s1 + $0xf18] sm:$0xff]
  %v503 = vld [vmem:[%s1 + $0xf20] sm:$0xff]
  %v504 = vld [vmem:[%s1 + $0xf28] sm:$0xff]
  %v505 = vld [vmem:[%s1 + $0xf30] sm:$0xff]
  %v506 = vld [vmem:[%s1 + $0xf38] sm:$0xff]
  %v507 = vld [vmem:[%s1 + $0xf40] sm:$0xff]
  %v508 = vld [vmem:[%s1 + $0xf48] sm:$0xff]
  %v509 = vld [vmem:[%s1 + $0xf50] sm:$0xff]
  %v510 = vld [vmem:[%s1 + $0xf58] sm:$0xff]
  %v511 = vld [vmem:[%s1 + $0xf60] sm:$0xff]
  %v512 = vld [vmem:[%s1 + $0xf68] sm:$0xff]
  %v513 = vld [vmem:[%s1 + $0xf70] sm:$0xff]
  %v514 = vld [vmem:[%s1 + $0xf78] sm:$0xff]
  %v515 = vld [vmem:[%s1 + $0xf80] sm:$0xff]
  %v516 = vld [vmem:[%s1 + $0xf88] sm:$0xff]
  %v517 = vld [vmem:[%s1 + $0xf90] sm:$0xff]
  %v518 = vld [vmem:[%s1 + $0xf98] sm:$0xff]
  %v519 = vld [vmem:[%s1 + $0xfa0] sm:$0xff]
  %v520 = vld [vmem:[%s1 + $0xfa8] sm:$0xff]
  %v521 = vld [vmem:[%s1 + $0xfb0] sm:$0xff]
  %v522 = vld [vmem:[%s1 + $0xfb8] sm:$0xff]
  %v523 = vld [vmem:[%s1 + $0xfc0] sm:$0xff]
  %v524 = vld [vmem:[%s1 + $0xfc8] sm:$0xff]
  %v525 = vld [vmem:[%s1 + $0xfd0] sm:$0xff]
  %v526 = vld [vmem:[%s1 + $0xfd8] sm:$0xff]
  %v527 = vld [vmem:[%s1 + $0xfe0] sm:$0xff]
  %v528 = vld [vmem:[%s1 + $0xfe8] sm:$0xff]
  %v529 = vld [vmem:[%s1 + $0xff0] sm:$0xff]
  %v530 = vld [vmem:[%s1 + $0xff8] sm:$0xff]
  %v531 = vld [vmem:[%s1 + $0x1000] sm:$0xff]
  %v532 = vld [vmem:[%s1 + $0x1008] sm:$0xff]
  %v533 = vld [vmem:[%s1 + $0x1010] sm:$0xff]
  %v534 = vld [vmem:[%s1 + $0x1018] sm:$0xff]
  %v535 = vld [vmem:[%s1 + $0x1020] sm:$0xff]
  %v536 = vld [vmem:[%s1 + $0x1028] sm:$0xff]
  %v537 = vld [vmem:[%s1 + $0x1030] sm:$0xff]
  %v538 = vld [vmem:[%s1 + $0x1038] sm:$0xff]
  %v539 = vld [vmem:[%s1 + $0x1040] sm:$0xff]
  %v540 = vld [vmem:[%s1 + $0x1048] sm:$0xff]
  %v541 = vld [vmem:[%s1 + $0x1050] sm:$0xff]
  %v542 = vld [vmem:[%s1 + $0x1058] sm:$0xff]
  %v543 = vld [vmem:[%s1 + $0x1060] sm:$0xff]
  %v544 = vld [vmem:[%s1 + $0x1068] sm:$0xff]
  %v545 = vld [vmem:[%s1 + $0x1070] sm:$0xff]
  %v546 = vld [vmem:[%s1 + $0x1078] sm:$0xff]
  %v547 = vld [vmem:[%s1 + $0x1080] sm:$0xff]
  %v548 = vld [vmem:[%s1 + $0x1088] sm:$0xff]
  %v549 = vld [vmem:[%s1 + $0x1090] sm:$0xff]
  %v550 = vld [vmem:[%s1 + $0x1098] sm:$0xff]
  %v551 = vld [vmem:[%s1 + $0x10a0] sm:$0xff]
  %v552 = vld [vmem:[%s1 + $0x10a8] sm:$0xff]
  %v553 = vld [vmem:[%s1 + $0x10b0] sm:$0xff]
  %v554 = vld [vmem:[%s1 + $0x10b8] sm:$0xff]
  %v555 = vld [vmem:[%s1 + $0x10c0] sm:$0xff]
  %v556 = vld [vmem:[%s1 + $0x10c8] sm:$0xff]
  %v557 = vld [vmem:[%s1 + $0x10d0] sm:$0xff]
  %v558 = vld [vmem:[%s1 + $0x10d8] sm:$0xff]
  %v559 = vld [vmem:[%s1 + $0x10e0] sm:$0xff]
  %v560 = vld [vmem:[%s1 + $0x10e8] sm:$0xff]
  %v561 = vld [vmem:[%s1 + $0x10f0] sm:$0xff]
  %v562 = vld [vmem:[%s1 + $0x10f8] sm:$0xff]
  %v563 = vld [vmem:[%s1 + $0x1100] sm:$0xff]
  %v564 = vld [vmem:[%s1 + $0x1108] sm:$0xff]
  %v565 = vld [vmem:[%s1 + $0x1110] sm:$0xff]
  %v566 = vld [vmem:[%s1 + $0x1118] sm:$0xff]
  %v567 = vld [vmem:[%s1 + $0x1120] sm:$0xff]
  %v568 = vld [vmem:[%s1 + $0x1128] sm:$0xff]
  %v569 = vld [vmem:[%s1 + $0x1130] sm:$0xff]
  %v570 = vld [vmem:[%s1 + $0x1138] sm:$0xff]
  %v571 = vld [vmem:[%s1 + $0x1140] sm:$0xff]
  %v572 = vld [vmem:[%s1 + $0x1148] sm:$0xff]
  %v573 = vld [vmem:[%s1 + $0x1150] sm:$0xff]
  %v574 = vld [vmem:[%s1 + $0x1158] sm:$0xff]
  %v575 = vld [vmem:[%s1 + $0x1160] sm:$0xff]
  %v576 = vld [vmem:[%s1 + $0x1168] sm:$0xff]
  %v577 = vld [vmem:[%s1 + $0x1170] sm:$0xff]
  %v578 = vld [vmem:[%s1 + $0x1178] sm:$0xff]
  %v579 = vld [vmem:[%s1 + $0x1180] sm:$0xff]
  %v580 = vld [vmem:[%s1 + $0x1188] sm:$0xff]
  %v581 = vld [vmem:[%s1 + $0x1190] sm:$0xff]
  %v582 = vld [vmem:[%s1 + $0x1198] sm:$0xff]
  %v583 = vld [vmem:[%s1 + $0x11a0] sm:$0xff]
  %v584 = vld [vmem:[%s1 + $0x11a8] sm:$0xff]
  %v585 = vld [vmem:[%s1 + $0x11b0] sm:$0xff]
  %v586 = vld [vmem:[%s1 + $0x11b8] sm:$0xff]
  %v587 = vld [vmem:[%s1 + $0x11c0] sm:$0xff]
  %v588 = vld [vmem:[%s1 + $0x11c8] sm:$0xff]
  %v589 = vld [vmem:[%s1 + $0x11d0] sm:$0xff]
  %v590 = vld [vmem:[%s1 + $0x11d8] sm:$0xff]
  %v591 = vld [vmem:[%s1 + $0x11e0] sm:$0xff]
  %v592 = vld [vmem:[%s1 + $0x11e8] sm:$0xff]
  %v593 = vld [vmem:[%s1 + $0x11f0] sm:$0xff]
  %v594 = vld [vmem:[%s1 + $0x11f8] sm:$0xff]
  %v595 = vld [vmem:[%s1 + $0x1200] sm:$0xff]
  %v596 = vld [vmem:[%s1 + $0x1208] sm:$0xff]
  %v597 = vld [vmem:[%s1 + $0x1210] sm:$0xff]
  %v598 = vld [vmem:[%s1 + $0x1218] sm:$0xff]
  %v599 = vld [vmem:[%s1 + $0x1220] sm:$0xff]
  %v600 = vld [vmem:[%s1 + $0x1228] sm:$0xff]
  %v601 = vld [vmem:[%s1 + $0x1230] sm:$0xff]
  %v602 = vld [vmem:[%s1 + $0x1238] sm:$0xff]
  %v603 = vld [vmem:[%s1 + $0x1240] sm:$0xff]
  %v604 = vld [vmem:[%s1 + $0x1248] sm:$0xff]
  %v605 = vld [vmem:[%s1 + $0x1250] sm:$0xff]
  %v606 = vld [vmem:[%s1 + $0x1258] sm:$0xff]
  %v607 = vld [vmem:[%s1 + $0x1260] sm:$0xff]
  %v608 = vld [vmem:[%s1 + $0x1268] sm:$0xff]
  %v609 = vld [vmem:[%s1 + $0x1270] sm:$0xff]
  %v610 = vld [vmem:[%s1 + $0x1278] sm:$0xff]
  %v611 = vld [vmem:[%s1 + $0x1280] sm:$0xff]
  %v612 = vld [vmem:[%s1 + $0x1288] sm:$0xff]
  %v613 = vld [vmem:[%s1 + $0x1290] sm:$0xff]
  %v614 = vld [vmem:[%s1 + $0x1298] sm:$0xff]
  %v615 = vld [vmem:[%s1 + $0x12a0] sm:$0xff]
  %v616 = vld [vmem:[%s1 + $0x12a8] sm:$0xff]
  %v617 = vld [vmem:[%s1 + $0x12b0] sm:$0xff]
  %v618 = vld [vmem:[%s1 + $0x12b8] sm:$0xff]
  %v619 = vld [vmem:[%s1 + $0x12c0] sm:$0xff]
  %v620 = vld [vmem:[%s1 + $0x12c8] sm:$0xff]
  %v621 = vld [vmem:[%s1 + $0x12d0] sm:$0xff]
  %v622 = vld [vmem:[%s1 + $0x12d8] sm:$0xff]
  %v623 = vld [vmem:[%s1 + $0x12e0] sm:$0xff]
  %v624 = vld [vmem:[%s1 + $0x12e8] sm:$0xff]
  %v625 = vld [vmem:[%s1 + $0x12f0] sm:$0xff]
  %v626 = vld [vmem:[%s1 + $0x12f8] sm:$0xff]
  %v627 = vld [vmem:[%s1 + $0x1300] sm:$0xff]
  %v628 = vld [vmem:[%s1 + $0x1308] sm:$0xff]
  %v629 = vld [vmem:[%s1 + $0x1310] sm:$0xff]
  %v630 = vld [vmem:[%s1 + $0x1318] sm:$0xff]
  %v631 = vld [vmem:[%s1 + $0x1320] sm:$0xff]
  %v632 = vld [vmem:[%s1 + $0x1328] sm:$0xff]
  %v633 = vld [vmem:[%s1 + $0x1330] sm:$0xff]
  %v634 = vld [vmem:[%s1 + $0x1338] sm:$0xff]
  %v635 = vld [vmem:[%s1 + $0x1340] sm:$0xff]
  %v636 = vld [vmem:[%s1 + $0x1348] sm:$0xff]
  %v637 = vld [vmem:[%s1 + $0x1350] sm:$0xff]
  %v638 = vld [vmem:[%s1 + $0x1358] sm:$0xff]
  %v639 = vld [vmem:[%s1 + $0x1360] sm:$0xff]
  %v640 = vld [vmem:[%s1 + $0x1368] sm:$0xff]
  %v641 = vld [vmem:[%s1 + $0x1370] sm:$0xff]
  %v642 = vld [vmem:[%s1 + $0x1378] sm:$0xff]
  %v643 = vld [vmem:[%s1 + $0x1380] sm:$0xff]
  %v644 = vld [vmem:[%s1 + $0x1388] sm:$0xff]
  %v645 = vld [vmem:[%s1 + $0x1390] sm:$0xff]
  %v646 = vld [vmem:[%s1 + $0x1398] sm:$0xff]
  %v647 = vld [vmem:[%s1 + $0x13a0] sm:$0xff]
  %v648 = vld [vmem:[%s1 + $0x13a8] sm:$0xff]
  %v649 = vld [vmem:[%s1 + $0x13b0] sm:$0xff]
  %v650 = vld [vmem:[%s1 + $0x13b8] sm:$0xff]
  %v651 = vld [vmem:[%s1 + $0x13c0] sm:$0xff]
  %v652 = vld [vmem:[%s1 + $0x13c8] sm:$0xff]
  %v653 = vld [vmem:[%s1 + $0x13d0] sm:$0xff]
  %v654 = vld [vmem:[%s1 + $0x13d8] sm:$0xff]
  %v655 = vld [vmem:[%s1 + $0x13e0] sm:$0xff]
  %v656 = vld [vmem:[%s1 + $0x13e8] sm:$0xff]
  %v657 = vld [vmem:[%s1 + $0x13f0] sm:$0xff]
  %v658 = vld [vmem:[%s1 + $0x13f8] sm:$0xff]
  %v659 = vld [vmem:[%s1 + $0x1400] sm:$0xff]
  %v660 = vld [vmem:[%s1 + $0x1408] sm:$0xff]
  %v661 = vld [vmem:[%s1 + $0x1410] sm:$0xff]
  %v662 = vld [vmem:[%s1 + $0x1418] sm:$0xff]
  %v663 = vld [vmem:[%s1 + $0x1420] sm:$0xff]
  %v664 = vld [vmem:[%s1 + $0x1428] sm:$0xff]
  %v665 = vld [vmem:[%s1 + $0x1430] sm:$0xff]
  %v666 = vld [vmem:[%s1 + $0x1438] sm:$0xff]
  %v667 = vld [vmem:[%s1 + $0x1440] sm:$0xff]
  %v668 = vld [vmem:[%s1 + $0x1448] sm:$0xff]
  %v669 = vld [vmem:[%s1 + $0x1450] sm:$0xff]
  %v670 = vld [vmem:[%s1 + $0x1458] sm:$0xff]
  %v671 = vld [vmem:[%s1 + $0x1460] sm:$0xff]
  %v672 = vld [vmem:[%s1 + $0x1468] sm:$0xff]
  %v673 = vld [vmem:[%s1 + $0x1470] sm:$0xff]
  %v674 = vld [vmem:[%s1 + $0x1478] sm:$0xff]
  %v675 = vld [vmem:[%s1 + $0x1480] sm:$0xff]
  %v676 = vld [vmem:[%s1 + $0x1488] sm:$0xff]
  %v677 = vld [vmem:[%s1 + $0x1490] sm:$0xff]
  %v678 = vld [vmem:[%s1 + $0x1498] sm:$0xff]
  %v679 = vld [vmem:[%s1 + $0x14a0] sm:$0xff]
  %v680 = vld [vmem:[%s1 + $0x14a8] sm:$0xff]
  %v681 = vld [vmem:[%s1 + $0x14b0] sm:$0xff]
  %v682 = vld [vmem:[%s1 + $0x14b8] sm:$0xff]
  %v683 = vld [vmem:[%s1 + $0x14c0] sm:$0xff]
  %v684 = vld [vmem:[%s1 + $0x14c8] sm:$0xff]
  %v685 = vld [vmem:[%s1 + $0x14d0] sm:$0xff]
  %v686 = vld [vmem:[%s1 + $0x14d8] sm:$0xff]
  %v687 = vld [vmem:[%s1 + $0x14e0] sm:$0xff]
  %v688 = vld [vmem:[%s1 + $0x14e8] sm:$0xff]
  %v689 = vld [vmem:[%s1 + $0x14f0] sm:$0xff]
  %v690 = vld [vmem:[%s1 + $0x14f8] sm:$0xff]
  %v691 = vld [vmem:[%s1 + $0x1500] sm:$0xff]
  %v692 = vld [vmem:[%s1 + $0x1508] sm:$0xff]
  %v693 = vld [vmem:[%s1 + $0x1510] sm:$0xff]
  %v694 = vld [vmem:[%s1 + $0x1518] sm:$0xff]
  %v695 = vld [vmem:[%s1 + $0x1520] sm:$0xff]
  %v696 = vld [vmem:[%s1 + $0x1528] sm:$0xff]
  %v697 = vld [vmem:[%s1 + $0x1530] sm:$0xff]
  %v698 = vld [vmem:[%s1 + $0x1538] sm:$0xff]
  %v699 = vld [vmem:[%s1 + $0x1540] sm:$0xff]
  %v700 = vld [vmem:[%s1 + $0x1548] sm:$0xff]
  %v701 = vld [vmem:[%s1 + $0x1550] sm:$0xff]
  %v702 = vld [vmem:[%s1 + $0x1558] sm:$0xff]
  %v703 = vld [vmem:[%s1 + $0x1560] sm:$0xff]
  %v704 = vld [vmem:[%s1 + $0x1568] sm:$0xff]
  %v705 = vld [vmem:[%s1 + $0x1570] sm:$0xff]
  %v706 = vld [vmem:[%s1 + $0x1578] sm:$0xff]
  %v707 = vld [vmem:[%s1 + $0x1580] sm:$0xff]
  %v708 = vld [vmem:[%s1 + $0x1588] sm:$0xff]
  %v709 = vld [vmem:[%s1 + $0x1590] sm:$0xff]
  %v710 = vld [vmem:[%s1 + $0x1598] sm:$0xff]
  %v711 = vld [vmem:[%s1 + $0x15a0] sm:$0xff]
  %v712 = vld [vmem:[%s1 + $0x15a8] sm:$0xff]
  %v713 = vld [vmem:[%s1 + $0x15b0] sm:$0xff]
  %v714 = vld [vmem:[%s1 + $0x15b8] sm:$0xff]
  %v715 = vld [vmem:[%s1 + $0x15c0] sm:$0xff]
  %v716 = vld [vmem:[%s1 + $0x15c8] sm:$0xff]
  %v717 = vld [vmem:[%s1 + $0x15d0] sm:$0xff]
  %v718 = vld [vmem:[%s1 + $0x15d8] sm:$0xff]
  %v719 = vld [vmem:[%s1 + $0x15e0] sm:$0xff]
  %v720 = vld [vmem:[%s1 + $0x15e8] sm:$0xff]
  %v721 = vld [vmem:[%s1 + $0x15f0] sm:$0xff]
  %v722 = vld [vmem:[%s1 + $0x15f8] sm:$0xff]
  %v723 = vld [vmem:[%s1 + $0x1600] sm:$0xff]
  %v724 = vld [vmem:[%s1 + $0x1608] sm:$0xff]
  %v725 = vld [vmem:[%s1 + $0x1610] sm:$0xff]
  %v726 = vld [vmem:[%s1 + $0x1618] sm:$0xff]
  %v727 = vld [vmem:[%s1 + $0x1620] sm:$0xff]
  %v728 = vld [vmem:[%s1 + $0x1628] sm:$0xff]
  %v729 = vld [vmem:[%s1 + $0x1630] sm:$0xff]
  %v730 = vld [vmem:[%s1 + $0x1638] sm:$0xff]
  %v731 = vld [vmem:[%s1 + $0x1640] sm:$0xff]
  %v732 = vld [vmem:[%s1 + $0x1648] sm:$0xff]
  %v733 = vld [vmem:[%s1 + $0x1650] sm:$0xff]
  %v734 = vld [vmem:[%s1 + $0x1658] sm:$0xff]
  %v735 = vld [vmem:[%s1 + $0x1660] sm:$0xff]
  %v736 = vld [vmem:[%s1 + $0x1668] sm:$0xff]
  %v737 = vld [vmem:[%s1 + $0x1670] sm:$0xff]
  %v738 = vld [vmem:[%s1 + $0x1678] sm:$0xff]
  %v739 = vld [vmem:[%s1 + $0x1680] sm:$0xff]
  %v740 = vld [vmem:[%s1 + $0x1688] sm:$0xff]
  %v741 = vld [vmem:[%s1 + $0x1690] sm:$0xff]
  %v742 = vld [vmem:[%s1 + $0x1698] sm:$0xff]
  %v743 = vld [vmem:[%s1 + $0x16a0] sm:$0xff]
  %v744 = vld [vmem:[%s1 + $0x16a8] sm:$0xff]
  %v745 = vld [vmem:[%s1 + $0x16b0] sm:$0xff]
  %v746 = vld [vmem:[%s1 + $0x16b8] sm:$0xff]
  %v747 = vld [vmem:[%s1 + $0x16c0] sm:$0xff]
  %v748 = vld [vmem:[%s1 + $0x16c8] sm:$0xff]
  %v749 = vld [vmem:[%s1 + $0x16d0] sm:$0xff]
  %v750 = vld [vmem:[%s1 + $0x16d8] sm:$0xff]
  %v751 = vld [vmem:[%s1 + $0x16e0] sm:$0xff]
  %v752 = vld [vmem:[%s1 + $0x16e8] sm:$0xff]
  %v753 = vld [vmem:[%s1 + $0x16f0] sm:$0xff]
  %v754 = vld [vmem:[%s1 + $0x16f8] sm:$0xff]
  %v755 = vld [vmem:[%s1 + $0x1700] sm:$0xff]
  %v756 = vld [vmem:[%s1 + $0x1708] sm:$0xff]
  %v757 = vld [vmem:[%s1 + $0x1710] sm:$0xff]
  %v758 = vld [vmem:[%s1 + $0x1718] sm:$0xff]
  %v759 = vld [vmem:[%s1 + $0x1720] sm:$0xff]
  %v760 = vld [vmem:[%s1 + $0x1728] sm:$0xff]
  %v761 = vld [vmem:[%s1 + $0x1730] sm:$0xff]
  %v762 = vld [vmem:[%s1 + $0x1738] sm:$0xff]
  %v763 = vld [vmem:[%s1 + $0x1740] sm:$0xff]
  %v764 = vld [vmem:[%s1 + $0x1748] sm:$0xff]
  %v765 = vld [vmem:[%s1 + $0x1750] sm:$0xff]
  %v766 = vld [vmem:[%s1 + $0x1758] sm:$0xff]
  %v767 = vld [vmem:[%s1 + $0x1760] sm:$0xff]
  %v768 = vld [vmem:[%s1 + $0x1768] sm:$0xff]
  %v769 = vld [vmem:[%s1 + $0x1770] sm:$0xff]
  %v770 = vld [vmem:[%s1 + $0x1778] sm:$0xff]
  %v771 = vld [vmem:[%s1 + $0x1780] sm:$0xff]
  %v772 = vld [vmem:[%s1 + $0x1788] sm:$0xff]
  %v773 = vld [vmem:[%s1 + $0x1790] sm:$0xff]
  %v774 = vld [vmem:[%s1 + $0x1798] sm:$0xff]
  %v775 = vld [vmem:[%s1 + $0x17a0] sm:$0xff]
  %v776 = vld [vmem:[%s1 + $0x17a8] sm:$0xff]
  %v777 = vld [vmem:[%s1 + $0x17b0] sm:$0xff]
  %v778 = vld [vmem:[%s1 + $0x17b8] sm:$0xff]
  %v779 = vld [vmem:[%s1 + $0x17c0] sm:$0xff]
  %v780 = vld [vmem:[%s1 + $0x17c8] sm:$0xff]
  %v781 = vld [vmem:[%s1 + $0x17d0] sm:$0xff]
  %v782 = vld [vmem:[%s1 + $0x17d8] sm:$0xff]
  %v783 = vld [vmem:[%s1 + $0x17e0] sm:$0xff]
  %v784 = vld [vmem:[%s1 + $0x17e8] sm:$0xff]
  %v785 = vld [vmem:[%s1 + $0x17f0] sm:$0xff]
  %v786 = vld [vmem:[%s1 + $0x17f8] sm:$0xff]
  %v787 = vld [vmem:[%s1 + $0x1800] sm:$0xff]
  %v788 = vld [vmem:[%s1 + $0x1808] sm:$0xff]
  %v789 = vld [vmem:[%s1 + $0x1810] sm:$0xff]
  %v790 = vld [vmem:[%s1 + $0x1818] sm:$0xff]
  %v791 = vld [vmem:[%s1 + $0x1820] sm:$0xff]
  %v792 = vld [vmem:[%s1 + $0x1828] sm:$0xff]
  %v793 = vld [vmem:[%s1 + $0x1830] sm:$0xff]
  %v794 = vld [vmem:[%s1 + $0x1838] sm:$0xff]
  %v795 = vld [vmem:[%s1 + $0x1840] sm:$0xff]
  %v796 = vld [vmem:[%s1 + $0x1848] sm:$0xff]
  %v797 = vld [vmem:[%s1 + $0x1850] sm:$0xff]
  %v798 = vld [vmem:[%s1 + $0x1858] sm:$0xff]
  %v799 = vld [vmem:[%s1 + $0x1860] sm:$0xff]
  %v800 = vld [vmem:[%s1 + $0x1868] sm:$0xff]
  %v801 = vld [vmem:[%s1 + $0x1870] sm:$0xff]
  %v802 = vld [vmem:[%s1 + $0x1878] sm:$0xff]
  %v803 = vld [vmem:[%s1 + $0x1880] sm:$0xff]
  %v804 = vld [vmem:[%s1 + $0x1888] sm:$0xff]
  %v805 = vld [vmem:[%s1 + $0x1890] sm:$0xff]
  %v806 = vld [vmem:[%s1 + $0x1898] sm:$0xff]
  %v807 = vld [vmem:[%s1 + $0x18a0] sm:$0xff]
  %v808 = vld [vmem:[%s1 + $0x18a8] sm:$0xff]
  %v809 = vld [vmem:[%s1 + $0x18b0] sm:$0xff]
  %v810 = vld [vmem:[%s1 + $0x18b8] sm:$0xff]
  %v811 = vld [vmem:[%s1 + $0x18c0] sm:$0xff]
  %v812 = vld [vmem:[%s1 + $0x18c8] sm:$0xff]
  %v813 = vld [vmem:[%s1 + $0x18d0] sm:$0xff]
  %v814 = vld [vmem:[%s1 + $0x18d8] sm:$0xff]
  %v815 = vld [vmem:[%s1 + $0x18e0] sm:$0xff]
  %v816 = vld [vmem:[%s1 + $0x18e8] sm:$0xff]
  %v817 = vld [vmem:[%s1 + $0x18f0] sm:$0xff]
  %v818 = vld [vmem:[%s1 + $0x18f8] sm:$0xff]
  %v819 = vld [vmem:[%s1 + $0x1900] sm:$0xff]
  %v820 = vld [vmem:[%s1 + $0x1908] sm:$0xff]
  %v821 = vld [vmem:[%s1 + $0x1910] sm:$0xff]
  %v822 = vld [vmem:[%s1 + $0x1918] sm:$0xff]
  %v823 = vld [vmem:[%s1 + $0x1920] sm:$0xff]
  %v824 = vld [vmem:[%s1 + $0x1928] sm:$0xff]
  %v825 = vld [vmem:[%s1 + $0x1930] sm:$0xff]
  %v826 = vld [vmem:[%s1 + $0x1938] sm:$0xff]
  %v827 = vld [vmem:[%s1 + $0x1940] sm:$0xff]
  %v828 = vld [vmem:[%s1 + $0x1948] sm:$0xff]
  %v829 = vld [vmem:[%s1 + $0x1950] sm:$0xff]
  %v830 = vld [vmem:[%s1 + $0x1958] sm:$0xff]
  %v831 = vld [vmem:[%s1 + $0x1960] sm:$0xff]
  %v832 = vld [vmem:[%s1 + $0x1968] sm:$0xff]
  %v833 = vld [vmem:[%s1 + $0x1970] sm:$0xff]
  %v834 = vld [vmem:[%s1 + $0x1978] sm:$0xff]
  %v835 = vld [vmem:[%s1 + $0x1980] sm:$0xff]
  %v836 = vld [vmem:[%s1 + $0x1988] sm:$0xff]
  %v837 = vld [vmem:[%s1 + $0x1990] sm:$0xff]
  %v838 = vld [vmem:[%s1 + $0x1998] sm:$0xff]
  %v839 = vld [vmem:[%s1 + $0x19a0] sm:$0xff]
  %v840 = vld [vmem:[%s1 + $0x19a8] sm:$0xff]
  %v841 = vld [vmem:[%s1 + $0x19b0] sm:$0xff]
  %v842 = vld [vmem:[%s1 + $0x19b8] sm:$0xff]
  %v843 = vld [vmem:[%s1 + $0x19c0] sm:$0xff]
  %v844 = vld [vmem:[%s1 + $0x19c8] sm:$0xff]
  %v845 = vld [vmem:[%s1 + $0x19d0] sm:$0xff]
  %v846 = vld [vmem:[%s1 + $0x19d8] sm:$0xff]
  %v847 = vld [vmem:[%s1 + $0x19e0] sm:$0xff]
  %v848 = vld [vmem:[%s1 + $0x19e8] sm:$0xff]
  %v849 = vld [vmem:[%s1 + $0x19f0] sm:$0xff]
  %v850 = vld [vmem:[%s1 + $0x19f8] sm:$0xff]
  %v851 = vld [vmem:[%s1 + $0x1a00] sm:$0xff]
  %v852 = vld [vmem:[%s1 + $0x1a08] sm:$0xff]
  %v853 = vld [vmem:[%s1 + $0x1a10] sm:$0xff]
  %v854 = vld [vmem:[%s1 + $0x1a18] sm:$0xff]
  %v855 = vld [vmem:[%s1 + $0x1a20] sm:$0xff]
  %v856 = vld [vmem:[%s1 + $0x1a28] sm:$0xff]
  %v857 = vld [vmem:[%s1 + $0x1a30] sm:$0xff]
  %v858 = vld [vmem:[%s1 + $0x1a38] sm:$0xff]
  %v859 = vld [vmem:[%s1 + $0x1a40] sm:$0xff]
  %v860 = vld [vmem:[%s1 + $0x1a48] sm:$0xff]
  %v861 = vld [vmem:[%s1 + $0x1a50] sm:$0xff]
  %v862 = vld [vmem:[%s1 + $0x1a58] sm:$0xff]
  %v863 = vld [vmem:[%s1 + $0x1a60] sm:$0xff]
  %v864 = vld [vmem:[%s1 + $0x1a68] sm:$0xff]
  %v865 = vld [vmem:[%s1 + $0x1a70] sm:$0xff]
  %v866 = vld [vmem:[%s1 + $0x1a78] sm:$0xff]
  %v867 = vld [vmem:[%s1 + $0x1a80] sm:$0xff]
  %v868 = vld [vmem:[%s1 + $0x1a88] sm:$0xff]
  %v869 = vld [vmem:[%s1 + $0x1a90] sm:$0xff]
  %v870 = vld [vmem:[%s1 + $0x1a98] sm:$0xff]
  %v871 = vld [vmem:[%s1 + $0x1aa0] sm:$0xff]
  %v872 = vld [vmem:[%s1 + $0x1aa8] sm:$0xff]
  %v873 = vld [vmem:[%s1 + $0x1ab0] sm:$0xff]
  %v874 = vld [vmem:[%s1 + $0x1ab8] sm:$0xff]
  %v875 = vld [vmem:[%s1 + $0x1ac0] sm:$0xff]
  %v876 = vld [vmem:[%s1 + $0x1ac8] sm:$0xff]
  %v877 = vld [vmem:[%s1 + $0x1ad0] sm:$0xff]
  %v878 = vld [vmem:[%s1 + $0x1ad8] sm:$0xff]
  %v879 = vld [vmem:[%s1 + $0x1ae0] sm:$0xff]
  %v880 = vld [vmem:[%s1 + $0x1ae8] sm:$0xff]
  %v881 = vld [vmem:[%s1 + $0x1af0] sm:$0xff]
  %v882 = vld [vmem:[%s1 + $0x1af8] sm:$0xff]
  %v883 = vld [vmem:[%s1 + $0x1b00] sm:$0xff]
  %v884 = vld [vmem:[%s1 + $0x1b08] sm:$0xff]
  %v885 = vld [vmem:[%s1 + $0x1b10] sm:$0xff]
  %v886 = vld [vmem:[%s1 + $0x1b18] sm:$0xff]
  %v887 = vld [vmem:[%s1 + $0x1b20] sm:$0xff]
  %v888 = vld [vmem:[%s1 + $0x1b28] sm:$0xff]
  %v889 = vld [vmem:[%s1 + $0x1b30] sm:$0xff]
  %v890 = vld [vmem:[%s1 + $0x1b38] sm:$0xff]
  %v891 = vld [vmem:[%s1 + $0x1b40] sm:$0xff]
  %v892 = vld [vmem:[%s1 + $0x1b48] sm:$0xff]
  %v893 = vld [vmem:[%s1 + $0x1b50] sm:$0xff]
  %v894 = vld [vmem:[%s1 + $0x1b58] sm:$0xff]
  %v895 = vld [vmem:[%s1 + $0x1b60] sm:$0xff]
  %v896 = vld [vmem:[%s1 + $0x1b68] sm:$0xff]
  %v897 = vld [vmem:[%s1 + $0x1b70] sm:$0xff]
  %v898 = vld [vmem:[%s1 + $0x1b78] sm:$0xff]
  %v899 = vld [vmem:[%s1 + $0x1b80] sm:$0xff]
  %v900 = vld [vmem:[%s1 + $0x1b88] sm:$0xff]
  %v901 = vld [vmem:[%s1 + $0x1b90] sm:$0xff]
  %v902 = vld [vmem:[%s1 + $0x1b98] sm:$0xff]
  %v903 = vld [vmem:[%s1 + $0x1ba0] sm:$0xff]
  %v904 = vld [vmem:[%s1 + $0x1ba8] sm:$0xff]
  %v905 = vld [vmem:[%s1 + $0x1bb0] sm:$0xff]
  %v906 = vld [vmem:[%s1 + $0x1bb8] sm:$0xff]
  %v907 = vld [vmem:[%s1 + $0x1bc0] sm:$0xff]
  %v908 = vld [vmem:[%s1 + $0x1bc8] sm:$0xff]
  %v909 = vld [vmem:[%s1 + $0x1bd0] sm:$0xff]
  %v910 = vld [vmem:[%s1 + $0x1bd8] sm:$0xff]
  %v911 = vld [vmem:[%s1 + $0x1be0] sm:$0xff]
  %v912 = vld [vmem:[%s1 + $0x1be8] sm:$0xff]
  %v913 = vld [vmem:[%s1 + $0x1bf0] sm:$0xff]
  %v914 = vld [vmem:[%s1 + $0x1bf8] sm:$0xff]
  %v915 = vld [vmem:[%s1 + $0x1c00] sm:$0xff]
  %v916 = vld [vmem:[%s1 + $0x1c08] sm:$0xff]
  %v917 = vld [vmem:[%s1 + $0x1c10] sm:$0xff]
  %v918 = vld [vmem:[%s1 + $0x1c18] sm:$0xff]
  %v919 = vld [vmem:[%s1 + $0x1c20] sm:$0xff]
  %v920 = vld [vmem:[%s1 + $0x1c28] sm:$0xff]
  %v921 = vld [vmem:[%s1 + $0x1c30] sm:$0xff]
  %v922 = vld [vmem:[%s1 + $0x1c38] sm:$0xff]
  %v923 = vld [vmem:[%s1 + $0x1c40] sm:$0xff]
  %v924 = vld [vmem:[%s1 + $0x1c48] sm:$0xff]
  %v925 = vld [vmem:[%s1 + $0x1c50] sm:$0xff]
  %v926 = vld [vmem:[%s1 + $0x1c58] sm:$0xff]
  %v927 = vld [vmem:[%s1 + $0x1c60] sm:$0xff]
  %v928 = vld [vmem:[%s1 + $0x1c68] sm:$0xff]
  %v929 = vld [vmem:[%s1 + $0x1c70] sm:$0xff]
  %v930 = vld [vmem:[%s1 + $0x1c78] sm:$0xff]
  %v931 = vld [vmem:[%s1 + $0x1c80] sm:$0xff]
  %v932 = vld [vmem:[%s1 + $0x1c88] sm:$0xff]
  %v933 = vld [vmem:[%s1 + $0x1c90] sm:$0xff]
  %v934 = vld [vmem:[%s1 + $0x1c98] sm:$0xff]
  %v935 = vld [vmem:[%s1 + $0x1ca0] sm:$0xff]
  %v936 = vld [vmem:[%s1 + $0x1ca8] sm:$0xff]
  %v937 = vld [vmem:[%s1 + $0x1cb0] sm:$0xff]
  %v938 = vld [vmem:[%s1 + $0x1cb8] sm:$0xff]
  %v939 = vld [vmem:[%s1 + $0x1cc0] sm:$0xff]
  %v940 = vld [vmem:[%s1 + $0x1cc8] sm:$0xff]
  %v941 = vld [vmem:[%s1 + $0x1cd0] sm:$0xff]
  %v942 = vld [vmem:[%s1 + $0x1cd8] sm:$0xff]
  %v943 = vld [vmem:[%s1 + $0x1ce0] sm:$0xff]
  %v944 = vld [vmem:[%s1 + $0x1ce8] sm:$0xff]
  %v945 = vld [vmem:[%s1 + $0x1cf0] sm:$0xff]
  %v946 = vld [vmem:[%s1 + $0x1cf8] sm:$0xff]
  %v947 = vld [vmem:[%s1 + $0x1d00] sm:$0xff]
  %v948 = vld [vmem:[%s1 + $0x1d08] sm:$0xff]
  %v949 = vld [vmem:[%s1 + $0x1d10] sm:$0xff]
  %v950 = vld [vmem:[%s1 + $0x1d18] sm:$0xff]
  %v951 = vld [vmem:[%s1 + $0x1d20] sm:$0xff]
  %v952 = vld [vmem:[%s1 + $0x1d28] sm:$0xff]
  %v953 = vld [vmem:[%s1 + $0x1d30] sm:$0xff]
  %v954 = vld [vmem:[%s1 + $0x1d38] sm:$0xff]
  %v955 = vld [vmem:[%s1 + $0x1d40] sm:$0xff]
  %v956 = vld [vmem:[%s1 + $0x1d48] sm:$0xff]
  %v957 = vld [vmem:[%s1 + $0x1d50] sm:$0xff]
  %v958 = vld [vmem:[%s1 + $0x1d58] sm:$0xff]
  %v959 = vld [vmem:[%s1 + $0x1d60] sm:$0xff]
  %v960 = vld [vmem:[%s1 + $0x1d68] sm:$0xff]
  %v961 = vld [vmem:[%s1 + $0x1d70] sm:$0xff]
  %v962 = vld [vmem:[%s1 + $0x1d78] sm:$0xff]
  %v963 = vld [vmem:[%s1 + $0x1d80] sm:$0xff]
  %v964 = vld [vmem:[%s1 + $0x1d88] sm:$0xff]
  %v965 = vld [vmem:[%s1 + $0x1d90] sm:$0xff]
  %v966 = vld [vmem:[%s1 + $0x1d98] sm:$0xff]
  %v967 = vld [vmem:[%s1 + $0x1da0] sm:$0xff]
  %v968 = vld [vmem:[%s1 + $0x1da8] sm:$0xff]
  %v969 = vld [vmem:[%s1 + $0x1db0] sm:$0xff]
  %v970 = vld [vmem:[%s1 + $0x1db8] sm:$0xff]
  %v971 = vld [vmem:[%s1 + $0x1dc0] sm:$0xff]
  %v972 = vld [vmem:[%s1 + $0x1dc8] sm:$0xff]
  %v973 = vld [vmem:[%s1 + $0x1dd0] sm:$0xff]
  %v974 = vld [vmem:[%s1 + $0x1dd8] sm:$0xff]
  %v975 = vld [vmem:[%s1 + $0x1de0] sm:$0xff]
  %v976 = vld [vmem:[%s1 + $0x1de8] sm:$0xff]
  %v977 = vld [vmem:[%s1 + $0x1df0] sm:$0xff]
  %v978 = vld [vmem:[%s1 + $0x1df8] sm:$0xff]
  %v979 = vld [vmem:[%s1 + $0x1e00] sm:$0xff]
  %v980 = vld [vmem:[%s1 + $0x1e08] sm:$0xff]
  %v981 = vld [vmem:[%s1 + $0x1e10] sm:$0xff]
  %v982 = vld [vmem:[%s1 + $0x1e18] sm:$0xff]
  %v983 = vld [vmem:[%s1 + $0x1e20] sm:$0xff]
  %v984 = vld [vmem:[%s1 + $0x1e28] sm:$0xff]
  %v985 = vld [vmem:[%s1 + $0x1e30] sm:$0xff]
  %v986 = vld [vmem:[%s1 + $0x1e38] sm:$0xff]
  %v987 = vld [vmem:[%s1 + $0x1e40] sm:$0xff]
  %v988 = vld [vmem:[%s1 + $0x1e48] sm:$0xff]
  %v989 = vld [vmem:[%s1 + $0x1e50] sm:$0xff]
  %v990 = vld [vmem:[%s1 + $0x1e58] sm:$0xff]
  %v991 = vld [vmem:[%s1 + $0x1e60] sm:$0xff]
  %v992 = vld [vmem:[%s1 + $0x1e68] sm:$0xff]
  %v993 = vld [vmem:[%s1 + $0x1e70] sm:$0xff]
  %v994 = vld [vmem:[%s1 + $0x1e78] sm:$0xff]
  %v995 = vld [vmem:[%s1 + $0x1e80] sm:$0xff]
  %v996 = vld [vmem:[%s1 + $0x1e88] sm:$0xff]
  %v997 = vld [vmem:[%s1 + $0x1e90] sm:$0xff]
  %v998 = vld [vmem:[%s1 + $0x1e98] sm:$0xff]
  %v999 = vld [vmem:[%s1 + $0x1ea0] sm:$0xff]
  %v1000 = vld [vmem:[%s1 + $0x1ea8] sm:$0xff]
  %v1001 = vld [vmem:[%s1 + $0x1eb0] sm:$0xff]
  %v1002 = vld [vmem:[%s1 + $0x1eb8] sm:$0xff]
  %v1003 = vld [vmem:[%s1 + $0x1ec0] sm:$0xff]
  %v1004 = vld [vmem:[%s1 + $0x1ec8] sm:$0xff]
  %v1005 = vld [vmem:[%s1 + $0x1ed0] sm:$0xff]
  %v1006 = vld [vmem:[%s1 + $0x1ed8] sm:$0xff]
  %v1007 = vld [vmem:[%s1 + $0x1ee0] sm:$0xff]
  %v1008 = vld [vmem:[%s1 + $0x1ee8] sm:$0xff]
  %v1009 = vld [vmem:[%s1 + $0x1ef0] sm:$0xff]
  %v1010 = vld [vmem:[%s1 + $0x1ef8] sm:$0xff]
  %v1011 = vld [vmem:[%s1 + $0x1f00] sm:$0xff]
  %v1012 = vld [vmem:[%s1 + $0x1f08] sm:$0xff]
  %v1013 = vld [vmem:[%s1 + $0x1f10] sm:$0xff]
  %v1014 = vld [vmem:[%s1 + $0x1f18] sm:$0xff]
  %v1015 = vld [vmem:[%s1 + $0x1f20] sm:$0xff]
  %v1016 = vld [vmem:[%s1 + $0x1f28] sm:$0xff]
  %v1017 = vld [vmem:[%s1 + $0x1f30] sm:$0xff]
  %v1018 = vld [vmem:[%s1 + $0x1f38] sm:$0xff]
  %v1019 = vld [vmem:[%s1 + $0x1f40] sm:$0xff]
  %v1020 = vld [vmem:[%s1 + $0x1f48] sm:$0xff]
  %v1021 = vld [vmem:[%s1 + $0x1f50] sm:$0xff]
  %v1022 = vld [vmem:[%s1 + $0x1f58] sm:$0xff]
  %v1023 = vld [vmem:[%s1 + $0x1f60] sm:$0xff]
  %v1024 = vld [vmem:[%s1 + $0x1f68] sm:$0xff]
  %v1025 = vld [vmem:[%s1 + $0x1f70] sm:$0xff]
  %v1026 = vld [vmem:[%s1 + $0x1f78] sm:$0xff]
  %v1027 = vld [vmem:[%s1 + $0x1f80] sm:$0xff]
  %v1028 = vld [vmem:[%s1 + $0x1f88] sm:$0xff]
  %v1029 = vld [vmem:[%s1 + $0x1f90] sm:$0xff]
  %v1030 = vld [vmem:[%s1 + $0x1f98] sm:$0xff]
  %v1031 = vld [vmem:[%s1 + $0x1fa0] sm:$0xff]
  %v1032 = vld [vmem:[%s1 + $0x1fa8] sm:$0xff]
  %v1033 = vld [vmem:[%s1 + $0x1fb0] sm:$0xff]
  %v1034 = vld [vmem:[%s1 + $0x1fb8] sm:$0xff]
  %v1035 = vld [vmem:[%s1 + $0x1fc0] sm:$0xff]
  %v1036 = vld [vmem:[%s1 + $0x1fc8] sm:$0xff]
  %v1037 = vld [vmem:[%s1 + $0x1fd0] sm:$0xff]
  %v1038 = vld [vmem:[%s1 + $0x1fd8] sm:$0xff]
  %v1039 = vld [vmem:[%s1 + $0x1fe0] sm:$0xff]
  %v1040 = vld [vmem:[%s1 + $0x1fe8] sm:$0xff]
  %v1041 = vld [vmem:[%s1 + $0x1ff0] sm:$0xff]
  %v1042 = vld [vmem:[%s1 + $0x1ff8] sm:$0xff]
  %v1043 = vld [vmem:[%s1 + $0x2000] sm:$0xff]
  %v1044 = vld [vmem:[%s1 + $0x2008] sm:$0xff]
  %v1045 = vld [vmem:[%s1 + $0x2010] sm:$0xff]
  %v1046 = vld [vmem:[%s1 + $0x2018] sm:$0xff]
  %v1047 = vld [vmem:[%s1 + $0x2020] sm:$0xff]
  %v1048 = vld [vmem:[%s1 + $0x2028] sm:$0xff]
  %v1049 = vld [vmem:[%s1 + $0x2030] sm:$0xff]
  %v1050 = vld [vmem:[%s1 + $0x2038] sm:$0xff]
  %v1051 = vld [vmem:[%s1 + $0x2040] sm:$0xff]
  %v1052 = vld [vmem:[%s1 + $0x2048] sm:$0xff]
  %v1053 = vld [vmem:[%s1 + $0x2050] sm:$0xff]
  %v1054 = vld [vmem:[%s1 + $0x2058] sm:$0xff]
  %v1055 = vld [vmem:[%s1 + $0x2060] sm:$0xff]
  %v1056 = vld [vmem:[%s1 + $0x2068] sm:$0xff]
  %v1057 = vld [vmem:[%s1 + $0x2070] sm:$0xff]
  %v1058 = vld [vmem:[%s1 + $0x2078] sm:$0xff]
  %v1059 = vld [vmem:[%s1 + $0x2080] sm:$0xff]
  %v1060 = vld [vmem:[%s1 + $0x2088] sm:$0xff]
  %v1061 = vld [vmem:[%s1 + $0x2090] sm:$0xff]
  %v1062 = vld [vmem:[%s1 + $0x2098] sm:$0xff]
  %v1063 = vld [vmem:[%s1 + $0x20a0] sm:$0xff]
  %v1064 = vld [vmem:[%s1 + $0x20a8] sm:$0xff]
  %v1065 = vld [vmem:[%s1 + $0x20b0] sm:$0xff]
  %v1066 = vld [vmem:[%s1 + $0x20b8] sm:$0xff]
  %v1067 = vld [vmem:[%s1 + $0x20c0] sm:$0xff]
  %v1068 = vld [vmem:[%s1 + $0x20c8] sm:$0xff]
  %v1069 = vld [vmem:[%s1 + $0x20d0] sm:$0xff]
  %v1070 = vld [vmem:[%s1 + $0x20d8] sm:$0xff]
  %v1071 = vld [vmem:[%s1 + $0x20e0] sm:$0xff]
  %v1072 = vld [vmem:[%s1 + $0x20e8] sm:$0xff]
  %v1073 = vld [vmem:[%s1 + $0x20f0] sm:$0xff]
  %v1074 = vld [vmem:[%s1 + $0x20f8] sm:$0xff]
  %v1075 = vld [vmem:[%s1 + $0x2100] sm:$0xff]
  %v1076 = vld [vmem:[%s1 + $0x2108] sm:$0xff]
  %v1077 = vld [vmem:[%s1 + $0x2110] sm:$0xff]
  %v1078 = vld [vmem:[%s1 + $0x2118] sm:$0xff]
  %v1079 = vld [vmem:[%s1 + $0x2120] sm:$0xff]
  %v1080 = vld [vmem:[%s1 + $0x2128] sm:$0xff]
  %v1081 = vld [vmem:[%s1 + $0x2130] sm:$0xff]
  %v1082 = vld [vmem:[%s1 + $0x2138] sm:$0xff]
  %v1083 = vld [vmem:[%s1 + $0x2140] sm:$0xff]
  %v1084 = vld [vmem:[%s1 + $0x2148] sm:$0xff]
  %v1085 = vld [vmem:[%s1 + $0x2150] sm:$0xff]
  %v1086 = vld [vmem:[%s1 + $0x2158] sm:$0xff]
  %v1087 = vld [vmem:[%s1 + $0x2160] sm:$0xff]
  %v1088 = vld [vmem:[%s1 + $0x2168] sm:$0xff]
  %v1089 = vld [vmem:[%s1 + $0x2170] sm:$0xff]
  %v1090 = vld [vmem:[%s1 + $0x2178] sm:$0xff]
  %v1091 = vld [vmem:[%s1 + $0x2180] sm:$0xff]
  %v1092 = vld [vmem:[%s1 + $0x2188] sm:$0xff]
  %v1093 = vld [vmem:[%s1 + $0x2190] sm:$0xff]
  %v1094 = vld [vmem:[%s1 + $0x2198] sm:$0xff]
  %v1095 = vld [vmem:[%s1 + $0x21a0] sm:$0xff]
  %v1096 = vld [vmem:[%s1 + $0x21a8] sm:$0xff]
  %v1097 = vld [vmem:[%s1 + $0x21b0] sm:$0xff]
  %v1098 = vld [vmem:[%s1 + $0x21b8] sm:$0xff]
  %v1099 = vld [vmem:[%s1 + $0x21c0] sm:$0xff]
  %v1100 = vld [vmem:[%s1 + $0x21c8] sm:$0xff]
  %v1101 = vld [vmem:[%s1 + $0x21d0] sm:$0xff]
  %v1102 = vld [vmem:[%s1 + $0x21d8] sm:$0xff]
  %v1103 = vld [vmem:[%s1 + $0x21e0] sm:$0xff]
  %v1104 = vld [vmem:[%s1 + $0x21e8] sm:$0xff]
  %v1105 = vld [vmem:[%s1 + $0x21f0] sm:$0xff]
  %v1106 = vld [vmem:[%s1 + $0x21f8] sm:$0xff]
  %v1107 = vld [vmem:[%s1 + $0x2200] sm:$0xff]
  %v1108 = vld [vmem:[%s1 + $0x2208] sm:$0xff]
  %v1109 = vld [vmem:[%s1 + $0x2210] sm:$0xff]
  %v1110 = vld [vmem:[%s1 + $0x2218] sm:$0xff]
  %v1111 = vld [vmem:[%s1 + $0x2220] sm:$0xff]
  %v1112 = vld [vmem:[%s1 + $0x2228] sm:$0xff]
  %v1113 = vld [vmem:[%s1 + $0x2230] sm:$0xff]
  %v1114 = vld [vmem:[%s1 + $0x2238] sm:$0xff]
  %v1115 = vld [vmem:[%s1 + $0x2240] sm:$0xff]
  %v1116 = vld [vmem:[%s1 + $0x2248] sm:$0xff]
  %v1117 = vld [vmem:[%s1 + $0x2250] sm:$0xff]
  %v1118 = vld [vmem:[%s1 + $0x2258] sm:$0xff]
  %v1119 = vld [vmem:[%s1 + $0x2260] sm:$0xff]
  %v1120 = vld [vmem:[%s1 + $0x2268] sm:$0xff]
  %v1121 = vld [vmem:[%s1 + $0x2270] sm:$0xff]
  %v1122 = vld [vmem:[%s1 + $0x2278] sm:$0xff]
  %v1123 = vld [vmem:[%s1 + $0x2280] sm:$0xff]
  %v1124 = vld [vmem:[%s1 + $0x2288] sm:$0xff]
  %v1125 = vld [vmem:[%s1 + $0x2290] sm:$0xff]
  %v1126 = vld [vmem:[%s1 + $0x2298] sm:$0xff]
  %v1127 = vld [vmem:[%s1 + $0x22a0] sm:$0xff]
  %v1128 = vld [vmem:[%s1 + $0x22a8] sm:$0xff]
  %v1129 = vld [vmem:[%s1 + $0x22b0] sm:$0xff]
  %v1130 = vld [vmem:[%s1 + $0x22b8] sm:$0xff]
  %v1131 = vld [vmem:[%s1 + $0x22c0] sm:$0xff]
  %v1132 = vld [vmem:[%s1 + $0x22c8] sm:$0xff]
  %v1133 = vld [vmem:[%s1 + $0x22d0] sm:$0xff]
  %v1134 = vld [vmem:[%s1 + $0x22d8] sm:$0xff]
  %v1135 = vld [vmem:[%s1 + $0x22e0] sm:$0xff]
  %v1136 = vld [vmem:[%s1 + $0x22e8] sm:$0xff]
  %v1137 = vld [vmem:[%s1 + $0x22f0] sm:$0xff]
  %v1138 = vld [vmem:[%s1 + $0x22f8] sm:$0xff]
  %v1139 = vld [vmem:[%s1 + $0x2300] sm:$0xff]
  %v1140 = vld [vmem:[%s1 + $0x2308] sm:$0xff]
  %v1141 = vld [vmem:[%s1 + $0x2310] sm:$0xff]
  %v1142 = vld [vmem:[%s1 + $0x2318] sm:$0xff]
  %v1143 = vld [vmem:[%s1 + $0x2320] sm:$0xff]
  %v1144 = vld [vmem:[%s1 + $0x2328] sm:$0xff]
  %v1145 = vld [vmem:[%s1 + $0x2330] sm:$0xff]
  %v1146 = vld [vmem:[%s1 + $0x2338] sm:$0xff]
  %v1147 = vld [vmem:[%s1 + $0x2340] sm:$0xff]
  %v1148 = vld [vmem:[%s1 + $0x2348] sm:$0xff]
  %v1149 = vld [vmem:[%s1 + $0x2350] sm:$0xff]
  %v1150 = vld [vmem:[%s1 + $0x2358] sm:$0xff]
  %v1151 = vld [vmem:[%s1 + $0x2360] sm:$0xff]
  %v1152 = vld [vmem:[%s1 + $0x2368] sm:$0xff]
  %v1153 = vld [vmem:[%s1 + $0x2370] sm:$0xff]
  %v1154 = vld [vmem:[%s1 + $0x2378] sm:$0xff]
  %v1155 = vld [vmem:[%s1 + $0x2380] sm:$0xff]
  %v1156 = vld [vmem:[%s1 + $0x2388] sm:$0xff]
  %v1157 = vld [vmem:[%s1 + $0x2390] sm:$0xff]
  %v1158 = vld [vmem:[%s1 + $0x2398] sm:$0xff]
  %v1159 = vld [vmem:[%s1 + $0x23a0] sm:$0xff]
  %v1160 = vld [vmem:[%s1 + $0x23a8] sm:$0xff]
  %v1161 = vld [vmem:[%s1 + $0x23b0] sm:$0xff]
  %v1162 = vld [vmem:[%s1 + $0x23b8] sm:$0xff]
  %v1163 = vld [vmem:[%s1 + $0x23c0] sm:$0xff]
  %v1164 = vld [vmem:[%s1 + $0x23c8] sm:$0xff]
  %v1165 = vld [vmem:[%s1 + $0x23d0] sm:$0xff]
  %v1166 = vld [vmem:[%s1 + $0x23d8] sm:$0xff]
  %v1167 = vld [vmem:[%s1 + $0x23e0] sm:$0xff]
  %v1168 = vld [vmem:[%s1 + $0x23e8] sm:$0xff]
  %v1169 = vld [vmem:[%s1 + $0x23f0] sm:$0xff]
  %v1170 = vld [vmem:[%s1 + $0x23f8] sm:$0xff]
  %v1171 = vld [vmem:[%s1 + $0x2400] sm:$0xff]
  %v1172 = vld [vmem:[%s1 + $0x2408] sm:$0xff]
  %v1173 = vld [vmem:[%s1 + $0x2410] sm:$0xff]
  %v1174 = vld [vmem:[%s1 + $0x2418] sm:$0xff]
  %v1175 = vld [vmem:[%s1 + $0x2420] sm:$0xff]
  %v1176 = vld [vmem:[%s1 + $0x2428] sm:$0xff]
  %v1177 = vld [vmem:[%s1 + $0x2430] sm:$0xff]
  %v1178 = vld [vmem:[%s1 + $0x2438] sm:$0xff]
  %v1179 = vld [vmem:[%s1 + $0x2440] sm:$0xff]
  %v1180 = vld [vmem:[%s1 + $0x2448] sm:$0xff]
  %v1181 = vld [vmem:[%s1 + $0x2450] sm:$0xff]
  %v1182 = vld [vmem:[%s1 + $0x2458] sm:$0xff]
  %v1183 = vld [vmem:[%s1 + $0x2460] sm:$0xff]
  %v1184 = vld [vmem:[%s1 + $0x2468] sm:$0xff]
  %v1185 = vld [vmem:[%s1 + $0x2470] sm:$0xff]
  %v1186 = vld [vmem:[%s1 + $0x2478] sm:$0xff]
  %v1187 = vld [vmem:[%s1 + $0x2480] sm:$0xff]
  %v1188 = vld [vmem:[%s1 + $0x2488] sm:$0xff]
  %v1189 = vld [vmem:[%s1 + $0x2490] sm:$0xff]
  %v1190 = vld [vmem:[%s1 + $0x2498] sm:$0xff]
  %v1191 = vld [vmem:[%s1 + $0x24a0] sm:$0xff]
  %v1192 = vld [vmem:[%s1 + $0x24a8] sm:$0xff]
  %v1193 = vld [vmem:[%s1 + $0x24b0] sm:$0xff]
  %v1194 = vld [vmem:[%s1 + $0x24b8] sm:$0xff]
  %v1195 = vld [vmem:[%s1 + $0x24c0] sm:$0xff]
  %v1196 = vld [vmem:[%s1 + $0x24c8] sm:$0xff]
  %v1197 = vld [vmem:[%s1 + $0x24d0] sm:$0xff]
  %v1198 = vld [vmem:[%s1 + $0x24d8] sm:$0xff]
  %v1199 = vld [vmem:[%s1 + $0x24e0] sm:$0xff]
  %v1200 = vld [vmem:[%s1 + $0x24e8] sm:$0xff]
  %v1201 = vld [vmem:[%s1 + $0x24f0] sm:$0xff]
  %v1202 = vld [vmem:[%s1 + $0x24f8] sm:$0xff]
  %v1203 = vld [vmem:[%s1 + $0x2500] sm:$0xff]
  %v1204 = vld [vmem:[%s1 + $0x2508] sm:$0xff]
  %v1205 = vld [vmem:[%s1 + $0x2510] sm:$0xff]
  %v1206 = vld [vmem:[%s1 + $0x2518] sm:$0xff]
  %v1207 = vld [vmem:[%s1 + $0x2520] sm:$0xff]
  %v1208 = vld [vmem:[%s1 + $0x2528] sm:$0xff]
  %v1209 = vld [vmem:[%s1 + $0x2530] sm:$0xff]
  %v1210 = vld [vmem:[%s1 + $0x2538] sm:$0xff]
  %v1211 = vld [vmem:[%s1 + $0x2540] sm:$0xff]
  %v1212 = vld [vmem:[%s1 + $0x2548] sm:$0xff]
  %v1213 = vld [vmem:[%s1 + $0x2550] sm:$0xff]
  %v1214 = vld [vmem:[%s1 + $0x2558] sm:$0xff]
  %v1215 = vld [vmem:[%s1 + $0x2560] sm:$0xff]
  %v1216 = vld [vmem:[%s1 + $0x2568] sm:$0xff]
  %v1217 = vld [vmem:[%s1 + $0x2570] sm:$0xff]
  %v1218 = vld [vmem:[%s1 + $0x2578] sm:$0xff]
  %v1219 = vld [vmem:[%s1 + $0x2580] sm:$0xff]
  %v1220 = vld [vmem:[%s1 + $0x2588] sm:$0xff]
  %v1221 = vld [vmem:[%s1 + $0x2590] sm:$0xff]
  %v1222 = vld [vmem:[%s1 + $0x2598] sm:$0xff]
  %v1223 = vld [vmem:[%s1 + $0x25a0] sm:$0xff]
  %v1224 = vld [vmem:[%s1 + $0x25a8] sm:$0xff]
  %v1225 = vld [vmem:[%s1 + $0x25b0] sm:$0xff]
  %v1226 = vld [vmem:[%s1 + $0x25b8] sm:$0xff]
  %v1227 = vld [vmem:[%s1 + $0x25c0] sm:$0xff]
  %v1228 = vld [vmem:[%s1 + $0x25c8] sm:$0xff]
  %v1229 = vld [vmem:[%s1 + $0x25d0] sm:$0xff]
  %v1230 = vld [vmem:[%s1 + $0x25d8] sm:$0xff]
  %v1231 = vld [vmem:[%s1 + $0x25e0] sm:$0xff]
  %v1232 = vld [vmem:[%s1 + $0x25e8] sm:$0xff]
  %v1233 = vld [vmem:[%s1 + $0x25f0] sm:$0xff]
  %v1234 = vld [vmem:[%s1 + $0x25f8] sm:$0xff]
  %v1235 = vld [vmem:[%s1 + $0x2600] sm:$0xff]
  %v1236 = vld [vmem:[%s1 + $0x2608] sm:$0xff]
  %v1237 = vld [vmem:[%s1 + $0x2610] sm:$0xff]
  %v1238 = vld [vmem:[%s1 + $0x2618] sm:$0xff]
  %v1239 = vld [vmem:[%s1 + $0x2620] sm:$0xff]
  %v1240 = vld [vmem:[%s1 + $0x2628] sm:$0xff]
  %v1241 = vld [vmem:[%s1 + $0x2630] sm:$0xff]
  %v1242 = vld [vmem:[%s1 + $0x2638] sm:$0xff]
  %v1243 = vld [vmem:[%s1 + $0x2640] sm:$0xff]
  %v1244 = vld [vmem:[%s1 + $0x2648] sm:$0xff]
  %v1245 = vld [vmem:[%s1 + $0x2650] sm:$0xff]
  %v1246 = vld [vmem:[%s1 + $0x2658] sm:$0xff]
  %v1247 = vld [vmem:[%s1 + $0x2660] sm:$0xff]
  %v1248 = vld [vmem:[%s1 + $0x2668] sm:$0xff]
  %v1249 = vld [vmem:[%s1 + $0x2670] sm:$0xff]
  %v1250 = vld [vmem:[%s1 + $0x2678] sm:$0xff]
  %v1251 = vld [vmem:[%s1 + $0x2680] sm:$0xff]
  %v1252 = vld [vmem:[%s1 + $0x2688] sm:$0xff]
  %v1253 = vld [vmem:[%s1 + $0x2690] sm:$0xff]
  %v1254 = vld [vmem:[%s1 + $0x2698] sm:$0xff]
  %v1255 = vld [vmem:[%s1 + $0x26a0] sm:$0xff]
  %v1256 = vld [vmem:[%s1 + $0x26a8] sm:$0xff]
  %v1257 = vld [vmem:[%s1 + $0x26b0] sm:$0xff]
  %v1258 = vld [vmem:[%s1 + $0x26b8] sm:$0xff]
  %v1259 = vld [vmem:[%s1 + $0x26c0] sm:$0xff]
  %v1260 = vld [vmem:[%s1 + $0x26c8] sm:$0xff]
  %v1261 = vld [vmem:[%s1 + $0x26d0] sm:$0xff]
  %v1262 = vld [vmem:[%s1 + $0x26d8] sm:$0xff]
  %v1263 = vld [vmem:[%s1 + $0x26e0] sm:$0xff]
  %v1264 = vld [vmem:[%s1 + $0x26e8] sm:$0xff]
  %v1265 = vld [vmem:[%s1 + $0x26f0] sm:$0xff]
  %v1266 = vld [vmem:[%s1 + $0x26f8] sm:$0xff]
  %v1267 = vld [vmem:[%s1 + $0x2700] sm:$0xff]
  %v1268 = vld [vmem:[%s1 + $0x2708] sm:$0xff]
  %v1269 = vld [vmem:[%s1 + $0x2710] sm:$0xff]
  %v1270 = vld [vmem:[%s1 + $0x2718] sm:$0xff]
  %v1271 = vld [vmem:[%s1 + $0x2720] sm:$0xff]
  %v1272 = vld [vmem:[%s1 + $0x2728] sm:$0xff]
  %v1273 = vld [vmem:[%s1 + $0x2730] sm:$0xff]
  %v1274 = vld [vmem:[%s1 + $0x2738] sm:$0xff]
  %v1275 = vld [vmem:[%s1 + $0x2740] sm:$0xff]
  %v1276 = vld [vmem:[%s1 + $0x2748] sm:$0xff]
  %v1277 = vld [vmem:[%s1 + $0x2750] sm:$0xff]
  %v1278 = vld [vmem:[%s1 + $0x2758] sm:$0xff]
  %v1279 = vld [vmem:[%s1 + $0x2760] sm:$0xff]
  %v1280 = vld [vmem:[%s1 + $0x2768] sm:$0xff]
  %v1281 = vld [vmem:[%s1 + $0x2770] sm:$0xff]
  %v1282 = vld [vmem:[%s1 + $0x2778] sm:$0xff]
  %v1283 = vld [vmem:[%s1 + $0x2780] sm:$0xff]
  %v1284 = vld [vmem:[%s1 + $0x2788] sm:$0xff]
  %v1285 = vld [vmem:[%s1 + $0x2790] sm:$0xff]
  %v1286 = vld [vmem:[%s1 + $0x2798] sm:$0xff]
  %v1287 = vld [vmem:[%s1 + $0x27a0] sm:$0xff]
  %v1288 = vld [vmem:[%s1 + $0x27a8] sm:$0xff]
  %v1289 = vld [vmem:[%s1 + $0x27b0] sm:$0xff]
  %v1290 = vld [vmem:[%s1 + $0x27b8] sm:$0xff]
  %v1291 = vld [vmem:[%s1 + $0x27c0] sm:$0xff]
  %v1292 = vld [vmem:[%s1 + $0x27c8] sm:$0xff]
  %v1293 = vld [vmem:[%s1 + $0x27d0] sm:$0xff]
  %v1294 = vld [vmem:[%s1 + $0x27d8] sm:$0xff]
  %v1295 = vld [vmem:[%s1 + $0x27e0] sm:$0xff]
  %v1296 = vld [vmem:[%s1 + $0x27e8] sm:$0xff]
  %v1297 = vld [vmem:[%s1 + $0x27f0] sm:$0xff]
  %v1298 = vld [vmem:[%s1 + $0x27f8] sm:$0xff]
  %v1299 = vld [vmem:[%s1 + $0x2800] sm:$0xff]
  %v1300 = vld [vmem:[%s1 + $0x2808] sm:$0xff]
  %v1301 = vld [vmem:[%s1 + $0x2810] sm:$0xff]
  %v1302 = vld [vmem:[%s1 + $0x2818] sm:$0xff]
  %v1303 = vld [vmem:[%s1 + $0x2820] sm:$0xff]
  %v1304 = vld [vmem:[%s1 + $0x2828] sm:$0xff]
  %v1305 = vld [vmem:[%s1 + $0x2830] sm:$0xff]
  %v1306 = vld [vmem:[%s1 + $0x2838] sm:$0xff]
  %v1307 = vld [vmem:[%s1 + $0x2840] sm:$0xff]
  %v1308 = vld [vmem:[%s1 + $0x2848] sm:$0xff]
  %v1309 = vld [vmem:[%s1 + $0x2850] sm:$0xff]
  %v1310 = vld [vmem:[%s1 + $0x2858] sm:$0xff]
  %v1311 = vld [vmem:[%s1 + $0x2860] sm:$0xff]
  %v1312 = vld [vmem:[%s1 + $0x2868] sm:$0xff]
  %v1313 = vld [vmem:[%s1 + $0x2870] sm:$0xff]
  %v1314 = vld [vmem:[%s1 + $0x2878] sm:$0xff]
  %v1315 = vld [vmem:[%s1 + $0x2880] sm:$0xff]
  %v1316 = vld [vmem:[%s1 + $0x2888] sm:$0xff]
  %v1317 = vld [vmem:[%s1 + $0x2890] sm:$0xff]
  %v1318 = vld [vmem:[%s1 + $0x2898] sm:$0xff]
  %v1319 = vld [vmem:[%s1 + $0x28a0] sm:$0xff]
  %v1320 = vld [vmem:[%s1 + $0x28a8] sm:$0xff]
  %v1321 = vld [vmem:[%s1 + $0x28b0] sm:$0xff]
  %v1322 = vld [vmem:[%s1 + $0x28b8] sm:$0xff]
  %v1323 = vld [vmem:[%s1 + $0x28c0] sm:$0xff]
  %v1324 = vld [vmem:[%s1 + $0x28c8] sm:$0xff]
  %v1325 = vld [vmem:[%s1 + $0x28d0] sm:$0xff]
  %v1326 = vld [vmem:[%s1 + $0x28d8] sm:$0xff]
  %v1327 = vld [vmem:[%s1 + $0x28e0] sm:$0xff]
  %v1328 = vld [vmem:[%s1 + $0x28e8] sm:$0xff]
  %v1329 = vld [vmem:[%s1 + $0x28f0] sm:$0xff]
  %v1330 = vld [vmem:[%s1 + $0x28f8] sm:$0xff]
  %v1331 = vld [vmem:[%s1 + $0x2900] sm:$0xff]
  %v1332 = vld [vmem:[%s1 + $0x2908] sm:$0xff]
  %v1333 = vld [vmem:[%s1 + $0x2910] sm:$0xff]
  %v1334 = vld [vmem:[%s1 + $0x2918] sm:$0xff]
  %v1335 = vld [vmem:[%s1 + $0x2920] sm:$0xff]
  %v1336 = vld [vmem:[%s1 + $0x2928] sm:$0xff]
  %v1337 = vld [vmem:[%s1 + $0x2930] sm:$0xff]
  %v1338 = vld [vmem:[%s1 + $0x2938] sm:$0xff]
  %v1339 = vld [vmem:[%s1 + $0x2940] sm:$0xff]
  %v1340 = vld [vmem:[%s1 + $0x2948] sm:$0xff]
  %v1341 = vld [vmem:[%s1 + $0x2950] sm:$0xff]
  %v1342 = vld [vmem:[%s1 + $0x2958] sm:$0xff]
  %v1343 = vld [vmem:[%s1 + $0x2960] sm:$0xff]
  %v1344 = vld [vmem:[%s1 + $0x2968] sm:$0xff]
  %v1345 = vld [vmem:[%s1 + $0x2970] sm:$0xff]
  %v1346 = vld [vmem:[%s1 + $0x2978] sm:$0xff]
  %v1347 = vld [vmem:[%s1 + $0x2980] sm:$0xff]
  %v1348 = vld [vmem:[%s1 + $0x2988] sm:$0xff]
  %v1349 = vld [vmem:[%s1 + $0x2990] sm:$0xff]
  %v1350 = vld [vmem:[%s1 + $0x2998] sm:$0xff]
  %v1351 = vld [vmem:[%s1 + $0x29a0] sm:$0xff]
  %v1352 = vld [vmem:[%s1 + $0x29a8] sm:$0xff]
  %v1353 = vld [vmem:[%s1 + $0x29b0] sm:$0xff]
  %v1354 = vld [vmem:[%s1 + $0x29b8] sm:$0xff]
  %v1355 = vld [vmem:[%s1 + $0x29c0] sm:$0xff]
  %v1356 = vld [vmem:[%s1 + $0x29c8] sm:$0xff]
  %v1357 = vld [vmem:[%s1 + $0x29d0] sm:$0xff]
  %v1358 = vld [vmem:[%s1 + $0x29d8] sm:$0xff]
  %v1359 = vld [vmem:[%s1 + $0x29e0] sm:$0xff]
  %v1360 = vld [vmem:[%s1 + $0x29e8] sm:$0xff]
  %v1361 = vld [vmem:[%s1 + $0x29f0] sm:$0xff]
  %v1362 = vld [vmem:[%s1 + $0x29f8] sm:$0xff]
  %v1363 = vld [vmem:[%s1 + $0x2a00] sm:$0xff]
  %v1364 = vld [vmem:[%s1 + $0x2a08] sm:$0xff]
  %v1365 = vld [vmem:[%s1 + $0x2a10] sm:$0xff]
  %v1366 = vld [vmem:[%s1 + $0x2a18] sm:$0xff]
  %v1367 = vld [vmem:[%s1 + $0x2a20] sm:$0xff]
  %v1368 = vld [vmem:[%s1 + $0x2a28] sm:$0xff]
  %v1369 = vld [vmem:[%s1 + $0x2a30] sm:$0xff]
  %v1370 = vld [vmem:[%s1 + $0x2a38] sm:$0xff]
  %v1371 = vld [vmem:[%s1 + $0x2a40] sm:$0xff]
  %v1372 = vld [vmem:[%s1 + $0x2a48] sm:$0xff]
  %v1373 = vld [vmem:[%s1 + $0x2a50] sm:$0xff]
  %v1374 = vld [vmem:[%s1 + $0x2a58] sm:$0xff]
  %v1375 = vld [vmem:[%s1 + $0x2a60] sm:$0xff]
  %v1376 = vld [vmem:[%s1 + $0x2a68] sm:$0xff]
  %v1377 = vld [vmem:[%s1 + $0x2a70] sm:$0xff]
  %v1378 = vld [vmem:[%s1 + $0x2a78] sm:$0xff]
  %v1379 = vld [vmem:[%s1 + $0x2a80] sm:$0xff]
  %v1380 = vld [vmem:[%s1 + $0x2a88] sm:$0xff]
  %v1381 = vld [vmem:[%s1 + $0x2a90] sm:$0xff]
  %v1382 = vld [vmem:[%s1 + $0x2a98] sm:$0xff]
  %v1383 = vld [vmem:[%s1 + $0x2aa0] sm:$0xff]
  %v1384 = vld [vmem:[%s1 + $0x2aa8] sm:$0xff]
  %v1385 = vld [vmem:[%s1 + $0x2ab0] sm:$0xff]
  %v1386 = vld [vmem:[%s1 + $0x2ab8] sm:$0xff]
  %v1387 = vld [vmem:[%s1 + $0x2ac0] sm:$0xff]
  %v1388 = vld [vmem:[%s1 + $0x2ac8] sm:$0xff]
  %v1389 = vld [vmem:[%s1 + $0x2ad0] sm:$0xff]
  %v1390 = vld [vmem:[%s1 + $0x2ad8] sm:$0xff]
  %v1391 = vld [vmem:[%s1 + $0x2ae0] sm:$0xff]
  %v1392 = vld [vmem:[%s1 + $0x2ae8] sm:$0xff]
  %v1393 = vld [vmem:[%s1 + $0x2af0] sm:$0xff]
  %v1394 = vld [vmem:[%s1 + $0x2af8] sm:$0xff]
  %v1395 = vld [vmem:[%s1 + $0x2b00] sm:$0xff]
  %v1396 = vld [vmem:[%s1 + $0x2b08] sm:$0xff]
  %v1397 = vld [vmem:[%s1 + $0x2b10] sm:$0xff]
  %v1398 = vld [vmem:[%s1 + $0x2b18] sm:$0xff]
  %v1399 = vld [vmem:[%s1 + $0x2b20] sm:$0xff]
  %v1400 = vld [vmem:[%s1 + $0x2b28] sm:$0xff]
  %v1401 = vld [vmem:[%s1 + $0x2b30] sm:$0xff]
  %v1402 = vld [vmem:[%s1 + $0x2b38] sm:$0xff]
  %v1403 = vld [vmem:[%s1 + $0x2b40] sm:$0xff]
  %v1404 = vld [vmem:[%s1 + $0x2b48] sm:$0xff]
  %v1405 = vld [vmem:[%s1 + $0x2b50] sm:$0xff]
  %v1406 = vld [vmem:[%s1 + $0x2b58] sm:$0xff]
  %v1407 = vld [vmem:[%s1 + $0x2b60] sm:$0xff]
  %v1408 = vld [vmem:[%s1 + $0x2b68] sm:$0xff]
  %v1409 = vld [vmem:[%s1 + $0x2b70] sm:$0xff]
  %v1410 = vld [vmem:[%s1 + $0x2b78] sm:$0xff]
  %v1411 = vld [vmem:[%s1 + $0x2b80] sm:$0xff]
  %v1412 = vld [vmem:[%s1 + $0x2b88] sm:$0xff]
  %v1413 = vld [vmem:[%s1 + $0x2b90] sm:$0xff]
  %v1414 = vld [vmem:[%s1 + $0x2b98] sm:$0xff]
  %v1415 = vld [vmem:[%s1 + $0x2ba0] sm:$0xff]
  %v1416 = vld [vmem:[%s1 + $0x2ba8] sm:$0xff]
  %v1417 = vld [vmem:[%s1 + $0x2bb0] sm:$0xff]
  %v1418 = vld [vmem:[%s1 + $0x2bb8] sm:$0xff]
  %v1419 = vld [vmem:[%s1 + $0x2bc0] sm:$0xff]
  %v1420 = vld [vmem:[%s1 + $0x2bc8] sm:$0xff]
  %v1421 = vld [vmem:[%s1 + $0x2bd0] sm:$0xff]
  %v1422 = vld [vmem:[%s1 + $0x2bd8] sm:$0xff]
  %v1423 = vld [vmem:[%s1 + $0x2be0] sm:$0xff]
  %v1424 = vld [vmem:[%s1 + $0x2be8] sm:$0xff]
  %v1425 = vld [vmem:[%s1 + $0x2bf0] sm:$0xff]
  %v1426 = vld [vmem:[%s1 + $0x2bf8] sm:$0xff]
  %v1427 = vld [vmem:[%s1 + $0x2c00] sm:$0xff]
  %v1428 = vld [vmem:[%s1 + $0x2c08] sm:$0xff]
  %v1429 = vld [vmem:[%s1 + $0x2c10] sm:$0xff]
  %v1430 = vld [vmem:[%s1 + $0x2c18] sm:$0xff]
  %v1431 = vld [vmem:[%s1 + $0x2c20] sm:$0xff]
  %v1432 = vld [vmem:[%s1 + $0x2c28] sm:$0xff]
  %v1433 = vld [vmem:[%s1 + $0x2c30] sm:$0xff]
  %v1434 = vld [vmem:[%s1 + $0x2c38] sm:$0xff]
  %v1435 = vld [vmem:[%s1 + $0x2c40] sm:$0xff]
  %v1436 = vld [vmem:[%s1 + $0x2c48] sm:$0xff]
  %v1437 = vld [vmem:[%s1 + $0x2c50] sm:$0xff]
  %v1438 = vld [vmem:[%s1 + $0x2c58] sm:$0xff]
  %v1439 = vld [vmem:[%s1 + $0x2c60] sm:$0xff]
  %v1440 = vld [vmem:[%s1 + $0x2c68] sm:$0xff]
  %v1441 = vld [vmem:[%s1 + $0x2c70] sm:$0xff]
  %v1442 = vld [vmem:[%s1 + $0x2c78] sm:$0xff]
  %v1443 = vld [vmem:[%s1 + $0x2c80] sm:$0xff]
  %v1444 = vld [vmem:[%s1 + $0x2c88] sm:$0xff]
  %v1445 = vld [vmem:[%s1 + $0x2c90] sm:$0xff]
  %v1446 = vld [vmem:[%s1 + $0x2c98] sm:$0xff]
  %v1447 = vld [vmem:[%s1 + $0x2ca0] sm:$0xff]
  %v1448 = vld [vmem:[%s1 + $0x2ca8] sm:$0xff]
  %v1449 = vld [vmem:[%s1 + $0x2cb0] sm:$0xff]
  %v1450 = vld [vmem:[%s1 + $0x2cb8] sm:$0xff]
  %v1451 = vld [vmem:[%s1 + $0x2cc0] sm:$0xff]
  %v1452 = vld [vmem:[%s1 + $0x2cc8] sm:$0xff]
  %v1453 = vld [vmem:[%s1 + $0x2cd0] sm:$0xff]
  %v1454 = vld [vmem:[%s1 + $0x2cd8] sm:$0xff]
  %v1455 = vld [vmem:[%s1 + $0x2ce0] sm:$0xff]
  %v1456 = vld [vmem:[%s1 + $0x2ce8] sm:$0xff]
  %v1457 = vld [vmem:[%s1 + $0x2cf0] sm:$0xff]
  %v1458 = vld [vmem:[%s1 + $0x2cf8] sm:$0xff]
  %v1459 = vld [vmem:[%s1 + $0x2d00] sm:$0xff]
  %v1460 = vld [vmem:[%s1 + $0x2d08] sm:$0xff]
  %v1461 = vld [vmem:[%s1 + $0x2d10] sm:$0xff]
  %v1462 = vld [vmem:[%s1 + $0x2d18] sm:$0xff]
  %v1463 = vld [vmem:[%s1 + $0x2d20] sm:$0xff]
  %v1464 = vld [vmem:[%s1 + $0x2d28] sm:$0xff]
  %v1465 = vld [vmem:[%s1 + $0x2d30] sm:$0xff]
  %v1466 = vld [vmem:[%s1 + $0x2d38] sm:$0xff]
  %v1467 = vld [vmem:[%s1 + $0x2d40] sm:$0xff]
  %v1468 = vld [vmem:[%s1 + $0x2d48] sm:$0xff]
  %v1469 = vld [vmem:[%s1 + $0x2d50] sm:$0xff]
  %v1470 = vld [vmem:[%s1 + $0x2d58] sm:$0xff]
  %v1471 = vld [vmem:[%s1 + $0x2d60] sm:$0xff]
  %v1472 = vld [vmem:[%s1 + $0x2d68] sm:$0xff]
  %v1473 = vld [vmem:[%s1 + $0x2d70] sm:$0xff]
  %v1474 = vld [vmem:[%s1 + $0x2d78] sm:$0xff]
  %v1475 = vld [vmem:[%s1 + $0x2d80] sm:$0xff]
  %v1476 = vld [vmem:[%s1 + $0x2d88] sm:$0xff]
  %v1477 = vld [vmem:[%s1 + $0x2d90] sm:$0xff]
  %v1478 = vld [vmem:[%s1 + $0x2d98] sm:$0xff]
  %v1479 = vld [vmem:[%s1 + $0x2da0] sm:$0xff]
  %v1480 = vld [vmem:[%s1 + $0x2da8] sm:$0xff]
  %v1481 = vld [vmem:[%s1 + $0x2db0] sm:$0xff]
  %v1482 = vld [vmem:[%s1 + $0x2db8] sm:$0xff]
  %v1483 = vld [vmem:[%s1 + $0x2dc0] sm:$0xff]
  %v1484 = vld [vmem:[%s1 + $0x2dc8] sm:$0xff]
  %v1485 = vld [vmem:[%s1 + $0x2dd0] sm:$0xff]
  %v1486 = vld [vmem:[%s1 + $0x2dd8] sm:$0xff]
  %v1487 = vld [vmem:[%s1 + $0x2de0] sm:$0xff]
  %v1488 = vld [vmem:[%s1 + $0x2de8] sm:$0xff]
  %v1489 = vld [vmem:[%s1 + $0x2df0] sm:$0xff]
  %v1490 = vld [vmem:[%s1 + $0x2df8] sm:$0xff]
  %v1491 = vld [vmem:[%s1 + $0x2e00] sm:$0xff]
  %v1492 = vld [vmem:[%s1 + $0x2e08] sm:$0xff]
  %v1493 = vld [vmem:[%s1 + $0x2e10] sm:$0xff]
  %v1494 = vld [vmem:[%s1 + $0x2e18] sm:$0xff]
  %v1495 = vld [vmem:[%s1 + $0x2e20] sm:$0xff]
  %v1496 = vld [vmem:[%s1 + $0x2e28] sm:$0xff]
  %v1497 = vld [vmem:[%s1 + $0x2e30] sm:$0xff]
  %v1498 = vld [vmem:[%s1 + $0x2e38] sm:$0xff]
  %v1499 = vld [vmem:[%s1 + $0x2e40] sm:$0xff]
  %v1500 = vld [vmem:[%s1 + $0x2e48] sm:$0xff]
  %v1501 = vld [vmem:[%s1 + $0x2e50] sm:$0xff]
  %v1502 = vld [vmem:[%s1 + $0x2e58] sm:$0xff]
  %v1503 = vld [vmem:[%s1 + $0x2e60] sm:$0xff]
  %v1504 = vld [vmem:[%s1 + $0x2e68] sm:$0xff]
  %v1505 = vld [vmem:[%s1 + $0x2e70] sm:$0xff]
  %v1506 = vld [vmem:[%s1 + $0x2e78] sm:$0xff]
  %v1507 = vld [vmem:[%s1 + $0x2e80] sm:$0xff]
  %v1508 = vld [vmem:[%s1 + $0x2e88] sm:$0xff]
  %v1509 = vld [vmem:[%s1 + $0x2e90] sm:$0xff]
  %v1510 = vld [vmem:[%s1 + $0x2e98] sm:$0xff]
  %v1511 = vld [vmem:[%s1 + $0x2ea0] sm:$0xff]
  %v1512 = vld [vmem:[%s1 + $0x2ea8] sm:$0xff]
  %v1513 = vld [vmem:[%s1 + $0x2eb0] sm:$0xff]
  %v1514 = vld [vmem:[%s1 + $0x2eb8] sm:$0xff]
  %v1515 = vld [vmem:[%s1 + $0x2ec0] sm:$0xff]
  %v1516 = vld [vmem:[%s1 + $0x2ec8] sm:$0xff]
  %v1517 = vld [vmem:[%s1 + $0x2ed0] sm:$0xff]
  %v1518 = vld [vmem:[%s1 + $0x2ed8] sm:$0xff]
  %v1519 = vld [vmem:[%s1 + $0x2ee0] sm:$0xff]
  %v1520 = vld [vmem:[%s1 + $0x2ee8] sm:$0xff]
  %v1521 = vld [vmem:[%s1 + $0x2ef0] sm:$0xff]
  %v1522 = vld [vmem:[%s1 + $0x2ef8] sm:$0xff]
  %v1523 = vld [vmem:[%s1 + $0x2f00] sm:$0xff]
  %v1524 = vld [vmem:[%s1 + $0x2f08] sm:$0xff]
  %v1525 = vld [vmem:[%s1 + $0x2f10] sm:$0xff]
  %v1526 = vld [vmem:[%s1 + $0x2f18] sm:$0xff]
  %v1527 = vld [vmem:[%s1 + $0x2f20] sm:$0xff]
  %v1528 = vld [vmem:[%s1 + $0x2f28] sm:$0xff]
  %v1529 = vld [vmem:[%s1 + $0x2f30] sm:$0xff]
  %v1530 = vld [vmem:[%s1 + $0x2f38] sm:$0xff]
  %v1531 = vld [vmem:[%s1 + $0x2f40] sm:$0xff]
  %v1532 = vld [vmem:[%s1 + $0x2f48] sm:$0xff]
  %v1533 = vld [vmem:[%s1 + $0x2f50] sm:$0xff]
  %v1534 = vld [vmem:[%s1 + $0x2f58] sm:$0xff]
  %v1535 = vld [vmem:[%s1 + $0x2f60] sm:$0xff]
  %v1536 = vld [vmem:[%s1 + $0x2f68] sm:$0xff]
  %v1537 = vld [vmem:[%s1 + $0x2f70] sm:$0xff]
  %v1538 = vld [vmem:[%s1 + $0x2f78] sm:$0xff]
  %v1539 = vld [vmem:[%s1 + $0x2f80] sm:$0xff]
  %v1540 = vld [vmem:[%s1 + $0x2f88] sm:$0xff]
  %v1541 = vld [vmem:[%s1 + $0x2f90] sm:$0xff]
  %v1542 = vld [vmem:[%s1 + $0x2f98] sm:$0xff]
  %v1543 = vld [vmem:[%s1 + $0x2fa0] sm:$0xff]
  %v1544 = vld [vmem:[%s1 + $0x2fa8] sm:$0xff]
  %v1545 = vld [vmem:[%s1 + $0x2fb0] sm:$0xff]
  %v1546 = vld [vmem:[%s1 + $0x2fb8] sm:$0xff]
  %v1547 = vld [vmem:[%s1 + $0x2fc0] sm:$0xff]
  %v1548 = vld [vmem:[%s1 + $0x2fc8] sm:$0xff]
  %v1549 = vld [vmem:[%s1 + $0x2fd0] sm:$0xff]
  %v1550 = vld [vmem:[%s1 + $0x2fd8] sm:$0xff]
  %v1551 = vld [vmem:[%s1 + $0x2fe0] sm:$0xff]
  %v1552 = vld [vmem:[%s1 + $0x2fe8] sm:$0xff]
  %v1553 = vld [vmem:[%s1 + $0x2ff0] sm:$0xff]
  %v1554 = vld [vmem:[%s1 + $0x2ff8] sm:$0xff]
  %v1555 = vld [vmem:[%s1 + $0x3000] sm:$0xff]
  %v1556 = vld [vmem:[%s1 + $0x3008] sm:$0xff]
  %v1557 = vld [vmem:[%s1 + $0x3010] sm:$0xff]
  %v1558 = vld [vmem:[%s1 + $0x3018] sm:$0xff]
  %v1559 = vld [vmem:[%s1 + $0x3020] sm:$0xff]
  %v1560 = vld [vmem:[%s1 + $0x3028] sm:$0xff]
  %v1561 = vld [vmem:[%s1 + $0x3030] sm:$0xff]
  %v1562 = vld [vmem:[%s1 + $0x3038] sm:$0xff]
  %v1563 = vld [vmem:[%s1 + $0x3040] sm:$0xff]
  %v1564 = vld [vmem:[%s1 + $0x3048] sm:$0xff]
  %v1565 = vld [vmem:[%s1 + $0x3050] sm:$0xff]
  %v1566 = vld [vmem:[%s1 + $0x3058] sm:$0xff]
  %v1567 = vld [vmem:[%s1 + $0x3060] sm:$0xff]
  %v1568 = vld [vmem:[%s1 + $0x3068] sm:$0xff]
  %v1569 = vld [vmem:[%s1 + $0x3070] sm:$0xff]
  %v1570 = vld [vmem:[%s1 + $0x3078] sm:$0xff]
  %v1571 = vld [vmem:[%s1 + $0x3080] sm:$0xff]
  %v1572 = vld [vmem:[%s1 + $0x3088] sm:$0xff]
  %v1573 = vld [vmem:[%s1 + $0x3090] sm:$0xff]
  %v1574 = vld [vmem:[%s1 + $0x3098] sm:$0xff]
  %v1575 = vld [vmem:[%s1 + $0x30a0] sm:$0xff]
  %v1576 = vld [vmem:[%s1 + $0x30a8] sm:$0xff]
  %v1577 = vld [vmem:[%s1 + $0x30b0] sm:$0xff]
  %v1578 = vld [vmem:[%s1 + $0x30b8] sm:$0xff]
  %v1579 = vld [vmem:[%s1 + $0x30c0] sm:$0xff]
  %v1580 = vld [vmem:[%s1 + $0x30c8] sm:$0xff]
  %v1581 = vld [vmem:[%s1 + $0x30d0] sm:$0xff]
  %v1582 = vld [vmem:[%s1 + $0x30d8] sm:$0xff]
  %v1583 = vld [vmem:[%s1 + $0x30e0] sm:$0xff]
  %v1584 = vld [vmem:[%s1 + $0x30e8] sm:$0xff]
  %v1585 = vld [vmem:[%s1 + $0x30f0] sm:$0xff]
  %v1586 = vld [vmem:[%s1 + $0x30f8] sm:$0xff]
  %v1587 = vld [vmem:[%s2] sm:$0xff]
  %v1589 = vlaneseq
  %v1590 = vshrl.u32 %v1589, 7
  %v1591 = vsub.s32 0, %v1590
  %v1592 = vrot.slane %v1587, %v1591
  %v1593 = vlaneseq
  %v1594 = vshrl.u32 %v1593, 7
  %v1595 = vsub.s32 1, %v1594
  %v1596 = vrot.slane %v1587, %v1595
  %v1597 = vlaneseq
  %v1598 = vshrl.u32 %v1597, 7
  %v1599 = vsub.s32 2, %v1598
  %v1600 = vrot.slane %v1587, %v1599
  %v1601 = vlaneseq
  %v1602 = vshrl.u32 %v1601, 7
  %v1603 = vsub.s32 3, %v1602
  %v1604 = vrot.slane %v1587, %v1603
  %v1605 = vlaneseq
  %v1606 = vshrl.u32 %v1605, 7
  %v1607 = vsub.s32 4, %v1606
  %v1608 = vrot.slane %v1587, %v1607
  %v1609 = vlaneseq
  %v1610 = vshrl.u32 %v1609, 7
  %v1611 = vsub.s32 5, %v1610
  %v1612 = vrot.slane %v1587, %v1611
  %v1613 = vlaneseq
  %v1614 = vshrl.u32 %v1613, 7
  %v1615 = vsub.s32 6, %v1614
  %v1616 = vrot.slane %v1587, %v1615
  %v1617 = vlaneseq
  %v1618 = vshrl.u32 %v1617, 7
  %v1619 = vsub.s32 7, %v1618
  %v1620 = vrot.slane %v1587, %v1619
  %v1633 = vcombine.high %v15, %v15
  %v1635 = vunpack.c.l.s4 1966171168
  %v1636 = vunpack.c.0.s8 %v1635
  %v1637 = vlaneseq
  %v1638 = vshrl.u32 %v1637, 7
  %v1639 = vsub.s32 %v1636, %v1638
  %v1640 = vrot.slane %v15, %v1639
  %v1642 = vunpack.c.l.s4 1966171168
  %v1643 = vunpack.c.0.s8 %v1642
  %v1644 = vlaneseq
  %v1645 = vshrl.u32 %v1644, 7
  %v1646 = vsub.s32 %v1643, %v1645
  %v1647 = vrot.slane %v1633, %v1646
  %v1648 = vcombine.high %v1640, %v1640
  %v1649 = vcombine.high %v1647, %v1647
  %v1651 = vunpack.c.l.s4 1966171168
  %v1652 = vunpack.c.0.s8 %v1651
  %v1653 = vlaneseq
  %v1654 = vshrl.u32 %v1653, 7
  %v1655 = vsub.s32 %v1652, %v1654
  %v1656 = vrot.slane %v1640, %v1655
  %v1658 = vunpack.c.l.s4 1966171168
  %v1659 = vunpack.c.0.s8 %v1658
  %v1660 = vlaneseq
  %v1661 = vshrl.u32 %v1660, 7
  %v1662 = vsub.s32 %v1659, %v1661
  %v1663 = vrot.slane %v1647, %v1662
  %v1665 = vunpack.c.l.s4 1966171168
  %v1666 = vunpack.c.0.s8 %v1665
  %v1667 = vlaneseq
  %v1668 = vshrl.u32 %v1667, 7
  %v1669 = vsub.s32 %v1666, %v1668
  %v1670 = vrot.slane %v1648, %v1669
  %v1672 = vunpack.c.l.s4 1966171168
  %v1673 = vunpack.c.0.s8 %v1672
  %v1674 = vlaneseq
  %v1675 = vshrl.u32 %v1674, 7
  %v1676 = vsub.s32 %v1673, %v1675
  %v1677 = vrot.slane %v1649, %v1676
  %v1678 = vcombine.high %v1656, %v1656
  %v1679 = vcombine.high %v1663, %v1663
  %v1680 = vcombine.high %v1670, %v1670
  %v1681 = vcombine.high %v1677, %v1677
  %v1682 = vcombine.high %v16, %v16
  %v1684 = vunpack.c.l.s4 1966171168
  %v1685 = vunpack.c.0.s8 %v1684
  %v1686 = vlaneseq
  %v1687 = vshrl.u32 %v1686, 7
  %v1688 = vsub.s32 %v1685, %v1687
  %v1689 = vrot.slane %v16, %v1688
  %v1691 = vunpack.c.l.s4 1966171168
  %v1692 = vunpack.c.0.s8 %v1691
  %v1693 = vlaneseq
  %v1694 = vshrl.u32 %v1693, 7
  %v1695 = vsub.s32 %v1692, %v1694
  %v1696 = vrot.slane %v1682, %v1695
  %v1697 = vcombine.high %v1689, %v1689
  %v1698 = vcombine.high %v1696, %v1696
  %v1700 = vunpack.c.l.s4 1966171168
  %v1701 = vunpack.c.0.s8 %v1700
  %v1702 = vlaneseq
  %v1703 = vshrl.u32 %v1702, 7
  %v1704 = vsub.s32 %v1701, %v1703
  %v1705 = vrot.slane %v1689, %v1704
  %v1707 = vunpack.c.l.s4 1966171168
  %v1708 = vunpack.c.0.s8 %v1707
  %v1709 = vlaneseq
  %v1710 = vshrl.u32 %v1709, 7
  %v1711 = vsub.s32 %v1708, %v1710
  %v1712 = vrot.slane %v1696, %v1711
  %v1714 = vunpack.c.l.s4 1966171168
  %v1715 = vunpack.c.0.s8 %v1714
  %v1716 = vlaneseq
  %v1717 = vshrl.u32 %v1716, 7
  %v1718 = vsub.s32 %v1715, %v1717
  %v1719 = vrot.slane %v1697, %v1718
  %v1721 = vunpack.c.l.s4 1966171168
  %v1722 = vunpack.c.0.s8 %v1721
  %v1723 = vlaneseq
  %v1724 = vshrl.u32 %v1723, 7
  %v1725 = vsub.s32 %v1722, %v1724
  %v1726 = vrot.slane %v1698, %v1725
  %v1727 = vcombine.high %v1705, %v1705
  %v1728 = vcombine.high %v1712, %v1712
  %v1729 = vcombine.high %v1719, %v1719
  %v1730 = vcombine.high %v1726, %v1726
  %v1731 = vcombine.high %v17, %v17
  %v1733 = vunpack.c.l.s4 1966171168
  %v1734 = vunpack.c.0.s8 %v1733
  %v1735 = vlaneseq
  %v1736 = vshrl.u32 %v1735, 7
  %v1737 = vsub.s32 %v1734, %v1736
  %v1738 = vrot.slane %v17, %v1737
  %v1740 = vunpack.c.l.s4 1966171168
  %v1741 = vunpack.c.0.s8 %v1740
  %v1742 = vlaneseq
  %v1743 = vshrl.u32 %v1742, 7
  %v1744 = vsub.s32 %v1741, %v1743
  %v1745 = vrot.slane %v1731, %v1744
  %v1746 = vcombine.high %v1738, %v1738
  %v1747 = vcombine.high %v1745, %v1745
  %v1749 = vunpack.c.l.s4 1966171168
  %v1750 = vunpack.c.0.s8 %v1749
  %v1751 = vlaneseq
  %v1752 = vshrl.u32 %v1751, 7
  %v1753 = vsub.s32 %v1750, %v1752
  %v1754 = vrot.slane %v1738, %v1753
  %v1756 = vunpack.c.l.s4 1966171168
  %v1757 = vunpack.c.0.s8 %v1756
  %v1758 = vlaneseq
  %v1759 = vshrl.u32 %v1758, 7
  %v1760 = vsub.s32 %v1757, %v1759
  %v1761 = vrot.slane %v1745, %v1760
  %v1763 = vunpack.c.l.s4 1966171168
  %v1764 = vunpack.c.0.s8 %v1763
  %v1765 = vlaneseq
  %v1766 = vshrl.u32 %v1765, 7
  %v1767 = vsub.s32 %v1764, %v1766
  %v1768 = vrot.slane %v1746, %v1767
  %v1770 = vunpack.c.l.s4 1966171168
  %v1771 = vunpack.c.0.s8 %v1770
  %v1772 = vlaneseq
  %v1773 = vshrl.u32 %v1772, 7
  %v1774 = vsub.s32 %v1771, %v1773
  %v1775 = vrot.slane %v1747, %v1774
  %v1776 = vcombine.high %v1754, %v1754
  %v1777 = vcombine.high %v1761, %v1761
  %v1778 = vcombine.high %v1768, %v1768
  %v1779 = vcombine.high %v1775, %v1775
  %v1781 = vunpack.c.l.s4 1966171168
  %v1782 = vunpack.c.0.s8 %v1781
  %v1783 = vlaneseq
  %v1784 = vshrl.u32 %v1783, 7
  %v1785 = vsub.s32 %v1782, %v1784
  %v1786 = vrot.slane %v18, %v1785
  %v1788 = vunpack.c.l.s4 1966171168
  %v1789 = vunpack.c.0.s8 %v1788
  %v1790 = vlaneseq
  %v1791 = vshrl.u32 %v1790, 7
  %v1792 = vsub.s32 %v1789, %v1791
  %v1793 = vrot.slane %v1786, %v1792
  %v3386 = vunpack.c.l.b16 %v19
  %v3387 = vunpack.c.h.b16 %v19
  %v3388 = vunpack.c.l.b16 %v20
  %v3389 = vunpack.c.h.b16 %v20
  %v3390 = vunpack.c.l.b16 %v21
  %v3391 = vunpack.c.h.b16 %v21
  %v3392 = vunpack.c.l.b16 %v22
  %v3393 = vunpack.c.h.b16 %v22
  %v3394 = vunpack.c.l.b16 %v23
  %v3395 = vunpack.c.h.b16 %v23
  %v3396 = vunpack.c.l.b16 %v24
  %v3397 = vunpack.c.h.b16 %v24
  %v3398 = vunpack.c.l.b16 %v25
  %v3399 = vunpack.c.h.b16 %v25
  %v3400 = vunpack.c.l.b16 %v26
  %v3401 = vunpack.c.h.b16 %v26
  %v3402 = vunpack.c.l.b16 %v27
  %v3403 = vunpack.c.h.b16 %v27
  %v3404 = vunpack.c.l.b16 %v28
  %v3405 = vunpack.c.h.b16 %v28
  %v3406 = vunpack.c.l.b16 %v29
  %v3407 = vunpack.c.h.b16 %v29
  %v3408 = vunpack.c.l.b16 %v30
  %v3409 = vunpack.c.h.b16 %v30
  %v3410 = vunpack.c.l.b16 %v31
  %v3411 = vunpack.c.h.b16 %v31
  %v3412 = vunpack.c.l.b16 %v32
  %v3413 = vunpack.c.h.b16 %v32
  %v3414 = vunpack.c.l.b16 %v33
  %v3415 = vunpack.c.h.b16 %v33
  %v3416 = vunpack.c.l.b16 %v34
  %v3417 = vunpack.c.h.b16 %v34
  %v3418 = vunpack.c.l.b16 %v35
  %v3419 = vunpack.c.h.b16 %v35
  %v3420 = vunpack.c.l.b16 %v36
  %v3421 = vunpack.c.h.b16 %v36
  %v3422 = vunpack.c.l.b16 %v37
  %v3423 = vunpack.c.h.b16 %v37
  %v3424 = vunpack.c.l.b16 %v38
  %v3425 = vunpack.c.h.b16 %v38
  %v3426 = vunpack.c.l.b16 %v39
  %v3427 = vunpack.c.h.b16 %v39
  %v3428 = vunpack.c.l.b16 %v40
  %v3429 = vunpack.c.h.b16 %v40
  %v3430 = vunpack.c.l.b16 %v41
  %v3431 = vunpack.c.h.b16 %v41
  %v3432 = vunpack.c.l.b16 %v42
  %v3433 = vunpack.c.h.b16 %v42
  %v3434 = vunpack.c.l.b16 %v43
  %v3435 = vunpack.c.h.b16 %v43
  %v3436 = vunpack.c.l.b16 %v44
  %v3437 = vunpack.c.h.b16 %v44
  %v3438 = vunpack.c.l.b16 %v45
  %v3439 = vunpack.c.h.b16 %v45
  %v3440 = vunpack.c.l.b16 %v46
  %v3441 = vunpack.c.h.b16 %v46
  %v3442 = vunpack.c.l.b16 %v47
  %v3443 = vunpack.c.h.b16 %v47
  %v3444 = vunpack.c.l.b16 %v48
  %v3445 = vunpack.c.h.b16 %v48
  %v3446 = vunpack.c.l.b16 %v49
  %v3447 = vunpack.c.h.b16 %v49
  %v3448 = vunpack.c.l.b16 %v50
  %v3449 = vunpack.c.h.b16 %v50
  %v3450 = vunpack.c.l.b16 %v51
  %v3451 = vunpack.c.h.b16 %v51
  %v3452 = vunpack.c.l.b16 %v52
  %v3453 = vunpack.c.h.b16 %v52
  %v3454 = vunpack.c.l.b16 %v53
  %v3455 = vunpack.c.h.b16 %v53
  %v3456 = vunpack.c.l.b16 %v54
  %v3457 = vunpack.c.h.b16 %v54
  %v3458 = vunpack.c.l.b16 %v55
  %v3459 = vunpack.c.h.b16 %v55
  %v3460 = vunpack.c.l.b16 %v56
  %v3461 = vunpack.c.h.b16 %v56
  %v3462 = vunpack.c.l.b16 %v57
  %v3463 = vunpack.c.h.b16 %v57
  %v3464 = vunpack.c.l.b16 %v58
  %v3465 = vunpack.c.h.b16 %v58
  %v3466 = vunpack.c.l.b16 %v59
  %v3467 = vunpack.c.h.b16 %v59
  %v3468 = vunpack.c.l.b16 %v60
  %v3469 = vunpack.c.h.b16 %v60
  %v3470 = vunpack.c.l.b16 %v61
  %v3471 = vunpack.c.h.b16 %v61
  %v3472 = vunpack.c.l.b16 %v62
  %v3473 = vunpack.c.h.b16 %v62
  %v3474 = vunpack.c.l.b16 %v63
  %v3475 = vunpack.c.h.b16 %v63
  %v3476 = vunpack.c.l.b16 %v64
  %v3477 = vunpack.c.h.b16 %v64
  %v3478 = vunpack.c.l.b16 %v65
  %v3479 = vunpack.c.h.b16 %v65
  %v3480 = vunpack.c.l.b16 %v66
  %v3481 = vunpack.c.h.b16 %v66
  %v3482 = vunpack.c.l.b16 %v67
  %v3483 = vunpack.c.h.b16 %v67
  %v3484 = vunpack.c.l.b16 %v68
  %v3485 = vunpack.c.h.b16 %v68
  %v3486 = vunpack.c.l.b16 %v69
  %v3487 = vunpack.c.h.b16 %v69
  %v3488 = vunpack.c.l.b16 %v70
  %v3489 = vunpack.c.h.b16 %v70
  %v3490 = vunpack.c.l.b16 %v71
  %v3491 = vunpack.c.h.b16 %v71
  %v3492 = vunpack.c.l.b16 %v72
  %v3493 = vunpack.c.h.b16 %v72
  %v3494 = vunpack.c.l.b16 %v73
  %v3495 = vunpack.c.h.b16 %v73
  %v3496 = vunpack.c.l.b16 %v74
  %v3497 = vunpack.c.h.b16 %v74
  %v3498 = vunpack.c.l.b16 %v75
  %v3499 = vunpack.c.h.b16 %v75
  %v3500 = vunpack.c.l.b16 %v76
  %v3501 = vunpack.c.h.b16 %v76
  %v3502 = vunpack.c.l.b16 %v77
  %v3503 = vunpack.c.h.b16 %v77
  %v3504 = vunpack.c.l.b16 %v78
  %v3505 = vunpack.c.h.b16 %v78
  %v3506 = vunpack.c.l.b16 %v79
  %v3507 = vunpack.c.h.b16 %v79
  %v3508 = vunpack.c.l.b16 %v80
  %v3509 = vunpack.c.h.b16 %v80
  %v3510 = vunpack.c.l.b16 %v81
  %v3511 = vunpack.c.h.b16 %v81
  %v3512 = vunpack.c.l.b16 %v82
  %v3513 = vunpack.c.h.b16 %v82
  %v3514 = vunpack.c.l.b16 %v83
  %v3515 = vunpack.c.h.b16 %v83
  %v3516 = vunpack.c.l.b16 %v84
  %v3517 = vunpack.c.h.b16 %v84
  %v3518 = vunpack.c.l.b16 %v85
  %v3519 = vunpack.c.h.b16 %v85
  %v3520 = vunpack.c.l.b16 %v86
  %v3521 = vunpack.c.h.b16 %v86
  %v3522 = vunpack.c.l.b16 %v87
  %v3523 = vunpack.c.h.b16 %v87
  %v3524 = vunpack.c.l.b16 %v88
  %v3525 = vunpack.c.h.b16 %v88
  %v3526 = vunpack.c.l.b16 %v89
  %v3527 = vunpack.c.h.b16 %v89
  %v3528 = vunpack.c.l.b16 %v90
  %v3529 = vunpack.c.h.b16 %v90
  %v3530 = vunpack.c.l.b16 %v91
  %v3531 = vunpack.c.h.b16 %v91
  %v3532 = vunpack.c.l.b16 %v92
  %v3533 = vunpack.c.h.b16 %v92
  %v3534 = vunpack.c.l.b16 %v93
  %v3535 = vunpack.c.h.b16 %v93
  %v3536 = vunpack.c.l.b16 %v94
  %v3537 = vunpack.c.h.b16 %v94
  %v3538 = vunpack.c.l.b16 %v95
  %v3539 = vunpack.c.h.b16 %v95
  %v3540 = vunpack.c.l.b16 %v96
  %v3541 = vunpack.c.h.b16 %v96
  %v3542 = vunpack.c.l.b16 %v97
  %v3543 = vunpack.c.h.b16 %v97
  %v3544 = vunpack.c.l.b16 %v98
  %v3545 = vunpack.c.h.b16 %v98
  %v3546 = vunpack.c.l.b16 %v99
  %v3547 = vunpack.c.h.b16 %v99
  %v3548 = vunpack.c.l.b16 %v100
  %v3549 = vunpack.c.h.b16 %v100
  %v3550 = vunpack.c.l.b16 %v101
  %v3551 = vunpack.c.h.b16 %v101
  %v3552 = vunpack.c.l.b16 %v102
  %v3553 = vunpack.c.h.b16 %v102
  %v3554 = vunpack.c.l.b16 %v103
  %v3555 = vunpack.c.h.b16 %v103
  %v3556 = vunpack.c.l.b16 %v104
  %v3557 = vunpack.c.h.b16 %v104
  %v3558 = vunpack.c.l.b16 %v105
  %v3559 = vunpack.c.h.b16 %v105
  %v3560 = vunpack.c.l.b16 %v106
  %v3561 = vunpack.c.h.b16 %v106
  %v3562 = vunpack.c.l.b16 %v107
  %v3563 = vunpack.c.h.b16 %v107
  %v3564 = vunpack.c.l.b16 %v108
  %v3565 = vunpack.c.h.b16 %v108
  %v3566 = vunpack.c.l.b16 %v109
  %v3567 = vunpack.c.h.b16 %v109
  %v3568 = vunpack.c.l.b16 %v110
  %v3569 = vunpack.c.h.b16 %v110
  %v3570 = vunpack.c.l.b16 %v111
  %v3571 = vunpack.c.h.b16 %v111
  %v3572 = vunpack.c.l.b16 %v112
  %v3573 = vunpack.c.h.b16 %v112
  %v3574 = vunpack.c.l.b16 %v113
  %v3575 = vunpack.c.h.b16 %v113
  %v3576 = vunpack.c.l.b16 %v114
  %v3577 = vunpack.c.h.b16 %v114
  %v3578 = vunpack.c.l.b16 %v115
  %v3579 = vunpack.c.h.b16 %v115
  %v3580 = vunpack.c.l.b16 %v116
  %v3581 = vunpack.c.h.b16 %v116
  %v3582 = vunpack.c.l.b16 %v117
  %v3583 = vunpack.c.h.b16 %v117
  %v3584 = vunpack.c.l.b16 %v118
  %v3585 = vunpack.c.h.b16 %v118
  %v3586 = vunpack.c.l.b16 %v119
  %v3587 = vunpack.c.h.b16 %v119
  %v3588 = vunpack.c.l.b16 %v120
  %v3589 = vunpack.c.h.b16 %v120
  %v3590 = vunpack.c.l.b16 %v121
  %v3591 = vunpack.c.h.b16 %v121
  %v3592 = vunpack.c.l.b16 %v122
  %v3593 = vunpack.c.h.b16 %v122
  %v3594 = vunpack.c.l.b16 %v123
  %v3595 = vunpack.c.h.b16 %v123
  %v3596 = vunpack.c.l.b16 %v124
  %v3597 = vunpack.c.h.b16 %v124
  %v3598 = vunpack.c.l.b16 %v125
  %v3599 = vunpack.c.h.b16 %v125
  %v3600 = vunpack.c.l.b16 %v126
  %v3601 = vunpack.c.h.b16 %v126
  %v3602 = vunpack.c.l.b16 %v127
  %v3603 = vunpack.c.h.b16 %v127
  %v3604 = vunpack.c.l.b16 %v128
  %v3605 = vunpack.c.h.b16 %v128
  %v3606 = vunpack.c.l.b16 %v129
  %v3607 = vunpack.c.h.b16 %v129
  %v3608 = vunpack.c.l.b16 %v130
  %v3609 = vunpack.c.h.b16 %v130
  %v3610 = vunpack.c.l.b16 %v131
  %v3611 = vunpack.c.h.b16 %v131
  %v3612 = vunpack.c.l.b16 %v132
  %v3613 = vunpack.c.h.b16 %v132
  %v3614 = vunpack.c.l.b16 %v133
  %v3615 = vunpack.c.h.b16 %v133
  %v3616 = vunpack.c.l.b16 %v134
  %v3617 = vunpack.c.h.b16 %v134
  %v3618 = vunpack.c.l.b16 %v135
  %v3619 = vunpack.c.h.b16 %v135
  %v3620 = vunpack.c.l.b16 %v136
  %v3621 = vunpack.c.h.b16 %v136
  %v3622 = vunpack.c.l.b16 %v137
  %v3623 = vunpack.c.h.b16 %v137
  %v3624 = vunpack.c.l.b16 %v138
  %v3625 = vunpack.c.h.b16 %v138
  %v3626 = vunpack.c.l.b16 %v139
  %v3627 = vunpack.c.h.b16 %v139
  %v3628 = vunpack.c.l.b16 %v140
  %v3629 = vunpack.c.h.b16 %v140
  %v3630 = vunpack.c.l.b16 %v141
  %v3631 = vunpack.c.h.b16 %v141
  %v3632 = vunpack.c.l.b16 %v142
  %v3633 = vunpack.c.h.b16 %v142
  %v3634 = vunpack.c.l.b16 %v143
  %v3635 = vunpack.c.h.b16 %v143
  %v3636 = vunpack.c.l.b16 %v144
  %v3637 = vunpack.c.h.b16 %v144
  %v3638 = vunpack.c.l.b16 %v145
  %v3639 = vunpack.c.h.b16 %v145
  %v3640 = vunpack.c.l.b16 %v146
  %v3641 = vunpack.c.h.b16 %v146
  %v3642 = vunpack.c.l.b16 %v147
  %v3643 = vunpack.c.h.b16 %v147
  %v3644 = vunpack.c.l.b16 %v148
  %v3645 = vunpack.c.h.b16 %v148
  %v3646 = vunpack.c.l.b16 %v149
  %v3647 = vunpack.c.h.b16 %v149
  %v3648 = vunpack.c.l.b16 %v150
  %v3649 = vunpack.c.h.b16 %v150
  %v3650 = vunpack.c.l.b16 %v151
  %v3651 = vunpack.c.h.b16 %v151
  %v3652 = vunpack.c.l.b16 %v152
  %v3653 = vunpack.c.h.b16 %v152
  %v3654 = vunpack.c.l.b16 %v153
  %v3655 = vunpack.c.h.b16 %v153
  %v3656 = vunpack.c.l.b16 %v154
  %v3657 = vunpack.c.h.b16 %v154
  %v3658 = vunpack.c.l.b16 %v155
  %v3659 = vunpack.c.h.b16 %v155
  %v3660 = vunpack.c.l.b16 %v156
  %v3661 = vunpack.c.h.b16 %v156
  %v3662 = vunpack.c.l.b16 %v157
  %v3663 = vunpack.c.h.b16 %v157
  %v3664 = vunpack.c.l.b16 %v158
  %v3665 = vunpack.c.h.b16 %v158
  %v3666 = vunpack.c.l.b16 %v159
  %v3667 = vunpack.c.h.b16 %v159
  %v3668 = vunpack.c.l.b16 %v160
  %v3669 = vunpack.c.h.b16 %v160
  %v3670 = vunpack.c.l.b16 %v161
  %v3671 = vunpack.c.h.b16 %v161
  %v3672 = vunpack.c.l.b16 %v162
  %v3673 = vunpack.c.h.b16 %v162
  %v3674 = vunpack.c.l.b16 %v163
  %v3675 = vunpack.c.h.b16 %v163
  %v3676 = vunpack.c.l.b16 %v164
  %v3677 = vunpack.c.h.b16 %v164
  %v3678 = vunpack.c.l.b16 %v165
  %v3679 = vunpack.c.h.b16 %v165
  %v3680 = vunpack.c.l.b16 %v166
  %v3681 = vunpack.c.h.b16 %v166
  %v3682 = vunpack.c.l.b16 %v167
  %v3683 = vunpack.c.h.b16 %v167
  %v3684 = vunpack.c.l.b16 %v168
  %v3685 = vunpack.c.h.b16 %v168
  %v3686 = vunpack.c.l.b16 %v169
  %v3687 = vunpack.c.h.b16 %v169
  %v3688 = vunpack.c.l.b16 %v170
  %v3689 = vunpack.c.h.b16 %v170
  %v3690 = vunpack.c.l.b16 %v171
  %v3691 = vunpack.c.h.b16 %v171
  %v3692 = vunpack.c.l.b16 %v172
  %v3693 = vunpack.c.h.b16 %v172
  %v3694 = vunpack.c.l.b16 %v173
  %v3695 = vunpack.c.h.b16 %v173
  %v3696 = vunpack.c.l.b16 %v174
  %v3697 = vunpack.c.h.b16 %v174
  %v3698 = vunpack.c.l.b16 %v175
  %v3699 = vunpack.c.h.b16 %v175
  %v3700 = vunpack.c.l.b16 %v176
  %v3701 = vunpack.c.h.b16 %v176
  %v3702 = vunpack.c.l.b16 %v177
  %v3703 = vunpack.c.h.b16 %v177
  %v3704 = vunpack.c.l.b16 %v178
  %v3705 = vunpack.c.h.b16 %v178
  %v3706 = vunpack.c.l.b16 %v179
  %v3707 = vunpack.c.h.b16 %v179
  %v3708 = vunpack.c.l.b16 %v180
  %v3709 = vunpack.c.h.b16 %v180
  %v3710 = vunpack.c.l.b16 %v181
  %v3711 = vunpack.c.h.b16 %v181
  %v3712 = vunpack.c.l.b16 %v182
  %v3713 = vunpack.c.h.b16 %v182
  %v3714 = vunpack.c.l.b16 %v183
  %v3715 = vunpack.c.h.b16 %v183
  %v3716 = vunpack.c.l.b16 %v184
  %v3717 = vunpack.c.h.b16 %v184
  %v3718 = vunpack.c.l.b16 %v185
  %v3719 = vunpack.c.h.b16 %v185
  %v3720 = vunpack.c.l.b16 %v186
  %v3721 = vunpack.c.h.b16 %v186
  %v3722 = vunpack.c.l.b16 %v187
  %v3723 = vunpack.c.h.b16 %v187
  %v3724 = vunpack.c.l.b16 %v188
  %v3725 = vunpack.c.h.b16 %v188
  %v3726 = vunpack.c.l.b16 %v189
  %v3727 = vunpack.c.h.b16 %v189
  %v3728 = vunpack.c.l.b16 %v190
  %v3729 = vunpack.c.h.b16 %v190
  %v3730 = vunpack.c.l.b16 %v191
  %v3731 = vunpack.c.h.b16 %v191
  %v3732 = vunpack.c.l.b16 %v192
  %v3733 = vunpack.c.h.b16 %v192
  %v3734 = vunpack.c.l.b16 %v193
  %v3735 = vunpack.c.h.b16 %v193
  %v3736 = vunpack.c.l.b16 %v194
  %v3737 = vunpack.c.h.b16 %v194
  %v3738 = vunpack.c.l.b16 %v195
  %v3739 = vunpack.c.h.b16 %v195
  %v3740 = vunpack.c.l.b16 %v196
  %v3741 = vunpack.c.h.b16 %v196
  %v3742 = vunpack.c.l.b16 %v197
  %v3743 = vunpack.c.h.b16 %v197
  %v3744 = vunpack.c.l.b16 %v198
  %v3745 = vunpack.c.h.b16 %v198
  %v3746 = vunpack.c.l.b16 %v199
  %v3747 = vunpack.c.h.b16 %v199
  %v3748 = vunpack.c.l.b16 %v200
  %v3749 = vunpack.c.h.b16 %v200
  %v3750 = vunpack.c.l.b16 %v201
  %v3751 = vunpack.c.h.b16 %v201
  %v3752 = vunpack.c.l.b16 %v202
  %v3753 = vunpack.c.h.b16 %v202
  %v3754 = vunpack.c.l.b16 %v203
  %v3755 = vunpack.c.h.b16 %v203
  %v3756 = vunpack.c.l.b16 %v204
  %v3757 = vunpack.c.h.b16 %v204
  %v3758 = vunpack.c.l.b16 %v205
  %v3759 = vunpack.c.h.b16 %v205
  %v3760 = vunpack.c.l.b16 %v206
  %v3761 = vunpack.c.h.b16 %v206
  %v3762 = vunpack.c.l.b16 %v207
  %v3763 = vunpack.c.h.b16 %v207
  %v3764 = vunpack.c.l.b16 %v208
  %v3765 = vunpack.c.h.b16 %v208
  %v3766 = vunpack.c.l.b16 %v209
  %v3767 = vunpack.c.h.b16 %v209
  %v3768 = vunpack.c.l.b16 %v210
  %v3769 = vunpack.c.h.b16 %v210
  %v3770 = vunpack.c.l.b16 %v211
  %v3771 = vunpack.c.h.b16 %v211
  %v3772 = vunpack.c.l.b16 %v212
  %v3773 = vunpack.c.h.b16 %v212
  %v3774 = vunpack.c.l.b16 %v213
  %v3775 = vunpack.c.h.b16 %v213
  %v3776 = vunpack.c.l.b16 %v214
  %v3777 = vunpack.c.h.b16 %v214
  %v3778 = vunpack.c.l.b16 %v215
  %v3779 = vunpack.c.h.b16 %v215
  %v3780 = vunpack.c.l.b16 %v216
  %v3781 = vunpack.c.h.b16 %v216
  %v3782 = vunpack.c.l.b16 %v217
  %v3783 = vunpack.c.h.b16 %v217
  %v3784 = vunpack.c.l.b16 %v218
  %v3785 = vunpack.c.h.b16 %v218
  %v3786 = vunpack.c.l.b16 %v219
  %v3787 = vunpack.c.h.b16 %v219
  %v3788 = vunpack.c.l.b16 %v220
  %v3789 = vunpack.c.h.b16 %v220
  %v3790 = vunpack.c.l.b16 %v221
  %v3791 = vunpack.c.h.b16 %v221
  %v3792 = vunpack.c.l.b16 %v222
  %v3793 = vunpack.c.h.b16 %v222
  %v3794 = vunpack.c.l.b16 %v223
  %v3795 = vunpack.c.h.b16 %v223
  %v3796 = vunpack.c.l.b16 %v224
  %v3797 = vunpack.c.h.b16 %v224
  %v3798 = vunpack.c.l.b16 %v225
  %v3799 = vunpack.c.h.b16 %v225
  %v3800 = vunpack.c.l.b16 %v226
  %v3801 = vunpack.c.h.b16 %v226
  %v3802 = vunpack.c.l.b16 %v227
  %v3803 = vunpack.c.h.b16 %v227
  %v3804 = vunpack.c.l.b16 %v228
  %v3805 = vunpack.c.h.b16 %v228
  %v3806 = vunpack.c.l.b16 %v229
  %v3807 = vunpack.c.h.b16 %v229
  %v3808 = vunpack.c.l.b16 %v230
  %v3809 = vunpack.c.h.b16 %v230
  %v3810 = vunpack.c.l.b16 %v231
  %v3811 = vunpack.c.h.b16 %v231
  %v3812 = vunpack.c.l.b16 %v232
  %v3813 = vunpack.c.h.b16 %v232
  %v3814 = vunpack.c.l.b16 %v233
  %v3815 = vunpack.c.h.b16 %v233
  %v3816 = vunpack.c.l.b16 %v234
  %v3817 = vunpack.c.h.b16 %v234
  %v3818 = vunpack.c.l.b16 %v235
  %v3819 = vunpack.c.h.b16 %v235
  %v3820 = vunpack.c.l.b16 %v236
  %v3821 = vunpack.c.h.b16 %v236
  %v3822 = vunpack.c.l.b16 %v237
  %v3823 = vunpack.c.h.b16 %v237
  %v3824 = vunpack.c.l.b16 %v238
  %v3825 = vunpack.c.h.b16 %v238
  %v3826 = vunpack.c.l.b16 %v239
  %v3827 = vunpack.c.h.b16 %v239
  %v3828 = vunpack.c.l.b16 %v240
  %v3829 = vunpack.c.h.b16 %v240
  %v3830 = vunpack.c.l.b16 %v241
  %v3831 = vunpack.c.h.b16 %v241
  %v3832 = vunpack.c.l.b16 %v242
  %v3833 = vunpack.c.h.b16 %v242
  %v3834 = vunpack.c.l.b16 %v243
  %v3835 = vunpack.c.h.b16 %v243
  %v3836 = vunpack.c.l.b16 %v244
  %v3837 = vunpack.c.h.b16 %v244
  %v3838 = vunpack.c.l.b16 %v245
  %v3839 = vunpack.c.h.b16 %v245
  %v3840 = vunpack.c.l.b16 %v246
  %v3841 = vunpack.c.h.b16 %v246
  %v3842 = vunpack.c.l.b16 %v247
  %v3843 = vunpack.c.h.b16 %v247
  %v3844 = vunpack.c.l.b16 %v248
  %v3845 = vunpack.c.h.b16 %v248
  %v3846 = vunpack.c.l.b16 %v249
  %v3847 = vunpack.c.h.b16 %v249
  %v3848 = vunpack.c.l.b16 %v250
  %v3849 = vunpack.c.h.b16 %v250
  %v3850 = vunpack.c.l.b16 %v251
  %v3851 = vunpack.c.h.b16 %v251
  %v3852 = vunpack.c.l.b16 %v252
  %v3853 = vunpack.c.h.b16 %v252
  %v3854 = vunpack.c.l.b16 %v253
  %v3855 = vunpack.c.h.b16 %v253
  %v3856 = vunpack.c.l.b16 %v254
  %v3857 = vunpack.c.h.b16 %v254
  %v3858 = vunpack.c.l.b16 %v255
  %v3859 = vunpack.c.h.b16 %v255
  %v3860 = vunpack.c.l.b16 %v256
  %v3861 = vunpack.c.h.b16 %v256
  %v3862 = vunpack.c.l.b16 %v257
  %v3863 = vunpack.c.h.b16 %v257
  %v3864 = vunpack.c.l.b16 %v258
  %v3865 = vunpack.c.h.b16 %v258
  %v3866 = vunpack.c.l.b16 %v259
  %v3867 = vunpack.c.h.b16 %v259
  %v3868 = vunpack.c.l.b16 %v260
  %v3869 = vunpack.c.h.b16 %v260
  %v3870 = vunpack.c.l.b16 %v261
  %v3871 = vunpack.c.h.b16 %v261
  %v3872 = vunpack.c.l.b16 %v262
  %v3873 = vunpack.c.h.b16 %v262
  %v3874 = vunpack.c.l.b16 %v263
  %v3875 = vunpack.c.h.b16 %v263
  %v3876 = vunpack.c.l.b16 %v264
  %v3877 = vunpack.c.h.b16 %v264
  %v3878 = vunpack.c.l.b16 %v265
  %v3879 = vunpack.c.h.b16 %v265
  %v3880 = vunpack.c.l.b16 %v266
  %v3881 = vunpack.c.h.b16 %v266
  %v3882 = vunpack.c.l.b16 %v267
  %v3883 = vunpack.c.h.b16 %v267
  %v3884 = vunpack.c.l.b16 %v268
  %v3885 = vunpack.c.h.b16 %v268
  %v3886 = vunpack.c.l.b16 %v269
  %v3887 = vunpack.c.h.b16 %v269
  %v3888 = vunpack.c.l.b16 %v270
  %v3889 = vunpack.c.h.b16 %v270
  %v3890 = vunpack.c.l.b16 %v271
  %v3891 = vunpack.c.h.b16 %v271
  %v3892 = vunpack.c.l.b16 %v272
  %v3893 = vunpack.c.h.b16 %v272
  %v3894 = vunpack.c.l.b16 %v273
  %v3895 = vunpack.c.h.b16 %v273
  %v3896 = vunpack.c.l.b16 %v274
  %v3897 = vunpack.c.h.b16 %v274
  %v3898 = vunpack.c.l.b16 %v275
  %v3899 = vunpack.c.h.b16 %v275
  %v3900 = vunpack.c.l.b16 %v276
  %v3901 = vunpack.c.h.b16 %v276
  %v3902 = vunpack.c.l.b16 %v277
  %v3903 = vunpack.c.h.b16 %v277
  %v3904 = vunpack.c.l.b16 %v278
  %v3905 = vunpack.c.h.b16 %v278
  %v3906 = vunpack.c.l.b16 %v279
  %v3907 = vunpack.c.h.b16 %v279
  %v3908 = vunpack.c.l.b16 %v280
  %v3909 = vunpack.c.h.b16 %v280
  %v3910 = vunpack.c.l.b16 %v281
  %v3911 = vunpack.c.h.b16 %v281
  %v3912 = vunpack.c.l.b16 %v282
  %v3913 = vunpack.c.h.b16 %v282
  %v3914 = vunpack.c.l.b16 %v283
  %v3915 = vunpack.c.h.b16 %v283
  %v3916 = vunpack.c.l.b16 %v284
  %v3917 = vunpack.c.h.b16 %v284
  %v3918 = vunpack.c.l.b16 %v285
  %v3919 = vunpack.c.h.b16 %v285
  %v3920 = vunpack.c.l.b16 %v286
  %v3921 = vunpack.c.h.b16 %v286
  %v3922 = vunpack.c.l.b16 %v287
  %v3923 = vunpack.c.h.b16 %v287
  %v3924 = vunpack.c.l.b16 %v288
  %v3925 = vunpack.c.h.b16 %v288
  %v3926 = vunpack.c.l.b16 %v289
  %v3927 = vunpack.c.h.b16 %v289
  %v3928 = vunpack.c.l.b16 %v290
  %v3929 = vunpack.c.h.b16 %v290
  %v3930 = vunpack.c.l.b16 %v291
  %v3931 = vunpack.c.h.b16 %v291
  %v3932 = vunpack.c.l.b16 %v292
  %v3933 = vunpack.c.h.b16 %v292
  %v3934 = vunpack.c.l.b16 %v293
  %v3935 = vunpack.c.h.b16 %v293
  %v3936 = vunpack.c.l.b16 %v294
  %v3937 = vunpack.c.h.b16 %v294
  %v3938 = vunpack.c.l.b16 %v295
  %v3939 = vunpack.c.h.b16 %v295
  %v3940 = vunpack.c.l.b16 %v296
  %v3941 = vunpack.c.h.b16 %v296
  %v3942 = vunpack.c.l.b16 %v297
  %v3943 = vunpack.c.h.b16 %v297
  %v3944 = vunpack.c.l.b16 %v298
  %v3945 = vunpack.c.h.b16 %v298
  %v3946 = vunpack.c.l.b16 %v299
  %v3947 = vunpack.c.h.b16 %v299
  %v3948 = vunpack.c.l.b16 %v300
  %v3949 = vunpack.c.h.b16 %v300
  %v3950 = vunpack.c.l.b16 %v301
  %v3951 = vunpack.c.h.b16 %v301
  %v3952 = vunpack.c.l.b16 %v302
  %v3953 = vunpack.c.h.b16 %v302
  %v3954 = vunpack.c.l.b16 %v303
  %v3955 = vunpack.c.h.b16 %v303
  %v3956 = vunpack.c.l.b16 %v304
  %v3957 = vunpack.c.h.b16 %v304
  %v3958 = vunpack.c.l.b16 %v305
  %v3959 = vunpack.c.h.b16 %v305
  %v3960 = vunpack.c.l.b16 %v306
  %v3961 = vunpack.c.h.b16 %v306
  %v3962 = vunpack.c.l.b16 %v307
  %v3963 = vunpack.c.h.b16 %v307
  %v3964 = vunpack.c.l.b16 %v308
  %v3965 = vunpack.c.h.b16 %v308
  %v3966 = vunpack.c.l.b16 %v309
  %v3967 = vunpack.c.h.b16 %v309
  %v3968 = vunpack.c.l.b16 %v310
  %v3969 = vunpack.c.h.b16 %v310
  %v3970 = vunpack.c.l.b16 %v311
  %v3971 = vunpack.c.h.b16 %v311
  %v3972 = vunpack.c.l.b16 %v312
  %v3973 = vunpack.c.h.b16 %v312
  %v3974 = vunpack.c.l.b16 %v313
  %v3975 = vunpack.c.h.b16 %v313
  %v3976 = vunpack.c.l.b16 %v314
  %v3977 = vunpack.c.h.b16 %v314
  %v3978 = vunpack.c.l.b16 %v315
  %v3979 = vunpack.c.h.b16 %v315
  %v3980 = vunpack.c.l.b16 %v316
  %v3981 = vunpack.c.h.b16 %v316
  %v3982 = vunpack.c.l.b16 %v317
  %v3983 = vunpack.c.h.b16 %v317
  %v3984 = vunpack.c.l.b16 %v318
  %v3985 = vunpack.c.h.b16 %v318
  %v3986 = vunpack.c.l.b16 %v319
  %v3987 = vunpack.c.h.b16 %v319
  %v3988 = vunpack.c.l.b16 %v320
  %v3989 = vunpack.c.h.b16 %v320
  %v3990 = vunpack.c.l.b16 %v321
  %v3991 = vunpack.c.h.b16 %v321
  %v3992 = vunpack.c.l.b16 %v322
  %v3993 = vunpack.c.h.b16 %v322
  %v3994 = vunpack.c.l.b16 %v323
  %v3995 = vunpack.c.h.b16 %v323
  %v3996 = vunpack.c.l.b16 %v324
  %v3997 = vunpack.c.h.b16 %v324
  %v3998 = vunpack.c.l.b16 %v325
  %v3999 = vunpack.c.h.b16 %v325
  %v4000 = vunpack.c.l.b16 %v326
  %v4001 = vunpack.c.h.b16 %v326
  %v4002 = vunpack.c.l.b16 %v327
  %v4003 = vunpack.c.h.b16 %v327
  %v4004 = vunpack.c.l.b16 %v328
  %v4005 = vunpack.c.h.b16 %v328
  %v4006 = vunpack.c.l.b16 %v329
  %v4007 = vunpack.c.h.b16 %v329
  %v4008 = vunpack.c.l.b16 %v330
  %v4009 = vunpack.c.h.b16 %v330
  %v4010 = vunpack.c.l.b16 %v331
  %v4011 = vunpack.c.h.b16 %v331
  %v4012 = vunpack.c.l.b16 %v332
  %v4013 = vunpack.c.h.b16 %v332
  %v4014 = vunpack.c.l.b16 %v333
  %v4015 = vunpack.c.h.b16 %v333
  %v4016 = vunpack.c.l.b16 %v334
  %v4017 = vunpack.c.h.b16 %v334
  %v4018 = vunpack.c.l.b16 %v335
  %v4019 = vunpack.c.h.b16 %v335
  %v4020 = vunpack.c.l.b16 %v336
  %v4021 = vunpack.c.h.b16 %v336
  %v4022 = vunpack.c.l.b16 %v337
  %v4023 = vunpack.c.h.b16 %v337
  %v4024 = vunpack.c.l.b16 %v338
  %v4025 = vunpack.c.h.b16 %v338
  %v4026 = vunpack.c.l.b16 %v339
  %v4027 = vunpack.c.h.b16 %v339
  %v4028 = vunpack.c.l.b16 %v340
  %v4029 = vunpack.c.h.b16 %v340
  %v4030 = vunpack.c.l.b16 %v341
  %v4031 = vunpack.c.h.b16 %v341
  %v4032 = vunpack.c.l.b16 %v342
  %v4033 = vunpack.c.h.b16 %v342
  %v4034 = vunpack.c.l.b16 %v343
  %v4035 = vunpack.c.h.b16 %v343
  %v4036 = vunpack.c.l.b16 %v344
  %v4037 = vunpack.c.h.b16 %v344
  %v4038 = vunpack.c.l.b16 %v345
  %v4039 = vunpack.c.h.b16 %v345
  %v4040 = vunpack.c.l.b16 %v346
  %v4041 = vunpack.c.h.b16 %v346
  %v4042 = vunpack.c.l.b16 %v347
  %v4043 = vunpack.c.h.b16 %v347
  %v4044 = vunpack.c.l.b16 %v348
  %v4045 = vunpack.c.h.b16 %v348
  %v4046 = vunpack.c.l.b16 %v349
  %v4047 = vunpack.c.h.b16 %v349
  %v4048 = vunpack.c.l.b16 %v350
  %v4049 = vunpack.c.h.b16 %v350
  %v4050 = vunpack.c.l.b16 %v351
  %v4051 = vunpack.c.h.b16 %v351
  %v4052 = vunpack.c.l.b16 %v352
  %v4053 = vunpack.c.h.b16 %v352
  %v4054 = vunpack.c.l.b16 %v353
  %v4055 = vunpack.c.h.b16 %v353
  %v4056 = vunpack.c.l.b16 %v354
  %v4057 = vunpack.c.h.b16 %v354
  %v4058 = vunpack.c.l.b16 %v355
  %v4059 = vunpack.c.h.b16 %v355
  %v4060 = vunpack.c.l.b16 %v356
  %v4061 = vunpack.c.h.b16 %v356
  %v4062 = vunpack.c.l.b16 %v357
  %v4063 = vunpack.c.h.b16 %v357
  %v4064 = vunpack.c.l.b16 %v358
  %v4065 = vunpack.c.h.b16 %v358
  %v4066 = vunpack.c.l.b16 %v359
  %v4067 = vunpack.c.h.b16 %v359
  %v4068 = vunpack.c.l.b16 %v360
  %v4069 = vunpack.c.h.b16 %v360
  %v4070 = vunpack.c.l.b16 %v361
  %v4071 = vunpack.c.h.b16 %v361
  %v4072 = vunpack.c.l.b16 %v362
  %v4073 = vunpack.c.h.b16 %v362
  %v4074 = vunpack.c.l.b16 %v363
  %v4075 = vunpack.c.h.b16 %v363
  %v4076 = vunpack.c.l.b16 %v364
  %v4077 = vunpack.c.h.b16 %v364
  %v4078 = vunpack.c.l.b16 %v365
  %v4079 = vunpack.c.h.b16 %v365
  %v4080 = vunpack.c.l.b16 %v366
  %v4081 = vunpack.c.h.b16 %v366
  %v4082 = vunpack.c.l.b16 %v367
  %v4083 = vunpack.c.h.b16 %v367
  %v4084 = vunpack.c.l.b16 %v368
  %v4085 = vunpack.c.h.b16 %v368
  %v4086 = vunpack.c.l.b16 %v369
  %v4087 = vunpack.c.h.b16 %v369
  %v4088 = vunpack.c.l.b16 %v370
  %v4089 = vunpack.c.h.b16 %v370
  %v4090 = vunpack.c.l.b16 %v371
  %v4091 = vunpack.c.h.b16 %v371
  %v4092 = vunpack.c.l.b16 %v372
  %v4093 = vunpack.c.h.b16 %v372
  %v4094 = vunpack.c.l.b16 %v373
  %v4095 = vunpack.c.h.b16 %v373
  %v4096 = vunpack.c.l.b16 %v374
  %v4097 = vunpack.c.h.b16 %v374
  %v4098 = vunpack.c.l.b16 %v375
  %v4099 = vunpack.c.h.b16 %v375
  %v4100 = vunpack.c.l.b16 %v376
  %v4101 = vunpack.c.h.b16 %v376
  %v4102 = vunpack.c.l.b16 %v377
  %v4103 = vunpack.c.h.b16 %v377
  %v4104 = vunpack.c.l.b16 %v378
  %v4105 = vunpack.c.h.b16 %v378
  %v4106 = vunpack.c.l.b16 %v379
  %v4107 = vunpack.c.h.b16 %v379
  %v4108 = vunpack.c.l.b16 %v380
  %v4109 = vunpack.c.h.b16 %v380
  %v4110 = vunpack.c.l.b16 %v381
  %v4111 = vunpack.c.h.b16 %v381
  %v4112 = vunpack.c.l.b16 %v382
  %v4113 = vunpack.c.h.b16 %v382
  %v4114 = vunpack.c.l.b16 %v383
  %v4115 = vunpack.c.h.b16 %v383
  %v4116 = vunpack.c.l.b16 %v384
  %v4117 = vunpack.c.h.b16 %v384
  %v4118 = vunpack.c.l.b16 %v385
  %v4119 = vunpack.c.h.b16 %v385
  %v4120 = vunpack.c.l.b16 %v386
  %v4121 = vunpack.c.h.b16 %v386
  %v4122 = vunpack.c.l.b16 %v387
  %v4123 = vunpack.c.h.b16 %v387
  %v4124 = vunpack.c.l.b16 %v388
  %v4125 = vunpack.c.h.b16 %v388
  %v4126 = vunpack.c.l.b16 %v389
  %v4127 = vunpack.c.h.b16 %v389
  %v4128 = vunpack.c.l.b16 %v390
  %v4129 = vunpack.c.h.b16 %v390
  %v4130 = vunpack.c.l.b16 %v391
  %v4131 = vunpack.c.h.b16 %v391
  %v4132 = vunpack.c.l.b16 %v392
  %v4133 = vunpack.c.h.b16 %v392
  %v4134 = vunpack.c.l.b16 %v393
  %v4135 = vunpack.c.h.b16 %v393
  %v4136 = vunpack.c.l.b16 %v394
  %v4137 = vunpack.c.h.b16 %v394
  %v4138 = vunpack.c.l.b16 %v395
  %v4139 = vunpack.c.h.b16 %v395
  %v4140 = vunpack.c.l.b16 %v396
  %v4141 = vunpack.c.h.b16 %v396
  %v4142 = vunpack.c.l.b16 %v397
  %v4143 = vunpack.c.h.b16 %v397
  %v4144 = vunpack.c.l.b16 %v398
  %v4145 = vunpack.c.h.b16 %v398
  %v4146 = vunpack.c.l.b16 %v399
  %v4147 = vunpack.c.h.b16 %v399
  %v4148 = vunpack.c.l.b16 %v400
  %v4149 = vunpack.c.h.b16 %v400
  %v4150 = vunpack.c.l.b16 %v401
  %v4151 = vunpack.c.h.b16 %v401
  %v4152 = vunpack.c.l.b16 %v402
  %v4153 = vunpack.c.h.b16 %v402
  %v4154 = vunpack.c.l.b16 %v403
  %v4155 = vunpack.c.h.b16 %v403
  %v4156 = vunpack.c.l.b16 %v404
  %v4157 = vunpack.c.h.b16 %v404
  %v4158 = vunpack.c.l.b16 %v405
  %v4159 = vunpack.c.h.b16 %v405
  %v4160 = vunpack.c.l.b16 %v406
  %v4161 = vunpack.c.h.b16 %v406
  %v4162 = vunpack.c.l.b16 %v407
  %v4163 = vunpack.c.h.b16 %v407
  %v4164 = vunpack.c.l.b16 %v408
  %v4165 = vunpack.c.h.b16 %v408
  %v4166 = vunpack.c.l.b16 %v409
  %v4167 = vunpack.c.h.b16 %v409
  %v4168 = vunpack.c.l.b16 %v410
  %v4169 = vunpack.c.h.b16 %v410
  %v4170 = vunpack.c.l.b16 %v411
  %v4171 = vunpack.c.h.b16 %v411
  %v4172 = vunpack.c.l.b16 %v412
  %v4173 = vunpack.c.h.b16 %v412
  %v4174 = vunpack.c.l.b16 %v413
  %v4175 = vunpack.c.h.b16 %v413
  %v4176 = vunpack.c.l.b16 %v414
  %v4177 = vunpack.c.h.b16 %v414
  %v4178 = vunpack.c.l.b16 %v415
  %v4179 = vunpack.c.h.b16 %v415
  %v4180 = vunpack.c.l.b16 %v416
  %v4181 = vunpack.c.h.b16 %v416
  %v4182 = vunpack.c.l.b16 %v417
  %v4183 = vunpack.c.h.b16 %v417
  %v4184 = vunpack.c.l.b16 %v418
  %v4185 = vunpack.c.h.b16 %v418
  %v4186 = vunpack.c.l.b16 %v419
  %v4187 = vunpack.c.h.b16 %v419
  %v4188 = vunpack.c.l.b16 %v420
  %v4189 = vunpack.c.h.b16 %v420
  %v4190 = vunpack.c.l.b16 %v421
  %v4191 = vunpack.c.h.b16 %v421
  %v4192 = vunpack.c.l.b16 %v422
  %v4193 = vunpack.c.h.b16 %v422
  %v4194 = vunpack.c.l.b16 %v423
  %v4195 = vunpack.c.h.b16 %v423
  %v4196 = vunpack.c.l.b16 %v424
  %v4197 = vunpack.c.h.b16 %v424
  %v4198 = vunpack.c.l.b16 %v425
  %v4199 = vunpack.c.h.b16 %v425
  %v4200 = vunpack.c.l.b16 %v426
  %v4201 = vunpack.c.h.b16 %v426
  %v4202 = vunpack.c.l.b16 %v427
  %v4203 = vunpack.c.h.b16 %v427
  %v4204 = vunpack.c.l.b16 %v428
  %v4205 = vunpack.c.h.b16 %v428
  %v4206 = vunpack.c.l.b16 %v429
  %v4207 = vunpack.c.h.b16 %v429
  %v4208 = vunpack.c.l.b16 %v430
  %v4209 = vunpack.c.h.b16 %v430
  %v4210 = vunpack.c.l.b16 %v431
  %v4211 = vunpack.c.h.b16 %v431
  %v4212 = vunpack.c.l.b16 %v432
  %v4213 = vunpack.c.h.b16 %v432
  %v4214 = vunpack.c.l.b16 %v433
  %v4215 = vunpack.c.h.b16 %v433
  %v4216 = vunpack.c.l.b16 %v434
  %v4217 = vunpack.c.h.b16 %v434
  %v4218 = vunpack.c.l.b16 %v435
  %v4219 = vunpack.c.h.b16 %v435
  %v4220 = vunpack.c.l.b16 %v436
  %v4221 = vunpack.c.h.b16 %v436
  %v4222 = vunpack.c.l.b16 %v437
  %v4223 = vunpack.c.h.b16 %v437
  %v4224 = vunpack.c.l.b16 %v438
  %v4225 = vunpack.c.h.b16 %v438
  %v4226 = vunpack.c.l.b16 %v439
  %v4227 = vunpack.c.h.b16 %v439
  %v4228 = vunpack.c.l.b16 %v440
  %v4229 = vunpack.c.h.b16 %v440
  %v4230 = vunpack.c.l.b16 %v441
  %v4231 = vunpack.c.h.b16 %v441
  %v4232 = vunpack.c.l.b16 %v442
  %v4233 = vunpack.c.h.b16 %v442
  %v4234 = vunpack.c.l.b16 %v443
  %v4235 = vunpack.c.h.b16 %v443
  %v4236 = vunpack.c.l.b16 %v444
  %v4237 = vunpack.c.h.b16 %v444
  %v4238 = vunpack.c.l.b16 %v445
  %v4239 = vunpack.c.h.b16 %v445
  %v4240 = vunpack.c.l.b16 %v446
  %v4241 = vunpack.c.h.b16 %v446
  %v4242 = vunpack.c.l.b16 %v447
  %v4243 = vunpack.c.h.b16 %v447
  %v4244 = vunpack.c.l.b16 %v448
  %v4245 = vunpack.c.h.b16 %v448
  %v4246 = vunpack.c.l.b16 %v449
  %v4247 = vunpack.c.h.b16 %v449
  %v4248 = vunpack.c.l.b16 %v450
  %v4249 = vunpack.c.h.b16 %v450
  %v4250 = vunpack.c.l.b16 %v451
  %v4251 = vunpack.c.h.b16 %v451
  %v4252 = vunpack.c.l.b16 %v452
  %v4253 = vunpack.c.h.b16 %v452
  %v4254 = vunpack.c.l.b16 %v453
  %v4255 = vunpack.c.h.b16 %v453
  %v4256 = vunpack.c.l.b16 %v454
  %v4257 = vunpack.c.h.b16 %v454
  %v4258 = vunpack.c.l.b16 %v455
  %v4259 = vunpack.c.h.b16 %v455
  %v4260 = vunpack.c.l.b16 %v456
  %v4261 = vunpack.c.h.b16 %v456
  %v4262 = vunpack.c.l.b16 %v457
  %v4263 = vunpack.c.h.b16 %v457
  %v4264 = vunpack.c.l.b16 %v458
  %v4265 = vunpack.c.h.b16 %v458
  %v4266 = vunpack.c.l.b16 %v459
  %v4267 = vunpack.c.h.b16 %v459
  %v4268 = vunpack.c.l.b16 %v460
  %v4269 = vunpack.c.h.b16 %v460
  %v4270 = vunpack.c.l.b16 %v461
  %v4271 = vunpack.c.h.b16 %v461
  %v4272 = vunpack.c.l.b16 %v462
  %v4273 = vunpack.c.h.b16 %v462
  %v4274 = vunpack.c.l.b16 %v463
  %v4275 = vunpack.c.h.b16 %v463
  %v4276 = vunpack.c.l.b16 %v464
  %v4277 = vunpack.c.h.b16 %v464
  %v4278 = vunpack.c.l.b16 %v465
  %v4279 = vunpack.c.h.b16 %v465
  %v4280 = vunpack.c.l.b16 %v466
  %v4281 = vunpack.c.h.b16 %v466
  %v4282 = vunpack.c.l.b16 %v467
  %v4283 = vunpack.c.h.b16 %v467
  %v4284 = vunpack.c.l.b16 %v468
  %v4285 = vunpack.c.h.b16 %v468
  %v4286 = vunpack.c.l.b16 %v469
  %v4287 = vunpack.c.h.b16 %v469
  %v4288 = vunpack.c.l.b16 %v470
  %v4289 = vunpack.c.h.b16 %v470
  %v4290 = vunpack.c.l.b16 %v471
  %v4291 = vunpack.c.h.b16 %v471
  %v4292 = vunpack.c.l.b16 %v472
  %v4293 = vunpack.c.h.b16 %v472
  %v4294 = vunpack.c.l.b16 %v473
  %v4295 = vunpack.c.h.b16 %v473
  %v4296 = vunpack.c.l.b16 %v474
  %v4297 = vunpack.c.h.b16 %v474
  %v4298 = vunpack.c.l.b16 %v475
  %v4299 = vunpack.c.h.b16 %v475
  %v4300 = vunpack.c.l.b16 %v476
  %v4301 = vunpack.c.h.b16 %v476
  %v4302 = vunpack.c.l.b16 %v477
  %v4303 = vunpack.c.h.b16 %v477
  %v4304 = vunpack.c.l.b16 %v478
  %v4305 = vunpack.c.h.b16 %v478
  %v4306 = vunpack.c.l.b16 %v479
  %v4307 = vunpack.c.h.b16 %v479
  %v4308 = vunpack.c.l.b16 %v480
  %v4309 = vunpack.c.h.b16 %v480
  %v4310 = vunpack.c.l.b16 %v481
  %v4311 = vunpack.c.h.b16 %v481
  %v4312 = vunpack.c.l.b16 %v482
  %v4313 = vunpack.c.h.b16 %v482
  %v4314 = vunpack.c.l.b16 %v483
  %v4315 = vunpack.c.h.b16 %v483
  %v4316 = vunpack.c.l.b16 %v484
  %v4317 = vunpack.c.h.b16 %v484
  %v4318 = vunpack.c.l.b16 %v485
  %v4319 = vunpack.c.h.b16 %v485
  %v4320 = vunpack.c.l.b16 %v486
  %v4321 = vunpack.c.h.b16 %v486
  %v4322 = vunpack.c.l.b16 %v487
  %v4323 = vunpack.c.h.b16 %v487
  %v4324 = vunpack.c.l.b16 %v488
  %v4325 = vunpack.c.h.b16 %v488
  %v4326 = vunpack.c.l.b16 %v489
  %v4327 = vunpack.c.h.b16 %v489
  %v4328 = vunpack.c.l.b16 %v490
  %v4329 = vunpack.c.h.b16 %v490
  %v4330 = vunpack.c.l.b16 %v491
  %v4331 = vunpack.c.h.b16 %v491
  %v4332 = vunpack.c.l.b16 %v492
  %v4333 = vunpack.c.h.b16 %v492
  %v4334 = vunpack.c.l.b16 %v493
  %v4335 = vunpack.c.h.b16 %v493
  %v4336 = vunpack.c.l.b16 %v494
  %v4337 = vunpack.c.h.b16 %v494
  %v4338 = vunpack.c.l.b16 %v495
  %v4339 = vunpack.c.h.b16 %v495
  %v4340 = vunpack.c.l.b16 %v496
  %v4341 = vunpack.c.h.b16 %v496
  %v4342 = vunpack.c.l.b16 %v497
  %v4343 = vunpack.c.h.b16 %v497
  %v4344 = vunpack.c.l.b16 %v498
  %v4345 = vunpack.c.h.b16 %v498
  %v4346 = vunpack.c.l.b16 %v499
  %v4347 = vunpack.c.h.b16 %v499
  %v4348 = vunpack.c.l.b16 %v500
  %v4349 = vunpack.c.h.b16 %v500
  %v4350 = vunpack.c.l.b16 %v501
  %v4351 = vunpack.c.h.b16 %v501
  %v4352 = vunpack.c.l.b16 %v502
  %v4353 = vunpack.c.h.b16 %v502
  %v4354 = vunpack.c.l.b16 %v503
  %v4355 = vunpack.c.h.b16 %v503
  %v4356 = vunpack.c.l.b16 %v504
  %v4357 = vunpack.c.h.b16 %v504
  %v4358 = vunpack.c.l.b16 %v505
  %v4359 = vunpack.c.h.b16 %v505
  %v4360 = vunpack.c.l.b16 %v506
  %v4361 = vunpack.c.h.b16 %v506
  %v4362 = vunpack.c.l.b16 %v507
  %v4363 = vunpack.c.h.b16 %v507
  %v4364 = vunpack.c.l.b16 %v508
  %v4365 = vunpack.c.h.b16 %v508
  %v4366 = vunpack.c.l.b16 %v509
  %v4367 = vunpack.c.h.b16 %v509
  %v4368 = vunpack.c.l.b16 %v510
  %v4369 = vunpack.c.h.b16 %v510
  %v4370 = vunpack.c.l.b16 %v511
  %v4371 = vunpack.c.h.b16 %v511
  %v4372 = vunpack.c.l.b16 %v512
  %v4373 = vunpack.c.h.b16 %v512
  %v4374 = vunpack.c.l.b16 %v513
  %v4375 = vunpack.c.h.b16 %v513
  %v4376 = vunpack.c.l.b16 %v514
  %v4377 = vunpack.c.h.b16 %v514
  %v4378 = vunpack.c.l.b16 %v515
  %v4379 = vunpack.c.h.b16 %v515
  %v4380 = vunpack.c.l.b16 %v516
  %v4381 = vunpack.c.h.b16 %v516
  %v4382 = vunpack.c.l.b16 %v517
  %v4383 = vunpack.c.h.b16 %v517
  %v4384 = vunpack.c.l.b16 %v518
  %v4385 = vunpack.c.h.b16 %v518
  %v4386 = vunpack.c.l.b16 %v519
  %v4387 = vunpack.c.h.b16 %v519
  %v4388 = vunpack.c.l.b16 %v520
  %v4389 = vunpack.c.h.b16 %v520
  %v4390 = vunpack.c.l.b16 %v521
  %v4391 = vunpack.c.h.b16 %v521
  %v4392 = vunpack.c.l.b16 %v522
  %v4393 = vunpack.c.h.b16 %v522
  %v4394 = vunpack.c.l.b16 %v523
  %v4395 = vunpack.c.h.b16 %v523
  %v4396 = vunpack.c.l.b16 %v524
  %v4397 = vunpack.c.h.b16 %v524
  %v4398 = vunpack.c.l.b16 %v525
  %v4399 = vunpack.c.h.b16 %v525
  %v4400 = vunpack.c.l.b16 %v526
  %v4401 = vunpack.c.h.b16 %v526
  %v4402 = vunpack.c.l.b16 %v527
  %v4403 = vunpack.c.h.b16 %v527
  %v4404 = vunpack.c.l.b16 %v528
  %v4405 = vunpack.c.h.b16 %v528
  %v4406 = vunpack.c.l.b16 %v529
  %v4407 = vunpack.c.h.b16 %v529
  %v4408 = vunpack.c.l.b16 %v530
  %v4409 = vunpack.c.h.b16 %v530
  %v4410 = vunpack.c.l.b16 %v531
  %v4411 = vunpack.c.h.b16 %v531
  %v4412 = vunpack.c.l.b16 %v532
  %v4413 = vunpack.c.h.b16 %v532
  %v4414 = vunpack.c.l.b16 %v533
  %v4415 = vunpack.c.h.b16 %v533
  %v4416 = vunpack.c.l.b16 %v534
  %v4417 = vunpack.c.h.b16 %v534
  %v4418 = vunpack.c.l.b16 %v535
  %v4419 = vunpack.c.h.b16 %v535
  %v4420 = vunpack.c.l.b16 %v536
  %v4421 = vunpack.c.h.b16 %v536
  %v4422 = vunpack.c.l.b16 %v537
  %v4423 = vunpack.c.h.b16 %v537
  %v4424 = vunpack.c.l.b16 %v538
  %v4425 = vunpack.c.h.b16 %v538
  %v4426 = vunpack.c.l.b16 %v539
  %v4427 = vunpack.c.h.b16 %v539
  %v4428 = vunpack.c.l.b16 %v540
  %v4429 = vunpack.c.h.b16 %v540
  %v4430 = vunpack.c.l.b16 %v541
  %v4431 = vunpack.c.h.b16 %v541
  %v4432 = vunpack.c.l.b16 %v542
  %v4433 = vunpack.c.h.b16 %v542
  %v4434 = vunpack.c.l.b16 %v543
  %v4435 = vunpack.c.h.b16 %v543
  %v4436 = vunpack.c.l.b16 %v544
  %v4437 = vunpack.c.h.b16 %v544
  %v4438 = vunpack.c.l.b16 %v545
  %v4439 = vunpack.c.h.b16 %v545
  %v4440 = vunpack.c.l.b16 %v546
  %v4441 = vunpack.c.h.b16 %v546
  %v4442 = vunpack.c.l.b16 %v547
  %v4443 = vunpack.c.h.b16 %v547
  %v4444 = vunpack.c.l.b16 %v548
  %v4445 = vunpack.c.h.b16 %v548
  %v4446 = vunpack.c.l.b16 %v549
  %v4447 = vunpack.c.h.b16 %v549
  %v4448 = vunpack.c.l.b16 %v550
  %v4449 = vunpack.c.h.b16 %v550
  %v4450 = vunpack.c.l.b16 %v551
  %v4451 = vunpack.c.h.b16 %v551
  %v4452 = vunpack.c.l.b16 %v552
  %v4453 = vunpack.c.h.b16 %v552
  %v4454 = vunpack.c.l.b16 %v553
  %v4455 = vunpack.c.h.b16 %v553
  %v4456 = vunpack.c.l.b16 %v554
  %v4457 = vunpack.c.h.b16 %v554
  %v4458 = vunpack.c.l.b16 %v555
  %v4459 = vunpack.c.h.b16 %v555
  %v4460 = vunpack.c.l.b16 %v556
  %v4461 = vunpack.c.h.b16 %v556
  %v4462 = vunpack.c.l.b16 %v557
  %v4463 = vunpack.c.h.b16 %v557
  %v4464 = vunpack.c.l.b16 %v558
  %v4465 = vunpack.c.h.b16 %v558
  %v4466 = vunpack.c.l.b16 %v559
  %v4467 = vunpack.c.h.b16 %v559
  %v4468 = vunpack.c.l.b16 %v560
  %v4469 = vunpack.c.h.b16 %v560
  %v4470 = vunpack.c.l.b16 %v561
  %v4471 = vunpack.c.h.b16 %v561
  %v4472 = vunpack.c.l.b16 %v562
  %v4473 = vunpack.c.h.b16 %v562
  %v4474 = vunpack.c.l.b16 %v563
  %v4475 = vunpack.c.h.b16 %v563
  %v4476 = vunpack.c.l.b16 %v564
  %v4477 = vunpack.c.h.b16 %v564
  %v4478 = vunpack.c.l.b16 %v565
  %v4479 = vunpack.c.h.b16 %v565
  %v4480 = vunpack.c.l.b16 %v566
  %v4481 = vunpack.c.h.b16 %v566
  %v4482 = vunpack.c.l.b16 %v567
  %v4483 = vunpack.c.h.b16 %v567
  %v4484 = vunpack.c.l.b16 %v568
  %v4485 = vunpack.c.h.b16 %v568
  %v4486 = vunpack.c.l.b16 %v569
  %v4487 = vunpack.c.h.b16 %v569
  %v4488 = vunpack.c.l.b16 %v570
  %v4489 = vunpack.c.h.b16 %v570
  %v4490 = vunpack.c.l.b16 %v571
  %v4491 = vunpack.c.h.b16 %v571
  %v4492 = vunpack.c.l.b16 %v572
  %v4493 = vunpack.c.h.b16 %v572
  %v4494 = vunpack.c.l.b16 %v573
  %v4495 = vunpack.c.h.b16 %v573
  %v4496 = vunpack.c.l.b16 %v574
  %v4497 = vunpack.c.h.b16 %v574
  %v4498 = vunpack.c.l.b16 %v575
  %v4499 = vunpack.c.h.b16 %v575
  %v4500 = vunpack.c.l.b16 %v576
  %v4501 = vunpack.c.h.b16 %v576
  %v4502 = vunpack.c.l.b16 %v577
  %v4503 = vunpack.c.h.b16 %v577
  %v4504 = vunpack.c.l.b16 %v578
  %v4505 = vunpack.c.h.b16 %v578
  %v4506 = vunpack.c.l.b16 %v579
  %v4507 = vunpack.c.h.b16 %v579
  %v4508 = vunpack.c.l.b16 %v580
  %v4509 = vunpack.c.h.b16 %v580
  %v4510 = vunpack.c.l.b16 %v581
  %v4511 = vunpack.c.h.b16 %v581
  %v4512 = vunpack.c.l.b16 %v582
  %v4513 = vunpack.c.h.b16 %v582
  %v4514 = vunpack.c.l.b16 %v583
  %v4515 = vunpack.c.h.b16 %v583
  %v4516 = vunpack.c.l.b16 %v584
  %v4517 = vunpack.c.h.b16 %v584
  %v4518 = vunpack.c.l.b16 %v585
  %v4519 = vunpack.c.h.b16 %v585
  %v4520 = vunpack.c.l.b16 %v586
  %v4521 = vunpack.c.h.b16 %v586
  %v4522 = vunpack.c.l.b16 %v587
  %v4523 = vunpack.c.h.b16 %v587
  %v4524 = vunpack.c.l.b16 %v588
  %v4525 = vunpack.c.h.b16 %v588
  %v4526 = vunpack.c.l.b16 %v589
  %v4527 = vunpack.c.h.b16 %v589
  %v4528 = vunpack.c.l.b16 %v590
  %v4529 = vunpack.c.h.b16 %v590
  %v4530 = vunpack.c.l.b16 %v591
  %v4531 = vunpack.c.h.b16 %v591
  %v4532 = vunpack.c.l.b16 %v592
  %v4533 = vunpack.c.h.b16 %v592
  %v4534 = vunpack.c.l.b16 %v593
  %v4535 = vunpack.c.h.b16 %v593
  %v4536 = vunpack.c.l.b16 %v594
  %v4537 = vunpack.c.h.b16 %v594
  %v4538 = vunpack.c.l.b16 %v595
  %v4539 = vunpack.c.h.b16 %v595
  %v4540 = vunpack.c.l.b16 %v596
  %v4541 = vunpack.c.h.b16 %v596
  %v4542 = vunpack.c.l.b16 %v597
  %v4543 = vunpack.c.h.b16 %v597
  %v4544 = vunpack.c.l.b16 %v598
  %v4545 = vunpack.c.h.b16 %v598
  %v4546 = vunpack.c.l.b16 %v599
  %v4547 = vunpack.c.h.b16 %v599
  %v4548 = vunpack.c.l.b16 %v600
  %v4549 = vunpack.c.h.b16 %v600
  %v4550 = vunpack.c.l.b16 %v601
  %v4551 = vunpack.c.h.b16 %v601
  %v4552 = vunpack.c.l.b16 %v602
  %v4553 = vunpack.c.h.b16 %v602
  %v4554 = vunpack.c.l.b16 %v603
  %v4555 = vunpack.c.h.b16 %v603
  %v4556 = vunpack.c.l.b16 %v604
  %v4557 = vunpack.c.h.b16 %v604
  %v4558 = vunpack.c.l.b16 %v605
  %v4559 = vunpack.c.h.b16 %v605
  %v4560 = vunpack.c.l.b16 %v606
  %v4561 = vunpack.c.h.b16 %v606
  %v4562 = vunpack.c.l.b16 %v607
  %v4563 = vunpack.c.h.b16 %v607
  %v4564 = vunpack.c.l.b16 %v608
  %v4565 = vunpack.c.h.b16 %v608
  %v4566 = vunpack.c.l.b16 %v609
  %v4567 = vunpack.c.h.b16 %v609
  %v4568 = vunpack.c.l.b16 %v610
  %v4569 = vunpack.c.h.b16 %v610
  %v4570 = vunpack.c.l.b16 %v611
  %v4571 = vunpack.c.h.b16 %v611
  %v4572 = vunpack.c.l.b16 %v612
  %v4573 = vunpack.c.h.b16 %v612
  %v4574 = vunpack.c.l.b16 %v613
  %v4575 = vunpack.c.h.b16 %v613
  %v4576 = vunpack.c.l.b16 %v614
  %v4577 = vunpack.c.h.b16 %v614
  %v4578 = vunpack.c.l.b16 %v615
  %v4579 = vunpack.c.h.b16 %v615
  %v4580 = vunpack.c.l.b16 %v616
  %v4581 = vunpack.c.h.b16 %v616
  %v4582 = vunpack.c.l.b16 %v617
  %v4583 = vunpack.c.h.b16 %v617
  %v4584 = vunpack.c.l.b16 %v618
  %v4585 = vunpack.c.h.b16 %v618
  %v4586 = vunpack.c.l.b16 %v619
  %v4587 = vunpack.c.h.b16 %v619
  %v4588 = vunpack.c.l.b16 %v620
  %v4589 = vunpack.c.h.b16 %v620
  %v4590 = vunpack.c.l.b16 %v621
  %v4591 = vunpack.c.h.b16 %v621
  %v4592 = vunpack.c.l.b16 %v622
  %v4593 = vunpack.c.h.b16 %v622
  %v4594 = vunpack.c.l.b16 %v623
  %v4595 = vunpack.c.h.b16 %v623
  %v4596 = vunpack.c.l.b16 %v624
  %v4597 = vunpack.c.h.b16 %v624
  %v4598 = vunpack.c.l.b16 %v625
  %v4599 = vunpack.c.h.b16 %v625
  %v4600 = vunpack.c.l.b16 %v626
  %v4601 = vunpack.c.h.b16 %v626
  %v4602 = vunpack.c.l.b16 %v627
  %v4603 = vunpack.c.h.b16 %v627
  %v4604 = vunpack.c.l.b16 %v628
  %v4605 = vunpack.c.h.b16 %v628
  %v4606 = vunpack.c.l.b16 %v629
  %v4607 = vunpack.c.h.b16 %v629
  %v4608 = vunpack.c.l.b16 %v630
  %v4609 = vunpack.c.h.b16 %v630
  %v4610 = vunpack.c.l.b16 %v631
  %v4611 = vunpack.c.h.b16 %v631
  %v4612 = vunpack.c.l.b16 %v632
  %v4613 = vunpack.c.h.b16 %v632
  %v4614 = vunpack.c.l.b16 %v633
  %v4615 = vunpack.c.h.b16 %v633
  %v4616 = vunpack.c.l.b16 %v634
  %v4617 = vunpack.c.h.b16 %v634
  %v4618 = vunpack.c.l.b16 %v635
  %v4619 = vunpack.c.h.b16 %v635
  %v4620 = vunpack.c.l.b16 %v636
  %v4621 = vunpack.c.h.b16 %v636
  %v4622 = vunpack.c.l.b16 %v637
  %v4623 = vunpack.c.h.b16 %v637
  %v4624 = vunpack.c.l.b16 %v638
  %v4625 = vunpack.c.h.b16 %v638
  %v4626 = vunpack.c.l.b16 %v639
  %v4627 = vunpack.c.h.b16 %v639
  %v4628 = vunpack.c.l.b16 %v640
  %v4629 = vunpack.c.h.b16 %v640
  %v4630 = vunpack.c.l.b16 %v641
  %v4631 = vunpack.c.h.b16 %v641
  %v4632 = vunpack.c.l.b16 %v642
  %v4633 = vunpack.c.h.b16 %v642
  %v4634 = vunpack.c.l.b16 %v643
  %v4635 = vunpack.c.h.b16 %v643
  %v4636 = vunpack.c.l.b16 %v644
  %v4637 = vunpack.c.h.b16 %v644
  %v4638 = vunpack.c.l.b16 %v645
  %v4639 = vunpack.c.h.b16 %v645
  %v4640 = vunpack.c.l.b16 %v646
  %v4641 = vunpack.c.h.b16 %v646
  %v4642 = vunpack.c.l.b16 %v647
  %v4643 = vunpack.c.h.b16 %v647
  %v4644 = vunpack.c.l.b16 %v648
  %v4645 = vunpack.c.h.b16 %v648
  %v4646 = vunpack.c.l.b16 %v649
  %v4647 = vunpack.c.h.b16 %v649
  %v4648 = vunpack.c.l.b16 %v650
  %v4649 = vunpack.c.h.b16 %v650
  %v4650 = vunpack.c.l.b16 %v651
  %v4651 = vunpack.c.h.b16 %v651
  %v4652 = vunpack.c.l.b16 %v652
  %v4653 = vunpack.c.h.b16 %v652
  %v4654 = vunpack.c.l.b16 %v653
  %v4655 = vunpack.c.h.b16 %v653
  %v4656 = vunpack.c.l.b16 %v654
  %v4657 = vunpack.c.h.b16 %v654
  %v4658 = vunpack.c.l.b16 %v655
  %v4659 = vunpack.c.h.b16 %v655
  %v4660 = vunpack.c.l.b16 %v656
  %v4661 = vunpack.c.h.b16 %v656
  %v4662 = vunpack.c.l.b16 %v657
  %v4663 = vunpack.c.h.b16 %v657
  %v4664 = vunpack.c.l.b16 %v658
  %v4665 = vunpack.c.h.b16 %v658
  %v4666 = vunpack.c.l.b16 %v659
  %v4667 = vunpack.c.h.b16 %v659
  %v4668 = vunpack.c.l.b16 %v660
  %v4669 = vunpack.c.h.b16 %v660
  %v4670 = vunpack.c.l.b16 %v661
  %v4671 = vunpack.c.h.b16 %v661
  %v4672 = vunpack.c.l.b16 %v662
  %v4673 = vunpack.c.h.b16 %v662
  %v4674 = vunpack.c.l.b16 %v663
  %v4675 = vunpack.c.h.b16 %v663
  %v4676 = vunpack.c.l.b16 %v664
  %v4677 = vunpack.c.h.b16 %v664
  %v4678 = vunpack.c.l.b16 %v665
  %v4679 = vunpack.c.h.b16 %v665
  %v4680 = vunpack.c.l.b16 %v666
  %v4681 = vunpack.c.h.b16 %v666
  %v4682 = vunpack.c.l.b16 %v667
  %v4683 = vunpack.c.h.b16 %v667
  %v4684 = vunpack.c.l.b16 %v668
  %v4685 = vunpack.c.h.b16 %v668
  %v4686 = vunpack.c.l.b16 %v669
  %v4687 = vunpack.c.h.b16 %v669
  %v4688 = vunpack.c.l.b16 %v670
  %v4689 = vunpack.c.h.b16 %v670
  %v4690 = vunpack.c.l.b16 %v671
  %v4691 = vunpack.c.h.b16 %v671
  %v4692 = vunpack.c.l.b16 %v672
  %v4693 = vunpack.c.h.b16 %v672
  %v4694 = vunpack.c.l.b16 %v673
  %v4695 = vunpack.c.h.b16 %v673
  %v4696 = vunpack.c.l.b16 %v674
  %v4697 = vunpack.c.h.b16 %v674
  %v4698 = vunpack.c.l.b16 %v675
  %v4699 = vunpack.c.h.b16 %v675
  %v4700 = vunpack.c.l.b16 %v676
  %v4701 = vunpack.c.h.b16 %v676
  %v4702 = vunpack.c.l.b16 %v677
  %v4703 = vunpack.c.h.b16 %v677
  %v4704 = vunpack.c.l.b16 %v678
  %v4705 = vunpack.c.h.b16 %v678
  %v4706 = vunpack.c.l.b16 %v679
  %v4707 = vunpack.c.h.b16 %v679
  %v4708 = vunpack.c.l.b16 %v680
  %v4709 = vunpack.c.h.b16 %v680
  %v4710 = vunpack.c.l.b16 %v681
  %v4711 = vunpack.c.h.b16 %v681
  %v4712 = vunpack.c.l.b16 %v682
  %v4713 = vunpack.c.h.b16 %v682
  %v4714 = vunpack.c.l.b16 %v683
  %v4715 = vunpack.c.h.b16 %v683
  %v4716 = vunpack.c.l.b16 %v684
  %v4717 = vunpack.c.h.b16 %v684
  %v4718 = vunpack.c.l.b16 %v685
  %v4719 = vunpack.c.h.b16 %v685
  %v4720 = vunpack.c.l.b16 %v686
  %v4721 = vunpack.c.h.b16 %v686
  %v4722 = vunpack.c.l.b16 %v687
  %v4723 = vunpack.c.h.b16 %v687
  %v4724 = vunpack.c.l.b16 %v688
  %v4725 = vunpack.c.h.b16 %v688
  %v4726 = vunpack.c.l.b16 %v689
  %v4727 = vunpack.c.h.b16 %v689
  %v4728 = vunpack.c.l.b16 %v690
  %v4729 = vunpack.c.h.b16 %v690
  %v4730 = vunpack.c.l.b16 %v691
  %v4731 = vunpack.c.h.b16 %v691
  %v4732 = vunpack.c.l.b16 %v692
  %v4733 = vunpack.c.h.b16 %v692
  %v4734 = vunpack.c.l.b16 %v693
  %v4735 = vunpack.c.h.b16 %v693
  %v4736 = vunpack.c.l.b16 %v694
  %v4737 = vunpack.c.h.b16 %v694
  %v4738 = vunpack.c.l.b16 %v695
  %v4739 = vunpack.c.h.b16 %v695
  %v4740 = vunpack.c.l.b16 %v696
  %v4741 = vunpack.c.h.b16 %v696
  %v4742 = vunpack.c.l.b16 %v697
  %v4743 = vunpack.c.h.b16 %v697
  %v4744 = vunpack.c.l.b16 %v698
  %v4745 = vunpack.c.h.b16 %v698
  %v4746 = vunpack.c.l.b16 %v699
  %v4747 = vunpack.c.h.b16 %v699
  %v4748 = vunpack.c.l.b16 %v700
  %v4749 = vunpack.c.h.b16 %v700
  %v4750 = vunpack.c.l.b16 %v701
  %v4751 = vunpack.c.h.b16 %v701
  %v4752 = vunpack.c.l.b16 %v702
  %v4753 = vunpack.c.h.b16 %v702
  %v4754 = vunpack.c.l.b16 %v703
  %v4755 = vunpack.c.h.b16 %v703
  %v4756 = vunpack.c.l.b16 %v704
  %v4757 = vunpack.c.h.b16 %v704
  %v4758 = vunpack.c.l.b16 %v705
  %v4759 = vunpack.c.h.b16 %v705
  %v4760 = vunpack.c.l.b16 %v706
  %v4761 = vunpack.c.h.b16 %v706
  %v4762 = vunpack.c.l.b16 %v707
  %v4763 = vunpack.c.h.b16 %v707
  %v4764 = vunpack.c.l.b16 %v708
  %v4765 = vunpack.c.h.b16 %v708
  %v4766 = vunpack.c.l.b16 %v709
  %v4767 = vunpack.c.h.b16 %v709
  %v4768 = vunpack.c.l.b16 %v710
  %v4769 = vunpack.c.h.b16 %v710
  %v4770 = vunpack.c.l.b16 %v711
  %v4771 = vunpack.c.h.b16 %v711
  %v4772 = vunpack.c.l.b16 %v712
  %v4773 = vunpack.c.h.b16 %v712
  %v4774 = vunpack.c.l.b16 %v713
  %v4775 = vunpack.c.h.b16 %v713
  %v4776 = vunpack.c.l.b16 %v714
  %v4777 = vunpack.c.h.b16 %v714
  %v4778 = vunpack.c.l.b16 %v715
  %v4779 = vunpack.c.h.b16 %v715
  %v4780 = vunpack.c.l.b16 %v716
  %v4781 = vunpack.c.h.b16 %v716
  %v4782 = vunpack.c.l.b16 %v717
  %v4783 = vunpack.c.h.b16 %v717
  %v4784 = vunpack.c.l.b16 %v718
  %v4785 = vunpack.c.h.b16 %v718
  %v4786 = vunpack.c.l.b16 %v719
  %v4787 = vunpack.c.h.b16 %v719
  %v4788 = vunpack.c.l.b16 %v720
  %v4789 = vunpack.c.h.b16 %v720
  %v4790 = vunpack.c.l.b16 %v721
  %v4791 = vunpack.c.h.b16 %v721
  %v4792 = vunpack.c.l.b16 %v722
  %v4793 = vunpack.c.h.b16 %v722
  %v4794 = vunpack.c.l.b16 %v723
  %v4795 = vunpack.c.h.b16 %v723
  %v4796 = vunpack.c.l.b16 %v724
  %v4797 = vunpack.c.h.b16 %v724
  %v4798 = vunpack.c.l.b16 %v725
  %v4799 = vunpack.c.h.b16 %v725
  %v4800 = vunpack.c.l.b16 %v726
  %v4801 = vunpack.c.h.b16 %v726
  %v4802 = vunpack.c.l.b16 %v727
  %v4803 = vunpack.c.h.b16 %v727
  %v4804 = vunpack.c.l.b16 %v728
  %v4805 = vunpack.c.h.b16 %v728
  %v4806 = vunpack.c.l.b16 %v729
  %v4807 = vunpack.c.h.b16 %v729
  %v4808 = vunpack.c.l.b16 %v730
  %v4809 = vunpack.c.h.b16 %v730
  %v4810 = vunpack.c.l.b16 %v731
  %v4811 = vunpack.c.h.b16 %v731
  %v4812 = vunpack.c.l.b16 %v732
  %v4813 = vunpack.c.h.b16 %v732
  %v4814 = vunpack.c.l.b16 %v733
  %v4815 = vunpack.c.h.b16 %v733
  %v4816 = vunpack.c.l.b16 %v734
  %v4817 = vunpack.c.h.b16 %v734
  %v4818 = vunpack.c.l.b16 %v735
  %v4819 = vunpack.c.h.b16 %v735
  %v4820 = vunpack.c.l.b16 %v736
  %v4821 = vunpack.c.h.b16 %v736
  %v4822 = vunpack.c.l.b16 %v737
  %v4823 = vunpack.c.h.b16 %v737
  %v4824 = vunpack.c.l.b16 %v738
  %v4825 = vunpack.c.h.b16 %v738
  %v4826 = vunpack.c.l.b16 %v739
  %v4827 = vunpack.c.h.b16 %v739
  %v4828 = vunpack.c.l.b16 %v740
  %v4829 = vunpack.c.h.b16 %v740
  %v4830 = vunpack.c.l.b16 %v741
  %v4831 = vunpack.c.h.b16 %v741
  %v4832 = vunpack.c.l.b16 %v742
  %v4833 = vunpack.c.h.b16 %v742
  %v4834 = vunpack.c.l.b16 %v743
  %v4835 = vunpack.c.h.b16 %v743
  %v4836 = vunpack.c.l.b16 %v744
  %v4837 = vunpack.c.h.b16 %v744
  %v4838 = vunpack.c.l.b16 %v745
  %v4839 = vunpack.c.h.b16 %v745
  %v4840 = vunpack.c.l.b16 %v746
  %v4841 = vunpack.c.h.b16 %v746
  %v4842 = vunpack.c.l.b16 %v747
  %v4843 = vunpack.c.h.b16 %v747
  %v4844 = vunpack.c.l.b16 %v748
  %v4845 = vunpack.c.h.b16 %v748
  %v4846 = vunpack.c.l.b16 %v749
  %v4847 = vunpack.c.h.b16 %v749
  %v4848 = vunpack.c.l.b16 %v750
  %v4849 = vunpack.c.h.b16 %v750
  %v4850 = vunpack.c.l.b16 %v751
  %v4851 = vunpack.c.h.b16 %v751
  %v4852 = vunpack.c.l.b16 %v752
  %v4853 = vunpack.c.h.b16 %v752
  %v4854 = vunpack.c.l.b16 %v753
  %v4855 = vunpack.c.h.b16 %v753
  %v4856 = vunpack.c.l.b16 %v754
  %v4857 = vunpack.c.h.b16 %v754
  %v4858 = vunpack.c.l.b16 %v755
  %v4859 = vunpack.c.h.b16 %v755
  %v4860 = vunpack.c.l.b16 %v756
  %v4861 = vunpack.c.h.b16 %v756
  %v4862 = vunpack.c.l.b16 %v757
  %v4863 = vunpack.c.h.b16 %v757
  %v4864 = vunpack.c.l.b16 %v758
  %v4865 = vunpack.c.h.b16 %v758
  %v4866 = vunpack.c.l.b16 %v759
  %v4867 = vunpack.c.h.b16 %v759
  %v4868 = vunpack.c.l.b16 %v760
  %v4869 = vunpack.c.h.b16 %v760
  %v4870 = vunpack.c.l.b16 %v761
  %v4871 = vunpack.c.h.b16 %v761
  %v4872 = vunpack.c.l.b16 %v762
  %v4873 = vunpack.c.h.b16 %v762
  %v4874 = vunpack.c.l.b16 %v763
  %v4875 = vunpack.c.h.b16 %v763
  %v4876 = vunpack.c.l.b16 %v764
  %v4877 = vunpack.c.h.b16 %v764
  %v4878 = vunpack.c.l.b16 %v765
  %v4879 = vunpack.c.h.b16 %v765
  %v4880 = vunpack.c.l.b16 %v766
  %v4881 = vunpack.c.h.b16 %v766
  %v4882 = vunpack.c.l.b16 %v767
  %v4883 = vunpack.c.h.b16 %v767
  %v4884 = vunpack.c.l.b16 %v768
  %v4885 = vunpack.c.h.b16 %v768
  %v4886 = vunpack.c.l.b16 %v769
  %v4887 = vunpack.c.h.b16 %v769
  %v4888 = vunpack.c.l.b16 %v770
  %v4889 = vunpack.c.h.b16 %v770
  %v4890 = vunpack.c.l.b16 %v771
  %v4891 = vunpack.c.h.b16 %v771
  %v4892 = vunpack.c.l.b16 %v772
  %v4893 = vunpack.c.h.b16 %v772
  %v4894 = vunpack.c.l.b16 %v773
  %v4895 = vunpack.c.h.b16 %v773
  %v4896 = vunpack.c.l.b16 %v774
  %v4897 = vunpack.c.h.b16 %v774
  %v4898 = vunpack.c.l.b16 %v775
  %v4899 = vunpack.c.h.b16 %v775
  %v4900 = vunpack.c.l.b16 %v776
  %v4901 = vunpack.c.h.b16 %v776
  %v4902 = vunpack.c.l.b16 %v777
  %v4903 = vunpack.c.h.b16 %v777
  %v4904 = vunpack.c.l.b16 %v778
  %v4905 = vunpack.c.h.b16 %v778
  %v4906 = vunpack.c.l.b16 %v779
  %v4907 = vunpack.c.h.b16 %v779
  %v4908 = vunpack.c.l.b16 %v780
  %v4909 = vunpack.c.h.b16 %v780
  %v4910 = vunpack.c.l.b16 %v781
  %v4911 = vunpack.c.h.b16 %v781
  %v4912 = vunpack.c.l.b16 %v782
  %v4913 = vunpack.c.h.b16 %v782
  %v4914 = vunpack.c.l.b16 %v783
  %v4915 = vunpack.c.h.b16 %v783
  %v4916 = vunpack.c.l.b16 %v784
  %v4917 = vunpack.c.h.b16 %v784
  %v4918 = vunpack.c.l.b16 %v785
  %v4919 = vunpack.c.h.b16 %v785
  %v4920 = vunpack.c.l.b16 %v786
  %v4921 = vunpack.c.h.b16 %v786
  %v4922 = vunpack.c.l.b16 %v787
  %v4923 = vunpack.c.h.b16 %v787
  %v4924 = vunpack.c.l.b16 %v788
  %v4925 = vunpack.c.h.b16 %v788
  %v4926 = vunpack.c.l.b16 %v789
  %v4927 = vunpack.c.h.b16 %v789
  %v4928 = vunpack.c.l.b16 %v790
  %v4929 = vunpack.c.h.b16 %v790
  %v4930 = vunpack.c.l.b16 %v791
  %v4931 = vunpack.c.h.b16 %v791
  %v4932 = vunpack.c.l.b16 %v792
  %v4933 = vunpack.c.h.b16 %v792
  %v4934 = vunpack.c.l.b16 %v793
  %v4935 = vunpack.c.h.b16 %v793
  %v4936 = vunpack.c.l.b16 %v794
  %v4937 = vunpack.c.h.b16 %v794
  %v4938 = vunpack.c.l.b16 %v795
  %v4939 = vunpack.c.h.b16 %v795
  %v4940 = vunpack.c.l.b16 %v796
  %v4941 = vunpack.c.h.b16 %v796
  %v4942 = vunpack.c.l.b16 %v797
  %v4943 = vunpack.c.h.b16 %v797
  %v4944 = vunpack.c.l.b16 %v798
  %v4945 = vunpack.c.h.b16 %v798
  %v4946 = vunpack.c.l.b16 %v799
  %v4947 = vunpack.c.h.b16 %v799
  %v4948 = vunpack.c.l.b16 %v800
  %v4949 = vunpack.c.h.b16 %v800
  %v4950 = vunpack.c.l.b16 %v801
  %v4951 = vunpack.c.h.b16 %v801
  %v4952 = vunpack.c.l.b16 %v802
  %v4953 = vunpack.c.h.b16 %v802
  %v4954 = vunpack.c.l.b16 %v803
  %v4955 = vunpack.c.h.b16 %v803
  %v4956 = vunpack.c.l.b16 %v804
  %v4957 = vunpack.c.h.b16 %v804
  %v4958 = vunpack.c.l.b16 %v805
  %v4959 = vunpack.c.h.b16 %v805
  %v4960 = vunpack.c.l.b16 %v806
  %v4961 = vunpack.c.h.b16 %v806
  %v4962 = vunpack.c.l.b16 %v807
  %v4963 = vunpack.c.h.b16 %v807
  %v4964 = vunpack.c.l.b16 %v808
  %v4965 = vunpack.c.h.b16 %v808
  %v4966 = vunpack.c.l.b16 %v809
  %v4967 = vunpack.c.h.b16 %v809
  %v4968 = vunpack.c.l.b16 %v810
  %v4969 = vunpack.c.h.b16 %v810
  %v4970 = vunpack.c.l.b16 %v811
  %v4971 = vunpack.c.h.b16 %v811
  %v4972 = vunpack.c.l.b16 %v812
  %v4973 = vunpack.c.h.b16 %v812
  %v4974 = vunpack.c.l.b16 %v813
  %v4975 = vunpack.c.h.b16 %v813
  %v4976 = vunpack.c.l.b16 %v814
  %v4977 = vunpack.c.h.b16 %v814
  %v4978 = vunpack.c.l.b16 %v815
  %v4979 = vunpack.c.h.b16 %v815
  %v4980 = vunpack.c.l.b16 %v816
  %v4981 = vunpack.c.h.b16 %v816
  %v4982 = vunpack.c.l.b16 %v817
  %v4983 = vunpack.c.h.b16 %v817
  %v4984 = vunpack.c.l.b16 %v818
  %v4985 = vunpack.c.h.b16 %v818
  %v4986 = vunpack.c.l.b16 %v819
  %v4987 = vunpack.c.h.b16 %v819
  %v4988 = vunpack.c.l.b16 %v820
  %v4989 = vunpack.c.h.b16 %v820
  %v4990 = vunpack.c.l.b16 %v821
  %v4991 = vunpack.c.h.b16 %v821
  %v4992 = vunpack.c.l.b16 %v822
  %v4993 = vunpack.c.h.b16 %v822
  %v4994 = vunpack.c.l.b16 %v823
  %v4995 = vunpack.c.h.b16 %v823
  %v4996 = vunpack.c.l.b16 %v824
  %v4997 = vunpack.c.h.b16 %v824
  %v4998 = vunpack.c.l.b16 %v825
  %v4999 = vunpack.c.h.b16 %v825
  %v5000 = vunpack.c.l.b16 %v826
  %v5001 = vunpack.c.h.b16 %v826
  %v5002 = vunpack.c.l.b16 %v827
  %v5003 = vunpack.c.h.b16 %v827
  %v5004 = vunpack.c.l.b16 %v828
  %v5005 = vunpack.c.h.b16 %v828
  %v5006 = vunpack.c.l.b16 %v829
  %v5007 = vunpack.c.h.b16 %v829
  %v5008 = vunpack.c.l.b16 %v830
  %v5009 = vunpack.c.h.b16 %v830
  %v5010 = vunpack.c.l.b16 %v831
  %v5011 = vunpack.c.h.b16 %v831
  %v5012 = vunpack.c.l.b16 %v832
  %v5013 = vunpack.c.h.b16 %v832
  %v5014 = vunpack.c.l.b16 %v833
  %v5015 = vunpack.c.h.b16 %v833
  %v5016 = vunpack.c.l.b16 %v834
  %v5017 = vunpack.c.h.b16 %v834
  %v5018 = vunpack.c.l.b16 %v835
  %v5019 = vunpack.c.h.b16 %v835
  %v5020 = vunpack.c.l.b16 %v836
  %v5021 = vunpack.c.h.b16 %v836
  %v5022 = vunpack.c.l.b16 %v837
  %v5023 = vunpack.c.h.b16 %v837
  %v5024 = vunpack.c.l.b16 %v838
  %v5025 = vunpack.c.h.b16 %v838
  %v5026 = vunpack.c.l.b16 %v839
  %v5027 = vunpack.c.h.b16 %v839
  %v5028 = vunpack.c.l.b16 %v840
  %v5029 = vunpack.c.h.b16 %v840
  %v5030 = vunpack.c.l.b16 %v841
  %v5031 = vunpack.c.h.b16 %v841
  %v5032 = vunpack.c.l.b16 %v842
  %v5033 = vunpack.c.h.b16 %v842
  %v5034 = vunpack.c.l.b16 %v843
  %v5035 = vunpack.c.h.b16 %v843
  %v5036 = vunpack.c.l.b16 %v844
  %v5037 = vunpack.c.h.b16 %v844
  %v5038 = vunpack.c.l.b16 %v845
  %v5039 = vunpack.c.h.b16 %v845
  %v5040 = vunpack.c.l.b16 %v846
  %v5041 = vunpack.c.h.b16 %v846
  %v5042 = vunpack.c.l.b16 %v847
  %v5043 = vunpack.c.h.b16 %v847
  %v5044 = vunpack.c.l.b16 %v848
  %v5045 = vunpack.c.h.b16 %v848
  %v5046 = vunpack.c.l.b16 %v849
  %v5047 = vunpack.c.h.b16 %v849
  %v5048 = vunpack.c.l.b16 %v850
  %v5049 = vunpack.c.h.b16 %v850
  %v5050 = vunpack.c.l.b16 %v851
  %v5051 = vunpack.c.h.b16 %v851
  %v5052 = vunpack.c.l.b16 %v852
  %v5053 = vunpack.c.h.b16 %v852
  %v5054 = vunpack.c.l.b16 %v853
  %v5055 = vunpack.c.h.b16 %v853
  %v5056 = vunpack.c.l.b16 %v854
  %v5057 = vunpack.c.h.b16 %v854
  %v5058 = vunpack.c.l.b16 %v855
  %v5059 = vunpack.c.h.b16 %v855
  %v5060 = vunpack.c.l.b16 %v856
  %v5061 = vunpack.c.h.b16 %v856
  %v5062 = vunpack.c.l.b16 %v857
  %v5063 = vunpack.c.h.b16 %v857
  %v5064 = vunpack.c.l.b16 %v858
  %v5065 = vunpack.c.h.b16 %v858
  %v5066 = vunpack.c.l.b16 %v859
  %v5067 = vunpack.c.h.b16 %v859
  %v5068 = vunpack.c.l.b16 %v860
  %v5069 = vunpack.c.h.b16 %v860
  %v5070 = vunpack.c.l.b16 %v861
  %v5071 = vunpack.c.h.b16 %v861
  %v5072 = vunpack.c.l.b16 %v862
  %v5073 = vunpack.c.h.b16 %v862
  %v5074 = vunpack.c.l.b16 %v863
  %v5075 = vunpack.c.h.b16 %v863
  %v5076 = vunpack.c.l.b16 %v864
  %v5077 = vunpack.c.h.b16 %v864
  %v5078 = vunpack.c.l.b16 %v865
  %v5079 = vunpack.c.h.b16 %v865
  %v5080 = vunpack.c.l.b16 %v866
  %v5081 = vunpack.c.h.b16 %v866
  %v5082 = vunpack.c.l.b16 %v867
  %v5083 = vunpack.c.h.b16 %v867
  %v5084 = vunpack.c.l.b16 %v868
  %v5085 = vunpack.c.h.b16 %v868
  %v5086 = vunpack.c.l.b16 %v869
  %v5087 = vunpack.c.h.b16 %v869
  %v5088 = vunpack.c.l.b16 %v870
  %v5089 = vunpack.c.h.b16 %v870
  %v5090 = vunpack.c.l.b16 %v871
  %v5091 = vunpack.c.h.b16 %v871
  %v5092 = vunpack.c.l.b16 %v872
  %v5093 = vunpack.c.h.b16 %v872
  %v5094 = vunpack.c.l.b16 %v873
  %v5095 = vunpack.c.h.b16 %v873
  %v5096 = vunpack.c.l.b16 %v874
  %v5097 = vunpack.c.h.b16 %v874
  %v5098 = vunpack.c.l.b16 %v875
  %v5099 = vunpack.c.h.b16 %v875
  %v5100 = vunpack.c.l.b16 %v876
  %v5101 = vunpack.c.h.b16 %v876
  %v5102 = vunpack.c.l.b16 %v877
  %v5103 = vunpack.c.h.b16 %v877
  %v5104 = vunpack.c.l.b16 %v878
  %v5105 = vunpack.c.h.b16 %v878
  %v5106 = vunpack.c.l.b16 %v879
  %v5107 = vunpack.c.h.b16 %v879
  %v5108 = vunpack.c.l.b16 %v880
  %v5109 = vunpack.c.h.b16 %v880
  %v5110 = vunpack.c.l.b16 %v881
  %v5111 = vunpack.c.h.b16 %v881
  %v5112 = vunpack.c.l.b16 %v882
  %v5113 = vunpack.c.h.b16 %v882
  %v5114 = vunpack.c.l.b16 %v883
  %v5115 = vunpack.c.h.b16 %v883
  %v5116 = vunpack.c.l.b16 %v884
  %v5117 = vunpack.c.h.b16 %v884
  %v5118 = vunpack.c.l.b16 %v885
  %v5119 = vunpack.c.h.b16 %v885
  %v5120 = vunpack.c.l.b16 %v886
  %v5121 = vunpack.c.h.b16 %v886
  %v5122 = vunpack.c.l.b16 %v887
  %v5123 = vunpack.c.h.b16 %v887
  %v5124 = vunpack.c.l.b16 %v888
  %v5125 = vunpack.c.h.b16 %v888
  %v5126 = vunpack.c.l.b16 %v889
  %v5127 = vunpack.c.h.b16 %v889
  %v5128 = vunpack.c.l.b16 %v890
  %v5129 = vunpack.c.h.b16 %v890
  %v5130 = vunpack.c.l.b16 %v891
  %v5131 = vunpack.c.h.b16 %v891
  %v5132 = vunpack.c.l.b16 %v892
  %v5133 = vunpack.c.h.b16 %v892
  %v5134 = vunpack.c.l.b16 %v893
  %v5135 = vunpack.c.h.b16 %v893
  %v5136 = vunpack.c.l.b16 %v894
  %v5137 = vunpack.c.h.b16 %v894
  %v5138 = vunpack.c.l.b16 %v895
  %v5139 = vunpack.c.h.b16 %v895
  %v5140 = vunpack.c.l.b16 %v896
  %v5141 = vunpack.c.h.b16 %v896
  %v5142 = vunpack.c.l.b16 %v897
  %v5143 = vunpack.c.h.b16 %v897
  %v5144 = vunpack.c.l.b16 %v898
  %v5145 = vunpack.c.h.b16 %v898
  %v5146 = vunpack.c.l.b16 %v899
  %v5147 = vunpack.c.h.b16 %v899
  %v5148 = vunpack.c.l.b16 %v900
  %v5149 = vunpack.c.h.b16 %v900
  %v5150 = vunpack.c.l.b16 %v901
  %v5151 = vunpack.c.h.b16 %v901
  %v5152 = vunpack.c.l.b16 %v902
  %v5153 = vunpack.c.h.b16 %v902
  %v5154 = vunpack.c.l.b16 %v903
  %v5155 = vunpack.c.h.b16 %v903
  %v5156 = vunpack.c.l.b16 %v904
  %v5157 = vunpack.c.h.b16 %v904
  %v5158 = vunpack.c.l.b16 %v905
  %v5159 = vunpack.c.h.b16 %v905
  %v5160 = vunpack.c.l.b16 %v906
  %v5161 = vunpack.c.h.b16 %v906
  %v5162 = vunpack.c.l.b16 %v907
  %v5163 = vunpack.c.h.b16 %v907
  %v5164 = vunpack.c.l.b16 %v908
  %v5165 = vunpack.c.h.b16 %v908
  %v5166 = vunpack.c.l.b16 %v909
  %v5167 = vunpack.c.h.b16 %v909
  %v5168 = vunpack.c.l.b16 %v910
  %v5169 = vunpack.c.h.b16 %v910
  %v5170 = vunpack.c.l.b16 %v911
  %v5171 = vunpack.c.h.b16 %v911
  %v5172 = vunpack.c.l.b16 %v912
  %v5173 = vunpack.c.h.b16 %v912
  %v5174 = vunpack.c.l.b16 %v913
  %v5175 = vunpack.c.h.b16 %v913
  %v5176 = vunpack.c.l.b16 %v914
  %v5177 = vunpack.c.h.b16 %v914
  %v5178 = vunpack.c.l.b16 %v915
  %v5179 = vunpack.c.h.b16 %v915
  %v5180 = vunpack.c.l.b16 %v916
  %v5181 = vunpack.c.h.b16 %v916
  %v5182 = vunpack.c.l.b16 %v917
  %v5183 = vunpack.c.h.b16 %v917
  %v5184 = vunpack.c.l.b16 %v918
  %v5185 = vunpack.c.h.b16 %v918
  %v5186 = vunpack.c.l.b16 %v919
  %v5187 = vunpack.c.h.b16 %v919
  %v5188 = vunpack.c.l.b16 %v920
  %v5189 = vunpack.c.h.b16 %v920
  %v5190 = vunpack.c.l.b16 %v921
  %v5191 = vunpack.c.h.b16 %v921
  %v5192 = vunpack.c.l.b16 %v922
  %v5193 = vunpack.c.h.b16 %v922
  %v5194 = vunpack.c.l.b16 %v923
  %v5195 = vunpack.c.h.b16 %v923
  %v5196 = vunpack.c.l.b16 %v924
  %v5197 = vunpack.c.h.b16 %v924
  %v5198 = vunpack.c.l.b16 %v925
  %v5199 = vunpack.c.h.b16 %v925
  %v5200 = vunpack.c.l.b16 %v926
  %v5201 = vunpack.c.h.b16 %v926
  %v5202 = vunpack.c.l.b16 %v927
  %v5203 = vunpack.c.h.b16 %v927
  %v5204 = vunpack.c.l.b16 %v928
  %v5205 = vunpack.c.h.b16 %v928
  %v5206 = vunpack.c.l.b16 %v929
  %v5207 = vunpack.c.h.b16 %v929
  %v5208 = vunpack.c.l.b16 %v930
  %v5209 = vunpack.c.h.b16 %v930
  %v5210 = vunpack.c.l.b16 %v931
  %v5211 = vunpack.c.h.b16 %v931
  %v5212 = vunpack.c.l.b16 %v932
  %v5213 = vunpack.c.h.b16 %v932
  %v5214 = vunpack.c.l.b16 %v933
  %v5215 = vunpack.c.h.b16 %v933
  %v5216 = vunpack.c.l.b16 %v934
  %v5217 = vunpack.c.h.b16 %v934
  %v5218 = vunpack.c.l.b16 %v935
  %v5219 = vunpack.c.h.b16 %v935
  %v5220 = vunpack.c.l.b16 %v936
  %v5221 = vunpack.c.h.b16 %v936
  %v5222 = vunpack.c.l.b16 %v937
  %v5223 = vunpack.c.h.b16 %v937
  %v5224 = vunpack.c.l.b16 %v938
  %v5225 = vunpack.c.h.b16 %v938
  %v5226 = vunpack.c.l.b16 %v939
  %v5227 = vunpack.c.h.b16 %v939
  %v5228 = vunpack.c.l.b16 %v940
  %v5229 = vunpack.c.h.b16 %v940
  %v5230 = vunpack.c.l.b16 %v941
  %v5231 = vunpack.c.h.b16 %v941
  %v5232 = vunpack.c.l.b16 %v942
  %v5233 = vunpack.c.h.b16 %v942
  %v5234 = vunpack.c.l.b16 %v943
  %v5235 = vunpack.c.h.b16 %v943
  %v5236 = vunpack.c.l.b16 %v944
  %v5237 = vunpack.c.h.b16 %v944
  %v5238 = vunpack.c.l.b16 %v945
  %v5239 = vunpack.c.h.b16 %v945
  %v5240 = vunpack.c.l.b16 %v946
  %v5241 = vunpack.c.h.b16 %v946
  %v5242 = vunpack.c.l.b16 %v947
  %v5243 = vunpack.c.h.b16 %v947
  %v5244 = vunpack.c.l.b16 %v948
  %v5245 = vunpack.c.h.b16 %v948
  %v5246 = vunpack.c.l.b16 %v949
  %v5247 = vunpack.c.h.b16 %v949
  %v5248 = vunpack.c.l.b16 %v950
  %v5249 = vunpack.c.h.b16 %v950
  %v5250 = vunpack.c.l.b16 %v951
  %v5251 = vunpack.c.h.b16 %v951
  %v5252 = vunpack.c.l.b16 %v952
  %v5253 = vunpack.c.h.b16 %v952
  %v5254 = vunpack.c.l.b16 %v953
  %v5255 = vunpack.c.h.b16 %v953
  %v5256 = vunpack.c.l.b16 %v954
  %v5257 = vunpack.c.h.b16 %v954
  %v5258 = vunpack.c.l.b16 %v955
  %v5259 = vunpack.c.h.b16 %v955
  %v5260 = vunpack.c.l.b16 %v956
  %v5261 = vunpack.c.h.b16 %v956
  %v5262 = vunpack.c.l.b16 %v957
  %v5263 = vunpack.c.h.b16 %v957
  %v5264 = vunpack.c.l.b16 %v958
  %v5265 = vunpack.c.h.b16 %v958
  %v5266 = vunpack.c.l.b16 %v959
  %v5267 = vunpack.c.h.b16 %v959
  %v5268 = vunpack.c.l.b16 %v960
  %v5269 = vunpack.c.h.b16 %v960
  %v5270 = vunpack.c.l.b16 %v961
  %v5271 = vunpack.c.h.b16 %v961
  %v5272 = vunpack.c.l.b16 %v962
  %v5273 = vunpack.c.h.b16 %v962
  %v5274 = vunpack.c.l.b16 %v963
  %v5275 = vunpack.c.h.b16 %v963
  %v5276 = vunpack.c.l.b16 %v964
  %v5277 = vunpack.c.h.b16 %v964
  %v5278 = vunpack.c.l.b16 %v965
  %v5279 = vunpack.c.h.b16 %v965
  %v5280 = vunpack.c.l.b16 %v966
  %v5281 = vunpack.c.h.b16 %v966
  %v5282 = vunpack.c.l.b16 %v967
  %v5283 = vunpack.c.h.b16 %v967
  %v5284 = vunpack.c.l.b16 %v968
  %v5285 = vunpack.c.h.b16 %v968
  %v5286 = vunpack.c.l.b16 %v969
  %v5287 = vunpack.c.h.b16 %v969
  %v5288 = vunpack.c.l.b16 %v970
  %v5289 = vunpack.c.h.b16 %v970
  %v5290 = vunpack.c.l.b16 %v971
  %v5291 = vunpack.c.h.b16 %v971
  %v5292 = vunpack.c.l.b16 %v972
  %v5293 = vunpack.c.h.b16 %v972
  %v5294 = vunpack.c.l.b16 %v973
  %v5295 = vunpack.c.h.b16 %v973
  %v5296 = vunpack.c.l.b16 %v974
  %v5297 = vunpack.c.h.b16 %v974
  %v5298 = vunpack.c.l.b16 %v975
  %v5299 = vunpack.c.h.b16 %v975
  %v5300 = vunpack.c.l.b16 %v976
  %v5301 = vunpack.c.h.b16 %v976
  %v5302 = vunpack.c.l.b16 %v977
  %v5303 = vunpack.c.h.b16 %v977
  %v5304 = vunpack.c.l.b16 %v978
  %v5305 = vunpack.c.h.b16 %v978
  %v5306 = vunpack.c.l.b16 %v979
  %v5307 = vunpack.c.h.b16 %v979
  %v5308 = vunpack.c.l.b16 %v980
  %v5309 = vunpack.c.h.b16 %v980
  %v5310 = vunpack.c.l.b16 %v981
  %v5311 = vunpack.c.h.b16 %v981
  %v5312 = vunpack.c.l.b16 %v982
  %v5313 = vunpack.c.h.b16 %v982
  %v5314 = vunpack.c.l.b16 %v983
  %v5315 = vunpack.c.h.b16 %v983
  %v5316 = vunpack.c.l.b16 %v984
  %v5317 = vunpack.c.h.b16 %v984
  %v5318 = vunpack.c.l.b16 %v985
  %v5319 = vunpack.c.h.b16 %v985
  %v5320 = vunpack.c.l.b16 %v986
  %v5321 = vunpack.c.h.b16 %v986
  %v5322 = vunpack.c.l.b16 %v987
  %v5323 = vunpack.c.h.b16 %v987
  %v5324 = vunpack.c.l.b16 %v988
  %v5325 = vunpack.c.h.b16 %v988
  %v5326 = vunpack.c.l.b16 %v989
  %v5327 = vunpack.c.h.b16 %v989
  %v5328 = vunpack.c.l.b16 %v990
  %v5329 = vunpack.c.h.b16 %v990
  %v5330 = vunpack.c.l.b16 %v991
  %v5331 = vunpack.c.h.b16 %v991
  %v5332 = vunpack.c.l.b16 %v992
  %v5333 = vunpack.c.h.b16 %v992
  %v5334 = vunpack.c.l.b16 %v993
  %v5335 = vunpack.c.h.b16 %v993
  %v5336 = vunpack.c.l.b16 %v994
  %v5337 = vunpack.c.h.b16 %v994
  %v5338 = vunpack.c.l.b16 %v995
  %v5339 = vunpack.c.h.b16 %v995
  %v5340 = vunpack.c.l.b16 %v996
  %v5341 = vunpack.c.h.b16 %v996
  %v5342 = vunpack.c.l.b16 %v997
  %v5343 = vunpack.c.h.b16 %v997
  %v5344 = vunpack.c.l.b16 %v998
  %v5345 = vunpack.c.h.b16 %v998
  %v5346 = vunpack.c.l.b16 %v999
  %v5347 = vunpack.c.h.b16 %v999
  %v5348 = vunpack.c.l.b16 %v1000
  %v5349 = vunpack.c.h.b16 %v1000
  %v5350 = vunpack.c.l.b16 %v1001
  %v5351 = vunpack.c.h.b16 %v1001
  %v5352 = vunpack.c.l.b16 %v1002
  %v5353 = vunpack.c.h.b16 %v1002
  %v5354 = vunpack.c.l.b16 %v1003
  %v5355 = vunpack.c.h.b16 %v1003
  %v5356 = vunpack.c.l.b16 %v1004
  %v5357 = vunpack.c.h.b16 %v1004
  %v5358 = vunpack.c.l.b16 %v1005
  %v5359 = vunpack.c.h.b16 %v1005
  %v5360 = vunpack.c.l.b16 %v1006
  %v5361 = vunpack.c.h.b16 %v1006
  %v5362 = vunpack.c.l.b16 %v1007
  %v5363 = vunpack.c.h.b16 %v1007
  %v5364 = vunpack.c.l.b16 %v1008
  %v5365 = vunpack.c.h.b16 %v1008
  %v5366 = vunpack.c.l.b16 %v1009
  %v5367 = vunpack.c.h.b16 %v1009
  %v5368 = vunpack.c.l.b16 %v1010
  %v5369 = vunpack.c.h.b16 %v1010
  %v5370 = vunpack.c.l.b16 %v1011
  %v5371 = vunpack.c.h.b16 %v1011
  %v5372 = vunpack.c.l.b16 %v1012
  %v5373 = vunpack.c.h.b16 %v1012
  %v5374 = vunpack.c.l.b16 %v1013
  %v5375 = vunpack.c.h.b16 %v1013
  %v5376 = vunpack.c.l.b16 %v1014
  %v5377 = vunpack.c.h.b16 %v1014
  %v5378 = vunpack.c.l.b16 %v1015
  %v5379 = vunpack.c.h.b16 %v1015
  %v5380 = vunpack.c.l.b16 %v1016
  %v5381 = vunpack.c.h.b16 %v1016
  %v5382 = vunpack.c.l.b16 %v1017
  %v5383 = vunpack.c.h.b16 %v1017
  %v5384 = vunpack.c.l.b16 %v1018
  %v5385 = vunpack.c.h.b16 %v1018
  %v5386 = vunpack.c.l.b16 %v1019
  %v5387 = vunpack.c.h.b16 %v1019
  %v5388 = vunpack.c.l.b16 %v1020
  %v5389 = vunpack.c.h.b16 %v1020
  %v5390 = vunpack.c.l.b16 %v1021
  %v5391 = vunpack.c.h.b16 %v1021
  %v5392 = vunpack.c.l.b16 %v1022
  %v5393 = vunpack.c.h.b16 %v1022
  %v5394 = vunpack.c.l.b16 %v1023
  %v5395 = vunpack.c.h.b16 %v1023
  %v5396 = vunpack.c.l.b16 %v1024
  %v5397 = vunpack.c.h.b16 %v1024
  %v5398 = vunpack.c.l.b16 %v1025
  %v5399 = vunpack.c.h.b16 %v1025
  %v5400 = vunpack.c.l.b16 %v1026
  %v5401 = vunpack.c.h.b16 %v1026
  %v5402 = vunpack.c.l.b16 %v1027
  %v5403 = vunpack.c.h.b16 %v1027
  %v5404 = vunpack.c.l.b16 %v1028
  %v5405 = vunpack.c.h.b16 %v1028
  %v5406 = vunpack.c.l.b16 %v1029
  %v5407 = vunpack.c.h.b16 %v1029
  %v5408 = vunpack.c.l.b16 %v1030
  %v5409 = vunpack.c.h.b16 %v1030
  %v5410 = vunpack.c.l.b16 %v1031
  %v5411 = vunpack.c.h.b16 %v1031
  %v5412 = vunpack.c.l.b16 %v1032
  %v5413 = vunpack.c.h.b16 %v1032
  %v5414 = vunpack.c.l.b16 %v1033
  %v5415 = vunpack.c.h.b16 %v1033
  %v5416 = vunpack.c.l.b16 %v1034
  %v5417 = vunpack.c.h.b16 %v1034
  %v5418 = vunpack.c.l.b16 %v1035
  %v5419 = vunpack.c.h.b16 %v1035
  %v5420 = vunpack.c.l.b16 %v1036
  %v5421 = vunpack.c.h.b16 %v1036
  %v5422 = vunpack.c.l.b16 %v1037
  %v5423 = vunpack.c.h.b16 %v1037
  %v5424 = vunpack.c.l.b16 %v1038
  %v5425 = vunpack.c.h.b16 %v1038
  %v5426 = vunpack.c.l.b16 %v1039
  %v5427 = vunpack.c.h.b16 %v1039
  %v5428 = vunpack.c.l.b16 %v1040
  %v5429 = vunpack.c.h.b16 %v1040
  %v5430 = vunpack.c.l.b16 %v1041
  %v5431 = vunpack.c.h.b16 %v1041
  %v5432 = vunpack.c.l.b16 %v1042
  %v5433 = vunpack.c.h.b16 %v1042
  %v5434 = vunpack.c.l.b16 %v1043
  %v5435 = vunpack.c.h.b16 %v1043
  %v5436 = vunpack.c.l.b16 %v1044
  %v5437 = vunpack.c.h.b16 %v1044
  %v5438 = vunpack.c.l.b16 %v1045
  %v5439 = vunpack.c.h.b16 %v1045
  %v5440 = vunpack.c.l.b16 %v1046
  %v5441 = vunpack.c.h.b16 %v1046
  %v5442 = vunpack.c.l.b16 %v1047
  %v5443 = vunpack.c.h.b16 %v1047
  %v5444 = vunpack.c.l.b16 %v1048
  %v5445 = vunpack.c.h.b16 %v1048
  %v5446 = vunpack.c.l.b16 %v1049
  %v5447 = vunpack.c.h.b16 %v1049
  %v5448 = vunpack.c.l.b16 %v1050
  %v5449 = vunpack.c.h.b16 %v1050
  %v5450 = vunpack.c.l.b16 %v1051
  %v5451 = vunpack.c.h.b16 %v1051
  %v5452 = vunpack.c.l.b16 %v1052
  %v5453 = vunpack.c.h.b16 %v1052
  %v5454 = vunpack.c.l.b16 %v1053
  %v5455 = vunpack.c.h.b16 %v1053
  %v5456 = vunpack.c.l.b16 %v1054
  %v5457 = vunpack.c.h.b16 %v1054
  %v5458 = vunpack.c.l.b16 %v1055
  %v5459 = vunpack.c.h.b16 %v1055
  %v5460 = vunpack.c.l.b16 %v1056
  %v5461 = vunpack.c.h.b16 %v1056
  %v5462 = vunpack.c.l.b16 %v1057
  %v5463 = vunpack.c.h.b16 %v1057
  %v5464 = vunpack.c.l.b16 %v1058
  %v5465 = vunpack.c.h.b16 %v1058
  %v5466 = vunpack.c.l.b16 %v1059
  %v5467 = vunpack.c.h.b16 %v1059
  %v5468 = vunpack.c.l.b16 %v1060
  %v5469 = vunpack.c.h.b16 %v1060
  %v5470 = vunpack.c.l.b16 %v1061
  %v5471 = vunpack.c.h.b16 %v1061
  %v5472 = vunpack.c.l.b16 %v1062
  %v5473 = vunpack.c.h.b16 %v1062
  %v5474 = vunpack.c.l.b16 %v1063
  %v5475 = vunpack.c.h.b16 %v1063
  %v5476 = vunpack.c.l.b16 %v1064
  %v5477 = vunpack.c.h.b16 %v1064
  %v5478 = vunpack.c.l.b16 %v1065
  %v5479 = vunpack.c.h.b16 %v1065
  %v5480 = vunpack.c.l.b16 %v1066
  %v5481 = vunpack.c.h.b16 %v1066
  %v5482 = vunpack.c.l.b16 %v1067
  %v5483 = vunpack.c.h.b16 %v1067
  %v5484 = vunpack.c.l.b16 %v1068
  %v5485 = vunpack.c.h.b16 %v1068
  %v5486 = vunpack.c.l.b16 %v1069
  %v5487 = vunpack.c.h.b16 %v1069
  %v5488 = vunpack.c.l.b16 %v1070
  %v5489 = vunpack.c.h.b16 %v1070
  %v5490 = vunpack.c.l.b16 %v1071
  %v5491 = vunpack.c.h.b16 %v1071
  %v5492 = vunpack.c.l.b16 %v1072
  %v5493 = vunpack.c.h.b16 %v1072
  %v5494 = vunpack.c.l.b16 %v1073
  %v5495 = vunpack.c.h.b16 %v1073
  %v5496 = vunpack.c.l.b16 %v1074
  %v5497 = vunpack.c.h.b16 %v1074
  %v5498 = vunpack.c.l.b16 %v1075
  %v5499 = vunpack.c.h.b16 %v1075
  %v5500 = vunpack.c.l.b16 %v1076
  %v5501 = vunpack.c.h.b16 %v1076
  %v5502 = vunpack.c.l.b16 %v1077
  %v5503 = vunpack.c.h.b16 %v1077
  %v5504 = vunpack.c.l.b16 %v1078
  %v5505 = vunpack.c.h.b16 %v1078
  %v5506 = vunpack.c.l.b16 %v1079
  %v5507 = vunpack.c.h.b16 %v1079
  %v5508 = vunpack.c.l.b16 %v1080
  %v5509 = vunpack.c.h.b16 %v1080
  %v5510 = vunpack.c.l.b16 %v1081
  %v5511 = vunpack.c.h.b16 %v1081
  %v5512 = vunpack.c.l.b16 %v1082
  %v5513 = vunpack.c.h.b16 %v1082
  %v5514 = vunpack.c.l.b16 %v1083
  %v5515 = vunpack.c.h.b16 %v1083
  %v5516 = vunpack.c.l.b16 %v1084
  %v5517 = vunpack.c.h.b16 %v1084
  %v5518 = vunpack.c.l.b16 %v1085
  %v5519 = vunpack.c.h.b16 %v1085
  %v5520 = vunpack.c.l.b16 %v1086
  %v5521 = vunpack.c.h.b16 %v1086
  %v5522 = vunpack.c.l.b16 %v1087
  %v5523 = vunpack.c.h.b16 %v1087
  %v5524 = vunpack.c.l.b16 %v1088
  %v5525 = vunpack.c.h.b16 %v1088
  %v5526 = vunpack.c.l.b16 %v1089
  %v5527 = vunpack.c.h.b16 %v1089
  %v5528 = vunpack.c.l.b16 %v1090
  %v5529 = vunpack.c.h.b16 %v1090
  %v5530 = vunpack.c.l.b16 %v1091
  %v5531 = vunpack.c.h.b16 %v1091
  %v5532 = vunpack.c.l.b16 %v1092
  %v5533 = vunpack.c.h.b16 %v1092
  %v5534 = vunpack.c.l.b16 %v1093
  %v5535 = vunpack.c.h.b16 %v1093
  %v5536 = vunpack.c.l.b16 %v1094
  %v5537 = vunpack.c.h.b16 %v1094
  %v5538 = vunpack.c.l.b16 %v1095
  %v5539 = vunpack.c.h.b16 %v1095
  %v5540 = vunpack.c.l.b16 %v1096
  %v5541 = vunpack.c.h.b16 %v1096
  %v5542 = vunpack.c.l.b16 %v1097
  %v5543 = vunpack.c.h.b16 %v1097
  %v5544 = vunpack.c.l.b16 %v1098
  %v5545 = vunpack.c.h.b16 %v1098
  %v5546 = vunpack.c.l.b16 %v1099
  %v5547 = vunpack.c.h.b16 %v1099
  %v5548 = vunpack.c.l.b16 %v1100
  %v5549 = vunpack.c.h.b16 %v1100
  %v5550 = vunpack.c.l.b16 %v1101
  %v5551 = vunpack.c.h.b16 %v1101
  %v5552 = vunpack.c.l.b16 %v1102
  %v5553 = vunpack.c.h.b16 %v1102
  %v5554 = vunpack.c.l.b16 %v1103
  %v5555 = vunpack.c.h.b16 %v1103
  %v5556 = vunpack.c.l.b16 %v1104
  %v5557 = vunpack.c.h.b16 %v1104
  %v5558 = vunpack.c.l.b16 %v1105
  %v5559 = vunpack.c.h.b16 %v1105
  %v5560 = vunpack.c.l.b16 %v1106
  %v5561 = vunpack.c.h.b16 %v1106
  %v5562 = vunpack.c.l.b16 %v1107
  %v5563 = vunpack.c.h.b16 %v1107
  %v5564 = vunpack.c.l.b16 %v1108
  %v5565 = vunpack.c.h.b16 %v1108
  %v5566 = vunpack.c.l.b16 %v1109
  %v5567 = vunpack.c.h.b16 %v1109
  %v5568 = vunpack.c.l.b16 %v1110
  %v5569 = vunpack.c.h.b16 %v1110
  %v5570 = vunpack.c.l.b16 %v1111
  %v5571 = vunpack.c.h.b16 %v1111
  %v5572 = vunpack.c.l.b16 %v1112
  %v5573 = vunpack.c.h.b16 %v1112
  %v5574 = vunpack.c.l.b16 %v1113
  %v5575 = vunpack.c.h.b16 %v1113
  %v5576 = vunpack.c.l.b16 %v1114
  %v5577 = vunpack.c.h.b16 %v1114
  %v5578 = vunpack.c.l.b16 %v1115
  %v5579 = vunpack.c.h.b16 %v1115
  %v5580 = vunpack.c.l.b16 %v1116
  %v5581 = vunpack.c.h.b16 %v1116
  %v5582 = vunpack.c.l.b16 %v1117
  %v5583 = vunpack.c.h.b16 %v1117
  %v5584 = vunpack.c.l.b16 %v1118
  %v5585 = vunpack.c.h.b16 %v1118
  %v5586 = vunpack.c.l.b16 %v1119
  %v5587 = vunpack.c.h.b16 %v1119
  %v5588 = vunpack.c.l.b16 %v1120
  %v5589 = vunpack.c.h.b16 %v1120
  %v5590 = vunpack.c.l.b16 %v1121
  %v5591 = vunpack.c.h.b16 %v1121
  %v5592 = vunpack.c.l.b16 %v1122
  %v5593 = vunpack.c.h.b16 %v1122
  %v5594 = vunpack.c.l.b16 %v1123
  %v5595 = vunpack.c.h.b16 %v1123
  %v5596 = vunpack.c.l.b16 %v1124
  %v5597 = vunpack.c.h.b16 %v1124
  %v5598 = vunpack.c.l.b16 %v1125
  %v5599 = vunpack.c.h.b16 %v1125
  %v5600 = vunpack.c.l.b16 %v1126
  %v5601 = vunpack.c.h.b16 %v1126
  %v5602 = vunpack.c.l.b16 %v1127
  %v5603 = vunpack.c.h.b16 %v1127
  %v5604 = vunpack.c.l.b16 %v1128
  %v5605 = vunpack.c.h.b16 %v1128
  %v5606 = vunpack.c.l.b16 %v1129
  %v5607 = vunpack.c.h.b16 %v1129
  %v5608 = vunpack.c.l.b16 %v1130
  %v5609 = vunpack.c.h.b16 %v1130
  %v5610 = vunpack.c.l.b16 %v1131
  %v5611 = vunpack.c.h.b16 %v1131
  %v5612 = vunpack.c.l.b16 %v1132
  %v5613 = vunpack.c.h.b16 %v1132
  %v5614 = vunpack.c.l.b16 %v1133
  %v5615 = vunpack.c.h.b16 %v1133
  %v5616 = vunpack.c.l.b16 %v1134
  %v5617 = vunpack.c.h.b16 %v1134
  %v5618 = vunpack.c.l.b16 %v1135
  %v5619 = vunpack.c.h.b16 %v1135
  %v5620 = vunpack.c.l.b16 %v1136
  %v5621 = vunpack.c.h.b16 %v1136
  %v5622 = vunpack.c.l.b16 %v1137
  %v5623 = vunpack.c.h.b16 %v1137
  %v5624 = vunpack.c.l.b16 %v1138
  %v5625 = vunpack.c.h.b16 %v1138
  %v5626 = vunpack.c.l.b16 %v1139
  %v5627 = vunpack.c.h.b16 %v1139
  %v5628 = vunpack.c.l.b16 %v1140
  %v5629 = vunpack.c.h.b16 %v1140
  %v5630 = vunpack.c.l.b16 %v1141
  %v5631 = vunpack.c.h.b16 %v1141
  %v5632 = vunpack.c.l.b16 %v1142
  %v5633 = vunpack.c.h.b16 %v1142
  %v5634 = vunpack.c.l.b16 %v1143
  %v5635 = vunpack.c.h.b16 %v1143
  %v5636 = vunpack.c.l.b16 %v1144
  %v5637 = vunpack.c.h.b16 %v1144
  %v5638 = vunpack.c.l.b16 %v1145
  %v5639 = vunpack.c.h.b16 %v1145
  %v5640 = vunpack.c.l.b16 %v1146
  %v5641 = vunpack.c.h.b16 %v1146
  %v5642 = vunpack.c.l.b16 %v1147
  %v5643 = vunpack.c.h.b16 %v1147
  %v5644 = vunpack.c.l.b16 %v1148
  %v5645 = vunpack.c.h.b16 %v1148
  %v5646 = vunpack.c.l.b16 %v1149
  %v5647 = vunpack.c.h.b16 %v1149
  %v5648 = vunpack.c.l.b16 %v1150
  %v5649 = vunpack.c.h.b16 %v1150
  %v5650 = vunpack.c.l.b16 %v1151
  %v5651 = vunpack.c.h.b16 %v1151
  %v5652 = vunpack.c.l.b16 %v1152
  %v5653 = vunpack.c.h.b16 %v1152
  %v5654 = vunpack.c.l.b16 %v1153
  %v5655 = vunpack.c.h.b16 %v1153
  %v5656 = vunpack.c.l.b16 %v1154
  %v5657 = vunpack.c.h.b16 %v1154
  %v5658 = vunpack.c.l.b16 %v1155
  %v5659 = vunpack.c.h.b16 %v1155
  %v5660 = vunpack.c.l.b16 %v1156
  %v5661 = vunpack.c.h.b16 %v1156
  %v5662 = vunpack.c.l.b16 %v1157
  %v5663 = vunpack.c.h.b16 %v1157
  %v5664 = vunpack.c.l.b16 %v1158
  %v5665 = vunpack.c.h.b16 %v1158
  %v5666 = vunpack.c.l.b16 %v1159
  %v5667 = vunpack.c.h.b16 %v1159
  %v5668 = vunpack.c.l.b16 %v1160
  %v5669 = vunpack.c.h.b16 %v1160
  %v5670 = vunpack.c.l.b16 %v1161
  %v5671 = vunpack.c.h.b16 %v1161
  %v5672 = vunpack.c.l.b16 %v1162
  %v5673 = vunpack.c.h.b16 %v1162
  %v5674 = vunpack.c.l.b16 %v1163
  %v5675 = vunpack.c.h.b16 %v1163
  %v5676 = vunpack.c.l.b16 %v1164
  %v5677 = vunpack.c.h.b16 %v1164
  %v5678 = vunpack.c.l.b16 %v1165
  %v5679 = vunpack.c.h.b16 %v1165
  %v5680 = vunpack.c.l.b16 %v1166
  %v5681 = vunpack.c.h.b16 %v1166
  %v5682 = vunpack.c.l.b16 %v1167
  %v5683 = vunpack.c.h.b16 %v1167
  %v5684 = vunpack.c.l.b16 %v1168
  %v5685 = vunpack.c.h.b16 %v1168
  %v5686 = vunpack.c.l.b16 %v1169
  %v5687 = vunpack.c.h.b16 %v1169
  %v5688 = vunpack.c.l.b16 %v1170
  %v5689 = vunpack.c.h.b16 %v1170
  %v5690 = vunpack.c.l.b16 %v1171
  %v5691 = vunpack.c.h.b16 %v1171
  %v5692 = vunpack.c.l.b16 %v1172
  %v5693 = vunpack.c.h.b16 %v1172
  %v5694 = vunpack.c.l.b16 %v1173
  %v5695 = vunpack.c.h.b16 %v1173
  %v5696 = vunpack.c.l.b16 %v1174
  %v5697 = vunpack.c.h.b16 %v1174
  %v5698 = vunpack.c.l.b16 %v1175
  %v5699 = vunpack.c.h.b16 %v1175
  %v5700 = vunpack.c.l.b16 %v1176
  %v5701 = vunpack.c.h.b16 %v1176
  %v5702 = vunpack.c.l.b16 %v1177
  %v5703 = vunpack.c.h.b16 %v1177
  %v5704 = vunpack.c.l.b16 %v1178
  %v5705 = vunpack.c.h.b16 %v1178
  %v5706 = vunpack.c.l.b16 %v1179
  %v5707 = vunpack.c.h.b16 %v1179
  %v5708 = vunpack.c.l.b16 %v1180
  %v5709 = vunpack.c.h.b16 %v1180
  %v5710 = vunpack.c.l.b16 %v1181
  %v5711 = vunpack.c.h.b16 %v1181
  %v5712 = vunpack.c.l.b16 %v1182
  %v5713 = vunpack.c.h.b16 %v1182
  %v5714 = vunpack.c.l.b16 %v1183
  %v5715 = vunpack.c.h.b16 %v1183
  %v5716 = vunpack.c.l.b16 %v1184
  %v5717 = vunpack.c.h.b16 %v1184
  %v5718 = vunpack.c.l.b16 %v1185
  %v5719 = vunpack.c.h.b16 %v1185
  %v5720 = vunpack.c.l.b16 %v1186
  %v5721 = vunpack.c.h.b16 %v1186
  %v5722 = vunpack.c.l.b16 %v1187
  %v5723 = vunpack.c.h.b16 %v1187
  %v5724 = vunpack.c.l.b16 %v1188
  %v5725 = vunpack.c.h.b16 %v1188
  %v5726 = vunpack.c.l.b16 %v1189
  %v5727 = vunpack.c.h.b16 %v1189
  %v5728 = vunpack.c.l.b16 %v1190
  %v5729 = vunpack.c.h.b16 %v1190
  %v5730 = vunpack.c.l.b16 %v1191
  %v5731 = vunpack.c.h.b16 %v1191
  %v5732 = vunpack.c.l.b16 %v1192
  %v5733 = vunpack.c.h.b16 %v1192
  %v5734 = vunpack.c.l.b16 %v1193
  %v5735 = vunpack.c.h.b16 %v1193
  %v5736 = vunpack.c.l.b16 %v1194
  %v5737 = vunpack.c.h.b16 %v1194
  %v5738 = vunpack.c.l.b16 %v1195
  %v5739 = vunpack.c.h.b16 %v1195
  %v5740 = vunpack.c.l.b16 %v1196
  %v5741 = vunpack.c.h.b16 %v1196
  %v5742 = vunpack.c.l.b16 %v1197
  %v5743 = vunpack.c.h.b16 %v1197
  %v5744 = vunpack.c.l.b16 %v1198
  %v5745 = vunpack.c.h.b16 %v1198
  %v5746 = vunpack.c.l.b16 %v1199
  %v5747 = vunpack.c.h.b16 %v1199
  %v5748 = vunpack.c.l.b16 %v1200
  %v5749 = vunpack.c.h.b16 %v1200
  %v5750 = vunpack.c.l.b16 %v1201
  %v5751 = vunpack.c.h.b16 %v1201
  %v5752 = vunpack.c.l.b16 %v1202
  %v5753 = vunpack.c.h.b16 %v1202
  %v5754 = vunpack.c.l.b16 %v1203
  %v5755 = vunpack.c.h.b16 %v1203
  %v5756 = vunpack.c.l.b16 %v1204
  %v5757 = vunpack.c.h.b16 %v1204
  %v5758 = vunpack.c.l.b16 %v1205
  %v5759 = vunpack.c.h.b16 %v1205
  %v5760 = vunpack.c.l.b16 %v1206
  %v5761 = vunpack.c.h.b16 %v1206
  %v5762 = vunpack.c.l.b16 %v1207
  %v5763 = vunpack.c.h.b16 %v1207
  %v5764 = vunpack.c.l.b16 %v1208
  %v5765 = vunpack.c.h.b16 %v1208
  %v5766 = vunpack.c.l.b16 %v1209
  %v5767 = vunpack.c.h.b16 %v1209
  %v5768 = vunpack.c.l.b16 %v1210
  %v5769 = vunpack.c.h.b16 %v1210
  %v5770 = vunpack.c.l.b16 %v1211
  %v5771 = vunpack.c.h.b16 %v1211
  %v5772 = vunpack.c.l.b16 %v1212
  %v5773 = vunpack.c.h.b16 %v1212
  %v5774 = vunpack.c.l.b16 %v1213
  %v5775 = vunpack.c.h.b16 %v1213
  %v5776 = vunpack.c.l.b16 %v1214
  %v5777 = vunpack.c.h.b16 %v1214
  %v5778 = vunpack.c.l.b16 %v1215
  %v5779 = vunpack.c.h.b16 %v1215
  %v5780 = vunpack.c.l.b16 %v1216
  %v5781 = vunpack.c.h.b16 %v1216
  %v5782 = vunpack.c.l.b16 %v1217
  %v5783 = vunpack.c.h.b16 %v1217
  %v5784 = vunpack.c.l.b16 %v1218
  %v5785 = vunpack.c.h.b16 %v1218
  %v5786 = vunpack.c.l.b16 %v1219
  %v5787 = vunpack.c.h.b16 %v1219
  %v5788 = vunpack.c.l.b16 %v1220
  %v5789 = vunpack.c.h.b16 %v1220
  %v5790 = vunpack.c.l.b16 %v1221
  %v5791 = vunpack.c.h.b16 %v1221
  %v5792 = vunpack.c.l.b16 %v1222
  %v5793 = vunpack.c.h.b16 %v1222
  %v5794 = vunpack.c.l.b16 %v1223
  %v5795 = vunpack.c.h.b16 %v1223
  %v5796 = vunpack.c.l.b16 %v1224
  %v5797 = vunpack.c.h.b16 %v1224
  %v5798 = vunpack.c.l.b16 %v1225
  %v5799 = vunpack.c.h.b16 %v1225
  %v5800 = vunpack.c.l.b16 %v1226
  %v5801 = vunpack.c.h.b16 %v1226
  %v5802 = vunpack.c.l.b16 %v1227
  %v5803 = vunpack.c.h.b16 %v1227
  %v5804 = vunpack.c.l.b16 %v1228
  %v5805 = vunpack.c.h.b16 %v1228
  %v5806 = vunpack.c.l.b16 %v1229
  %v5807 = vunpack.c.h.b16 %v1229
  %v5808 = vunpack.c.l.b16 %v1230
  %v5809 = vunpack.c.h.b16 %v1230
  %v5810 = vunpack.c.l.b16 %v1231
  %v5811 = vunpack.c.h.b16 %v1231
  %v5812 = vunpack.c.l.b16 %v1232
  %v5813 = vunpack.c.h.b16 %v1232
  %v5814 = vunpack.c.l.b16 %v1233
  %v5815 = vunpack.c.h.b16 %v1233
  %v5816 = vunpack.c.l.b16 %v1234
  %v5817 = vunpack.c.h.b16 %v1234
  %v5818 = vunpack.c.l.b16 %v1235
  %v5819 = vunpack.c.h.b16 %v1235
  %v5820 = vunpack.c.l.b16 %v1236
  %v5821 = vunpack.c.h.b16 %v1236
  %v5822 = vunpack.c.l.b16 %v1237
  %v5823 = vunpack.c.h.b16 %v1237
  %v5824 = vunpack.c.l.b16 %v1238
  %v5825 = vunpack.c.h.b16 %v1238
  %v5826 = vunpack.c.l.b16 %v1239
  %v5827 = vunpack.c.h.b16 %v1239
  %v5828 = vunpack.c.l.b16 %v1240
  %v5829 = vunpack.c.h.b16 %v1240
  %v5830 = vunpack.c.l.b16 %v1241
  %v5831 = vunpack.c.h.b16 %v1241
  %v5832 = vunpack.c.l.b16 %v1242
  %v5833 = vunpack.c.h.b16 %v1242
  %v5834 = vunpack.c.l.b16 %v1243
  %v5835 = vunpack.c.h.b16 %v1243
  %v5836 = vunpack.c.l.b16 %v1244
  %v5837 = vunpack.c.h.b16 %v1244
  %v5838 = vunpack.c.l.b16 %v1245
  %v5839 = vunpack.c.h.b16 %v1245
  %v5840 = vunpack.c.l.b16 %v1246
  %v5841 = vunpack.c.h.b16 %v1246
  %v5842 = vunpack.c.l.b16 %v1247
  %v5843 = vunpack.c.h.b16 %v1247
  %v5844 = vunpack.c.l.b16 %v1248
  %v5845 = vunpack.c.h.b16 %v1248
  %v5846 = vunpack.c.l.b16 %v1249
  %v5847 = vunpack.c.h.b16 %v1249
  %v5848 = vunpack.c.l.b16 %v1250
  %v5849 = vunpack.c.h.b16 %v1250
  %v5850 = vunpack.c.l.b16 %v1251
  %v5851 = vunpack.c.h.b16 %v1251
  %v5852 = vunpack.c.l.b16 %v1252
  %v5853 = vunpack.c.h.b16 %v1252
  %v5854 = vunpack.c.l.b16 %v1253
  %v5855 = vunpack.c.h.b16 %v1253
  %v5856 = vunpack.c.l.b16 %v1254
  %v5857 = vunpack.c.h.b16 %v1254
  %v5858 = vunpack.c.l.b16 %v1255
  %v5859 = vunpack.c.h.b16 %v1255
  %v5860 = vunpack.c.l.b16 %v1256
  %v5861 = vunpack.c.h.b16 %v1256
  %v5862 = vunpack.c.l.b16 %v1257
  %v5863 = vunpack.c.h.b16 %v1257
  %v5864 = vunpack.c.l.b16 %v1258
  %v5865 = vunpack.c.h.b16 %v1258
  %v5866 = vunpack.c.l.b16 %v1259
  %v5867 = vunpack.c.h.b16 %v1259
  %v5868 = vunpack.c.l.b16 %v1260
  %v5869 = vunpack.c.h.b16 %v1260
  %v5870 = vunpack.c.l.b16 %v1261
  %v5871 = vunpack.c.h.b16 %v1261
  %v5872 = vunpack.c.l.b16 %v1262
  %v5873 = vunpack.c.h.b16 %v1262
  %v5874 = vunpack.c.l.b16 %v1263
  %v5875 = vunpack.c.h.b16 %v1263
  %v5876 = vunpack.c.l.b16 %v1264
  %v5877 = vunpack.c.h.b16 %v1264
  %v5878 = vunpack.c.l.b16 %v1265
  %v5879 = vunpack.c.h.b16 %v1265
  %v5880 = vunpack.c.l.b16 %v1266
  %v5881 = vunpack.c.h.b16 %v1266
  %v5882 = vunpack.c.l.b16 %v1267
  %v5883 = vunpack.c.h.b16 %v1267
  %v5884 = vunpack.c.l.b16 %v1268
  %v5885 = vunpack.c.h.b16 %v1268
  %v5886 = vunpack.c.l.b16 %v1269
  %v5887 = vunpack.c.h.b16 %v1269
  %v5888 = vunpack.c.l.b16 %v1270
  %v5889 = vunpack.c.h.b16 %v1270
  %v5890 = vunpack.c.l.b16 %v1271
  %v5891 = vunpack.c.h.b16 %v1271
  %v5892 = vunpack.c.l.b16 %v1272
  %v5893 = vunpack.c.h.b16 %v1272
  %v5894 = vunpack.c.l.b16 %v1273
  %v5895 = vunpack.c.h.b16 %v1273
  %v5896 = vunpack.c.l.b16 %v1274
  %v5897 = vunpack.c.h.b16 %v1274
  %v5898 = vunpack.c.l.b16 %v1275
  %v5899 = vunpack.c.h.b16 %v1275
  %v5900 = vunpack.c.l.b16 %v1276
  %v5901 = vunpack.c.h.b16 %v1276
  %v5902 = vunpack.c.l.b16 %v1277
  %v5903 = vunpack.c.h.b16 %v1277
  %v5904 = vunpack.c.l.b16 %v1278
  %v5905 = vunpack.c.h.b16 %v1278
  %v5906 = vunpack.c.l.b16 %v1279
  %v5907 = vunpack.c.h.b16 %v1279
  %v5908 = vunpack.c.l.b16 %v1280
  %v5909 = vunpack.c.h.b16 %v1280
  %v5910 = vunpack.c.l.b16 %v1281
  %v5911 = vunpack.c.h.b16 %v1281
  %v5912 = vunpack.c.l.b16 %v1282
  %v5913 = vunpack.c.h.b16 %v1282
  %v5914 = vunpack.c.l.b16 %v1283
  %v5915 = vunpack.c.h.b16 %v1283
  %v5916 = vunpack.c.l.b16 %v1284
  %v5917 = vunpack.c.h.b16 %v1284
  %v5918 = vunpack.c.l.b16 %v1285
  %v5919 = vunpack.c.h.b16 %v1285
  %v5920 = vunpack.c.l.b16 %v1286
  %v5921 = vunpack.c.h.b16 %v1286
  %v5922 = vunpack.c.l.b16 %v1287
  %v5923 = vunpack.c.h.b16 %v1287
  %v5924 = vunpack.c.l.b16 %v1288
  %v5925 = vunpack.c.h.b16 %v1288
  %v5926 = vunpack.c.l.b16 %v1289
  %v5927 = vunpack.c.h.b16 %v1289
  %v5928 = vunpack.c.l.b16 %v1290
  %v5929 = vunpack.c.h.b16 %v1290
  %v5930 = vunpack.c.l.b16 %v1291
  %v5931 = vunpack.c.h.b16 %v1291
  %v5932 = vunpack.c.l.b16 %v1292
  %v5933 = vunpack.c.h.b16 %v1292
  %v5934 = vunpack.c.l.b16 %v1293
  %v5935 = vunpack.c.h.b16 %v1293
  %v5936 = vunpack.c.l.b16 %v1294
  %v5937 = vunpack.c.h.b16 %v1294
  %v5938 = vunpack.c.l.b16 %v1295
  %v5939 = vunpack.c.h.b16 %v1295
  %v5940 = vunpack.c.l.b16 %v1296
  %v5941 = vunpack.c.h.b16 %v1296
  %v5942 = vunpack.c.l.b16 %v1297
  %v5943 = vunpack.c.h.b16 %v1297
  %v5944 = vunpack.c.l.b16 %v1298
  %v5945 = vunpack.c.h.b16 %v1298
  %v5946 = vunpack.c.l.b16 %v1299
  %v5947 = vunpack.c.h.b16 %v1299
  %v5948 = vunpack.c.l.b16 %v1300
  %v5949 = vunpack.c.h.b16 %v1300
  %v5950 = vunpack.c.l.b16 %v1301
  %v5951 = vunpack.c.h.b16 %v1301
  %v5952 = vunpack.c.l.b16 %v1302
  %v5953 = vunpack.c.h.b16 %v1302
  %v5954 = vunpack.c.l.b16 %v1303
  %v5955 = vunpack.c.h.b16 %v1303
  %v5956 = vunpack.c.l.b16 %v1304
  %v5957 = vunpack.c.h.b16 %v1304
  %v5958 = vunpack.c.l.b16 %v1305
  %v5959 = vunpack.c.h.b16 %v1305
  %v5960 = vunpack.c.l.b16 %v1306
  %v5961 = vunpack.c.h.b16 %v1306
  %v5962 = vunpack.c.l.b16 %v1307
  %v5963 = vunpack.c.h.b16 %v1307
  %v5964 = vunpack.c.l.b16 %v1308
  %v5965 = vunpack.c.h.b16 %v1308
  %v5966 = vunpack.c.l.b16 %v1309
  %v5967 = vunpack.c.h.b16 %v1309
  %v5968 = vunpack.c.l.b16 %v1310
  %v5969 = vunpack.c.h.b16 %v1310
  %v5970 = vunpack.c.l.b16 %v1311
  %v5971 = vunpack.c.h.b16 %v1311
  %v5972 = vunpack.c.l.b16 %v1312
  %v5973 = vunpack.c.h.b16 %v1312
  %v5974 = vunpack.c.l.b16 %v1313
  %v5975 = vunpack.c.h.b16 %v1313
  %v5976 = vunpack.c.l.b16 %v1314
  %v5977 = vunpack.c.h.b16 %v1314
  %v5978 = vunpack.c.l.b16 %v1315
  %v5979 = vunpack.c.h.b16 %v1315
  %v5980 = vunpack.c.l.b16 %v1316
  %v5981 = vunpack.c.h.b16 %v1316
  %v5982 = vunpack.c.l.b16 %v1317
  %v5983 = vunpack.c.h.b16 %v1317
  %v5984 = vunpack.c.l.b16 %v1318
  %v5985 = vunpack.c.h.b16 %v1318
  %v5986 = vunpack.c.l.b16 %v1319
  %v5987 = vunpack.c.h.b16 %v1319
  %v5988 = vunpack.c.l.b16 %v1320
  %v5989 = vunpack.c.h.b16 %v1320
  %v5990 = vunpack.c.l.b16 %v1321
  %v5991 = vunpack.c.h.b16 %v1321
  %v5992 = vunpack.c.l.b16 %v1322
  %v5993 = vunpack.c.h.b16 %v1322
  %v5994 = vunpack.c.l.b16 %v1323
  %v5995 = vunpack.c.h.b16 %v1323
  %v5996 = vunpack.c.l.b16 %v1324
  %v5997 = vunpack.c.h.b16 %v1324
  %v5998 = vunpack.c.l.b16 %v1325
  %v5999 = vunpack.c.h.b16 %v1325
  %v6000 = vunpack.c.l.b16 %v1326
  %v6001 = vunpack.c.h.b16 %v1326
  %v6002 = vunpack.c.l.b16 %v1327
  %v6003 = vunpack.c.h.b16 %v1327
  %v6004 = vunpack.c.l.b16 %v1328
  %v6005 = vunpack.c.h.b16 %v1328
  %v6006 = vunpack.c.l.b16 %v1329
  %v6007 = vunpack.c.h.b16 %v1329
  %v6008 = vunpack.c.l.b16 %v1330
  %v6009 = vunpack.c.h.b16 %v1330
  %v6010 = vunpack.c.l.b16 %v1331
  %v6011 = vunpack.c.h.b16 %v1331
  %v6012 = vunpack.c.l.b16 %v1332
  %v6013 = vunpack.c.h.b16 %v1332
  %v6014 = vunpack.c.l.b16 %v1333
  %v6015 = vunpack.c.h.b16 %v1333
  %v6016 = vunpack.c.l.b16 %v1334
  %v6017 = vunpack.c.h.b16 %v1334
  %v6018 = vunpack.c.l.b16 %v1335
  %v6019 = vunpack.c.h.b16 %v1335
  %v6020 = vunpack.c.l.b16 %v1336
  %v6021 = vunpack.c.h.b16 %v1336
  %v6022 = vunpack.c.l.b16 %v1337
  %v6023 = vunpack.c.h.b16 %v1337
  %v6024 = vunpack.c.l.b16 %v1338
  %v6025 = vunpack.c.h.b16 %v1338
  %v6026 = vunpack.c.l.b16 %v1339
  %v6027 = vunpack.c.h.b16 %v1339
  %v6028 = vunpack.c.l.b16 %v1340
  %v6029 = vunpack.c.h.b16 %v1340
  %v6030 = vunpack.c.l.b16 %v1341
  %v6031 = vunpack.c.h.b16 %v1341
  %v6032 = vunpack.c.l.b16 %v1342
  %v6033 = vunpack.c.h.b16 %v1342
  %v6034 = vunpack.c.l.b16 %v1343
  %v6035 = vunpack.c.h.b16 %v1343
  %v6036 = vunpack.c.l.b16 %v1344
  %v6037 = vunpack.c.h.b16 %v1344
  %v6038 = vunpack.c.l.b16 %v1345
  %v6039 = vunpack.c.h.b16 %v1345
  %v6040 = vunpack.c.l.b16 %v1346
  %v6041 = vunpack.c.h.b16 %v1346
  %v6042 = vunpack.c.l.b16 %v1347
  %v6043 = vunpack.c.h.b16 %v1347
  %v6044 = vunpack.c.l.b16 %v1348
  %v6045 = vunpack.c.h.b16 %v1348
  %v6046 = vunpack.c.l.b16 %v1349
  %v6047 = vunpack.c.h.b16 %v1349
  %v6048 = vunpack.c.l.b16 %v1350
  %v6049 = vunpack.c.h.b16 %v1350
  %v6050 = vunpack.c.l.b16 %v1351
  %v6051 = vunpack.c.h.b16 %v1351
  %v6052 = vunpack.c.l.b16 %v1352
  %v6053 = vunpack.c.h.b16 %v1352
  %v6054 = vunpack.c.l.b16 %v1353
  %v6055 = vunpack.c.h.b16 %v1353
  %v6056 = vunpack.c.l.b16 %v1354
  %v6057 = vunpack.c.h.b16 %v1354
  %v6058 = vunpack.c.l.b16 %v1355
  %v6059 = vunpack.c.h.b16 %v1355
  %v6060 = vunpack.c.l.b16 %v1356
  %v6061 = vunpack.c.h.b16 %v1356
  %v6062 = vunpack.c.l.b16 %v1357
  %v6063 = vunpack.c.h.b16 %v1357
  %v6064 = vunpack.c.l.b16 %v1358
  %v6065 = vunpack.c.h.b16 %v1358
  %v6066 = vunpack.c.l.b16 %v1359
  %v6067 = vunpack.c.h.b16 %v1359
  %v6068 = vunpack.c.l.b16 %v1360
  %v6069 = vunpack.c.h.b16 %v1360
  %v6070 = vunpack.c.l.b16 %v1361
  %v6071 = vunpack.c.h.b16 %v1361
  %v6072 = vunpack.c.l.b16 %v1362
  %v6073 = vunpack.c.h.b16 %v1362
  %v6074 = vunpack.c.l.b16 %v1363
  %v6075 = vunpack.c.h.b16 %v1363
  %v6076 = vunpack.c.l.b16 %v1364
  %v6077 = vunpack.c.h.b16 %v1364
  %v6078 = vunpack.c.l.b16 %v1365
  %v6079 = vunpack.c.h.b16 %v1365
  %v6080 = vunpack.c.l.b16 %v1366
  %v6081 = vunpack.c.h.b16 %v1366
  %v6082 = vunpack.c.l.b16 %v1367
  %v6083 = vunpack.c.h.b16 %v1367
  %v6084 = vunpack.c.l.b16 %v1368
  %v6085 = vunpack.c.h.b16 %v1368
  %v6086 = vunpack.c.l.b16 %v1369
  %v6087 = vunpack.c.h.b16 %v1369
  %v6088 = vunpack.c.l.b16 %v1370
  %v6089 = vunpack.c.h.b16 %v1370
  %v6090 = vunpack.c.l.b16 %v1371
  %v6091 = vunpack.c.h.b16 %v1371
  %v6092 = vunpack.c.l.b16 %v1372
  %v6093 = vunpack.c.h.b16 %v1372
  %v6094 = vunpack.c.l.b16 %v1373
  %v6095 = vunpack.c.h.b16 %v1373
  %v6096 = vunpack.c.l.b16 %v1374
  %v6097 = vunpack.c.h.b16 %v1374
  %v6098 = vunpack.c.l.b16 %v1375
  %v6099 = vunpack.c.h.b16 %v1375
  %v6100 = vunpack.c.l.b16 %v1376
  %v6101 = vunpack.c.h.b16 %v1376
  %v6102 = vunpack.c.l.b16 %v1377
  %v6103 = vunpack.c.h.b16 %v1377
  %v6104 = vunpack.c.l.b16 %v1378
  %v6105 = vunpack.c.h.b16 %v1378
  %v6106 = vunpack.c.l.b16 %v1379
  %v6107 = vunpack.c.h.b16 %v1379
  %v6108 = vunpack.c.l.b16 %v1380
  %v6109 = vunpack.c.h.b16 %v1380
  %v6110 = vunpack.c.l.b16 %v1381
  %v6111 = vunpack.c.h.b16 %v1381
  %v6112 = vunpack.c.l.b16 %v1382
  %v6113 = vunpack.c.h.b16 %v1382
  %v6114 = vunpack.c.l.b16 %v1383
  %v6115 = vunpack.c.h.b16 %v1383
  %v6116 = vunpack.c.l.b16 %v1384
  %v6117 = vunpack.c.h.b16 %v1384
  %v6118 = vunpack.c.l.b16 %v1385
  %v6119 = vunpack.c.h.b16 %v1385
  %v6120 = vunpack.c.l.b16 %v1386
  %v6121 = vunpack.c.h.b16 %v1386
  %v6122 = vunpack.c.l.b16 %v1387
  %v6123 = vunpack.c.h.b16 %v1387
  %v6124 = vunpack.c.l.b16 %v1388
  %v6125 = vunpack.c.h.b16 %v1388
  %v6126 = vunpack.c.l.b16 %v1389
  %v6127 = vunpack.c.h.b16 %v1389
  %v6128 = vunpack.c.l.b16 %v1390
  %v6129 = vunpack.c.h.b16 %v1390
  %v6130 = vunpack.c.l.b16 %v1391
  %v6131 = vunpack.c.h.b16 %v1391
  %v6132 = vunpack.c.l.b16 %v1392
  %v6133 = vunpack.c.h.b16 %v1392
  %v6134 = vunpack.c.l.b16 %v1393
  %v6135 = vunpack.c.h.b16 %v1393
  %v6136 = vunpack.c.l.b16 %v1394
  %v6137 = vunpack.c.h.b16 %v1394
  %v6138 = vunpack.c.l.b16 %v1395
  %v6139 = vunpack.c.h.b16 %v1395
  %v6140 = vunpack.c.l.b16 %v1396
  %v6141 = vunpack.c.h.b16 %v1396
  %v6142 = vunpack.c.l.b16 %v1397
  %v6143 = vunpack.c.h.b16 %v1397
  %v6144 = vunpack.c.l.b16 %v1398
  %v6145 = vunpack.c.h.b16 %v1398
  %v6146 = vunpack.c.l.b16 %v1399
  %v6147 = vunpack.c.h.b16 %v1399
  %v6148 = vunpack.c.l.b16 %v1400
  %v6149 = vunpack.c.h.b16 %v1400
  %v6150 = vunpack.c.l.b16 %v1401
  %v6151 = vunpack.c.h.b16 %v1401
  %v6152 = vunpack.c.l.b16 %v1402
  %v6153 = vunpack.c.h.b16 %v1402
  %v6154 = vunpack.c.l.b16 %v1403
  %v6155 = vunpack.c.h.b16 %v1403
  %v6156 = vunpack.c.l.b16 %v1404
  %v6157 = vunpack.c.h.b16 %v1404
  %v6158 = vunpack.c.l.b16 %v1405
  %v6159 = vunpack.c.h.b16 %v1405
  %v6160 = vunpack.c.l.b16 %v1406
  %v6161 = vunpack.c.h.b16 %v1406
  %v6162 = vunpack.c.l.b16 %v1407
  %v6163 = vunpack.c.h.b16 %v1407
  %v6164 = vunpack.c.l.b16 %v1408
  %v6165 = vunpack.c.h.b16 %v1408
  %v6166 = vunpack.c.l.b16 %v1409
  %v6167 = vunpack.c.h.b16 %v1409
  %v6168 = vunpack.c.l.b16 %v1410
  %v6169 = vunpack.c.h.b16 %v1410
  %v6170 = vunpack.c.l.b16 %v1411
  %v6171 = vunpack.c.h.b16 %v1411
  %v6172 = vunpack.c.l.b16 %v1412
  %v6173 = vunpack.c.h.b16 %v1412
  %v6174 = vunpack.c.l.b16 %v1413
  %v6175 = vunpack.c.h.b16 %v1413
  %v6176 = vunpack.c.l.b16 %v1414
  %v6177 = vunpack.c.h.b16 %v1414
  %v6178 = vunpack.c.l.b16 %v1415
  %v6179 = vunpack.c.h.b16 %v1415
  %v6180 = vunpack.c.l.b16 %v1416
  %v6181 = vunpack.c.h.b16 %v1416
  %v6182 = vunpack.c.l.b16 %v1417
  %v6183 = vunpack.c.h.b16 %v1417
  %v6184 = vunpack.c.l.b16 %v1418
  %v6185 = vunpack.c.h.b16 %v1418
  %v6186 = vunpack.c.l.b16 %v1419
  %v6187 = vunpack.c.h.b16 %v1419
  %v6188 = vunpack.c.l.b16 %v1420
  %v6189 = vunpack.c.h.b16 %v1420
  %v6190 = vunpack.c.l.b16 %v1421
  %v6191 = vunpack.c.h.b16 %v1421
  %v6192 = vunpack.c.l.b16 %v1422
  %v6193 = vunpack.c.h.b16 %v1422
  %v6194 = vunpack.c.l.b16 %v1423
  %v6195 = vunpack.c.h.b16 %v1423
  %v6196 = vunpack.c.l.b16 %v1424
  %v6197 = vunpack.c.h.b16 %v1424
  %v6198 = vunpack.c.l.b16 %v1425
  %v6199 = vunpack.c.h.b16 %v1425
  %v6200 = vunpack.c.l.b16 %v1426
  %v6201 = vunpack.c.h.b16 %v1426
  %v6202 = vunpack.c.l.b16 %v1427
  %v6203 = vunpack.c.h.b16 %v1427
  %v6204 = vunpack.c.l.b16 %v1428
  %v6205 = vunpack.c.h.b16 %v1428
  %v6206 = vunpack.c.l.b16 %v1429
  %v6207 = vunpack.c.h.b16 %v1429
  %v6208 = vunpack.c.l.b16 %v1430
  %v6209 = vunpack.c.h.b16 %v1430
  %v6210 = vunpack.c.l.b16 %v1431
  %v6211 = vunpack.c.h.b16 %v1431
  %v6212 = vunpack.c.l.b16 %v1432
  %v6213 = vunpack.c.h.b16 %v1432
  %v6214 = vunpack.c.l.b16 %v1433
  %v6215 = vunpack.c.h.b16 %v1433
  %v6216 = vunpack.c.l.b16 %v1434
  %v6217 = vunpack.c.h.b16 %v1434
  %v6218 = vunpack.c.l.b16 %v1435
  %v6219 = vunpack.c.h.b16 %v1435
  %v6220 = vunpack.c.l.b16 %v1436
  %v6221 = vunpack.c.h.b16 %v1436
  %v6222 = vunpack.c.l.b16 %v1437
  %v6223 = vunpack.c.h.b16 %v1437
  %v6224 = vunpack.c.l.b16 %v1438
  %v6225 = vunpack.c.h.b16 %v1438
  %v6226 = vunpack.c.l.b16 %v1439
  %v6227 = vunpack.c.h.b16 %v1439
  %v6228 = vunpack.c.l.b16 %v1440
  %v6229 = vunpack.c.h.b16 %v1440
  %v6230 = vunpack.c.l.b16 %v1441
  %v6231 = vunpack.c.h.b16 %v1441
  %v6232 = vunpack.c.l.b16 %v1442
  %v6233 = vunpack.c.h.b16 %v1442
  %v6234 = vunpack.c.l.b16 %v1443
  %v6235 = vunpack.c.h.b16 %v1443
  %v6236 = vunpack.c.l.b16 %v1444
  %v6237 = vunpack.c.h.b16 %v1444
  %v6238 = vunpack.c.l.b16 %v1445
  %v6239 = vunpack.c.h.b16 %v1445
  %v6240 = vunpack.c.l.b16 %v1446
  %v6241 = vunpack.c.h.b16 %v1446
  %v6242 = vunpack.c.l.b16 %v1447
  %v6243 = vunpack.c.h.b16 %v1447
  %v6244 = vunpack.c.l.b16 %v1448
  %v6245 = vunpack.c.h.b16 %v1448
  %v6246 = vunpack.c.l.b16 %v1449
  %v6247 = vunpack.c.h.b16 %v1449
  %v6248 = vunpack.c.l.b16 %v1450
  %v6249 = vunpack.c.h.b16 %v1450
  %v6250 = vunpack.c.l.b16 %v1451
  %v6251 = vunpack.c.h.b16 %v1451
  %v6252 = vunpack.c.l.b16 %v1452
  %v6253 = vunpack.c.h.b16 %v1452
  %v6254 = vunpack.c.l.b16 %v1453
  %v6255 = vunpack.c.h.b16 %v1453
  %v6256 = vunpack.c.l.b16 %v1454
  %v6257 = vunpack.c.h.b16 %v1454
  %v6258 = vunpack.c.l.b16 %v1455
  %v6259 = vunpack.c.h.b16 %v1455
  %v6260 = vunpack.c.l.b16 %v1456
  %v6261 = vunpack.c.h.b16 %v1456
  %v6262 = vunpack.c.l.b16 %v1457
  %v6263 = vunpack.c.h.b16 %v1457
  %v6264 = vunpack.c.l.b16 %v1458
  %v6265 = vunpack.c.h.b16 %v1458
  %v6266 = vunpack.c.l.b16 %v1459
  %v6267 = vunpack.c.h.b16 %v1459
  %v6268 = vunpack.c.l.b16 %v1460
  %v6269 = vunpack.c.h.b16 %v1460
  %v6270 = vunpack.c.l.b16 %v1461
  %v6271 = vunpack.c.h.b16 %v1461
  %v6272 = vunpack.c.l.b16 %v1462
  %v6273 = vunpack.c.h.b16 %v1462
  %v6274 = vunpack.c.l.b16 %v1463
  %v6275 = vunpack.c.h.b16 %v1463
  %v6276 = vunpack.c.l.b16 %v1464
  %v6277 = vunpack.c.h.b16 %v1464
  %v6278 = vunpack.c.l.b16 %v1465
  %v6279 = vunpack.c.h.b16 %v1465
  %v6280 = vunpack.c.l.b16 %v1466
  %v6281 = vunpack.c.h.b16 %v1466
  %v6282 = vunpack.c.l.b16 %v1467
  %v6283 = vunpack.c.h.b16 %v1467
  %v6284 = vunpack.c.l.b16 %v1468
  %v6285 = vunpack.c.h.b16 %v1468
  %v6286 = vunpack.c.l.b16 %v1469
  %v6287 = vunpack.c.h.b16 %v1469
  %v6288 = vunpack.c.l.b16 %v1470
  %v6289 = vunpack.c.h.b16 %v1470
  %v6290 = vunpack.c.l.b16 %v1471
  %v6291 = vunpack.c.h.b16 %v1471
  %v6292 = vunpack.c.l.b16 %v1472
  %v6293 = vunpack.c.h.b16 %v1472
  %v6294 = vunpack.c.l.b16 %v1473
  %v6295 = vunpack.c.h.b16 %v1473
  %v6296 = vunpack.c.l.b16 %v1474
  %v6297 = vunpack.c.h.b16 %v1474
  %v6298 = vunpack.c.l.b16 %v1475
  %v6299 = vunpack.c.h.b16 %v1475
  %v6300 = vunpack.c.l.b16 %v1476
  %v6301 = vunpack.c.h.b16 %v1476
  %v6302 = vunpack.c.l.b16 %v1477
  %v6303 = vunpack.c.h.b16 %v1477
  %v6304 = vunpack.c.l.b16 %v1478
  %v6305 = vunpack.c.h.b16 %v1478
  %v6306 = vunpack.c.l.b16 %v1479
  %v6307 = vunpack.c.h.b16 %v1479
  %v6308 = vunpack.c.l.b16 %v1480
  %v6309 = vunpack.c.h.b16 %v1480
  %v6310 = vunpack.c.l.b16 %v1481
  %v6311 = vunpack.c.h.b16 %v1481
  %v6312 = vunpack.c.l.b16 %v1482
  %v6313 = vunpack.c.h.b16 %v1482
  %v6314 = vunpack.c.l.b16 %v1483
  %v6315 = vunpack.c.h.b16 %v1483
  %v6316 = vunpack.c.l.b16 %v1484
  %v6317 = vunpack.c.h.b16 %v1484
  %v6318 = vunpack.c.l.b16 %v1485
  %v6319 = vunpack.c.h.b16 %v1485
  %v6320 = vunpack.c.l.b16 %v1486
  %v6321 = vunpack.c.h.b16 %v1486
  %v6322 = vunpack.c.l.b16 %v1487
  %v6323 = vunpack.c.h.b16 %v1487
  %v6324 = vunpack.c.l.b16 %v1488
  %v6325 = vunpack.c.h.b16 %v1488
  %v6326 = vunpack.c.l.b16 %v1489
  %v6327 = vunpack.c.h.b16 %v1489
  %v6328 = vunpack.c.l.b16 %v1490
  %v6329 = vunpack.c.h.b16 %v1490
  %v6330 = vunpack.c.l.b16 %v1491
  %v6331 = vunpack.c.h.b16 %v1491
  %v6332 = vunpack.c.l.b16 %v1492
  %v6333 = vunpack.c.h.b16 %v1492
  %v6334 = vunpack.c.l.b16 %v1493
  %v6335 = vunpack.c.h.b16 %v1493
  %v6336 = vunpack.c.l.b16 %v1494
  %v6337 = vunpack.c.h.b16 %v1494
  %v6338 = vunpack.c.l.b16 %v1495
  %v6339 = vunpack.c.h.b16 %v1495
  %v6340 = vunpack.c.l.b16 %v1496
  %v6341 = vunpack.c.h.b16 %v1496
  %v6342 = vunpack.c.l.b16 %v1497
  %v6343 = vunpack.c.h.b16 %v1497
  %v6344 = vunpack.c.l.b16 %v1498
  %v6345 = vunpack.c.h.b16 %v1498
  %v6346 = vunpack.c.l.b16 %v1499
  %v6347 = vunpack.c.h.b16 %v1499
  %v6348 = vunpack.c.l.b16 %v1500
  %v6349 = vunpack.c.h.b16 %v1500
  %v6350 = vunpack.c.l.b16 %v1501
  %v6351 = vunpack.c.h.b16 %v1501
  %v6352 = vunpack.c.l.b16 %v1502
  %v6353 = vunpack.c.h.b16 %v1502
  %v6354 = vunpack.c.l.b16 %v1503
  %v6355 = vunpack.c.h.b16 %v1503
  %v6356 = vunpack.c.l.b16 %v1504
  %v6357 = vunpack.c.h.b16 %v1504
  %v6358 = vunpack.c.l.b16 %v1505
  %v6359 = vunpack.c.h.b16 %v1505
  %v6360 = vunpack.c.l.b16 %v1506
  %v6361 = vunpack.c.h.b16 %v1506
  %v6362 = vunpack.c.l.b16 %v1507
  %v6363 = vunpack.c.h.b16 %v1507
  %v6364 = vunpack.c.l.b16 %v1508
  %v6365 = vunpack.c.h.b16 %v1508
  %v6366 = vunpack.c.l.b16 %v1509
  %v6367 = vunpack.c.h.b16 %v1509
  %v6368 = vunpack.c.l.b16 %v1510
  %v6369 = vunpack.c.h.b16 %v1510
  %v6370 = vunpack.c.l.b16 %v1511
  %v6371 = vunpack.c.h.b16 %v1511
  %v6372 = vunpack.c.l.b16 %v1512
  %v6373 = vunpack.c.h.b16 %v1512
  %v6374 = vunpack.c.l.b16 %v1513
  %v6375 = vunpack.c.h.b16 %v1513
  %v6376 = vunpack.c.l.b16 %v1514
  %v6377 = vunpack.c.h.b16 %v1514
  %v6378 = vunpack.c.l.b16 %v1515
  %v6379 = vunpack.c.h.b16 %v1515
  %v6380 = vunpack.c.l.b16 %v1516
  %v6381 = vunpack.c.h.b16 %v1516
  %v6382 = vunpack.c.l.b16 %v1517
  %v6383 = vunpack.c.h.b16 %v1517
  %v6384 = vunpack.c.l.b16 %v1518
  %v6385 = vunpack.c.h.b16 %v1518
  %v6386 = vunpack.c.l.b16 %v1519
  %v6387 = vunpack.c.h.b16 %v1519
  %v6388 = vunpack.c.l.b16 %v1520
  %v6389 = vunpack.c.h.b16 %v1520
  %v6390 = vunpack.c.l.b16 %v1521
  %v6391 = vunpack.c.h.b16 %v1521
  %v6392 = vunpack.c.l.b16 %v1522
  %v6393 = vunpack.c.h.b16 %v1522
  %v6394 = vunpack.c.l.b16 %v1523
  %v6395 = vunpack.c.h.b16 %v1523
  %v6396 = vunpack.c.l.b16 %v1524
  %v6397 = vunpack.c.h.b16 %v1524
  %v6398 = vunpack.c.l.b16 %v1525
  %v6399 = vunpack.c.h.b16 %v1525
  %v6400 = vunpack.c.l.b16 %v1526
  %v6401 = vunpack.c.h.b16 %v1526
  %v6402 = vunpack.c.l.b16 %v1527
  %v6403 = vunpack.c.h.b16 %v1527
  %v6404 = vunpack.c.l.b16 %v1528
  %v6405 = vunpack.c.h.b16 %v1528
  %v6406 = vunpack.c.l.b16 %v1529
  %v6407 = vunpack.c.h.b16 %v1529
  %v6408 = vunpack.c.l.b16 %v1530
  %v6409 = vunpack.c.h.b16 %v1530
  %v6410 = vunpack.c.l.b16 %v1531
  %v6411 = vunpack.c.h.b16 %v1531
  %v6412 = vunpack.c.l.b16 %v1532
  %v6413 = vunpack.c.h.b16 %v1532
  %v6414 = vunpack.c.l.b16 %v1533
  %v6415 = vunpack.c.h.b16 %v1533
  %v6416 = vunpack.c.l.b16 %v1534
  %v6417 = vunpack.c.h.b16 %v1534
  %v6418 = vunpack.c.l.b16 %v1535
  %v6419 = vunpack.c.h.b16 %v1535
  %v6420 = vunpack.c.l.b16 %v1536
  %v6421 = vunpack.c.h.b16 %v1536
  %v6422 = vunpack.c.l.b16 %v1537
  %v6423 = vunpack.c.h.b16 %v1537
  %v6424 = vunpack.c.l.b16 %v1538
  %v6425 = vunpack.c.h.b16 %v1538
  %v6426 = vunpack.c.l.b16 %v1539
  %v6427 = vunpack.c.h.b16 %v1539
  %v6428 = vunpack.c.l.b16 %v1540
  %v6429 = vunpack.c.h.b16 %v1540
  %v6430 = vunpack.c.l.b16 %v1541
  %v6431 = vunpack.c.h.b16 %v1541
  %v6432 = vunpack.c.l.b16 %v1542
  %v6433 = vunpack.c.h.b16 %v1542
  %v6434 = vunpack.c.l.b16 %v1543
  %v6435 = vunpack.c.h.b16 %v1543
  %v6436 = vunpack.c.l.b16 %v1544
  %v6437 = vunpack.c.h.b16 %v1544
  %v6438 = vunpack.c.l.b16 %v1545
  %v6439 = vunpack.c.h.b16 %v1545
  %v6440 = vunpack.c.l.b16 %v1546
  %v6441 = vunpack.c.h.b16 %v1546
  %v6442 = vunpack.c.l.b16 %v1547
  %v6443 = vunpack.c.h.b16 %v1547
  %v6444 = vunpack.c.l.b16 %v1548
  %v6445 = vunpack.c.h.b16 %v1548
  %v6446 = vunpack.c.l.b16 %v1549
  %v6447 = vunpack.c.h.b16 %v1549
  %v6448 = vunpack.c.l.b16 %v1550
  %v6449 = vunpack.c.h.b16 %v1550
  %v6450 = vunpack.c.l.b16 %v1551
  %v6451 = vunpack.c.h.b16 %v1551
  %v6452 = vunpack.c.l.b16 %v1552
  %v6453 = vunpack.c.h.b16 %v1552
  %v6454 = vunpack.c.l.b16 %v1553
  %v6455 = vunpack.c.h.b16 %v1553
  %v6456 = vunpack.c.l.b16 %v1554
  %v6457 = vunpack.c.h.b16 %v1554
  %v6458 = vunpack.c.l.b16 %v1555
  %v6459 = vunpack.c.h.b16 %v1555
  %v6460 = vunpack.c.l.b16 %v1556
  %v6461 = vunpack.c.h.b16 %v1556
  %v6462 = vunpack.c.l.b16 %v1557
  %v6463 = vunpack.c.h.b16 %v1557
  %v6464 = vunpack.c.l.b16 %v1558
  %v6465 = vunpack.c.h.b16 %v1558
  %v6466 = vunpack.c.l.b16 %v1559
  %v6467 = vunpack.c.h.b16 %v1559
  %v6468 = vunpack.c.l.b16 %v1560
  %v6469 = vunpack.c.h.b16 %v1560
  %v6470 = vunpack.c.l.b16 %v1561
  %v6471 = vunpack.c.h.b16 %v1561
  %v6472 = vunpack.c.l.b16 %v1562
  %v6473 = vunpack.c.h.b16 %v1562
  %v6474 = vunpack.c.l.b16 %v1563
  %v6475 = vunpack.c.h.b16 %v1563
  %v6476 = vunpack.c.l.b16 %v1564
  %v6477 = vunpack.c.h.b16 %v1564
  %v6478 = vunpack.c.l.b16 %v1565
  %v6479 = vunpack.c.h.b16 %v1565
  %v6480 = vunpack.c.l.b16 %v1566
  %v6481 = vunpack.c.h.b16 %v1566
  %v6482 = vunpack.c.l.b16 %v1567
  %v6483 = vunpack.c.h.b16 %v1567
  %v6484 = vunpack.c.l.b16 %v1568
  %v6485 = vunpack.c.h.b16 %v1568
  %v6486 = vunpack.c.l.b16 %v1569
  %v6487 = vunpack.c.h.b16 %v1569
  %v6488 = vunpack.c.l.b16 %v1570
  %v6489 = vunpack.c.h.b16 %v1570
  %v6490 = vunpack.c.l.b16 %v1571
  %v6491 = vunpack.c.h.b16 %v1571
  %v6492 = vunpack.c.l.b16 %v1572
  %v6493 = vunpack.c.h.b16 %v1572
  %v6494 = vunpack.c.l.b16 %v1573
  %v6495 = vunpack.c.h.b16 %v1573
  %v6496 = vunpack.c.l.b16 %v1574
  %v6497 = vunpack.c.h.b16 %v1574
  %v6498 = vunpack.c.l.b16 %v1575
  %v6499 = vunpack.c.h.b16 %v1575
  %v6500 = vunpack.c.l.b16 %v1576
  %v6501 = vunpack.c.h.b16 %v1576
  %v6502 = vunpack.c.l.b16 %v1577
  %v6503 = vunpack.c.h.b16 %v1577
  %v6504 = vunpack.c.l.b16 %v1578
  %v6505 = vunpack.c.h.b16 %v1578
  %v6506 = vunpack.c.l.b16 %v1579
  %v6507 = vunpack.c.h.b16 %v1579
  %v6508 = vunpack.c.l.b16 %v1580
  %v6509 = vunpack.c.h.b16 %v1580
  %v6510 = vunpack.c.l.b16 %v1581
  %v6511 = vunpack.c.h.b16 %v1581
  %v6512 = vunpack.c.l.b16 %v1582
  %v6513 = vunpack.c.h.b16 %v1582
  %v6514 = vunpack.c.l.b16 %v1583
  %v6515 = vunpack.c.h.b16 %v1583
  %v6516 = vunpack.c.l.b16 %v1584
  %v6517 = vunpack.c.h.b16 %v1584
  %v6518 = vunpack.c.l.b16 %v1585
  %v6519 = vunpack.c.h.b16 %v1585
  %v6520 = vunpack.c.l.b16 %v1586
  %v6521 = vunpack.c.h.b16 %v1586
  %v6522 = vpack.c.b16 %v3394, %v3386
  %v6523 = vpack.c.b16 %v3395, %v3387
  %v6524 = vpack.c.b16 %v3396, %v3388
  %v6525 = vpack.c.b16 %v3397, %v3389
  %v6526 = vpack.c.b16 %v3398, %v3390
  %v6527 = vpack.c.b16 %v3399, %v3391
  %v6528 = vpack.c.b16 %v3400, %v3392
  %v6529 = vpack.c.b16 %v3401, %v3393
  %v6530 = vpack.c.b16 %v3410, %v3402
  %v6531 = vpack.c.b16 %v3411, %v3403
  %v6532 = vpack.c.b16 %v3412, %v3404
  %v6533 = vpack.c.b16 %v3413, %v3405
  %v6534 = vpack.c.b16 %v3414, %v3406
  %v6535 = vpack.c.b16 %v3415, %v3407
  %v6536 = vpack.c.b16 %v3416, %v3408
  %v6537 = vpack.c.b16 %v3417, %v3409
  %v6538 = vpack.c.b16 %v3426, %v3418
  %v6539 = vpack.c.b16 %v3427, %v3419
  %v6540 = vpack.c.b16 %v3428, %v3420
  %v6541 = vpack.c.b16 %v3429, %v3421
  %v6542 = vpack.c.b16 %v3430, %v3422
  %v6543 = vpack.c.b16 %v3431, %v3423
  %v6544 = vpack.c.b16 %v3432, %v3424
  %v6545 = vpack.c.b16 %v3433, %v3425
  %v6546 = vpack.c.b16 %v3442, %v3434
  %v6547 = vpack.c.b16 %v3443, %v3435
  %v6548 = vpack.c.b16 %v3444, %v3436
  %v6549 = vpack.c.b16 %v3445, %v3437
  %v6550 = vpack.c.b16 %v3446, %v3438
  %v6551 = vpack.c.b16 %v3447, %v3439
  %v6552 = vpack.c.b16 %v3448, %v3440
  %v6553 = vpack.c.b16 %v3449, %v3441
  %v6554 = vpack.c.b16 %v3458, %v3450
  %v6555 = vpack.c.b16 %v3459, %v3451
  %v6556 = vpack.c.b16 %v3460, %v3452
  %v6557 = vpack.c.b16 %v3461, %v3453
  %v6558 = vpack.c.b16 %v3462, %v3454
  %v6559 = vpack.c.b16 %v3463, %v3455
  %v6560 = vpack.c.b16 %v3464, %v3456
  %v6561 = vpack.c.b16 %v3465, %v3457
  %v6562 = vpack.c.b16 %v3474, %v3466
  %v6563 = vpack.c.b16 %v3475, %v3467
  %v6564 = vpack.c.b16 %v3476, %v3468
  %v6565 = vpack.c.b16 %v3477, %v3469
  %v6566 = vpack.c.b16 %v3478, %v3470
  %v6567 = vpack.c.b16 %v3479, %v3471
  %v6568 = vpack.c.b16 %v3480, %v3472
  %v6569 = vpack.c.b16 %v3481, %v3473
  %v6570 = vpack.c.b16 %v3490, %v3482
  %v6571 = vpack.c.b16 %v3491, %v3483
  %v6572 = vpack.c.b16 %v3492, %v3484
  %v6573 = vpack.c.b16 %v3493, %v3485
  %v6574 = vpack.c.b16 %v3494, %v3486
  %v6575 = vpack.c.b16 %v3495, %v3487
  %v6576 = vpack.c.b16 %v3496, %v3488
  %v6577 = vpack.c.b16 %v3497, %v3489
  %v6578 = vpack.c.b16 %v3506, %v3498
  %v6579 = vpack.c.b16 %v3507, %v3499
  %v6580 = vpack.c.b16 %v3508, %v3500
  %v6581 = vpack.c.b16 %v3509, %v3501
  %v6582 = vpack.c.b16 %v3510, %v3502
  %v6583 = vpack.c.b16 %v3511, %v3503
  %v6584 = vpack.c.b16 %v3512, %v3504
  %v6585 = vpack.c.b16 %v3513, %v3505
  %v6586 = vpack.c.b16 %v3522, %v3514
  %v6587 = vpack.c.b16 %v3523, %v3515
  %v6588 = vpack.c.b16 %v3524, %v3516
  %v6589 = vpack.c.b16 %v3525, %v3517
  %v6590 = vpack.c.b16 %v3526, %v3518
  %v6591 = vpack.c.b16 %v3527, %v3519
  %v6592 = vpack.c.b16 %v3528, %v3520
  %v6593 = vpack.c.b16 %v3529, %v3521
  %v6594 = vpack.c.b16 %v3538, %v3530
  %v6595 = vpack.c.b16 %v3539, %v3531
  %v6596 = vpack.c.b16 %v3540, %v3532
  %v6597 = vpack.c.b16 %v3541, %v3533
  %v6598 = vpack.c.b16 %v3542, %v3534
  %v6599 = vpack.c.b16 %v3543, %v3535
  %v6600 = vpack.c.b16 %v3544, %v3536
  %v6601 = vpack.c.b16 %v3545, %v3537
  %v6602 = vpack.c.b16 %v3554, %v3546
  %v6603 = vpack.c.b16 %v3555, %v3547
  %v6604 = vpack.c.b16 %v3556, %v3548
  %v6605 = vpack.c.b16 %v3557, %v3549
  %v6606 = vpack.c.b16 %v3558, %v3550
  %v6607 = vpack.c.b16 %v3559, %v3551
  %v6608 = vpack.c.b16 %v3560, %v3552
  %v6609 = vpack.c.b16 %v3561, %v3553
  %v6610 = vpack.c.b16 %v3570, %v3562
  %v6611 = vpack.c.b16 %v3571, %v3563
  %v6612 = vpack.c.b16 %v3572, %v3564
  %v6613 = vpack.c.b16 %v3573, %v3565
  %v6614 = vpack.c.b16 %v3574, %v3566
  %v6615 = vpack.c.b16 %v3575, %v3567
  %v6616 = vpack.c.b16 %v3576, %v3568
  %v6617 = vpack.c.b16 %v3577, %v3569
  %v6618 = vpack.c.b16 %v3586, %v3578
  %v6619 = vpack.c.b16 %v3587, %v3579
  %v6620 = vpack.c.b16 %v3588, %v3580
  %v6621 = vpack.c.b16 %v3589, %v3581
  %v6622 = vpack.c.b16 %v3590, %v3582
  %v6623 = vpack.c.b16 %v3591, %v3583
  %v6624 = vpack.c.b16 %v3592, %v3584
  %v6625 = vpack.c.b16 %v3593, %v3585
  %v6626 = vpack.c.b16 %v3602, %v3594
  %v6627 = vpack.c.b16 %v3603, %v3595
  %v6628 = vpack.c.b16 %v3604, %v3596
  %v6629 = vpack.c.b16 %v3605, %v3597
  %v6630 = vpack.c.b16 %v3606, %v3598
  %v6631 = vpack.c.b16 %v3607, %v3599
  %v6632 = vpack.c.b16 %v3608, %v3600
  %v6633 = vpack.c.b16 %v3609, %v3601
  %v6634 = vpack.c.b16 %v3618, %v3610
  %v6635 = vpack.c.b16 %v3619, %v3611
  %v6636 = vpack.c.b16 %v3620, %v3612
  %v6637 = vpack.c.b16 %v3621, %v3613
  %v6638 = vpack.c.b16 %v3622, %v3614
  %v6639 = vpack.c.b16 %v3623, %v3615
  %v6640 = vpack.c.b16 %v3624, %v3616
  %v6641 = vpack.c.b16 %v3625, %v3617
  %v6642 = vpack.c.b16 %v3634, %v3626
  %v6643 = vpack.c.b16 %v3635, %v3627
  %v6644 = vpack.c.b16 %v3636, %v3628
  %v6645 = vpack.c.b16 %v3637, %v3629
  %v6646 = vpack.c.b16 %v3638, %v3630
  %v6647 = vpack.c.b16 %v3639, %v3631
  %v6648 = vpack.c.b16 %v3640, %v3632
  %v6649 = vpack.c.b16 %v3641, %v3633
  %v6650 = vpack.c.b16 %v3650, %v3642
  %v6651 = vpack.c.b16 %v3651, %v3643
  %v6652 = vpack.c.b16 %v3652, %v3644
  %v6653 = vpack.c.b16 %v3653, %v3645
  %v6654 = vpack.c.b16 %v3654, %v3646
  %v6655 = vpack.c.b16 %v3655, %v3647
  %v6656 = vpack.c.b16 %v3656, %v3648
  %v6657 = vpack.c.b16 %v3657, %v3649
  %v6658 = vpack.c.b16 %v3666, %v3658
  %v6659 = vpack.c.b16 %v3667, %v3659
  %v6660 = vpack.c.b16 %v3668, %v3660
  %v6661 = vpack.c.b16 %v3669, %v3661
  %v6662 = vpack.c.b16 %v3670, %v3662
  %v6663 = vpack.c.b16 %v3671, %v3663
  %v6664 = vpack.c.b16 %v3672, %v3664
  %v6665 = vpack.c.b16 %v3673, %v3665
  %v6666 = vpack.c.b16 %v3682, %v3674
  %v6667 = vpack.c.b16 %v3683, %v3675
  %v6668 = vpack.c.b16 %v3684, %v3676
  %v6669 = vpack.c.b16 %v3685, %v3677
  %v6670 = vpack.c.b16 %v3686, %v3678
  %v6671 = vpack.c.b16 %v3687, %v3679
  %v6672 = vpack.c.b16 %v3688, %v3680
  %v6673 = vpack.c.b16 %v3689, %v3681
  %v6674 = vpack.c.b16 %v3698, %v3690
  %v6675 = vpack.c.b16 %v3699, %v3691
  %v6676 = vpack.c.b16 %v3700, %v3692
  %v6677 = vpack.c.b16 %v3701, %v3693
  %v6678 = vpack.c.b16 %v3702, %v3694
  %v6679 = vpack.c.b16 %v3703, %v3695
  %v6680 = vpack.c.b16 %v3704, %v3696
  %v6681 = vpack.c.b16 %v3705, %v3697
  %v6682 = vpack.c.b16 %v3714, %v3706
  %v6683 = vpack.c.b16 %v3715, %v3707
  %v6684 = vpack.c.b16 %v3716, %v3708
  %v6685 = vpack.c.b16 %v3717, %v3709
  %v6686 = vpack.c.b16 %v3718, %v3710
  %v6687 = vpack.c.b16 %v3719, %v3711
  %v6688 = vpack.c.b16 %v3720, %v3712
  %v6689 = vpack.c.b16 %v3721, %v3713
  %v6690 = vpack.c.b16 %v3730, %v3722
  %v6691 = vpack.c.b16 %v3731, %v3723
  %v6692 = vpack.c.b16 %v3732, %v3724
  %v6693 = vpack.c.b16 %v3733, %v3725
  %v6694 = vpack.c.b16 %v3734, %v3726
  %v6695 = vpack.c.b16 %v3735, %v3727
  %v6696 = vpack.c.b16 %v3736, %v3728
  %v6697 = vpack.c.b16 %v3737, %v3729
  %v6698 = vpack.c.b16 %v3746, %v3738
  %v6699 = vpack.c.b16 %v3747, %v3739
  %v6700 = vpack.c.b16 %v3748, %v3740
  %v6701 = vpack.c.b16 %v3749, %v3741
  %v6702 = vpack.c.b16 %v3750, %v3742
  %v6703 = vpack.c.b16 %v3751, %v3743
  %v6704 = vpack.c.b16 %v3752, %v3744
  %v6705 = vpack.c.b16 %v3753, %v3745
  %v6706 = vpack.c.b16 %v3762, %v3754
  %v6707 = vpack.c.b16 %v3763, %v3755
  %v6708 = vpack.c.b16 %v3764, %v3756
  %v6709 = vpack.c.b16 %v3765, %v3757
  %v6710 = vpack.c.b16 %v3766, %v3758
  %v6711 = vpack.c.b16 %v3767, %v3759
  %v6712 = vpack.c.b16 %v3768, %v3760
  %v6713 = vpack.c.b16 %v3769, %v3761
  %v6714 = vpack.c.b16 %v3778, %v3770
  %v6715 = vpack.c.b16 %v3779, %v3771
  %v6716 = vpack.c.b16 %v3780, %v3772
  %v6717 = vpack.c.b16 %v3781, %v3773
  %v6718 = vpack.c.b16 %v3782, %v3774
  %v6719 = vpack.c.b16 %v3783, %v3775
  %v6720 = vpack.c.b16 %v3784, %v3776
  %v6721 = vpack.c.b16 %v3785, %v3777
  %v6722 = vpack.c.b16 %v3794, %v3786
  %v6723 = vpack.c.b16 %v3795, %v3787
  %v6724 = vpack.c.b16 %v3796, %v3788
  %v6725 = vpack.c.b16 %v3797, %v3789
  %v6726 = vpack.c.b16 %v3798, %v3790
  %v6727 = vpack.c.b16 %v3799, %v3791
  %v6728 = vpack.c.b16 %v3800, %v3792
  %v6729 = vpack.c.b16 %v3801, %v3793
  %v6730 = vpack.c.b16 %v3810, %v3802
  %v6731 = vpack.c.b16 %v3811, %v3803
  %v6732 = vpack.c.b16 %v3812, %v3804
  %v6733 = vpack.c.b16 %v3813, %v3805
  %v6734 = vpack.c.b16 %v3814, %v3806
  %v6735 = vpack.c.b16 %v3815, %v3807
  %v6736 = vpack.c.b16 %v3816, %v3808
  %v6737 = vpack.c.b16 %v3817, %v3809
  %v6738 = vpack.c.b16 %v3826, %v3818
  %v6739 = vpack.c.b16 %v3827, %v3819
  %v6740 = vpack.c.b16 %v3828, %v3820
  %v6741 = vpack.c.b16 %v3829, %v3821
  %v6742 = vpack.c.b16 %v3830, %v3822
  %v6743 = vpack.c.b16 %v3831, %v3823
  %v6744 = vpack.c.b16 %v3832, %v3824
  %v6745 = vpack.c.b16 %v3833, %v3825
  %v6746 = vpack.c.b16 %v3842, %v3834
  %v6747 = vpack.c.b16 %v3843, %v3835
  %v6748 = vpack.c.b16 %v3844, %v3836
  %v6749 = vpack.c.b16 %v3845, %v3837
  %v6750 = vpack.c.b16 %v3846, %v3838
  %v6751 = vpack.c.b16 %v3847, %v3839
  %v6752 = vpack.c.b16 %v3848, %v3840
  %v6753 = vpack.c.b16 %v3849, %v3841
  %v6754 = vpack.c.b16 %v3858, %v3850
  %v6755 = vpack.c.b16 %v3859, %v3851
  %v6756 = vpack.c.b16 %v3860, %v3852
  %v6757 = vpack.c.b16 %v3861, %v3853
  %v6758 = vpack.c.b16 %v3862, %v3854
  %v6759 = vpack.c.b16 %v3863, %v3855
  %v6760 = vpack.c.b16 %v3864, %v3856
  %v6761 = vpack.c.b16 %v3865, %v3857
  %v6762 = vpack.c.b16 %v3874, %v3866
  %v6763 = vpack.c.b16 %v3875, %v3867
  %v6764 = vpack.c.b16 %v3876, %v3868
  %v6765 = vpack.c.b16 %v3877, %v3869
  %v6766 = vpack.c.b16 %v3878, %v3870
  %v6767 = vpack.c.b16 %v3879, %v3871
  %v6768 = vpack.c.b16 %v3880, %v3872
  %v6769 = vpack.c.b16 %v3881, %v3873
  %v6770 = vpack.c.b16 %v3890, %v3882
  %v6771 = vpack.c.b16 %v3891, %v3883
  %v6772 = vpack.c.b16 %v3892, %v3884
  %v6773 = vpack.c.b16 %v3893, %v3885
  %v6774 = vpack.c.b16 %v3894, %v3886
  %v6775 = vpack.c.b16 %v3895, %v3887
  %v6776 = vpack.c.b16 %v3896, %v3888
  %v6777 = vpack.c.b16 %v3897, %v3889
  %v6778 = vpack.c.b16 %v3906, %v3898
  %v6779 = vpack.c.b16 %v3907, %v3899
  %v6780 = vpack.c.b16 %v3908, %v3900
  %v6781 = vpack.c.b16 %v3909, %v3901
  %v6782 = vpack.c.b16 %v3910, %v3902
  %v6783 = vpack.c.b16 %v3911, %v3903
  %v6784 = vpack.c.b16 %v3912, %v3904
  %v6785 = vpack.c.b16 %v3913, %v3905
  %v6786 = vpack.c.b16 %v3922, %v3914
  %v6787 = vpack.c.b16 %v3923, %v3915
  %v6788 = vpack.c.b16 %v3924, %v3916
  %v6789 = vpack.c.b16 %v3925, %v3917
  %v6790 = vpack.c.b16 %v3926, %v3918
  %v6791 = vpack.c.b16 %v3927, %v3919
  %v6792 = vpack.c.b16 %v3928, %v3920
  %v6793 = vpack.c.b16 %v3929, %v3921
  %v6794 = vpack.c.b16 %v3938, %v3930
  %v6795 = vpack.c.b16 %v3939, %v3931
  %v6796 = vpack.c.b16 %v3940, %v3932
  %v6797 = vpack.c.b16 %v3941, %v3933
  %v6798 = vpack.c.b16 %v3942, %v3934
  %v6799 = vpack.c.b16 %v3943, %v3935
  %v6800 = vpack.c.b16 %v3944, %v3936
  %v6801 = vpack.c.b16 %v3945, %v3937
  %v6802 = vpack.c.b16 %v3954, %v3946
  %v6803 = vpack.c.b16 %v3955, %v3947
  %v6804 = vpack.c.b16 %v3956, %v3948
  %v6805 = vpack.c.b16 %v3957, %v3949
  %v6806 = vpack.c.b16 %v3958, %v3950
  %v6807 = vpack.c.b16 %v3959, %v3951
  %v6808 = vpack.c.b16 %v3960, %v3952
  %v6809 = vpack.c.b16 %v3961, %v3953
  %v6810 = vpack.c.b16 %v3970, %v3962
  %v6811 = vpack.c.b16 %v3971, %v3963
  %v6812 = vpack.c.b16 %v3972, %v3964
  %v6813 = vpack.c.b16 %v3973, %v3965
  %v6814 = vpack.c.b16 %v3974, %v3966
  %v6815 = vpack.c.b16 %v3975, %v3967
  %v6816 = vpack.c.b16 %v3976, %v3968
  %v6817 = vpack.c.b16 %v3977, %v3969
  %v6818 = vpack.c.b16 %v3986, %v3978
  %v6819 = vpack.c.b16 %v3987, %v3979
  %v6820 = vpack.c.b16 %v3988, %v3980
  %v6821 = vpack.c.b16 %v3989, %v3981
  %v6822 = vpack.c.b16 %v3990, %v3982
  %v6823 = vpack.c.b16 %v3991, %v3983
  %v6824 = vpack.c.b16 %v3992, %v3984
  %v6825 = vpack.c.b16 %v3993, %v3985
  %v6826 = vpack.c.b16 %v4002, %v3994
  %v6827 = vpack.c.b16 %v4003, %v3995
  %v6828 = vpack.c.b16 %v4004, %v3996
  %v6829 = vpack.c.b16 %v4005, %v3997
  %v6830 = vpack.c.b16 %v4006, %v3998
  %v6831 = vpack.c.b16 %v4007, %v3999
  %v6832 = vpack.c.b16 %v4008, %v4000
  %v6833 = vpack.c.b16 %v4009, %v4001
  %v6834 = vpack.c.b16 %v4018, %v4010
  %v6835 = vpack.c.b16 %v4019, %v4011
  %v6836 = vpack.c.b16 %v4020, %v4012
  %v6837 = vpack.c.b16 %v4021, %v4013
  %v6838 = vpack.c.b16 %v4022, %v4014
  %v6839 = vpack.c.b16 %v4023, %v4015
  %v6840 = vpack.c.b16 %v4024, %v4016
  %v6841 = vpack.c.b16 %v4025, %v4017
  %v6842 = vpack.c.b16 %v4034, %v4026
  %v6843 = vpack.c.b16 %v4035, %v4027
  %v6844 = vpack.c.b16 %v4036, %v4028
  %v6845 = vpack.c.b16 %v4037, %v4029
  %v6846 = vpack.c.b16 %v4038, %v4030
  %v6847 = vpack.c.b16 %v4039, %v4031
  %v6848 = vpack.c.b16 %v4040, %v4032
  %v6849 = vpack.c.b16 %v4041, %v4033
  %v6850 = vpack.c.b16 %v4050, %v4042
  %v6851 = vpack.c.b16 %v4051, %v4043
  %v6852 = vpack.c.b16 %v4052, %v4044
  %v6853 = vpack.c.b16 %v4053, %v4045
  %v6854 = vpack.c.b16 %v4054, %v4046
  %v6855 = vpack.c.b16 %v4055, %v4047
  %v6856 = vpack.c.b16 %v4056, %v4048
  %v6857 = vpack.c.b16 %v4057, %v4049
  %v6858 = vpack.c.b16 %v4066, %v4058
  %v6859 = vpack.c.b16 %v4067, %v4059
  %v6860 = vpack.c.b16 %v4068, %v4060
  %v6861 = vpack.c.b16 %v4069, %v4061
  %v6862 = vpack.c.b16 %v4070, %v4062
  %v6863 = vpack.c.b16 %v4071, %v4063
  %v6864 = vpack.c.b16 %v4072, %v4064
  %v6865 = vpack.c.b16 %v4073, %v4065
  %v6866 = vpack.c.b16 %v4082, %v4074
  %v6867 = vpack.c.b16 %v4083, %v4075
  %v6868 = vpack.c.b16 %v4084, %v4076
  %v6869 = vpack.c.b16 %v4085, %v4077
  %v6870 = vpack.c.b16 %v4086, %v4078
  %v6871 = vpack.c.b16 %v4087, %v4079
  %v6872 = vpack.c.b16 %v4088, %v4080
  %v6873 = vpack.c.b16 %v4089, %v4081
  %v6874 = vpack.c.b16 %v4098, %v4090
  %v6875 = vpack.c.b16 %v4099, %v4091
  %v6876 = vpack.c.b16 %v4100, %v4092
  %v6877 = vpack.c.b16 %v4101, %v4093
  %v6878 = vpack.c.b16 %v4102, %v4094
  %v6879 = vpack.c.b16 %v4103, %v4095
  %v6880 = vpack.c.b16 %v4104, %v4096
  %v6881 = vpack.c.b16 %v4105, %v4097
  %v6882 = vpack.c.b16 %v4114, %v4106
  %v6883 = vpack.c.b16 %v4115, %v4107
  %v6884 = vpack.c.b16 %v4116, %v4108
  %v6885 = vpack.c.b16 %v4117, %v4109
  %v6886 = vpack.c.b16 %v4118, %v4110
  %v6887 = vpack.c.b16 %v4119, %v4111
  %v6888 = vpack.c.b16 %v4120, %v4112
  %v6889 = vpack.c.b16 %v4121, %v4113
  %v6890 = vpack.c.b16 %v4130, %v4122
  %v6891 = vpack.c.b16 %v4131, %v4123
  %v6892 = vpack.c.b16 %v4132, %v4124
  %v6893 = vpack.c.b16 %v4133, %v4125
  %v6894 = vpack.c.b16 %v4134, %v4126
  %v6895 = vpack.c.b16 %v4135, %v4127
  %v6896 = vpack.c.b16 %v4136, %v4128
  %v6897 = vpack.c.b16 %v4137, %v4129
  %v6898 = vpack.c.b16 %v4146, %v4138
  %v6899 = vpack.c.b16 %v4147, %v4139
  %v6900 = vpack.c.b16 %v4148, %v4140
  %v6901 = vpack.c.b16 %v4149, %v4141
  %v6902 = vpack.c.b16 %v4150, %v4142
  %v6903 = vpack.c.b16 %v4151, %v4143
  %v6904 = vpack.c.b16 %v4152, %v4144
  %v6905 = vpack.c.b16 %v4153, %v4145
  %v6906 = vpack.c.b16 %v4162, %v4154
  %v6907 = vpack.c.b16 %v4163, %v4155
  %v6908 = vpack.c.b16 %v4164, %v4156
  %v6909 = vpack.c.b16 %v4165, %v4157
  %v6910 = vpack.c.b16 %v4166, %v4158
  %v6911 = vpack.c.b16 %v4167, %v4159
  %v6912 = vpack.c.b16 %v4168, %v4160
  %v6913 = vpack.c.b16 %v4169, %v4161
  %v6914 = vpack.c.b16 %v4178, %v4170
  %v6915 = vpack.c.b16 %v4179, %v4171
  %v6916 = vpack.c.b16 %v4180, %v4172
  %v6917 = vpack.c.b16 %v4181, %v4173
  %v6918 = vpack.c.b16 %v4182, %v4174
  %v6919 = vpack.c.b16 %v4183, %v4175
  %v6920 = vpack.c.b16 %v4184, %v4176
  %v6921 = vpack.c.b16 %v4185, %v4177
  %v6922 = vpack.c.b16 %v4194, %v4186
  %v6923 = vpack.c.b16 %v4195, %v4187
  %v6924 = vpack.c.b16 %v4196, %v4188
  %v6925 = vpack.c.b16 %v4197, %v4189
  %v6926 = vpack.c.b16 %v4198, %v4190
  %v6927 = vpack.c.b16 %v4199, %v4191
  %v6928 = vpack.c.b16 %v4200, %v4192
  %v6929 = vpack.c.b16 %v4201, %v4193
  %v6930 = vpack.c.b16 %v4210, %v4202
  %v6931 = vpack.c.b16 %v4211, %v4203
  %v6932 = vpack.c.b16 %v4212, %v4204
  %v6933 = vpack.c.b16 %v4213, %v4205
  %v6934 = vpack.c.b16 %v4214, %v4206
  %v6935 = vpack.c.b16 %v4215, %v4207
  %v6936 = vpack.c.b16 %v4216, %v4208
  %v6937 = vpack.c.b16 %v4217, %v4209
  %v6938 = vpack.c.b16 %v4226, %v4218
  %v6939 = vpack.c.b16 %v4227, %v4219
  %v6940 = vpack.c.b16 %v4228, %v4220
  %v6941 = vpack.c.b16 %v4229, %v4221
  %v6942 = vpack.c.b16 %v4230, %v4222
  %v6943 = vpack.c.b16 %v4231, %v4223
  %v6944 = vpack.c.b16 %v4232, %v4224
  %v6945 = vpack.c.b16 %v4233, %v4225
  %v6946 = vpack.c.b16 %v4242, %v4234
  %v6947 = vpack.c.b16 %v4243, %v4235
  %v6948 = vpack.c.b16 %v4244, %v4236
  %v6949 = vpack.c.b16 %v4245, %v4237
  %v6950 = vpack.c.b16 %v4246, %v4238
  %v6951 = vpack.c.b16 %v4247, %v4239
  %v6952 = vpack.c.b16 %v4248, %v4240
  %v6953 = vpack.c.b16 %v4249, %v4241
  %v6954 = vpack.c.b16 %v4258, %v4250
  %v6955 = vpack.c.b16 %v4259, %v4251
  %v6956 = vpack.c.b16 %v4260, %v4252
  %v6957 = vpack.c.b16 %v4261, %v4253
  %v6958 = vpack.c.b16 %v4262, %v4254
  %v6959 = vpack.c.b16 %v4263, %v4255
  %v6960 = vpack.c.b16 %v4264, %v4256
  %v6961 = vpack.c.b16 %v4265, %v4257
  %v6962 = vpack.c.b16 %v4274, %v4266
  %v6963 = vpack.c.b16 %v4275, %v4267
  %v6964 = vpack.c.b16 %v4276, %v4268
  %v6965 = vpack.c.b16 %v4277, %v4269
  %v6966 = vpack.c.b16 %v4278, %v4270
  %v6967 = vpack.c.b16 %v4279, %v4271
  %v6968 = vpack.c.b16 %v4280, %v4272
  %v6969 = vpack.c.b16 %v4281, %v4273
  %v6970 = vpack.c.b16 %v4290, %v4282
  %v6971 = vpack.c.b16 %v4291, %v4283
  %v6972 = vpack.c.b16 %v4292, %v4284
  %v6973 = vpack.c.b16 %v4293, %v4285
  %v6974 = vpack.c.b16 %v4294, %v4286
  %v6975 = vpack.c.b16 %v4295, %v4287
  %v6976 = vpack.c.b16 %v4296, %v4288
  %v6977 = vpack.c.b16 %v4297, %v4289
  %v6978 = vpack.c.b16 %v4306, %v4298
  %v6979 = vpack.c.b16 %v4307, %v4299
  %v6980 = vpack.c.b16 %v4308, %v4300
  %v6981 = vpack.c.b16 %v4309, %v4301
  %v6982 = vpack.c.b16 %v4310, %v4302
  %v6983 = vpack.c.b16 %v4311, %v4303
  %v6984 = vpack.c.b16 %v4312, %v4304
  %v6985 = vpack.c.b16 %v4313, %v4305
  %v6986 = vpack.c.b16 %v4322, %v4314
  %v6987 = vpack.c.b16 %v4323, %v4315
  %v6988 = vpack.c.b16 %v4324, %v4316
  %v6989 = vpack.c.b16 %v4325, %v4317
  %v6990 = vpack.c.b16 %v4326, %v4318
  %v6991 = vpack.c.b16 %v4327, %v4319
  %v6992 = vpack.c.b16 %v4328, %v4320
  %v6993 = vpack.c.b16 %v4329, %v4321
  %v6994 = vpack.c.b16 %v4338, %v4330
  %v6995 = vpack.c.b16 %v4339, %v4331
  %v6996 = vpack.c.b16 %v4340, %v4332
  %v6997 = vpack.c.b16 %v4341, %v4333
  %v6998 = vpack.c.b16 %v4342, %v4334
  %v6999 = vpack.c.b16 %v4343, %v4335
  %v7000 = vpack.c.b16 %v4344, %v4336
  %v7001 = vpack.c.b16 %v4345, %v4337
  %v7002 = vpack.c.b16 %v4354, %v4346
  %v7003 = vpack.c.b16 %v4355, %v4347
  %v7004 = vpack.c.b16 %v4356, %v4348
  %v7005 = vpack.c.b16 %v4357, %v4349
  %v7006 = vpack.c.b16 %v4358, %v4350
  %v7007 = vpack.c.b16 %v4359, %v4351
  %v7008 = vpack.c.b16 %v4360, %v4352
  %v7009 = vpack.c.b16 %v4361, %v4353
  %v7010 = vpack.c.b16 %v4370, %v4362
  %v7011 = vpack.c.b16 %v4371, %v4363
  %v7012 = vpack.c.b16 %v4372, %v4364
  %v7013 = vpack.c.b16 %v4373, %v4365
  %v7014 = vpack.c.b16 %v4374, %v4366
  %v7015 = vpack.c.b16 %v4375, %v4367
  %v7016 = vpack.c.b16 %v4376, %v4368
  %v7017 = vpack.c.b16 %v4377, %v4369
  %v7018 = vpack.c.b16 %v4386, %v4378
  %v7019 = vpack.c.b16 %v4387, %v4379
  %v7020 = vpack.c.b16 %v4388, %v4380
  %v7021 = vpack.c.b16 %v4389, %v4381
  %v7022 = vpack.c.b16 %v4390, %v4382
  %v7023 = vpack.c.b16 %v4391, %v4383
  %v7024 = vpack.c.b16 %v4392, %v4384
  %v7025 = vpack.c.b16 %v4393, %v4385
  %v7026 = vpack.c.b16 %v4402, %v4394
  %v7027 = vpack.c.b16 %v4403, %v4395
  %v7028 = vpack.c.b16 %v4404, %v4396
  %v7029 = vpack.c.b16 %v4405, %v4397
  %v7030 = vpack.c.b16 %v4406, %v4398
  %v7031 = vpack.c.b16 %v4407, %v4399
  %v7032 = vpack.c.b16 %v4408, %v4400
  %v7033 = vpack.c.b16 %v4409, %v4401
  %v7034 = vpack.c.b16 %v4418, %v4410
  %v7035 = vpack.c.b16 %v4419, %v4411
  %v7036 = vpack.c.b16 %v4420, %v4412
  %v7037 = vpack.c.b16 %v4421, %v4413
  %v7038 = vpack.c.b16 %v4422, %v4414
  %v7039 = vpack.c.b16 %v4423, %v4415
  %v7040 = vpack.c.b16 %v4424, %v4416
  %v7041 = vpack.c.b16 %v4425, %v4417
  %v7042 = vpack.c.b16 %v4434, %v4426
  %v7043 = vpack.c.b16 %v4435, %v4427
  %v7044 = vpack.c.b16 %v4436, %v4428
  %v7045 = vpack.c.b16 %v4437, %v4429
  %v7046 = vpack.c.b16 %v4438, %v4430
  %v7047 = vpack.c.b16 %v4439, %v4431
  %v7048 = vpack.c.b16 %v4440, %v4432
  %v7049 = vpack.c.b16 %v4441, %v4433
  %v7050 = vpack.c.b16 %v4450, %v4442
  %v7051 = vpack.c.b16 %v4451, %v4443
  %v7052 = vpack.c.b16 %v4452, %v4444
  %v7053 = vpack.c.b16 %v4453, %v4445
  %v7054 = vpack.c.b16 %v4454, %v4446
  %v7055 = vpack.c.b16 %v4455, %v4447
  %v7056 = vpack.c.b16 %v4456, %v4448
  %v7057 = vpack.c.b16 %v4457, %v4449
  %v7058 = vpack.c.b16 %v4466, %v4458
  %v7059 = vpack.c.b16 %v4467, %v4459
  %v7060 = vpack.c.b16 %v4468, %v4460
  %v7061 = vpack.c.b16 %v4469, %v4461
  %v7062 = vpack.c.b16 %v4470, %v4462
  %v7063 = vpack.c.b16 %v4471, %v4463
  %v7064 = vpack.c.b16 %v4472, %v4464
  %v7065 = vpack.c.b16 %v4473, %v4465
  %v7066 = vpack.c.b16 %v4482, %v4474
  %v7067 = vpack.c.b16 %v4483, %v4475
  %v7068 = vpack.c.b16 %v4484, %v4476
  %v7069 = vpack.c.b16 %v4485, %v4477
  %v7070 = vpack.c.b16 %v4486, %v4478
  %v7071 = vpack.c.b16 %v4487, %v4479
  %v7072 = vpack.c.b16 %v4488, %v4480
  %v7073 = vpack.c.b16 %v4489, %v4481
  %v7074 = vpack.c.b16 %v4498, %v4490
  %v7075 = vpack.c.b16 %v4499, %v4491
  %v7076 = vpack.c.b16 %v4500, %v4492
  %v7077 = vpack.c.b16 %v4501, %v4493
  %v7078 = vpack.c.b16 %v4502, %v4494
  %v7079 = vpack.c.b16 %v4503, %v4495
  %v7080 = vpack.c.b16 %v4504, %v4496
  %v7081 = vpack.c.b16 %v4505, %v4497
  %v7082 = vpack.c.b16 %v4514, %v4506
  %v7083 = vpack.c.b16 %v4515, %v4507
  %v7084 = vpack.c.b16 %v4516, %v4508
  %v7085 = vpack.c.b16 %v4517, %v4509
  %v7086 = vpack.c.b16 %v4518, %v4510
  %v7087 = vpack.c.b16 %v4519, %v4511
  %v7088 = vpack.c.b16 %v4520, %v4512
  %v7089 = vpack.c.b16 %v4521, %v4513
  %v7090 = vpack.c.b16 %v4530, %v4522
  %v7091 = vpack.c.b16 %v4531, %v4523
  %v7092 = vpack.c.b16 %v4532, %v4524
  %v7093 = vpack.c.b16 %v4533, %v4525
  %v7094 = vpack.c.b16 %v4534, %v4526
  %v7095 = vpack.c.b16 %v4535, %v4527
  %v7096 = vpack.c.b16 %v4536, %v4528
  %v7097 = vpack.c.b16 %v4537, %v4529
  %v7098 = vpack.c.b16 %v4546, %v4538
  %v7099 = vpack.c.b16 %v4547, %v4539
  %v7100 = vpack.c.b16 %v4548, %v4540
  %v7101 = vpack.c.b16 %v4549, %v4541
  %v7102 = vpack.c.b16 %v4550, %v4542
  %v7103 = vpack.c.b16 %v4551, %v4543
  %v7104 = vpack.c.b16 %v4552, %v4544
  %v7105 = vpack.c.b16 %v4553, %v4545
  %v7106 = vpack.c.b16 %v4562, %v4554
  %v7107 = vpack.c.b16 %v4563, %v4555
  %v7108 = vpack.c.b16 %v4564, %v4556
  %v7109 = vpack.c.b16 %v4565, %v4557
  %v7110 = vpack.c.b16 %v4566, %v4558
  %v7111 = vpack.c.b16 %v4567, %v4559
  %v7112 = vpack.c.b16 %v4568, %v4560
  %v7113 = vpack.c.b16 %v4569, %v4561
  %v7114 = vpack.c.b16 %v4578, %v4570
  %v7115 = vpack.c.b16 %v4579, %v4571
  %v7116 = vpack.c.b16 %v4580, %v4572
  %v7117 = vpack.c.b16 %v4581, %v4573
  %v7118 = vpack.c.b16 %v4582, %v4574
  %v7119 = vpack.c.b16 %v4583, %v4575
  %v7120 = vpack.c.b16 %v4584, %v4576
  %v7121 = vpack.c.b16 %v4585, %v4577
  %v7122 = vpack.c.b16 %v4594, %v4586
  %v7123 = vpack.c.b16 %v4595, %v4587
  %v7124 = vpack.c.b16 %v4596, %v4588
  %v7125 = vpack.c.b16 %v4597, %v4589
  %v7126 = vpack.c.b16 %v4598, %v4590
  %v7127 = vpack.c.b16 %v4599, %v4591
  %v7128 = vpack.c.b16 %v4600, %v4592
  %v7129 = vpack.c.b16 %v4601, %v4593
  %v7130 = vpack.c.b16 %v4610, %v4602
  %v7131 = vpack.c.b16 %v4611, %v4603
  %v7132 = vpack.c.b16 %v4612, %v4604
  %v7133 = vpack.c.b16 %v4613, %v4605
  %v7134 = vpack.c.b16 %v4614, %v4606
  %v7135 = vpack.c.b16 %v4615, %v4607
  %v7136 = vpack.c.b16 %v4616, %v4608
  %v7137 = vpack.c.b16 %v4617, %v4609
  %v7138 = vpack.c.b16 %v4626, %v4618
  %v7139 = vpack.c.b16 %v4627, %v4619
  %v7140 = vpack.c.b16 %v4628, %v4620
  %v7141 = vpack.c.b16 %v4629, %v4621
  %v7142 = vpack.c.b16 %v4630, %v4622
  %v7143 = vpack.c.b16 %v4631, %v4623
  %v7144 = vpack.c.b16 %v4632, %v4624
  %v7145 = vpack.c.b16 %v4633, %v4625
  %v7146 = vpack.c.b16 %v4642, %v4634
  %v7147 = vpack.c.b16 %v4643, %v4635
  %v7148 = vpack.c.b16 %v4644, %v4636
  %v7149 = vpack.c.b16 %v4645, %v4637
  %v7150 = vpack.c.b16 %v4646, %v4638
  %v7151 = vpack.c.b16 %v4647, %v4639
  %v7152 = vpack.c.b16 %v4648, %v4640
  %v7153 = vpack.c.b16 %v4649, %v4641
  %v7154 = vpack.c.b16 %v4658, %v4650
  %v7155 = vpack.c.b16 %v4659, %v4651
  %v7156 = vpack.c.b16 %v4660, %v4652
  %v7157 = vpack.c.b16 %v4661, %v4653
  %v7158 = vpack.c.b16 %v4662, %v4654
  %v7159 = vpack.c.b16 %v4663, %v4655
  %v7160 = vpack.c.b16 %v4664, %v4656
  %v7161 = vpack.c.b16 %v4665, %v4657
  %v7162 = vpack.c.b16 %v4674, %v4666
  %v7163 = vpack.c.b16 %v4675, %v4667
  %v7164 = vpack.c.b16 %v4676, %v4668
  %v7165 = vpack.c.b16 %v4677, %v4669
  %v7166 = vpack.c.b16 %v4678, %v4670
  %v7167 = vpack.c.b16 %v4679, %v4671
  %v7168 = vpack.c.b16 %v4680, %v4672
  %v7169 = vpack.c.b16 %v4681, %v4673
  %v7170 = vpack.c.b16 %v4690, %v4682
  %v7171 = vpack.c.b16 %v4691, %v4683
  %v7172 = vpack.c.b16 %v4692, %v4684
  %v7173 = vpack.c.b16 %v4693, %v4685
  %v7174 = vpack.c.b16 %v4694, %v4686
  %v7175 = vpack.c.b16 %v4695, %v4687
  %v7176 = vpack.c.b16 %v4696, %v4688
  %v7177 = vpack.c.b16 %v4697, %v4689
  %v7178 = vpack.c.b16 %v4706, %v4698
  %v7179 = vpack.c.b16 %v4707, %v4699
  %v7180 = vpack.c.b16 %v4708, %v4700
  %v7181 = vpack.c.b16 %v4709, %v4701
  %v7182 = vpack.c.b16 %v4710, %v4702
  %v7183 = vpack.c.b16 %v4711, %v4703
  %v7184 = vpack.c.b16 %v4712, %v4704
  %v7185 = vpack.c.b16 %v4713, %v4705
  %v7186 = vpack.c.b16 %v4722, %v4714
  %v7187 = vpack.c.b16 %v4723, %v4715
  %v7188 = vpack.c.b16 %v4724, %v4716
  %v7189 = vpack.c.b16 %v4725, %v4717
  %v7190 = vpack.c.b16 %v4726, %v4718
  %v7191 = vpack.c.b16 %v4727, %v4719
  %v7192 = vpack.c.b16 %v4728, %v4720
  %v7193 = vpack.c.b16 %v4729, %v4721
  %v7194 = vpack.c.b16 %v4738, %v4730
  %v7195 = vpack.c.b16 %v4739, %v4731
  %v7196 = vpack.c.b16 %v4740, %v4732
  %v7197 = vpack.c.b16 %v4741, %v4733
  %v7198 = vpack.c.b16 %v4742, %v4734
  %v7199 = vpack.c.b16 %v4743, %v4735
  %v7200 = vpack.c.b16 %v4744, %v4736
  %v7201 = vpack.c.b16 %v4745, %v4737
  %v7202 = vpack.c.b16 %v4754, %v4746
  %v7203 = vpack.c.b16 %v4755, %v4747
  %v7204 = vpack.c.b16 %v4756, %v4748
  %v7205 = vpack.c.b16 %v4757, %v4749
  %v7206 = vpack.c.b16 %v4758, %v4750
  %v7207 = vpack.c.b16 %v4759, %v4751
  %v7208 = vpack.c.b16 %v4760, %v4752
  %v7209 = vpack.c.b16 %v4761, %v4753
  %v7210 = vpack.c.b16 %v4770, %v4762
  %v7211 = vpack.c.b16 %v4771, %v4763
  %v7212 = vpack.c.b16 %v4772, %v4764
  %v7213 = vpack.c.b16 %v4773, %v4765
  %v7214 = vpack.c.b16 %v4774, %v4766
  %v7215 = vpack.c.b16 %v4775, %v4767
  %v7216 = vpack.c.b16 %v4776, %v4768
  %v7217 = vpack.c.b16 %v4777, %v4769
  %v7218 = vpack.c.b16 %v4786, %v4778
  %v7219 = vpack.c.b16 %v4787, %v4779
  %v7220 = vpack.c.b16 %v4788, %v4780
  %v7221 = vpack.c.b16 %v4789, %v4781
  %v7222 = vpack.c.b16 %v4790, %v4782
  %v7223 = vpack.c.b16 %v4791, %v4783
  %v7224 = vpack.c.b16 %v4792, %v4784
  %v7225 = vpack.c.b16 %v4793, %v4785
  %v7226 = vpack.c.b16 %v4802, %v4794
  %v7227 = vpack.c.b16 %v4803, %v4795
  %v7228 = vpack.c.b16 %v4804, %v4796
  %v7229 = vpack.c.b16 %v4805, %v4797
  %v7230 = vpack.c.b16 %v4806, %v4798
  %v7231 = vpack.c.b16 %v4807, %v4799
  %v7232 = vpack.c.b16 %v4808, %v4800
  %v7233 = vpack.c.b16 %v4809, %v4801
  %v7234 = vpack.c.b16 %v4818, %v4810
  %v7235 = vpack.c.b16 %v4819, %v4811
  %v7236 = vpack.c.b16 %v4820, %v4812
  %v7237 = vpack.c.b16 %v4821, %v4813
  %v7238 = vpack.c.b16 %v4822, %v4814
  %v7239 = vpack.c.b16 %v4823, %v4815
  %v7240 = vpack.c.b16 %v4824, %v4816
  %v7241 = vpack.c.b16 %v4825, %v4817
  %v7242 = vpack.c.b16 %v4834, %v4826
  %v7243 = vpack.c.b16 %v4835, %v4827
  %v7244 = vpack.c.b16 %v4836, %v4828
  %v7245 = vpack.c.b16 %v4837, %v4829
  %v7246 = vpack.c.b16 %v4838, %v4830
  %v7247 = vpack.c.b16 %v4839, %v4831
  %v7248 = vpack.c.b16 %v4840, %v4832
  %v7249 = vpack.c.b16 %v4841, %v4833
  %v7250 = vpack.c.b16 %v4850, %v4842
  %v7251 = vpack.c.b16 %v4851, %v4843
  %v7252 = vpack.c.b16 %v4852, %v4844
  %v7253 = vpack.c.b16 %v4853, %v4845
  %v7254 = vpack.c.b16 %v4854, %v4846
  %v7255 = vpack.c.b16 %v4855, %v4847
  %v7256 = vpack.c.b16 %v4856, %v4848
  %v7257 = vpack.c.b16 %v4857, %v4849
  %v7258 = vpack.c.b16 %v4866, %v4858
  %v7259 = vpack.c.b16 %v4867, %v4859
  %v7260 = vpack.c.b16 %v4868, %v4860
  %v7261 = vpack.c.b16 %v4869, %v4861
  %v7262 = vpack.c.b16 %v4870, %v4862
  %v7263 = vpack.c.b16 %v4871, %v4863
  %v7264 = vpack.c.b16 %v4872, %v4864
  %v7265 = vpack.c.b16 %v4873, %v4865
  %v7266 = vpack.c.b16 %v4882, %v4874
  %v7267 = vpack.c.b16 %v4883, %v4875
  %v7268 = vpack.c.b16 %v4884, %v4876
  %v7269 = vpack.c.b16 %v4885, %v4877
  %v7270 = vpack.c.b16 %v4886, %v4878
  %v7271 = vpack.c.b16 %v4887, %v4879
  %v7272 = vpack.c.b16 %v4888, %v4880
  %v7273 = vpack.c.b16 %v4889, %v4881
  %v7274 = vpack.c.b16 %v4898, %v4890
  %v7275 = vpack.c.b16 %v4899, %v4891
  %v7276 = vpack.c.b16 %v4900, %v4892
  %v7277 = vpack.c.b16 %v4901, %v4893
  %v7278 = vpack.c.b16 %v4902, %v4894
  %v7279 = vpack.c.b16 %v4903, %v4895
  %v7280 = vpack.c.b16 %v4904, %v4896
  %v7281 = vpack.c.b16 %v4905, %v4897
  %v7282 = vpack.c.b16 %v4914, %v4906
  %v7283 = vpack.c.b16 %v4915, %v4907
  %v7284 = vpack.c.b16 %v4916, %v4908
  %v7285 = vpack.c.b16 %v4917, %v4909
  %v7286 = vpack.c.b16 %v4918, %v4910
  %v7287 = vpack.c.b16 %v4919, %v4911
  %v7288 = vpack.c.b16 %v4920, %v4912
  %v7289 = vpack.c.b16 %v4921, %v4913
  %v7290 = vpack.c.b16 %v4930, %v4922
  %v7291 = vpack.c.b16 %v4931, %v4923
  %v7292 = vpack.c.b16 %v4932, %v4924
  %v7293 = vpack.c.b16 %v4933, %v4925
  %v7294 = vpack.c.b16 %v4934, %v4926
  %v7295 = vpack.c.b16 %v4935, %v4927
  %v7296 = vpack.c.b16 %v4936, %v4928
  %v7297 = vpack.c.b16 %v4937, %v4929
  %v7298 = vpack.c.b16 %v4946, %v4938
  %v7299 = vpack.c.b16 %v4947, %v4939
  %v7300 = vpack.c.b16 %v4948, %v4940
  %v7301 = vpack.c.b16 %v4949, %v4941
  %v7302 = vpack.c.b16 %v4950, %v4942
  %v7303 = vpack.c.b16 %v4951, %v4943
  %v7304 = vpack.c.b16 %v4952, %v4944
  %v7305 = vpack.c.b16 %v4953, %v4945
  %v7306 = vpack.c.b16 %v4962, %v4954
  %v7307 = vpack.c.b16 %v4963, %v4955
  %v7308 = vpack.c.b16 %v4964, %v4956
  %v7309 = vpack.c.b16 %v4965, %v4957
  %v7310 = vpack.c.b16 %v4966, %v4958
  %v7311 = vpack.c.b16 %v4967, %v4959
  %v7312 = vpack.c.b16 %v4968, %v4960
  %v7313 = vpack.c.b16 %v4969, %v4961
  %v7314 = vpack.c.b16 %v4978, %v4970
  %v7315 = vpack.c.b16 %v4979, %v4971
  %v7316 = vpack.c.b16 %v4980, %v4972
  %v7317 = vpack.c.b16 %v4981, %v4973
  %v7318 = vpack.c.b16 %v4982, %v4974
  %v7319 = vpack.c.b16 %v4983, %v4975
  %v7320 = vpack.c.b16 %v4984, %v4976
  %v7321 = vpack.c.b16 %v4985, %v4977
  %v7322 = vpack.c.b16 %v4994, %v4986
  %v7323 = vpack.c.b16 %v4995, %v4987
  %v7324 = vpack.c.b16 %v4996, %v4988
  %v7325 = vpack.c.b16 %v4997, %v4989
  %v7326 = vpack.c.b16 %v4998, %v4990
  %v7327 = vpack.c.b16 %v4999, %v4991
  %v7328 = vpack.c.b16 %v5000, %v4992
  %v7329 = vpack.c.b16 %v5001, %v4993
  %v7330 = vpack.c.b16 %v5010, %v5002
  %v7331 = vpack.c.b16 %v5011, %v5003
  %v7332 = vpack.c.b16 %v5012, %v5004
  %v7333 = vpack.c.b16 %v5013, %v5005
  %v7334 = vpack.c.b16 %v5014, %v5006
  %v7335 = vpack.c.b16 %v5015, %v5007
  %v7336 = vpack.c.b16 %v5016, %v5008
  %v7337 = vpack.c.b16 %v5017, %v5009
  %v7338 = vpack.c.b16 %v5026, %v5018
  %v7339 = vpack.c.b16 %v5027, %v5019
  %v7340 = vpack.c.b16 %v5028, %v5020
  %v7341 = vpack.c.b16 %v5029, %v5021
  %v7342 = vpack.c.b16 %v5030, %v5022
  %v7343 = vpack.c.b16 %v5031, %v5023
  %v7344 = vpack.c.b16 %v5032, %v5024
  %v7345 = vpack.c.b16 %v5033, %v5025
  %v7346 = vpack.c.b16 %v5042, %v5034
  %v7347 = vpack.c.b16 %v5043, %v5035
  %v7348 = vpack.c.b16 %v5044, %v5036
  %v7349 = vpack.c.b16 %v5045, %v5037
  %v7350 = vpack.c.b16 %v5046, %v5038
  %v7351 = vpack.c.b16 %v5047, %v5039
  %v7352 = vpack.c.b16 %v5048, %v5040
  %v7353 = vpack.c.b16 %v5049, %v5041
  %v7354 = vpack.c.b16 %v5058, %v5050
  %v7355 = vpack.c.b16 %v5059, %v5051
  %v7356 = vpack.c.b16 %v5060, %v5052
  %v7357 = vpack.c.b16 %v5061, %v5053
  %v7358 = vpack.c.b16 %v5062, %v5054
  %v7359 = vpack.c.b16 %v5063, %v5055
  %v7360 = vpack.c.b16 %v5064, %v5056
  %v7361 = vpack.c.b16 %v5065, %v5057
  %v7362 = vpack.c.b16 %v5074, %v5066
  %v7363 = vpack.c.b16 %v5075, %v5067
  %v7364 = vpack.c.b16 %v5076, %v5068
  %v7365 = vpack.c.b16 %v5077, %v5069
  %v7366 = vpack.c.b16 %v5078, %v5070
  %v7367 = vpack.c.b16 %v5079, %v5071
  %v7368 = vpack.c.b16 %v5080, %v5072
  %v7369 = vpack.c.b16 %v5081, %v5073
  %v7370 = vpack.c.b16 %v5090, %v5082
  %v7371 = vpack.c.b16 %v5091, %v5083
  %v7372 = vpack.c.b16 %v5092, %v5084
  %v7373 = vpack.c.b16 %v5093, %v5085
  %v7374 = vpack.c.b16 %v5094, %v5086
  %v7375 = vpack.c.b16 %v5095, %v5087
  %v7376 = vpack.c.b16 %v5096, %v5088
  %v7377 = vpack.c.b16 %v5097, %v5089
  %v7378 = vpack.c.b16 %v5106, %v5098
  %v7379 = vpack.c.b16 %v5107, %v5099
  %v7380 = vpack.c.b16 %v5108, %v5100
  %v7381 = vpack.c.b16 %v5109, %v5101
  %v7382 = vpack.c.b16 %v5110, %v5102
  %v7383 = vpack.c.b16 %v5111, %v5103
  %v7384 = vpack.c.b16 %v5112, %v5104
  %v7385 = vpack.c.b16 %v5113, %v5105
  %v7386 = vpack.c.b16 %v5122, %v5114
  %v7387 = vpack.c.b16 %v5123, %v5115
  %v7388 = vpack.c.b16 %v5124, %v5116
  %v7389 = vpack.c.b16 %v5125, %v5117
  %v7390 = vpack.c.b16 %v5126, %v5118
  %v7391 = vpack.c.b16 %v5127, %v5119
  %v7392 = vpack.c.b16 %v5128, %v5120
  %v7393 = vpack.c.b16 %v5129, %v5121
  %v7394 = vpack.c.b16 %v5138, %v5130
  %v7395 = vpack.c.b16 %v5139, %v5131
  %v7396 = vpack.c.b16 %v5140, %v5132
  %v7397 = vpack.c.b16 %v5141, %v5133
  %v7398 = vpack.c.b16 %v5142, %v5134
  %v7399 = vpack.c.b16 %v5143, %v5135
  %v7400 = vpack.c.b16 %v5144, %v5136
  %v7401 = vpack.c.b16 %v5145, %v5137
  %v7402 = vpack.c.b16 %v5154, %v5146
  %v7403 = vpack.c.b16 %v5155, %v5147
  %v7404 = vpack.c.b16 %v5156, %v5148
  %v7405 = vpack.c.b16 %v5157, %v5149
  %v7406 = vpack.c.b16 %v5158, %v5150
  %v7407 = vpack.c.b16 %v5159, %v5151
  %v7408 = vpack.c.b16 %v5160, %v5152
  %v7409 = vpack.c.b16 %v5161, %v5153
  %v7410 = vpack.c.b16 %v5170, %v5162
  %v7411 = vpack.c.b16 %v5171, %v5163
  %v7412 = vpack.c.b16 %v5172, %v5164
  %v7413 = vpack.c.b16 %v5173, %v5165
  %v7414 = vpack.c.b16 %v5174, %v5166
  %v7415 = vpack.c.b16 %v5175, %v5167
  %v7416 = vpack.c.b16 %v5176, %v5168
  %v7417 = vpack.c.b16 %v5177, %v5169
  %v7418 = vpack.c.b16 %v5186, %v5178
  %v7419 = vpack.c.b16 %v5187, %v5179
  %v7420 = vpack.c.b16 %v5188, %v5180
  %v7421 = vpack.c.b16 %v5189, %v5181
  %v7422 = vpack.c.b16 %v5190, %v5182
  %v7423 = vpack.c.b16 %v5191, %v5183
  %v7424 = vpack.c.b16 %v5192, %v5184
  %v7425 = vpack.c.b16 %v5193, %v5185
  %v7426 = vpack.c.b16 %v5202, %v5194
  %v7427 = vpack.c.b16 %v5203, %v5195
  %v7428 = vpack.c.b16 %v5204, %v5196
  %v7429 = vpack.c.b16 %v5205, %v5197
  %v7430 = vpack.c.b16 %v5206, %v5198
  %v7431 = vpack.c.b16 %v5207, %v5199
  %v7432 = vpack.c.b16 %v5208, %v5200
  %v7433 = vpack.c.b16 %v5209, %v5201
  %v7434 = vpack.c.b16 %v5218, %v5210
  %v7435 = vpack.c.b16 %v5219, %v5211
  %v7436 = vpack.c.b16 %v5220, %v5212
  %v7437 = vpack.c.b16 %v5221, %v5213
  %v7438 = vpack.c.b16 %v5222, %v5214
  %v7439 = vpack.c.b16 %v5223, %v5215
  %v7440 = vpack.c.b16 %v5224, %v5216
  %v7441 = vpack.c.b16 %v5225, %v5217
  %v7442 = vpack.c.b16 %v5234, %v5226
  %v7443 = vpack.c.b16 %v5235, %v5227
  %v7444 = vpack.c.b16 %v5236, %v5228
  %v7445 = vpack.c.b16 %v5237, %v5229
  %v7446 = vpack.c.b16 %v5238, %v5230
  %v7447 = vpack.c.b16 %v5239, %v5231
  %v7448 = vpack.c.b16 %v5240, %v5232
  %v7449 = vpack.c.b16 %v5241, %v5233
  %v7450 = vpack.c.b16 %v5250, %v5242
  %v7451 = vpack.c.b16 %v5251, %v5243
  %v7452 = vpack.c.b16 %v5252, %v5244
  %v7453 = vpack.c.b16 %v5253, %v5245
  %v7454 = vpack.c.b16 %v5254, %v5246
  %v7455 = vpack.c.b16 %v5255, %v5247
  %v7456 = vpack.c.b16 %v5256, %v5248
  %v7457 = vpack.c.b16 %v5257, %v5249
  %v7458 = vpack.c.b16 %v5266, %v5258
  %v7459 = vpack.c.b16 %v5267, %v5259
  %v7460 = vpack.c.b16 %v5268, %v5260
  %v7461 = vpack.c.b16 %v5269, %v5261
  %v7462 = vpack.c.b16 %v5270, %v5262
  %v7463 = vpack.c.b16 %v5271, %v5263
  %v7464 = vpack.c.b16 %v5272, %v5264
  %v7465 = vpack.c.b16 %v5273, %v5265
  %v7466 = vpack.c.b16 %v5282, %v5274
  %v7467 = vpack.c.b16 %v5283, %v5275
  %v7468 = vpack.c.b16 %v5284, %v5276
  %v7469 = vpack.c.b16 %v5285, %v5277
  %v7470 = vpack.c.b16 %v5286, %v5278
  %v7471 = vpack.c.b16 %v5287, %v5279
  %v7472 = vpack.c.b16 %v5288, %v5280
  %v7473 = vpack.c.b16 %v5289, %v5281
  %v7474 = vpack.c.b16 %v5298, %v5290
  %v7475 = vpack.c.b16 %v5299, %v5291
  %v7476 = vpack.c.b16 %v5300, %v5292
  %v7477 = vpack.c.b16 %v5301, %v5293
  %v7478 = vpack.c.b16 %v5302, %v5294
  %v7479 = vpack.c.b16 %v5303, %v5295
  %v7480 = vpack.c.b16 %v5304, %v5296
  %v7481 = vpack.c.b16 %v5305, %v5297
  %v7482 = vpack.c.b16 %v5314, %v5306
  %v7483 = vpack.c.b16 %v5315, %v5307
  %v7484 = vpack.c.b16 %v5316, %v5308
  %v7485 = vpack.c.b16 %v5317, %v5309
  %v7486 = vpack.c.b16 %v5318, %v5310
  %v7487 = vpack.c.b16 %v5319, %v5311
  %v7488 = vpack.c.b16 %v5320, %v5312
  %v7489 = vpack.c.b16 %v5321, %v5313
  %v7490 = vpack.c.b16 %v5330, %v5322
  %v7491 = vpack.c.b16 %v5331, %v5323
  %v7492 = vpack.c.b16 %v5332, %v5324
  %v7493 = vpack.c.b16 %v5333, %v5325
  %v7494 = vpack.c.b16 %v5334, %v5326
  %v7495 = vpack.c.b16 %v5335, %v5327
  %v7496 = vpack.c.b16 %v5336, %v5328
  %v7497 = vpack.c.b16 %v5337, %v5329
  %v7498 = vpack.c.b16 %v5346, %v5338
  %v7499 = vpack.c.b16 %v5347, %v5339
  %v7500 = vpack.c.b16 %v5348, %v5340
  %v7501 = vpack.c.b16 %v5349, %v5341
  %v7502 = vpack.c.b16 %v5350, %v5342
  %v7503 = vpack.c.b16 %v5351, %v5343
  %v7504 = vpack.c.b16 %v5352, %v5344
  %v7505 = vpack.c.b16 %v5353, %v5345
  %v7506 = vpack.c.b16 %v5362, %v5354
  %v7507 = vpack.c.b16 %v5363, %v5355
  %v7508 = vpack.c.b16 %v5364, %v5356
  %v7509 = vpack.c.b16 %v5365, %v5357
  %v7510 = vpack.c.b16 %v5366, %v5358
  %v7511 = vpack.c.b16 %v5367, %v5359
  %v7512 = vpack.c.b16 %v5368, %v5360
  %v7513 = vpack.c.b16 %v5369, %v5361
  %v7514 = vpack.c.b16 %v5378, %v5370
  %v7515 = vpack.c.b16 %v5379, %v5371
  %v7516 = vpack.c.b16 %v5380, %v5372
  %v7517 = vpack.c.b16 %v5381, %v5373
  %v7518 = vpack.c.b16 %v5382, %v5374
  %v7519 = vpack.c.b16 %v5383, %v5375
  %v7520 = vpack.c.b16 %v5384, %v5376
  %v7521 = vpack.c.b16 %v5385, %v5377
  %v7522 = vpack.c.b16 %v5394, %v5386
  %v7523 = vpack.c.b16 %v5395, %v5387
  %v7524 = vpack.c.b16 %v5396, %v5388
  %v7525 = vpack.c.b16 %v5397, %v5389
  %v7526 = vpack.c.b16 %v5398, %v5390
  %v7527 = vpack.c.b16 %v5399, %v5391
  %v7528 = vpack.c.b16 %v5400, %v5392
  %v7529 = vpack.c.b16 %v5401, %v5393
  %v7530 = vpack.c.b16 %v5410, %v5402
  %v7531 = vpack.c.b16 %v5411, %v5403
  %v7532 = vpack.c.b16 %v5412, %v5404
  %v7533 = vpack.c.b16 %v5413, %v5405
  %v7534 = vpack.c.b16 %v5414, %v5406
  %v7535 = vpack.c.b16 %v5415, %v5407
  %v7536 = vpack.c.b16 %v5416, %v5408
  %v7537 = vpack.c.b16 %v5417, %v5409
  %v7538 = vpack.c.b16 %v5426, %v5418
  %v7539 = vpack.c.b16 %v5427, %v5419
  %v7540 = vpack.c.b16 %v5428, %v5420
  %v7541 = vpack.c.b16 %v5429, %v5421
  %v7542 = vpack.c.b16 %v5430, %v5422
  %v7543 = vpack.c.b16 %v5431, %v5423
  %v7544 = vpack.c.b16 %v5432, %v5424
  %v7545 = vpack.c.b16 %v5433, %v5425
  %v7546 = vpack.c.b16 %v5442, %v5434
  %v7547 = vpack.c.b16 %v5443, %v5435
  %v7548 = vpack.c.b16 %v5444, %v5436
  %v7549 = vpack.c.b16 %v5445, %v5437
  %v7550 = vpack.c.b16 %v5446, %v5438
  %v7551 = vpack.c.b16 %v5447, %v5439
  %v7552 = vpack.c.b16 %v5448, %v5440
  %v7553 = vpack.c.b16 %v5449, %v5441
  %v7554 = vpack.c.b16 %v5458, %v5450
  %v7555 = vpack.c.b16 %v5459, %v5451
  %v7556 = vpack.c.b16 %v5460, %v5452
  %v7557 = vpack.c.b16 %v5461, %v5453
  %v7558 = vpack.c.b16 %v5462, %v5454
  %v7559 = vpack.c.b16 %v5463, %v5455
  %v7560 = vpack.c.b16 %v5464, %v5456
  %v7561 = vpack.c.b16 %v5465, %v5457
  %v7562 = vpack.c.b16 %v5474, %v5466
  %v7563 = vpack.c.b16 %v5475, %v5467
  %v7564 = vpack.c.b16 %v5476, %v5468
  %v7565 = vpack.c.b16 %v5477, %v5469
  %v7566 = vpack.c.b16 %v5478, %v5470
  %v7567 = vpack.c.b16 %v5479, %v5471
  %v7568 = vpack.c.b16 %v5480, %v5472
  %v7569 = vpack.c.b16 %v5481, %v5473
  %v7570 = vpack.c.b16 %v5490, %v5482
  %v7571 = vpack.c.b16 %v5491, %v5483
  %v7572 = vpack.c.b16 %v5492, %v5484
  %v7573 = vpack.c.b16 %v5493, %v5485
  %v7574 = vpack.c.b16 %v5494, %v5486
  %v7575 = vpack.c.b16 %v5495, %v5487
  %v7576 = vpack.c.b16 %v5496, %v5488
  %v7577 = vpack.c.b16 %v5497, %v5489
  %v7578 = vpack.c.b16 %v5506, %v5498
  %v7579 = vpack.c.b16 %v5507, %v5499
  %v7580 = vpack.c.b16 %v5508, %v5500
  %v7581 = vpack.c.b16 %v5509, %v5501
  %v7582 = vpack.c.b16 %v5510, %v5502
  %v7583 = vpack.c.b16 %v5511, %v5503
  %v7584 = vpack.c.b16 %v5512, %v5504
  %v7585 = vpack.c.b16 %v5513, %v5505
  %v7586 = vpack.c.b16 %v5522, %v5514
  %v7587 = vpack.c.b16 %v5523, %v5515
  %v7588 = vpack.c.b16 %v5524, %v5516
  %v7589 = vpack.c.b16 %v5525, %v5517
  %v7590 = vpack.c.b16 %v5526, %v5518
  %v7591 = vpack.c.b16 %v5527, %v5519
  %v7592 = vpack.c.b16 %v5528, %v5520
  %v7593 = vpack.c.b16 %v5529, %v5521
  %v7594 = vpack.c.b16 %v5538, %v5530
  %v7595 = vpack.c.b16 %v5539, %v5531
  %v7596 = vpack.c.b16 %v5540, %v5532
  %v7597 = vpack.c.b16 %v5541, %v5533
  %v7598 = vpack.c.b16 %v5542, %v5534
  %v7599 = vpack.c.b16 %v5543, %v5535
  %v7600 = vpack.c.b16 %v5544, %v5536
  %v7601 = vpack.c.b16 %v5545, %v5537
  %v7602 = vpack.c.b16 %v5554, %v5546
  %v7603 = vpack.c.b16 %v5555, %v5547
  %v7604 = vpack.c.b16 %v5556, %v5548
  %v7605 = vpack.c.b16 %v5557, %v5549
  %v7606 = vpack.c.b16 %v5558, %v5550
  %v7607 = vpack.c.b16 %v5559, %v5551
  %v7608 = vpack.c.b16 %v5560, %v5552
  %v7609 = vpack.c.b16 %v5561, %v5553
  %v7610 = vpack.c.b16 %v5570, %v5562
  %v7611 = vpack.c.b16 %v5571, %v5563
  %v7612 = vpack.c.b16 %v5572, %v5564
  %v7613 = vpack.c.b16 %v5573, %v5565
  %v7614 = vpack.c.b16 %v5574, %v5566
  %v7615 = vpack.c.b16 %v5575, %v5567
  %v7616 = vpack.c.b16 %v5576, %v5568
  %v7617 = vpack.c.b16 %v5577, %v5569
  %v7618 = vpack.c.b16 %v5586, %v5578
  %v7619 = vpack.c.b16 %v5587, %v5579
  %v7620 = vpack.c.b16 %v5588, %v5580
  %v7621 = vpack.c.b16 %v5589, %v5581
  %v7622 = vpack.c.b16 %v5590, %v5582
  %v7623 = vpack.c.b16 %v5591, %v5583
  %v7624 = vpack.c.b16 %v5592, %v5584
  %v7625 = vpack.c.b16 %v5593, %v5585
  %v7626 = vpack.c.b16 %v5602, %v5594
  %v7627 = vpack.c.b16 %v5603, %v5595
  %v7628 = vpack.c.b16 %v5604, %v5596
  %v7629 = vpack.c.b16 %v5605, %v5597
  %v7630 = vpack.c.b16 %v5606, %v5598
  %v7631 = vpack.c.b16 %v5607, %v5599
  %v7632 = vpack.c.b16 %v5608, %v5600
  %v7633 = vpack.c.b16 %v5609, %v5601
  %v7634 = vpack.c.b16 %v5618, %v5610
  %v7635 = vpack.c.b16 %v5619, %v5611
  %v7636 = vpack.c.b16 %v5620, %v5612
  %v7637 = vpack.c.b16 %v5621, %v5613
  %v7638 = vpack.c.b16 %v5622, %v5614
  %v7639 = vpack.c.b16 %v5623, %v5615
  %v7640 = vpack.c.b16 %v5624, %v5616
  %v7641 = vpack.c.b16 %v5625, %v5617
  %v7642 = vpack.c.b16 %v5634, %v5626
  %v7643 = vpack.c.b16 %v5635, %v5627
  %v7644 = vpack.c.b16 %v5636, %v5628
  %v7645 = vpack.c.b16 %v5637, %v5629
  %v7646 = vpack.c.b16 %v5638, %v5630
  %v7647 = vpack.c.b16 %v5639, %v5631
  %v7648 = vpack.c.b16 %v5640, %v5632
  %v7649 = vpack.c.b16 %v5641, %v5633
  %v7650 = vpack.c.b16 %v5650, %v5642
  %v7651 = vpack.c.b16 %v5651, %v5643
  %v7652 = vpack.c.b16 %v5652, %v5644
  %v7653 = vpack.c.b16 %v5653, %v5645
  %v7654 = vpack.c.b16 %v5654, %v5646
  %v7655 = vpack.c.b16 %v5655, %v5647
  %v7656 = vpack.c.b16 %v5656, %v5648
  %v7657 = vpack.c.b16 %v5657, %v5649
  %v7658 = vpack.c.b16 %v5666, %v5658
  %v7659 = vpack.c.b16 %v5667, %v5659
  %v7660 = vpack.c.b16 %v5668, %v5660
  %v7661 = vpack.c.b16 %v5669, %v5661
  %v7662 = vpack.c.b16 %v5670, %v5662
  %v7663 = vpack.c.b16 %v5671, %v5663
  %v7664 = vpack.c.b16 %v5672, %v5664
  %v7665 = vpack.c.b16 %v5673, %v5665
  %v7666 = vpack.c.b16 %v5682, %v5674
  %v7667 = vpack.c.b16 %v5683, %v5675
  %v7668 = vpack.c.b16 %v5684, %v5676
  %v7669 = vpack.c.b16 %v5685, %v5677
  %v7670 = vpack.c.b16 %v5686, %v5678
  %v7671 = vpack.c.b16 %v5687, %v5679
  %v7672 = vpack.c.b16 %v5688, %v5680
  %v7673 = vpack.c.b16 %v5689, %v5681
  %v7674 = vpack.c.b16 %v5698, %v5690
  %v7675 = vpack.c.b16 %v5699, %v5691
  %v7676 = vpack.c.b16 %v5700, %v5692
  %v7677 = vpack.c.b16 %v5701, %v5693
  %v7678 = vpack.c.b16 %v5702, %v5694
  %v7679 = vpack.c.b16 %v5703, %v5695
  %v7680 = vpack.c.b16 %v5704, %v5696
  %v7681 = vpack.c.b16 %v5705, %v5697
  %v7682 = vpack.c.b16 %v5714, %v5706
  %v7683 = vpack.c.b16 %v5715, %v5707
  %v7684 = vpack.c.b16 %v5716, %v5708
  %v7685 = vpack.c.b16 %v5717, %v5709
  %v7686 = vpack.c.b16 %v5718, %v5710
  %v7687 = vpack.c.b16 %v5719, %v5711
  %v7688 = vpack.c.b16 %v5720, %v5712
  %v7689 = vpack.c.b16 %v5721, %v5713
  %v7690 = vpack.c.b16 %v5730, %v5722
  %v7691 = vpack.c.b16 %v5731, %v5723
  %v7692 = vpack.c.b16 %v5732, %v5724
  %v7693 = vpack.c.b16 %v5733, %v5725
  %v7694 = vpack.c.b16 %v5734, %v5726
  %v7695 = vpack.c.b16 %v5735, %v5727
  %v7696 = vpack.c.b16 %v5736, %v5728
  %v7697 = vpack.c.b16 %v5737, %v5729
  %v7698 = vpack.c.b16 %v5746, %v5738
  %v7699 = vpack.c.b16 %v5747, %v5739
  %v7700 = vpack.c.b16 %v5748, %v5740
  %v7701 = vpack.c.b16 %v5749, %v5741
  %v7702 = vpack.c.b16 %v5750, %v5742
  %v7703 = vpack.c.b16 %v5751, %v5743
  %v7704 = vpack.c.b16 %v5752, %v5744
  %v7705 = vpack.c.b16 %v5753, %v5745
  %v7706 = vpack.c.b16 %v5762, %v5754
  %v7707 = vpack.c.b16 %v5763, %v5755
  %v7708 = vpack.c.b16 %v5764, %v5756
  %v7709 = vpack.c.b16 %v5765, %v5757
  %v7710 = vpack.c.b16 %v5766, %v5758
  %v7711 = vpack.c.b16 %v5767, %v5759
  %v7712 = vpack.c.b16 %v5768, %v5760
  %v7713 = vpack.c.b16 %v5769, %v5761
  %v7714 = vpack.c.b16 %v5778, %v5770
  %v7715 = vpack.c.b16 %v5779, %v5771
  %v7716 = vpack.c.b16 %v5780, %v5772
  %v7717 = vpack.c.b16 %v5781, %v5773
  %v7718 = vpack.c.b16 %v5782, %v5774
  %v7719 = vpack.c.b16 %v5783, %v5775
  %v7720 = vpack.c.b16 %v5784, %v5776
  %v7721 = vpack.c.b16 %v5785, %v5777
  %v7722 = vpack.c.b16 %v5794, %v5786
  %v7723 = vpack.c.b16 %v5795, %v5787
  %v7724 = vpack.c.b16 %v5796, %v5788
  %v7725 = vpack.c.b16 %v5797, %v5789
  %v7726 = vpack.c.b16 %v5798, %v5790
  %v7727 = vpack.c.b16 %v5799, %v5791
  %v7728 = vpack.c.b16 %v5800, %v5792
  %v7729 = vpack.c.b16 %v5801, %v5793
  %v7730 = vpack.c.b16 %v5810, %v5802
  %v7731 = vpack.c.b16 %v5811, %v5803
  %v7732 = vpack.c.b16 %v5812, %v5804
  %v7733 = vpack.c.b16 %v5813, %v5805
  %v7734 = vpack.c.b16 %v5814, %v5806
  %v7735 = vpack.c.b16 %v5815, %v5807
  %v7736 = vpack.c.b16 %v5816, %v5808
  %v7737 = vpack.c.b16 %v5817, %v5809
  %v7738 = vpack.c.b16 %v5826, %v5818
  %v7739 = vpack.c.b16 %v5827, %v5819
  %v7740 = vpack.c.b16 %v5828, %v5820
  %v7741 = vpack.c.b16 %v5829, %v5821
  %v7742 = vpack.c.b16 %v5830, %v5822
  %v7743 = vpack.c.b16 %v5831, %v5823
  %v7744 = vpack.c.b16 %v5832, %v5824
  %v7745 = vpack.c.b16 %v5833, %v5825
  %v7746 = vpack.c.b16 %v5842, %v5834
  %v7747 = vpack.c.b16 %v5843, %v5835
  %v7748 = vpack.c.b16 %v5844, %v5836
  %v7749 = vpack.c.b16 %v5845, %v5837
  %v7750 = vpack.c.b16 %v5846, %v5838
  %v7751 = vpack.c.b16 %v5847, %v5839
  %v7752 = vpack.c.b16 %v5848, %v5840
  %v7753 = vpack.c.b16 %v5849, %v5841
  %v7754 = vpack.c.b16 %v5858, %v5850
  %v7755 = vpack.c.b16 %v5859, %v5851
  %v7756 = vpack.c.b16 %v5860, %v5852
  %v7757 = vpack.c.b16 %v5861, %v5853
  %v7758 = vpack.c.b16 %v5862, %v5854
  %v7759 = vpack.c.b16 %v5863, %v5855
  %v7760 = vpack.c.b16 %v5864, %v5856
  %v7761 = vpack.c.b16 %v5865, %v5857
  %v7762 = vpack.c.b16 %v5874, %v5866
  %v7763 = vpack.c.b16 %v5875, %v5867
  %v7764 = vpack.c.b16 %v5876, %v5868
  %v7765 = vpack.c.b16 %v5877, %v5869
  %v7766 = vpack.c.b16 %v5878, %v5870
  %v7767 = vpack.c.b16 %v5879, %v5871
  %v7768 = vpack.c.b16 %v5880, %v5872
  %v7769 = vpack.c.b16 %v5881, %v5873
  %v7770 = vpack.c.b16 %v5890, %v5882
  %v7771 = vpack.c.b16 %v5891, %v5883
  %v7772 = vpack.c.b16 %v5892, %v5884
  %v7773 = vpack.c.b16 %v5893, %v5885
  %v7774 = vpack.c.b16 %v5894, %v5886
  %v7775 = vpack.c.b16 %v5895, %v5887
  %v7776 = vpack.c.b16 %v5896, %v5888
  %v7777 = vpack.c.b16 %v5897, %v5889
  %v7778 = vpack.c.b16 %v5906, %v5898
  %v7779 = vpack.c.b16 %v5907, %v5899
  %v7780 = vpack.c.b16 %v5908, %v5900
  %v7781 = vpack.c.b16 %v5909, %v5901
  %v7782 = vpack.c.b16 %v5910, %v5902
  %v7783 = vpack.c.b16 %v5911, %v5903
  %v7784 = vpack.c.b16 %v5912, %v5904
  %v7785 = vpack.c.b16 %v5913, %v5905
  %v7786 = vpack.c.b16 %v5922, %v5914
  %v7787 = vpack.c.b16 %v5923, %v5915
  %v7788 = vpack.c.b16 %v5924, %v5916
  %v7789 = vpack.c.b16 %v5925, %v5917
  %v7790 = vpack.c.b16 %v5926, %v5918
  %v7791 = vpack.c.b16 %v5927, %v5919
  %v7792 = vpack.c.b16 %v5928, %v5920
  %v7793 = vpack.c.b16 %v5929, %v5921
  %v7794 = vpack.c.b16 %v5938, %v5930
  %v7795 = vpack.c.b16 %v5939, %v5931
  %v7796 = vpack.c.b16 %v5940, %v5932
  %v7797 = vpack.c.b16 %v5941, %v5933
  %v7798 = vpack.c.b16 %v5942, %v5934
  %v7799 = vpack.c.b16 %v5943, %v5935
  %v7800 = vpack.c.b16 %v5944, %v5936
  %v7801 = vpack.c.b16 %v5945, %v5937
  %v7802 = vpack.c.b16 %v5954, %v5946
  %v7803 = vpack.c.b16 %v5955, %v5947
  %v7804 = vpack.c.b16 %v5956, %v5948
  %v7805 = vpack.c.b16 %v5957, %v5949
  %v7806 = vpack.c.b16 %v5958, %v5950
  %v7807 = vpack.c.b16 %v5959, %v5951
  %v7808 = vpack.c.b16 %v5960, %v5952
  %v7809 = vpack.c.b16 %v5961, %v5953
  %v7810 = vpack.c.b16 %v5970, %v5962
  %v7811 = vpack.c.b16 %v5971, %v5963
  %v7812 = vpack.c.b16 %v5972, %v5964
  %v7813 = vpack.c.b16 %v5973, %v5965
  %v7814 = vpack.c.b16 %v5974, %v5966
  %v7815 = vpack.c.b16 %v5975, %v5967
  %v7816 = vpack.c.b16 %v5976, %v5968
  %v7817 = vpack.c.b16 %v5977, %v5969
  %v7818 = vpack.c.b16 %v5986, %v5978
  %v7819 = vpack.c.b16 %v5987, %v5979
  %v7820 = vpack.c.b16 %v5988, %v5980
  %v7821 = vpack.c.b16 %v5989, %v5981
  %v7822 = vpack.c.b16 %v5990, %v5982
  %v7823 = vpack.c.b16 %v5991, %v5983
  %v7824 = vpack.c.b16 %v5992, %v5984
  %v7825 = vpack.c.b16 %v5993, %v5985
  %v7826 = vpack.c.b16 %v6002, %v5994
  %v7827 = vpack.c.b16 %v6003, %v5995
  %v7828 = vpack.c.b16 %v6004, %v5996
  %v7829 = vpack.c.b16 %v6005, %v5997
  %v7830 = vpack.c.b16 %v6006, %v5998
  %v7831 = vpack.c.b16 %v6007, %v5999
  %v7832 = vpack.c.b16 %v6008, %v6000
  %v7833 = vpack.c.b16 %v6009, %v6001
  %v7834 = vpack.c.b16 %v6018, %v6010
  %v7835 = vpack.c.b16 %v6019, %v6011
  %v7836 = vpack.c.b16 %v6020, %v6012
  %v7837 = vpack.c.b16 %v6021, %v6013
  %v7838 = vpack.c.b16 %v6022, %v6014
  %v7839 = vpack.c.b16 %v6023, %v6015
  %v7840 = vpack.c.b16 %v6024, %v6016
  %v7841 = vpack.c.b16 %v6025, %v6017
  %v7842 = vpack.c.b16 %v6034, %v6026
  %v7843 = vpack.c.b16 %v6035, %v6027
  %v7844 = vpack.c.b16 %v6036, %v6028
  %v7845 = vpack.c.b16 %v6037, %v6029
  %v7846 = vpack.c.b16 %v6038, %v6030
  %v7847 = vpack.c.b16 %v6039, %v6031
  %v7848 = vpack.c.b16 %v6040, %v6032
  %v7849 = vpack.c.b16 %v6041, %v6033
  %v7850 = vpack.c.b16 %v6050, %v6042
  %v7851 = vpack.c.b16 %v6051, %v6043
  %v7852 = vpack.c.b16 %v6052, %v6044
  %v7853 = vpack.c.b16 %v6053, %v6045
  %v7854 = vpack.c.b16 %v6054, %v6046
  %v7855 = vpack.c.b16 %v6055, %v6047
  %v7856 = vpack.c.b16 %v6056, %v6048
  %v7857 = vpack.c.b16 %v6057, %v6049
  %v7858 = vpack.c.b16 %v6066, %v6058
  %v7859 = vpack.c.b16 %v6067, %v6059
  %v7860 = vpack.c.b16 %v6068, %v6060
  %v7861 = vpack.c.b16 %v6069, %v6061
  %v7862 = vpack.c.b16 %v6070, %v6062
  %v7863 = vpack.c.b16 %v6071, %v6063
  %v7864 = vpack.c.b16 %v6072, %v6064
  %v7865 = vpack.c.b16 %v6073, %v6065
  %v7866 = vpack.c.b16 %v6082, %v6074
  %v7867 = vpack.c.b16 %v6083, %v6075
  %v7868 = vpack.c.b16 %v6084, %v6076
  %v7869 = vpack.c.b16 %v6085, %v6077
  %v7870 = vpack.c.b16 %v6086, %v6078
  %v7871 = vpack.c.b16 %v6087, %v6079
  %v7872 = vpack.c.b16 %v6088, %v6080
  %v7873 = vpack.c.b16 %v6089, %v6081
  %v7874 = vpack.c.b16 %v6098, %v6090
  %v7875 = vpack.c.b16 %v6099, %v6091
  %v7876 = vpack.c.b16 %v6100, %v6092
  %v7877 = vpack.c.b16 %v6101, %v6093
  %v7878 = vpack.c.b16 %v6102, %v6094
  %v7879 = vpack.c.b16 %v6103, %v6095
  %v7880 = vpack.c.b16 %v6104, %v6096
  %v7881 = vpack.c.b16 %v6105, %v6097
  %v7882 = vpack.c.b16 %v6114, %v6106
  %v7883 = vpack.c.b16 %v6115, %v6107
  %v7884 = vpack.c.b16 %v6116, %v6108
  %v7885 = vpack.c.b16 %v6117, %v6109
  %v7886 = vpack.c.b16 %v6118, %v6110
  %v7887 = vpack.c.b16 %v6119, %v6111
  %v7888 = vpack.c.b16 %v6120, %v6112
  %v7889 = vpack.c.b16 %v6121, %v6113
  %v7890 = vpack.c.b16 %v6130, %v6122
  %v7891 = vpack.c.b16 %v6131, %v6123
  %v7892 = vpack.c.b16 %v6132, %v6124
  %v7893 = vpack.c.b16 %v6133, %v6125
  %v7894 = vpack.c.b16 %v6134, %v6126
  %v7895 = vpack.c.b16 %v6135, %v6127
  %v7896 = vpack.c.b16 %v6136, %v6128
  %v7897 = vpack.c.b16 %v6137, %v6129
  %v7898 = vpack.c.b16 %v6146, %v6138
  %v7899 = vpack.c.b16 %v6147, %v6139
  %v7900 = vpack.c.b16 %v6148, %v6140
  %v7901 = vpack.c.b16 %v6149, %v6141
  %v7902 = vpack.c.b16 %v6150, %v6142
  %v7903 = vpack.c.b16 %v6151, %v6143
  %v7904 = vpack.c.b16 %v6152, %v6144
  %v7905 = vpack.c.b16 %v6153, %v6145
  %v7906 = vpack.c.b16 %v6162, %v6154
  %v7907 = vpack.c.b16 %v6163, %v6155
  %v7908 = vpack.c.b16 %v6164, %v6156
  %v7909 = vpack.c.b16 %v6165, %v6157
  %v7910 = vpack.c.b16 %v6166, %v6158
  %v7911 = vpack.c.b16 %v6167, %v6159
  %v7912 = vpack.c.b16 %v6168, %v6160
  %v7913 = vpack.c.b16 %v6169, %v6161
  %v7914 = vpack.c.b16 %v6178, %v6170
  %v7915 = vpack.c.b16 %v6179, %v6171
  %v7916 = vpack.c.b16 %v6180, %v6172
  %v7917 = vpack.c.b16 %v6181, %v6173
  %v7918 = vpack.c.b16 %v6182, %v6174
  %v7919 = vpack.c.b16 %v6183, %v6175
  %v7920 = vpack.c.b16 %v6184, %v6176
  %v7921 = vpack.c.b16 %v6185, %v6177
  %v7922 = vpack.c.b16 %v6194, %v6186
  %v7923 = vpack.c.b16 %v6195, %v6187
  %v7924 = vpack.c.b16 %v6196, %v6188
  %v7925 = vpack.c.b16 %v6197, %v6189
  %v7926 = vpack.c.b16 %v6198, %v6190
  %v7927 = vpack.c.b16 %v6199, %v6191
  %v7928 = vpack.c.b16 %v6200, %v6192
  %v7929 = vpack.c.b16 %v6201, %v6193
  %v7930 = vpack.c.b16 %v6210, %v6202
  %v7931 = vpack.c.b16 %v6211, %v6203
  %v7932 = vpack.c.b16 %v6212, %v6204
  %v7933 = vpack.c.b16 %v6213, %v6205
  %v7934 = vpack.c.b16 %v6214, %v6206
  %v7935 = vpack.c.b16 %v6215, %v6207
  %v7936 = vpack.c.b16 %v6216, %v6208
  %v7937 = vpack.c.b16 %v6217, %v6209
  %v7938 = vpack.c.b16 %v6226, %v6218
  %v7939 = vpack.c.b16 %v6227, %v6219
  %v7940 = vpack.c.b16 %v6228, %v6220
  %v7941 = vpack.c.b16 %v6229, %v6221
  %v7942 = vpack.c.b16 %v6230, %v6222
  %v7943 = vpack.c.b16 %v6231, %v6223
  %v7944 = vpack.c.b16 %v6232, %v6224
  %v7945 = vpack.c.b16 %v6233, %v6225
  %v7946 = vpack.c.b16 %v6242, %v6234
  %v7947 = vpack.c.b16 %v6243, %v6235
  %v7948 = vpack.c.b16 %v6244, %v6236
  %v7949 = vpack.c.b16 %v6245, %v6237
  %v7950 = vpack.c.b16 %v6246, %v6238
  %v7951 = vpack.c.b16 %v6247, %v6239
  %v7952 = vpack.c.b16 %v6248, %v6240
  %v7953 = vpack.c.b16 %v6249, %v6241
  %v7954 = vpack.c.b16 %v6258, %v6250
  %v7955 = vpack.c.b16 %v6259, %v6251
  %v7956 = vpack.c.b16 %v6260, %v6252
  %v7957 = vpack.c.b16 %v6261, %v6253
  %v7958 = vpack.c.b16 %v6262, %v6254
  %v7959 = vpack.c.b16 %v6263, %v6255
  %v7960 = vpack.c.b16 %v6264, %v6256
  %v7961 = vpack.c.b16 %v6265, %v6257
  %v7962 = vpack.c.b16 %v6274, %v6266
  %v7963 = vpack.c.b16 %v6275, %v6267
  %v7964 = vpack.c.b16 %v6276, %v6268
  %v7965 = vpack.c.b16 %v6277, %v6269
  %v7966 = vpack.c.b16 %v6278, %v6270
  %v7967 = vpack.c.b16 %v6279, %v6271
  %v7968 = vpack.c.b16 %v6280, %v6272
  %v7969 = vpack.c.b16 %v6281, %v6273
  %v7970 = vpack.c.b16 %v6290, %v6282
  %v7971 = vpack.c.b16 %v6291, %v6283
  %v7972 = vpack.c.b16 %v6292, %v6284
  %v7973 = vpack.c.b16 %v6293, %v6285
  %v7974 = vpack.c.b16 %v6294, %v6286
  %v7975 = vpack.c.b16 %v6295, %v6287
  %v7976 = vpack.c.b16 %v6296, %v6288
  %v7977 = vpack.c.b16 %v6297, %v6289
  %v7978 = vpack.c.b16 %v6306, %v6298
  %v7979 = vpack.c.b16 %v6307, %v6299
  %v7980 = vpack.c.b16 %v6308, %v6300
  %v7981 = vpack.c.b16 %v6309, %v6301
  %v7982 = vpack.c.b16 %v6310, %v6302
  %v7983 = vpack.c.b16 %v6311, %v6303
  %v7984 = vpack.c.b16 %v6312, %v6304
  %v7985 = vpack.c.b16 %v6313, %v6305
  %v7986 = vpack.c.b16 %v6322, %v6314
  %v7987 = vpack.c.b16 %v6323, %v6315
  %v7988 = vpack.c.b16 %v6324, %v6316
  %v7989 = vpack.c.b16 %v6325, %v6317
  %v7990 = vpack.c.b16 %v6326, %v6318
  %v7991 = vpack.c.b16 %v6327, %v6319
  %v7992 = vpack.c.b16 %v6328, %v6320
  %v7993 = vpack.c.b16 %v6329, %v6321
  %v7994 = vpack.c.b16 %v6338, %v6330
  %v7995 = vpack.c.b16 %v6339, %v6331
  %v7996 = vpack.c.b16 %v6340, %v6332
  %v7997 = vpack.c.b16 %v6341, %v6333
  %v7998 = vpack.c.b16 %v6342, %v6334
  %v7999 = vpack.c.b16 %v6343, %v6335
  %v8000 = vpack.c.b16 %v6344, %v6336
  %v8001 = vpack.c.b16 %v6345, %v6337
  %v8002 = vpack.c.b16 %v6354, %v6346
  %v8003 = vpack.c.b16 %v6355, %v6347
  %v8004 = vpack.c.b16 %v6356, %v6348
  %v8005 = vpack.c.b16 %v6357, %v6349
  %v8006 = vpack.c.b16 %v6358, %v6350
  %v8007 = vpack.c.b16 %v6359, %v6351
  %v8008 = vpack.c.b16 %v6360, %v6352
  %v8009 = vpack.c.b16 %v6361, %v6353
  %v8010 = vpack.c.b16 %v6370, %v6362
  %v8011 = vpack.c.b16 %v6371, %v6363
  %v8012 = vpack.c.b16 %v6372, %v6364
  %v8013 = vpack.c.b16 %v6373, %v6365
  %v8014 = vpack.c.b16 %v6374, %v6366
  %v8015 = vpack.c.b16 %v6375, %v6367
  %v8016 = vpack.c.b16 %v6376, %v6368
  %v8017 = vpack.c.b16 %v6377, %v6369
  %v8018 = vpack.c.b16 %v6386, %v6378
  %v8019 = vpack.c.b16 %v6387, %v6379
  %v8020 = vpack.c.b16 %v6388, %v6380
  %v8021 = vpack.c.b16 %v6389, %v6381
  %v8022 = vpack.c.b16 %v6390, %v6382
  %v8023 = vpack.c.b16 %v6391, %v6383
  %v8024 = vpack.c.b16 %v6392, %v6384
  %v8025 = vpack.c.b16 %v6393, %v6385
  %v8026 = vpack.c.b16 %v6402, %v6394
  %v8027 = vpack.c.b16 %v6403, %v6395
  %v8028 = vpack.c.b16 %v6404, %v6396
  %v8029 = vpack.c.b16 %v6405, %v6397
  %v8030 = vpack.c.b16 %v6406, %v6398
  %v8031 = vpack.c.b16 %v6407, %v6399
  %v8032 = vpack.c.b16 %v6408, %v6400
  %v8033 = vpack.c.b16 %v6409, %v6401
  %v8034 = vpack.c.b16 %v6418, %v6410
  %v8035 = vpack.c.b16 %v6419, %v6411
  %v8036 = vpack.c.b16 %v6420, %v6412
  %v8037 = vpack.c.b16 %v6421, %v6413
  %v8038 = vpack.c.b16 %v6422, %v6414
  %v8039 = vpack.c.b16 %v6423, %v6415
  %v8040 = vpack.c.b16 %v6424, %v6416
  %v8041 = vpack.c.b16 %v6425, %v6417
  %v8042 = vpack.c.b16 %v6434, %v6426
  %v8043 = vpack.c.b16 %v6435, %v6427
  %v8044 = vpack.c.b16 %v6436, %v6428
  %v8045 = vpack.c.b16 %v6437, %v6429
  %v8046 = vpack.c.b16 %v6438, %v6430
  %v8047 = vpack.c.b16 %v6439, %v6431
  %v8048 = vpack.c.b16 %v6440, %v6432
  %v8049 = vpack.c.b16 %v6441, %v6433
  %v8050 = vpack.c.b16 %v6450, %v6442
  %v8051 = vpack.c.b16 %v6451, %v6443
  %v8052 = vpack.c.b16 %v6452, %v6444
  %v8053 = vpack.c.b16 %v6453, %v6445
  %v8054 = vpack.c.b16 %v6454, %v6446
  %v8055 = vpack.c.b16 %v6455, %v6447
  %v8056 = vpack.c.b16 %v6456, %v6448
  %v8057 = vpack.c.b16 %v6457, %v6449
  %v8058 = vpack.c.b16 %v6466, %v6458
  %v8059 = vpack.c.b16 %v6467, %v6459
  %v8060 = vpack.c.b16 %v6468, %v6460
  %v8061 = vpack.c.b16 %v6469, %v6461
  %v8062 = vpack.c.b16 %v6470, %v6462
  %v8063 = vpack.c.b16 %v6471, %v6463
  %v8064 = vpack.c.b16 %v6472, %v6464
  %v8065 = vpack.c.b16 %v6473, %v6465
  %v8066 = vpack.c.b16 %v6482, %v6474
  %v8067 = vpack.c.b16 %v6483, %v6475
  %v8068 = vpack.c.b16 %v6484, %v6476
  %v8069 = vpack.c.b16 %v6485, %v6477
  %v8070 = vpack.c.b16 %v6486, %v6478
  %v8071 = vpack.c.b16 %v6487, %v6479
  %v8072 = vpack.c.b16 %v6488, %v6480
  %v8073 = vpack.c.b16 %v6489, %v6481
  %v8074 = vpack.c.b16 %v6498, %v6490
  %v8075 = vpack.c.b16 %v6499, %v6491
  %v8076 = vpack.c.b16 %v6500, %v6492
  %v8077 = vpack.c.b16 %v6501, %v6493
  %v8078 = vpack.c.b16 %v6502, %v6494
  %v8079 = vpack.c.b16 %v6503, %v6495
  %v8080 = vpack.c.b16 %v6504, %v6496
  %v8081 = vpack.c.b16 %v6505, %v6497
  %v8082 = vpack.c.b16 %v6514, %v6506
  %v8083 = vpack.c.b16 %v6515, %v6507
  %v8084 = vpack.c.b16 %v6516, %v6508
  %v8085 = vpack.c.b16 %v6517, %v6509
  %v8086 = vpack.c.b16 %v6518, %v6510
  %v8087 = vpack.c.b16 %v6519, %v6511
  %v8088 = vpack.c.b16 %v6520, %v6512
  %v8089 = vpack.c.b16 %v6521, %v6513
  %vm9658 = vcmask 523264
  %v9660 = vsel %vm9658, %v1793, 0
  %9662 = vmatprep.subr.bf16.mxu0 %v6523
  %9663 = vmatpush1.bf16.msra.mxu0 %v6522
  %9664 = vmatprep.subr.bf16.mxu0 %v6531
  %9665 = vmatpush1.bf16.msra.mxu0 %v6530
  %9666 = vmatprep.subr.bf16.mxu0 %v6539
  %9667 = vmatpush1.bf16.msra.mxu0 %v6538
  %9668 = vmatprep.subr.bf16.mxu0 %v6547
  %9669 = vmatpush1.bf16.msra.mxu0 %v6546
  %9670 = vmatprep.subr.bf16.mxu0 %v6555
  %9671 = vmatpush1.bf16.msra.mxu0 %v6554
  %9672 = vmatprep.subr.bf16.mxu0 %v6563
  %9673 = vmatpush1.bf16.msra.mxu0 %v6562
  %9674 = vmatprep.subr.bf16.mxu0 %v6571
  %9675 = vmatpush1.bf16.msra.mxu0 %v6570
  %9676 = vmatprep.subr.bf16.mxu0 %v6579
  %9677 = vmatpush1.bf16.msra.mxu0 %v6578
  %9678 = vmatprep.subr.bf16.mxu0 %v6587
  %9679 = vmatpush1.bf16.msra.mxu0 %v6586
  %9680 = vmatprep.subr.bf16.mxu0 %v6595
  %9681 = vmatpush1.bf16.msra.mxu0 %v6594
  %9682 = vmatprep.subr.bf16.mxu0 %v6603
  %9683 = vmatpush1.bf16.msra.mxu0 %v6602
  %9684 = vmatprep.subr.bf16.mxu0 %v6611
  %9685 = vmatpush1.bf16.msra.mxu0 %v6610
  %9686 = vmatprep.subr.bf16.mxu0 %v6619
  %9687 = vmatpush1.bf16.msra.mxu0 %v6618
  %9688 = vmatprep.subr.bf16.mxu0 %v6627
  %9689 = vmatpush1.bf16.msra.mxu0 %v6626
  %9690 = vmatprep.subr.bf16.mxu0 %v6635
  %9691 = vmatpush1.bf16.msra.mxu0 %v6634
  %9692 = vmatprep.subr.bf16.mxu0 %v6643
  %9693 = vmatpush1.bf16.msra.mxu0 %v6642
  %9694 = vmatprep.mubr.bf16.mxu0 %v1670
  %9695 = vmatmul.mubr.bf16.gmra.mrb[0].mxu0 %v1656
  %v9696 = vpop.f32.mrb[0].mxu0
  %v9697 = vadd.f32 %v1592, %v9696
  %v9698 = vpop.f32.mrb[0].mxu0
  %v9699 = vadd.f32 %v1596, %v9698
  %v9700 = vpop.f32.mrb[0].mxu0
  %v9701 = vpop.f32.mrb[0].mxu0
  %9702 = vdwg.mxu0
  %9703 = vmatprep.subr.bf16.mxu0 %v6651
  %9704 = vmatpush1.bf16.msra.mxu0 %v6650
  %9705 = vmatprep.subr.bf16.mxu0 %v6659
  %9706 = vmatpush1.bf16.msra.mxu0 %v6658
  %9707 = vmatprep.subr.bf16.mxu0 %v6667
  %9708 = vmatpush1.bf16.msra.mxu0 %v6666
  %9709 = vmatprep.subr.bf16.mxu0 %v6675
  %9710 = vmatpush1.bf16.msra.mxu0 %v6674
  %9711 = vmatprep.subr.bf16.mxu0 %v6683
  %9712 = vmatpush1.bf16.msra.mxu0 %v6682
  %9713 = vmatprep.subr.bf16.mxu0 %v6691
  %9714 = vmatpush1.bf16.msra.mxu0 %v6690
  %9715 = vmatprep.subr.bf16.mxu0 %v6699
  %9716 = vmatpush1.bf16.msra.mxu0 %v6698
  %9717 = vmatprep.subr.bf16.mxu0 %v6707
  %9718 = vmatpush1.bf16.msra.mxu0 %v6706
  %9719 = vmatprep.subr.bf16.mxu0 %v6715
  %9720 = vmatpush1.bf16.msra.mxu0 %v6714
  %9721 = vmatprep.subr.bf16.mxu0 %v6723
  %9722 = vmatpush1.bf16.msra.mxu0 %v6722
  %9723 = vmatprep.subr.bf16.mxu0 %v6731
  %9724 = vmatpush1.bf16.msra.mxu0 %v6730
  %9725 = vmatprep.subr.bf16.mxu0 %v6739
  %9726 = vmatpush1.bf16.msra.mxu0 %v6738
  %9727 = vmatprep.subr.bf16.mxu0 %v6747
  %9728 = vmatpush1.bf16.msra.mxu0 %v6746
  %9729 = vmatprep.subr.bf16.mxu0 %v6755
  %9730 = vmatpush1.bf16.msra.mxu0 %v6754
  %9731 = vmatprep.subr.bf16.mxu0 %v6763
  %9732 = vmatpush1.bf16.msra.mxu0 %v6762
  %9733 = vmatprep.subr.bf16.mxu0 %v6771
  %9734 = vmatpush1.bf16.msra.mxu0 %v6770
  %9735 = vmatprep.mubr.bf16.mxu0 %v1680
  %9736 = vmatmul.mubr.bf16.gmra.mrb[0].mxu0 %v1678
  %v9737 = vpop.f32.mrb[0].mxu0
  %v9738 = vadd.f32 %v9697, %v9737
  %v9739 = vpop.f32.mrb[0].mxu0
  %v9740 = vadd.f32 %v9699, %v9739
  %v9741 = vpop.f32.mrb[0].mxu0
  %v9742 = vpop.f32.mrb[0].mxu0
  %9743 = vdwg.mxu0
  %9744 = vmatprep.subr.bf16.mxu0 %v6779
  %9745 = vmatpush1.bf16.msra.mxu0 %v6778
  %9746 = vmatprep.subr.bf16.mxu0 %v6787
  %9747 = vmatpush1.bf16.msra.mxu0 %v6786
  %9748 = vmatprep.subr.bf16.mxu0 %v6795
  %9749 = vmatpush1.bf16.msra.mxu0 %v6794
  %9750 = vmatprep.subr.bf16.mxu0 %v6803
  %9751 = vmatpush1.bf16.msra.mxu0 %v6802
  %9752 = vmatprep.subr.bf16.mxu0 %v6811
  %9753 = vmatpush1.bf16.msra.mxu0 %v6810
  %9754 = vmatprep.subr.bf16.mxu0 %v6819
  %9755 = vmatpush1.bf16.msra.mxu0 %v6818
  %9756 = vmatprep.subr.bf16.mxu0 %v6827
  %9757 = vmatpush1.bf16.msra.mxu0 %v6826
  %9758 = vmatprep.subr.bf16.mxu0 %v6835
  %9759 = vmatpush1.bf16.msra.mxu0 %v6834
  %9760 = vmatprep.subr.bf16.mxu0 %v6843
  %9761 = vmatpush1.bf16.msra.mxu0 %v6842
  %9762 = vmatprep.subr.bf16.mxu0 %v6851
  %9763 = vmatpush1.bf16.msra.mxu0 %v6850
  %9764 = vmatprep.subr.bf16.mxu0 %v6859
  %9765 = vmatpush1.bf16.msra.mxu0 %v6858
  %9766 = vmatprep.subr.bf16.mxu0 %v6867
  %9767 = vmatpush1.bf16.msra.mxu0 %v6866
  %9768 = vmatprep.subr.bf16.mxu0 %v6875
  %9769 = vmatpush1.bf16.msra.mxu0 %v6874
  %9770 = vmatprep.subr.bf16.mxu0 %v6883
  %9771 = vmatpush1.bf16.msra.mxu0 %v6882
  %9772 = vmatprep.subr.bf16.mxu0 %v6891
  %9773 = vmatpush1.bf16.msra.mxu0 %v6890
  %9774 = vmatprep.subr.bf16.mxu0 %v6899
  %9775 = vmatpush1.bf16.msra.mxu0 %v6898
  %9776 = vmatprep.mubr.bf16.mxu0 %v1677
  %9777 = vmatmul.mubr.bf16.gmra.mrb[0].mxu0 %v1663
  %v9778 = vpop.f32.mrb[0].mxu0
  %v9779 = vadd.f32 %v9738, %v9778
  %v9780 = vpop.f32.mrb[0].mxu0
  %v9781 = vadd.f32 %v9740, %v9780
  %v9782 = vpop.f32.mrb[0].mxu0
  %v9783 = vpop.f32.mrb[0].mxu0
  %9784 = vdwg.mxu0
  %9785 = vmatprep.subr.bf16.mxu0 %v6907
  %9786 = vmatpush1.bf16.msra.mxu0 %v6906
  %9787 = vmatprep.subr.bf16.mxu0 %v6915
  %9788 = vmatpush1.bf16.msra.mxu0 %v6914
  %9789 = vmatprep.subr.bf16.mxu0 %v6923
  %9790 = vmatpush1.bf16.msra.mxu0 %v6922
  %9791 = vmatprep.subr.bf16.mxu0 %v6931
  %9792 = vmatpush1.bf16.msra.mxu0 %v6930
  %9793 = vmatprep.subr.bf16.mxu0 %v6939
  %9794 = vmatpush1.bf16.msra.mxu0 %v6938
  %9795 = vmatprep.subr.bf16.mxu0 %v6947
  %9796 = vmatpush1.bf16.msra.mxu0 %v6946
  %9797 = vmatprep.subr.bf16.mxu0 %v6955
  %9798 = vmatpush1.bf16.msra.mxu0 %v6954
  %9799 = vmatprep.subr.bf16.mxu0 %v6963
  %9800 = vmatpush1.bf16.msra.mxu0 %v6962
  %9801 = vmatprep.subr.bf16.mxu0 %v6971
  %9802 = vmatpush1.bf16.msra.mxu0 %v6970
  %9803 = vmatprep.subr.bf16.mxu0 %v6979
  %9804 = vmatpush1.bf16.msra.mxu0 %v6978
  %9805 = vmatprep.subr.bf16.mxu0 %v6987
  %9806 = vmatpush1.bf16.msra.mxu0 %v6986
  %9807 = vmatprep.subr.bf16.mxu0 %v6995
  %9808 = vmatpush1.bf16.msra.mxu0 %v6994
  %9809 = vmatprep.subr.bf16.mxu0 %v7003
  %9810 = vmatpush1.bf16.msra.mxu0 %v7002
  %9811 = vmatprep.subr.bf16.mxu0 %v7011
  %9812 = vmatpush1.bf16.msra.mxu0 %v7010
  %9813 = vmatprep.subr.bf16.mxu0 %v7019
  %9814 = vmatpush1.bf16.msra.mxu0 %v7018
  %9815 = vmatprep.subr.bf16.mxu0 %v7027
  %9816 = vmatpush1.bf16.msra.mxu0 %v7026
  %9817 = vmatprep.mubr.bf16.mxu0 %v1681
  %9818 = vmatmul.mubr.bf16.gmra.mrb[0].mxu0 %v1679
  %v9819 = vpop.f32.mrb[0].mxu0
  %v9820 = vadd.f32 %v9779, %v9819
  %v9821 = vpop.f32.mrb[0].mxu0
  %v9822 = vadd.f32 %v9781, %v9821
  %v9823 = vpop.f32.mrb[0].mxu0
  %v9824 = vpop.f32.mrb[0].mxu0
  %9825 = vdwg.mxu0
  %9826 = vmatprep.subr.bf16.mxu0 %v7035
  %9827 = vmatpush1.bf16.msra.mxu0 %v7034
  %9828 = vmatprep.subr.bf16.mxu0 %v7043
  %9829 = vmatpush1.bf16.msra.mxu0 %v7042
  %9830 = vmatprep.subr.bf16.mxu0 %v7051
  %9831 = vmatpush1.bf16.msra.mxu0 %v7050
  %9832 = vmatprep.subr.bf16.mxu0 %v7059
  %9833 = vmatpush1.bf16.msra.mxu0 %v7058
  %9834 = vmatprep.subr.bf16.mxu0 %v7067
  %9835 = vmatpush1.bf16.msra.mxu0 %v7066
  %9836 = vmatprep.subr.bf16.mxu0 %v7075
  %9837 = vmatpush1.bf16.msra.mxu0 %v7074
  %9838 = vmatprep.subr.bf16.mxu0 %v7083
  %9839 = vmatpush1.bf16.msra.mxu0 %v7082
  %9840 = vmatprep.subr.bf16.mxu0 %v7091
  %9841 = vmatpush1.bf16.msra.mxu0 %v7090
  %9842 = vmatprep.subr.bf16.mxu0 %v7099
  %9843 = vmatpush1.bf16.msra.mxu0 %v7098
  %9844 = vmatprep.subr.bf16.mxu0 %v7107
  %9845 = vmatpush1.bf16.msra.mxu0 %v7106
  %9846 = vmatprep.subr.bf16.mxu0 %v7115
  %9847 = vmatpush1.bf16.msra.mxu0 %v7114
  %9848 = vmatprep.subr.bf16.mxu0 %v7123
  %9849 = vmatpush1.bf16.msra.mxu0 %v7122
  %9850 = vmatprep.subr.bf16.mxu0 %v7131
  %9851 = vmatpush1.bf16.msra.mxu0 %v7130
  %9852 = vmatprep.subr.bf16.mxu0 %v7139
  %9853 = vmatpush1.bf16.msra.mxu0 %v7138
  %9854 = vmatprep.subr.bf16.mxu0 %v7147
  %9855 = vmatpush1.bf16.msra.mxu0 %v7146
  %9856 = vmatprep.subr.bf16.mxu0 %v7155
  %9857 = vmatpush1.bf16.msra.mxu0 %v7154
  %9858 = vmatprep.mubr.bf16.mxu0 %v1719
  %9859 = vmatmul.mubr.bf16.gmra.mrb[0].mxu0 %v1705
  %v9860 = vpop.f32.mrb[0].mxu0
  %v9861 = vadd.f32 %v9820, %v9860
  %v9862 = vpop.f32.mrb[0].mxu0
  %v9863 = vadd.f32 %v9822, %v9862
  %v9864 = vpop.f32.mrb[0].mxu0
  %v9865 = vpop.f32.mrb[0].mxu0
  %9866 = vdwg.mxu0
  %9867 = vmatprep.subr.bf16.mxu0 %v7163
  %9868 = vmatpush1.bf16.msra.mxu0 %v7162
  %9869 = vmatprep.subr.bf16.mxu0 %v7171
  %9870 = vmatpush1.bf16.msra.mxu0 %v7170
  %9871 = vmatprep.subr.bf16.mxu0 %v7179
  %9872 = vmatpush1.bf16.msra.mxu0 %v7178
  %9873 = vmatprep.subr.bf16.mxu0 %v7187
  %9874 = vmatpush1.bf16.msra.mxu0 %v7186
  %9875 = vmatprep.subr.bf16.mxu0 %v7195
  %9876 = vmatpush1.bf16.msra.mxu0 %v7194
  %9877 = vmatprep.subr.bf16.mxu0 %v7203
  %9878 = vmatpush1.bf16.msra.mxu0 %v7202
  %9879 = vmatprep.subr.bf16.mxu0 %v7211
  %9880 = vmatpush1.bf16.msra.mxu0 %v7210
  %9881 = vmatprep.subr.bf16.mxu0 %v7219
  %9882 = vmatpush1.bf16.msra.mxu0 %v7218
  %9883 = vmatprep.subr.bf16.mxu0 %v7227
  %9884 = vmatpush1.bf16.msra.mxu0 %v7226
  %9885 = vmatprep.subr.bf16.mxu0 %v7235
  %9886 = vmatpush1.bf16.msra.mxu0 %v7234
  %9887 = vmatprep.subr.bf16.mxu0 %v7243
  %9888 = vmatpush1.bf16.msra.mxu0 %v7242
  %9889 = vmatprep.subr.bf16.mxu0 %v7251
  %9890 = vmatpush1.bf16.msra.mxu0 %v7250
  %9891 = vmatprep.subr.bf16.mxu0 %v7259
  %9892 = vmatpush1.bf16.msra.mxu0 %v7258
  %9893 = vmatprep.subr.bf16.mxu0 %v7267
  %9894 = vmatpush1.bf16.msra.mxu0 %v7266
  %9895 = vmatprep.subr.bf16.mxu0 %v7275
  %9896 = vmatpush1.bf16.msra.mxu0 %v7274
  %9897 = vmatprep.subr.bf16.mxu0 %v7283
  %9898 = vmatpush1.bf16.msra.mxu0 %v7282
  %9899 = vmatprep.mubr.bf16.mxu0 %v1729
  %9900 = vmatmul.mubr.bf16.gmra.mrb[0].mxu0 %v1727
  %v9901 = vpop.f32.mrb[0].mxu0
  %v9902 = vadd.f32 %v9861, %v9901
  %v9903 = vpop.f32.mrb[0].mxu0
  %v9904 = vadd.f32 %v9863, %v9903
  %v9905 = vpop.f32.mrb[0].mxu0
  %v9906 = vpop.f32.mrb[0].mxu0
  %9907 = vdwg.mxu0
  %9908 = vmatprep.subr.bf16.mxu0 %v7291
  %9909 = vmatpush1.bf16.msra.mxu0 %v7290
  %9910 = vmatprep.subr.bf16.mxu0 %v7299
  %9911 = vmatpush1.bf16.msra.mxu0 %v7298
  %9912 = vmatprep.subr.bf16.mxu0 %v7307
  %9913 = vmatpush1.bf16.msra.mxu0 %v7306
  %9914 = vmatprep.subr.bf16.mxu0 %v7315
  %9915 = vmatpush1.bf16.msra.mxu0 %v7314
  %9916 = vmatprep.subr.bf16.mxu0 %v7323
  %9917 = vmatpush1.bf16.msra.mxu0 %v7322
  %9918 = vmatprep.subr.bf16.mxu0 %v7331
  %9919 = vmatpush1.bf16.msra.mxu0 %v7330
  %9920 = vmatprep.subr.bf16.mxu0 %v7339
  %9921 = vmatpush1.bf16.msra.mxu0 %v7338
  %9922 = vmatprep.subr.bf16.mxu0 %v7347
  %9923 = vmatpush1.bf16.msra.mxu0 %v7346
  %9924 = vmatprep.subr.bf16.mxu0 %v7355
  %9925 = vmatpush1.bf16.msra.mxu0 %v7354
  %9926 = vmatprep.subr.bf16.mxu0 %v7363
  %9927 = vmatpush1.bf16.msra.mxu0 %v7362
  %9928 = vmatprep.subr.bf16.mxu0 %v7371
  %9929 = vmatpush1.bf16.msra.mxu0 %v7370
  %9930 = vmatprep.subr.bf16.mxu0 %v7379
  %9931 = vmatpush1.bf16.msra.mxu0 %v7378
  %9932 = vmatprep.subr.bf16.mxu0 %v7387
  %9933 = vmatpush1.bf16.msra.mxu0 %v7386
  %9934 = vmatprep.subr.bf16.mxu0 %v7395
  %9935 = vmatpush1.bf16.msra.mxu0 %v7394
  %9936 = vmatprep.subr.bf16.mxu0 %v7403
  %9937 = vmatpush1.bf16.msra.mxu0 %v7402
  %9938 = vmatprep.subr.bf16.mxu0 %v7411
  %9939 = vmatpush1.bf16.msra.mxu0 %v7410
  %9940 = vmatprep.mubr.bf16.mxu0 %v1726
  %9941 = vmatmul.mubr.bf16.gmra.mrb[0].mxu0 %v1712
  %v9942 = vpop.f32.mrb[0].mxu0
  %v9943 = vadd.f32 %v9902, %v9942
  %v9944 = vpop.f32.mrb[0].mxu0
  %v9945 = vadd.f32 %v9904, %v9944
  %v9946 = vpop.f32.mrb[0].mxu0
  %v9947 = vpop.f32.mrb[0].mxu0
  %9948 = vdwg.mxu0
  %9949 = vmatprep.subr.bf16.mxu0 %v7419
  %9950 = vmatpush1.bf16.msra.mxu0 %v7418
  %9951 = vmatprep.subr.bf16.mxu0 %v7427
  %9952 = vmatpush1.bf16.msra.mxu0 %v7426
  %9953 = vmatprep.subr.bf16.mxu0 %v7435
  %9954 = vmatpush1.bf16.msra.mxu0 %v7434
  %9955 = vmatprep.subr.bf16.mxu0 %v7443
  %9956 = vmatpush1.bf16.msra.mxu0 %v7442
  %9957 = vmatprep.subr.bf16.mxu0 %v7451
  %9958 = vmatpush1.bf16.msra.mxu0 %v7450
  %9959 = vmatprep.subr.bf16.mxu0 %v7459
  %9960 = vmatpush1.bf16.msra.mxu0 %v7458
  %9961 = vmatprep.subr.bf16.mxu0 %v7467
  %9962 = vmatpush1.bf16.msra.mxu0 %v7466
  %9963 = vmatprep.subr.bf16.mxu0 %v7475
  %9964 = vmatpush1.bf16.msra.mxu0 %v7474
  %9965 = vmatprep.subr.bf16.mxu0 %v7483
  %9966 = vmatpush1.bf16.msra.mxu0 %v7482
  %9967 = vmatprep.subr.bf16.mxu0 %v7491
  %9968 = vmatpush1.bf16.msra.mxu0 %v7490
  %9969 = vmatprep.subr.bf16.mxu0 %v7499
  %9970 = vmatpush1.bf16.msra.mxu0 %v7498
  %9971 = vmatprep.subr.bf16.mxu0 %v7507
  %9972 = vmatpush1.bf16.msra.mxu0 %v7506
  %9973 = vmatprep.subr.bf16.mxu0 %v7515
  %9974 = vmatpush1.bf16.msra.mxu0 %v7514
  %9975 = vmatprep.subr.bf16.mxu0 %v7523
  %9976 = vmatpush1.bf16.msra.mxu0 %v7522
  %9977 = vmatprep.subr.bf16.mxu0 %v7531
  %9978 = vmatpush1.bf16.msra.mxu0 %v7530
  %9979 = vmatprep.subr.bf16.mxu0 %v7539
  %9980 = vmatpush1.bf16.msra.mxu0 %v7538
  %9981 = vmatprep.mubr.bf16.mxu0 %v1730
  %9982 = vmatmul.mubr.bf16.gmra.mrb[0].mxu0 %v1728
  %v9983 = vpop.f32.mrb[0].mxu0
  %v9984 = vadd.f32 %v9943, %v9983
  %v9985 = vpop.f32.mrb[0].mxu0
  %v9986 = vadd.f32 %v9945, %v9985
  %v9987 = vpop.f32.mrb[0].mxu0
  %v9988 = vpop.f32.mrb[0].mxu0
  %9989 = vdwg.mxu0
  %9990 = vmatprep.subr.bf16.mxu0 %v7547
  %9991 = vmatpush1.bf16.msra.mxu0 %v7546
  %9992 = vmatprep.subr.bf16.mxu0 %v7555
  %9993 = vmatpush1.bf16.msra.mxu0 %v7554
  %9994 = vmatprep.subr.bf16.mxu0 %v7563
  %9995 = vmatpush1.bf16.msra.mxu0 %v7562
  %9996 = vmatprep.subr.bf16.mxu0 %v7571
  %9997 = vmatpush1.bf16.msra.mxu0 %v7570
  %9998 = vmatprep.subr.bf16.mxu0 %v7579
  %9999 = vmatpush1.bf16.msra.mxu0 %v7578
  %10000 = vmatprep.subr.bf16.mxu0 %v7587
  %10001 = vmatpush1.bf16.msra.mxu0 %v7586
  %10002 = vmatprep.subr.bf16.mxu0 %v7595
  %10003 = vmatpush1.bf16.msra.mxu0 %v7594
  %10004 = vmatprep.subr.bf16.mxu0 %v7603
  %10005 = vmatpush1.bf16.msra.mxu0 %v7602
  %10006 = vmatprep.subr.bf16.mxu0 %v7611
  %10007 = vmatpush1.bf16.msra.mxu0 %v7610
  %10008 = vmatprep.subr.bf16.mxu0 %v7619
  %10009 = vmatpush1.bf16.msra.mxu0 %v7618
  %10010 = vmatprep.subr.bf16.mxu0 %v7627
  %10011 = vmatpush1.bf16.msra.mxu0 %v7626
  %10012 = vmatprep.subr.bf16.mxu0 %v7635
  %10013 = vmatpush1.bf16.msra.mxu0 %v7634
  %10014 = vmatprep.subr.bf16.mxu0 %v7643
  %10015 = vmatpush1.bf16.msra.mxu0 %v7642
  %10016 = vmatprep.subr.bf16.mxu0 %v7651
  %10017 = vmatpush1.bf16.msra.mxu0 %v7650
  %10018 = vmatprep.subr.bf16.mxu0 %v7659
  %10019 = vmatpush1.bf16.msra.mxu0 %v7658
  %10020 = vmatprep.subr.bf16.mxu0 %v7667
  %10021 = vmatpush1.bf16.msra.mxu0 %v7666
  %10022 = vmatprep.mubr.bf16.mxu0 %v1768
  %10023 = vmatmul.mubr.bf16.gmra.mrb[0].mxu0 %v1754
  %v10024 = vpop.f32.mrb[0].mxu0
  %v10025 = vadd.f32 %v9984, %v10024
  %v10026 = vpop.f32.mrb[0].mxu0
  %v10027 = vadd.f32 %v9986, %v10026
  %v10028 = vpop.f32.mrb[0].mxu0
  %v10029 = vpop.f32.mrb[0].mxu0
  %10030 = vdwg.mxu0
  %10031 = vmatprep.subr.bf16.mxu0 %v7675
  %10032 = vmatpush1.bf16.msra.mxu0 %v7674
  %10033 = vmatprep.subr.bf16.mxu0 %v7683
  %10034 = vmatpush1.bf16.msra.mxu0 %v7682
  %10035 = vmatprep.subr.bf16.mxu0 %v7691
  %10036 = vmatpush1.bf16.msra.mxu0 %v7690
  %10037 = vmatprep.subr.bf16.mxu0 %v7699
  %10038 = vmatpush1.bf16.msra.mxu0 %v7698
  %10039 = vmatprep.subr.bf16.mxu0 %v7707
  %10040 = vmatpush1.bf16.msra.mxu0 %v7706
  %10041 = vmatprep.subr.bf16.mxu0 %v7715
  %10042 = vmatpush1.bf16.msra.mxu0 %v7714
  %10043 = vmatprep.subr.bf16.mxu0 %v7723
  %10044 = vmatpush1.bf16.msra.mxu0 %v7722
  %10045 = vmatprep.subr.bf16.mxu0 %v7731
  %10046 = vmatpush1.bf16.msra.mxu0 %v7730
  %10047 = vmatprep.subr.bf16.mxu0 %v7739
  %10048 = vmatpush1.bf16.msra.mxu0 %v7738
  %10049 = vmatprep.subr.bf16.mxu0 %v7747
  %10050 = vmatpush1.bf16.msra.mxu0 %v7746
  %10051 = vmatprep.subr.bf16.mxu0 %v7755
  %10052 = vmatpush1.bf16.msra.mxu0 %v7754
  %10053 = vmatprep.subr.bf16.mxu0 %v7763
  %10054 = vmatpush1.bf16.msra.mxu0 %v7762
  %10055 = vmatprep.subr.bf16.mxu0 %v7771
  %10056 = vmatpush1.bf16.msra.mxu0 %v7770
  %10057 = vmatprep.subr.bf16.mxu0 %v7779
  %10058 = vmatpush1.bf16.msra.mxu0 %v7778
  %10059 = vmatprep.subr.bf16.mxu0 %v7787
  %10060 = vmatpush1.bf16.msra.mxu0 %v7786
  %10061 = vmatprep.subr.bf16.mxu0 %v7795
  %10062 = vmatpush1.bf16.msra.mxu0 %v7794
  %10063 = vmatprep.mubr.bf16.mxu0 %v1778
  %10064 = vmatmul.mubr.bf16.gmra.mrb[0].mxu0 %v1776
  %v10065 = vpop.f32.mrb[0].mxu0
  %v10066 = vadd.f32 %v10025, %v10065
  %v10067 = vpop.f32.mrb[0].mxu0
  %v10068 = vadd.f32 %v10027, %v10067
  %v10069 = vpop.f32.mrb[0].mxu0
  %v10070 = vpop.f32.mrb[0].mxu0
  %10071 = vdwg.mxu0
  %10072 = vmatprep.subr.bf16.mxu0 %v7803
  %10073 = vmatpush1.bf16.msra.mxu0 %v7802
  %10074 = vmatprep.subr.bf16.mxu0 %v7811
  %10075 = vmatpush1.bf16.msra.mxu0 %v7810
  %10076 = vmatprep.subr.bf16.mxu0 %v7819
  %10077 = vmatpush1.bf16.msra.mxu0 %v7818
  %10078 = vmatprep.subr.bf16.mxu0 %v7827
  %10079 = vmatpush1.bf16.msra.mxu0 %v7826
  %10080 = vmatprep.subr.bf16.mxu0 %v7835
  %10081 = vmatpush1.bf16.msra.mxu0 %v7834
  %10082 = vmatprep.subr.bf16.mxu0 %v7843
  %10083 = vmatpush1.bf16.msra.mxu0 %v7842
  %10084 = vmatprep.subr.bf16.mxu0 %v7851
  %10085 = vmatpush1.bf16.msra.mxu0 %v7850
  %10086 = vmatprep.subr.bf16.mxu0 %v7859
  %10087 = vmatpush1.bf16.msra.mxu0 %v7858
  %10088 = vmatprep.subr.bf16.mxu0 %v7867
  %10089 = vmatpush1.bf16.msra.mxu0 %v7866
  %10090 = vmatprep.subr.bf16.mxu0 %v7875
  %10091 = vmatpush1.bf16.msra.mxu0 %v7874
  %10092 = vmatprep.subr.bf16.mxu0 %v7883
  %10093 = vmatpush1.bf16.msra.mxu0 %v7882
  %10094 = vmatprep.subr.bf16.mxu0 %v7891
  %10095 = vmatpush1.bf16.msra.mxu0 %v7890
  %10096 = vmatprep.subr.bf16.mxu0 %v7899
  %10097 = vmatpush1.bf16.msra.mxu0 %v7898
  %10098 = vmatprep.subr.bf16.mxu0 %v7907
  %10099 = vmatpush1.bf16.msra.mxu0 %v7906
  %10100 = vmatprep.subr.bf16.mxu0 %v7915
  %10101 = vmatpush1.bf16.msra.mxu0 %v7914
  %10102 = vmatprep.subr.bf16.mxu0 %v7923
  %10103 = vmatpush1.bf16.msra.mxu0 %v7922
  %10104 = vmatprep.mubr.bf16.mxu0 %v1775
  %10105 = vmatmul.mubr.bf16.gmra.mrb[0].mxu0 %v1761
  %v10106 = vpop.f32.mrb[0].mxu0
  %v10107 = vadd.f32 %v10066, %v10106
  %v10108 = vpop.f32.mrb[0].mxu0
  %v10109 = vadd.f32 %v10068, %v10108
  %v10110 = vpop.f32.mrb[0].mxu0
  %v10111 = vpop.f32.mrb[0].mxu0
  %10112 = vdwg.mxu0
  %10113 = vmatprep.subr.bf16.mxu0 %v7931
  %10114 = vmatpush1.bf16.msra.mxu0 %v7930
  %10115 = vmatprep.subr.bf16.mxu0 %v7939
  %10116 = vmatpush1.bf16.msra.mxu0 %v7938
  %10117 = vmatprep.subr.bf16.mxu0 %v7947
  %10118 = vmatpush1.bf16.msra.mxu0 %v7946
  %10119 = vmatprep.subr.bf16.mxu0 %v7955
  %10120 = vmatpush1.bf16.msra.mxu0 %v7954
  %10121 = vmatprep.subr.bf16.mxu0 %v7963
  %10122 = vmatpush1.bf16.msra.mxu0 %v7962
  %10123 = vmatprep.subr.bf16.mxu0 %v7971
  %10124 = vmatpush1.bf16.msra.mxu0 %v7970
  %10125 = vmatprep.subr.bf16.mxu0 %v7979
  %10126 = vmatpush1.bf16.msra.mxu0 %v7978
  %10127 = vmatprep.subr.bf16.mxu0 %v7987
  %10128 = vmatpush1.bf16.msra.mxu0 %v7986
  %10129 = vmatprep.subr.bf16.mxu0 %v7995
  %10130 = vmatpush1.bf16.msra.mxu0 %v7994
  %10131 = vmatprep.subr.bf16.mxu0 %v8003
  %10132 = vmatpush1.bf16.msra.mxu0 %v8002
  %10133 = vmatprep.subr.bf16.mxu0 %v8011
  %10134 = vmatpush1.bf16.msra.mxu0 %v8010
  %10135 = vmatprep.subr.bf16.mxu0 %v8019
  %10136 = vmatpush1.bf16.msra.mxu0 %v8018
  %10137 = vmatprep.subr.bf16.mxu0 %v8027
  %10138 = vmatpush1.bf16.msra.mxu0 %v8026
  %10139 = vmatprep.subr.bf16.mxu0 %v8035
  %10140 = vmatpush1.bf16.msra.mxu0 %v8034
  %10141 = vmatprep.subr.bf16.mxu0 %v8043
  %10142 = vmatpush1.bf16.msra.mxu0 %v8042
  %10143 = vmatprep.subr.bf16.mxu0 %v8051
  %10144 = vmatpush1.bf16.msra.mxu0 %v8050
  %10145 = vmatprep.mubr.bf16.mxu0 %v1779
  %10146 = vmatmul.mubr.bf16.gmra.mrb[0].mxu0 %v1777
  %v10147 = vpop.f32.mrb[0].mxu0
  %v10148 = vadd.f32 %v10107, %v10147
  %v10149 = vpop.f32.mrb[0].mxu0
  %v10150 = vadd.f32 %v10109, %v10149
  %v10151 = vpop.f32.mrb[0].mxu0
  %v10152 = vpop.f32.mrb[0].mxu0
  %10153 = vdwg.mxu0
  %10154 = vmatprep.subr.bf16.mxu0 %v8059
  %10155 = vmatpush1.bf16.msra.mxu0 %v8058
  %10156 = vmatprep.subr.bf16.mxu0 %v8067
  %10157 = vmatpush1.bf16.msra.mxu0 %v8066
  %10158 = vmatprep.subr.bf16.mxu0 %v8075
  %10159 = vmatpush1.bf16.msra.mxu0 %v8074
  %10160 = vmatprep.subr.bf16.mxu0 %v8083
  %10161 = vmatpush1.bf16.msra.mxu0 %v8082
  %10162 = vmatprep.subr.bf16.mxu0 0
  %10163 = vmatpush1.bf16.msra.mxu0 0
  %10164 = vmatprep.subr.bf16.mxu0 0
  %10165 = vmatpush1.bf16.msra.mxu0 0
  %10166 = vmatprep.subr.bf16.mxu0 0
  %10167 = vmatpush1.bf16.msra.mxu0 0
  %10168 = vmatprep.subr.bf16.mxu0 0
  %10169 = vmatpush1.bf16.msra.mxu0 0
  %10170 = vmatprep.subr.bf16.mxu0 0
  %10171 = vmatpush1.bf16.msra.mxu0 0
  %10172 = vmatprep.subr.bf16.mxu0 0
  %10173 = vmatpush1.bf16.msra.mxu0 0
  %10174 = vmatprep.subr.bf16.mxu0 0
  %10175 = vmatpush1.bf16.msra.mxu0 0
  %10176 = vmatprep.subr.bf16.mxu0 0
  %10177 = vmatpush1.bf16.msra.mxu0 0
  %10178 = vmatprep.subr.bf16.mxu0 0
  %10179 = vmatpush1.bf16.msra.mxu0 0
  %10180 = vmatprep.subr.bf16.mxu0 0
  %10181 = vmatpush1.bf16.msra.mxu0 0
  %10182 = vmatprep.subr.bf16.mxu0 0
  %10183 = vmatpush1.bf16.msra.mxu0 0
  %10184 = vmatprep.subr.bf16.mxu0 0
  %10185 = vmatpush1.bf16.msra.mxu0 0
  %10186 = vmatprep.mubr.bf16.mxu0 0
  %10187 = vmatmul.mubr.bf16.gmra.mrb[0].mxu0 %v9660
  %v10188 = vpop.f32.mrb[0].mxu0
  %v10189 = vadd.f32 %v10148, %v10188
  %v10190 = vpop.f32.mrb[0].mxu0
  %v10191 = vadd.f32 %v10150, %v10190
  %v10192 = vpop.f32.mrb[0].mxu0
  %v10193 = vpop.f32.mrb[0].mxu0
  %10194 = vdwg.mxu0
  %10195 = vmatprep.subr.bf16.mxu0 %v6525
  %10196 = vmatpush1.bf16.msra.mxu0 %v6524
  %10197 = vmatprep.subr.bf16.mxu0 %v6533
  %10198 = vmatpush1.bf16.msra.mxu0 %v6532
  %10199 = vmatprep.subr.bf16.mxu0 %v6541
  %10200 = vmatpush1.bf16.msra.mxu0 %v6540
  %10201 = vmatprep.subr.bf16.mxu0 %v6549
  %10202 = vmatpush1.bf16.msra.mxu0 %v6548
  %10203 = vmatprep.subr.bf16.mxu0 %v6557
  %10204 = vmatpush1.bf16.msra.mxu0 %v6556
  %10205 = vmatprep.subr.bf16.mxu0 %v6565
  %10206 = vmatpush1.bf16.msra.mxu0 %v6564
  %10207 = vmatprep.subr.bf16.mxu0 %v6573
  %10208 = vmatpush1.bf16.msra.mxu0 %v6572
  %10209 = vmatprep.subr.bf16.mxu0 %v6581
  %10210 = vmatpush1.bf16.msra.mxu0 %v6580
  %10211 = vmatprep.subr.bf16.mxu0 %v6589
  %10212 = vmatpush1.bf16.msra.mxu0 %v6588
  %10213 = vmatprep.subr.bf16.mxu0 %v6597
  %10214 = vmatpush1.bf16.msra.mxu0 %v6596
  %10215 = vmatprep.subr.bf16.mxu0 %v6605
  %10216 = vmatpush1.bf16.msra.mxu0 %v6604
  %10217 = vmatprep.subr.bf16.mxu0 %v6613
  %10218 = vmatpush1.bf16.msra.mxu0 %v6612
  %10219 = vmatprep.subr.bf16.mxu0 %v6621
  %10220 = vmatpush1.bf16.msra.mxu0 %v6620
  %10221 = vmatprep.subr.bf16.mxu0 %v6629
  %10222 = vmatpush1.bf16.msra.mxu0 %v6628
  %10223 = vmatprep.subr.bf16.mxu0 %v6637
  %10224 = vmatpush1.bf16.msra.mxu0 %v6636
  %10225 = vmatprep.subr.bf16.mxu0 %v6645
  %10226 = vmatpush1.bf16.msra.mxu0 %v6644
  %10227 = vmatprep.mubr.bf16.mxu0 %v1670
  %10228 = vmatmul.mubr.bf16.gmra.mrb[0].mxu0 %v1656
  %v10229 = vpop.f32.mrb[0].mxu0
  %v10230 = vadd.f32 %v1600, %v10229
  %v10231 = vpop.f32.mrb[0].mxu0
  %v10232 = vadd.f32 %v1604, %v10231
  %v10233 = vpop.f32.mrb[0].mxu0
  %v10234 = vpop.f32.mrb[0].mxu0
  %10235 = vdwg.mxu0
  %10236 = vmatprep.subr.bf16.mxu0 %v6653
  %10237 = vmatpush1.bf16.msra.mxu0 %v6652
  %10238 = vmatprep.subr.bf16.mxu0 %v6661
  %10239 = vmatpush1.bf16.msra.mxu0 %v6660
  %10240 = vmatprep.subr.bf16.mxu0 %v6669
  %10241 = vmatpush1.bf16.msra.mxu0 %v6668
  %10242 = vmatprep.subr.bf16.mxu0 %v6677
  %10243 = vmatpush1.bf16.msra.mxu0 %v6676
  %10244 = vmatprep.subr.bf16.mxu0 %v6685
  %10245 = vmatpush1.bf16.msra.mxu0 %v6684
  %10246 = vmatprep.subr.bf16.mxu0 %v6693
  %10247 = vmatpush1.bf16.msra.mxu0 %v6692
  %10248 = vmatprep.subr.bf16.mxu0 %v6701
  %10249 = vmatpush1.bf16.msra.mxu0 %v6700
  %10250 = vmatprep.subr.bf16.mxu0 %v6709
  %10251 = vmatpush1.bf16.msra.mxu0 %v6708
  %10252 = vmatprep.subr.bf16.mxu0 %v6717
  %10253 = vmatpush1.bf16.msra.mxu0 %v6716
  %10254 = vmatprep.subr.bf16.mxu0 %v6725
  %10255 = vmatpush1.bf16.msra.mxu0 %v6724
  %10256 = vmatprep.subr.bf16.mxu0 %v6733
  %10257 = vmatpush1.bf16.msra.mxu0 %v6732
  %10258 = vmatprep.subr.bf16.mxu0 %v6741
  %10259 = vmatpush1.bf16.msra.mxu0 %v6740
  %10260 = vmatprep.subr.bf16.mxu0 %v6749
  %10261 = vmatpush1.bf16.msra.mxu0 %v6748
  %10262 = vmatprep.subr.bf16.mxu0 %v6757
  %10263 = vmatpush1.bf16.msra.mxu0 %v6756
  %10264 = vmatprep.subr.bf16.mxu0 %v6765
  %10265 = vmatpush1.bf16.msra.mxu0 %v6764
  %10266 = vmatprep.subr.bf16.mxu0 %v6773
  %10267 = vmatpush1.bf16.msra.mxu0 %v6772
  %10268 = vmatprep.mubr.bf16.mxu0 %v1680
  %10269 = vmatmul.mubr.bf16.gmra.mrb[0].mxu0 %v1678
  %v10270 = vpop.f32.mrb[0].mxu0
  %v10271 = vadd.f32 %v10230, %v10270
  %v10272 = vpop.f32.mrb[0].mxu0
  %v10273 = vadd.f32 %v10232, %v10272
  %v10274 = vpop.f32.mrb[0].mxu0
  %v10275 = vpop.f32.mrb[0].mxu0
  %10276 = vdwg.mxu0
  %10277 = vmatprep.subr.bf16.mxu0 %v6781
  %10278 = vmatpush1.bf16.msra.mxu0 %v6780
  %10279 = vmatprep.subr.bf16.mxu0 %v6789
  %10280 = vmatpush1.bf16.msra.mxu0 %v6788
  %10281 = vmatprep.subr.bf16.mxu0 %v6797
  %10282 = vmatpush1.bf16.msra.mxu0 %v6796
  %10283 = vmatprep.subr.bf16.mxu0 %v6805
  %10284 = vmatpush1.bf16.msra.mxu0 %v6804
  %10285 = vmatprep.subr.bf16.mxu0 %v6813
  %10286 = vmatpush1.bf16.msra.mxu0 %v6812
  %10287 = vmatprep.subr.bf16.mxu0 %v6821
  %10288 = vmatpush1.bf16.msra.mxu0 %v6820
  %10289 = vmatprep.subr.bf16.mxu0 %v6829
  %10290 = vmatpush1.bf16.msra.mxu0 %v6828
  %10291 = vmatprep.subr.bf16.mxu0 %v6837
  %10292 = vmatpush1.bf16.msra.mxu0 %v6836
  %10293 = vmatprep.subr.bf16.mxu0 %v6845
  %10294 = vmatpush1.bf16.msra.mxu0 %v6844
  %10295 = vmatprep.subr.bf16.mxu0 %v6853
  %10296 = vmatpush1.bf16.msra.mxu0 %v6852
  %10297 = vmatprep.subr.bf16.mxu0 %v6861
  %10298 = vmatpush1.bf16.msra.mxu0 %v6860
  %10299 = vmatprep.subr.bf16.mxu0 %v6869
  %10300 = vmatpush1.bf16.msra.mxu0 %v6868
  %10301 = vmatprep.subr.bf16.mxu0 %v6877
  %10302 = vmatpush1.bf16.msra.mxu0 %v6876
  %10303 = vmatprep.subr.bf16.mxu0 %v6885
  %10304 = vmatpush1.bf16.msra.mxu0 %v6884
  %10305 = vmatprep.subr.bf16.mxu0 %v6893
  %10306 = vmatpush1.bf16.msra.mxu0 %v6892
  %10307 = vmatprep.subr.bf16.mxu0 %v6901
  %10308 = vmatpush1.bf16.msra.mxu0 %v6900
  %10309 = vmatprep.mubr.bf16.mxu0 %v1677
  %10310 = vmatmul.mubr.bf16.gmra.mrb[0].mxu0 %v1663
  %v10311 = vpop.f32.mrb[0].mxu0
  %v10312 = vadd.f32 %v10271, %v10311
  %v10313 = vpop.f32.mrb[0].mxu0
  %v10314 = vadd.f32 %v10273, %v10313
  %v10315 = vpop.f32.mrb[0].mxu0
  %v10316 = vpop.f32.mrb[0].mxu0
  %10317 = vdwg.mxu0
  %10318 = vmatprep.subr.bf16.mxu0 %v6909
  %10319 = vmatpush1.bf16.msra.mxu0 %v6908
  %10320 = vmatprep.subr.bf16.mxu0 %v6917
  %10321 = vmatpush1.bf16.msra.mxu0 %v6916
  %10322 = vmatprep.subr.bf16.mxu0 %v6925
  %10323 = vmatpush1.bf16.msra.mxu0 %v6924
  %10324 = vmatprep.subr.bf16.mxu0 %v6933
  %10325 = vmatpush1.bf16.msra.mxu0 %v6932
  %10326 = vmatprep.subr.bf16.mxu0 %v6941
  %10327 = vmatpush1.bf16.msra.mxu0 %v6940
  %10328 = vmatprep.subr.bf16.mxu0 %v6949
  %10329 = vmatpush1.bf16.msra.mxu0 %v6948
  %10330 = vmatprep.subr.bf16.mxu0 %v6957
  %10331 = vmatpush1.bf16.msra.mxu0 %v6956
  %10332 = vmatprep.subr.bf16.mxu0 %v6965
  %10333 = vmatpush1.bf16.msra.mxu0 %v6964
  %10334 = vmatprep.subr.bf16.mxu0 %v6973
  %10335 = vmatpush1.bf16.msra.mxu0 %v6972
  %10336 = vmatprep.subr.bf16.mxu0 %v6981
  %10337 = vmatpush1.bf16.msra.mxu0 %v6980
  %10338 = vmatprep.subr.bf16.mxu0 %v6989
  %10339 = vmatpush1.bf16.msra.mxu0 %v6988
  %10340 = vmatprep.subr.bf16.mxu0 %v6997
  %10341 = vmatpush1.bf16.msra.mxu0 %v6996
  %10342 = vmatprep.subr.bf16.mxu0 %v7005
  %10343 = vmatpush1.bf16.msra.mxu0 %v7004
  %10344 = vmatprep.subr.bf16.mxu0 %v7013
  %10345 = vmatpush1.bf16.msra.mxu0 %v7012
  %10346 = vmatprep.subr.bf16.mxu0 %v7021
  %10347 = vmatpush1.bf16.msra.mxu0 %v7020
  %10348 = vmatprep.subr.bf16.mxu0 %v7029
  %10349 = vmatpush1.bf16.msra.mxu0 %v7028
  %10350 = vmatprep.mubr.bf16.mxu0 %v1681
  %10351 = vmatmul.mubr.bf16.gmra.mrb[0].mxu0 %v1679
  %v10352 = vpop.f32.mrb[0].mxu0
  %v10353 = vadd.f32 %v10312, %v10352
  %v10354 = vpop.f32.mrb[0].mxu0
  %v10355 = vadd.f32 %v10314, %v10354
  %v10356 = vpop.f32.mrb[0].mxu0
  %v10357 = vpop.f32.mrb[0].mxu0
  %10358 = vdwg.mxu0
  %10359 = vmatprep.subr.bf16.mxu0 %v7037
  %10360 = vmatpush1.bf16.msra.mxu0 %v7036
  %10361 = vmatprep.subr.bf16.mxu0 %v7045
  %10362 = vmatpush1.bf16.msra.mxu0 %v7044
  %10363 = vmatprep.subr.bf16.mxu0 %v7053
  %10364 = vmatpush1.bf16.msra.mxu0 %v7052
  %10365 = vmatprep.subr.bf16.mxu0 %v7061
  %10366 = vmatpush1.bf16.msra.mxu0 %v7060
  %10367 = vmatprep.subr.bf16.mxu0 %v7069
  %10368 = vmatpush1.bf16.msra.mxu0 %v7068
  %10369 = vmatprep.subr.bf16.mxu0 %v7077
  %10370 = vmatpush1.bf16.msra.mxu0 %v7076
  %10371 = vmatprep.subr.bf16.mxu0 %v7085
  %10372 = vmatpush1.bf16.msra.mxu0 %v7084
  %10373 = vmatprep.subr.bf16.mxu0 %v7093
  %10374 = vmatpush1.bf16.msra.mxu0 %v7092
  %10375 = vmatprep.subr.bf16.mxu0 %v7101
  %10376 = vmatpush1.bf16.msra.mxu0 %v7100
  %10377 = vmatprep.subr.bf16.mxu0 %v7109
  %10378 = vmatpush1.bf16.msra.mxu0 %v7108
  %10379 = vmatprep.subr.bf16.mxu0 %v7117
  %10380 = vmatpush1.bf16.msra.mxu0 %v7116
  %10381 = vmatprep.subr.bf16.mxu0 %v7125
  %10382 = vmatpush1.bf16.msra.mxu0 %v7124
  %10383 = vmatprep.subr.bf16.mxu0 %v7133
  %10384 = vmatpush1.bf16.msra.mxu0 %v7132
  %10385 = vmatprep.subr.bf16.mxu0 %v7141
  %10386 = vmatpush1.bf16.msra.mxu0 %v7140
  %10387 = vmatprep.subr.bf16.mxu0 %v7149
  %10388 = vmatpush1.bf16.msra.mxu0 %v7148
  %10389 = vmatprep.subr.bf16.mxu0 %v7157
  %10390 = vmatpush1.bf16.msra.mxu0 %v7156
  %10391 = vmatprep.mubr.bf16.mxu0 %v1719
  %10392 = vmatmul.mubr.bf16.gmra.mrb[0].mxu0 %v1705
  %v10393 = vpop.f32.mrb[0].mxu0
  %v10394 = vadd.f32 %v10353, %v10393
  %v10395 = vpop.f32.mrb[0].mxu0
  %v10396 = vadd.f32 %v10355, %v10395
  %v10397 = vpop.f32.mrb[0].mxu0
  %v10398 = vpop.f32.mrb[0].mxu0
  %10399 = vdwg.mxu0
  %10400 = vmatprep.subr.bf16.mxu0 %v7165
  %10401 = vmatpush1.bf16.msra.mxu0 %v7164
  %10402 = vmatprep.subr.bf16.mxu0 %v7173
  %10403 = vmatpush1.bf16.msra.mxu0 %v7172
  %10404 = vmatprep.subr.bf16.mxu0 %v7181
  %10405 = vmatpush1.bf16.msra.mxu0 %v7180
  %10406 = vmatprep.subr.bf16.mxu0 %v7189
  %10407 = vmatpush1.bf16.msra.mxu0 %v7188
  %10408 = vmatprep.subr.bf16.mxu0 %v7197
  %10409 = vmatpush1.bf16.msra.mxu0 %v7196
  %10410 = vmatprep.subr.bf16.mxu0 %v7205
  %10411 = vmatpush1.bf16.msra.mxu0 %v7204
  %10412 = vmatprep.subr.bf16.mxu0 %v7213
  %10413 = vmatpush1.bf16.msra.mxu0 %v7212
  %10414 = vmatprep.subr.bf16.mxu0 %v7221
  %10415 = vmatpush1.bf16.msra.mxu0 %v7220
  %10416 = vmatprep.subr.bf16.mxu0 %v7229
  %10417 = vmatpush1.bf16.msra.mxu0 %v7228
  %10418 = vmatprep.subr.bf16.mxu0 %v7237
  %10419 = vmatpush1.bf16.msra.mxu0 %v7236
  %10420 = vmatprep.subr.bf16.mxu0 %v7245
  %10421 = vmatpush1.bf16.msra.mxu0 %v7244
  %10422 = vmatprep.subr.bf16.mxu0 %v7253
  %10423 = vmatpush1.bf16.msra.mxu0 %v7252
  %10424 = vmatprep.subr.bf16.mxu0 %v7261
  %10425 = vmatpush1.bf16.msra.mxu0 %v7260
  %10426 = vmatprep.subr.bf16.mxu0 %v7269
  %10427 = vmatpush1.bf16.msra.mxu0 %v7268
  %10428 = vmatprep.subr.bf16.mxu0 %v7277
  %10429 = vmatpush1.bf16.msra.mxu0 %v7276
  %10430 = vmatprep.subr.bf16.mxu0 %v7285
  %10431 = vmatpush1.bf16.msra.mxu0 %v7284
  %10432 = vmatprep.mubr.bf16.mxu0 %v1729
  %10433 = vmatmul.mubr.bf16.gmra.mrb[0].mxu0 %v1727
  %v10434 = vpop.f32.mrb[0].mxu0
  %v10435 = vadd.f32 %v10394, %v10434
  %v10436 = vpop.f32.mrb[0].mxu0
  %v10437 = vadd.f32 %v10396, %v10436
  %v10438 = vpop.f32.mrb[0].mxu0
  %v10439 = vpop.f32.mrb[0].mxu0
  %10440 = vdwg.mxu0
  %10441 = vmatprep.subr.bf16.mxu0 %v7293
  %10442 = vmatpush1.bf16.msra.mxu0 %v7292
  %10443 = vmatprep.subr.bf16.mxu0 %v7301
  %10444 = vmatpush1.bf16.msra.mxu0 %v7300
  %10445 = vmatprep.subr.bf16.mxu0 %v7309
  %10446 = vmatpush1.bf16.msra.mxu0 %v7308
  %10447 = vmatprep.subr.bf16.mxu0 %v7317
  %10448 = vmatpush1.bf16.msra.mxu0 %v7316
  %10449 = vmatprep.subr.bf16.mxu0 %v7325
  %10450 = vmatpush1.bf16.msra.mxu0 %v7324
  %10451 = vmatprep.subr.bf16.mxu0 %v7333
  %10452 = vmatpush1.bf16.msra.mxu0 %v7332
  %10453 = vmatprep.subr.bf16.mxu0 %v7341
  %10454 = vmatpush1.bf16.msra.mxu0 %v7340
  %10455 = vmatprep.subr.bf16.mxu0 %v7349
  %10456 = vmatpush1.bf16.msra.mxu0 %v7348
  %10457 = vmatprep.subr.bf16.mxu0 %v7357
  %10458 = vmatpush1.bf16.msra.mxu0 %v7356
  %10459 = vmatprep.subr.bf16.mxu0 %v7365
  %10460 = vmatpush1.bf16.msra.mxu0 %v7364
  %10461 = vmatprep.subr.bf16.mxu0 %v7373
  %10462 = vmatpush1.bf16.msra.mxu0 %v7372
  %10463 = vmatprep.subr.bf16.mxu0 %v7381
  %10464 = vmatpush1.bf16.msra.mxu0 %v7380
  %10465 = vmatprep.subr.bf16.mxu0 %v7389
  %10466 = vmatpush1.bf16.msra.mxu0 %v7388
  %10467 = vmatprep.subr.bf16.mxu0 %v7397
  %10468 = vmatpush1.bf16.msra.mxu0 %v7396
  %10469 = vmatprep.subr.bf16.mxu0 %v7405
  %10470 = vmatpush1.bf16.msra.mxu0 %v7404
  %10471 = vmatprep.subr.bf16.mxu0 %v7413
  %10472 = vmatpush1.bf16.msra.mxu0 %v7412
  %10473 = vmatprep.mubr.bf16.mxu0 %v1726
  %10474 = vmatmul.mubr.bf16.gmra.mrb[0].mxu0 %v1712
  %v10475 = vpop.f32.mrb[0].mxu0
  %v10476 = vadd.f32 %v10435, %v10475
  %v10477 = vpop.f32.mrb[0].mxu0
  %v10478 = vadd.f32 %v10437, %v10477
  %v10479 = vpop.f32.mrb[0].mxu0
  %v10480 = vpop.f32.mrb[0].mxu0
  %10481 = vdwg.mxu0
  %10482 = vmatprep.subr.bf16.mxu0 %v7421
  %10483 = vmatpush1.bf16.msra.mxu0 %v7420
  %10484 = vmatprep.subr.bf16.mxu0 %v7429
  %10485 = vmatpush1.bf16.msra.mxu0 %v7428
  %10486 = vmatprep.subr.bf16.mxu0 %v7437
  %10487 = vmatpush1.bf16.msra.mxu0 %v7436
  %10488 = vmatprep.subr.bf16.mxu0 %v7445
  %10489 = vmatpush1.bf16.msra.mxu0 %v7444
  %10490 = vmatprep.subr.bf16.mxu0 %v7453
  %10491 = vmatpush1.bf16.msra.mxu0 %v7452
  %10492 = vmatprep.subr.bf16.mxu0 %v7461
  %10493 = vmatpush1.bf16.msra.mxu0 %v7460
  %10494 = vmatprep.subr.bf16.mxu0 %v7469
  %10495 = vmatpush1.bf16.msra.mxu0 %v7468
  %10496 = vmatprep.subr.bf16.mxu0 %v7477
  %10497 = vmatpush1.bf16.msra.mxu0 %v7476
  %10498 = vmatprep.subr.bf16.mxu0 %v7485
  %10499 = vmatpush1.bf16.msra.mxu0 %v7484
  %10500 = vmatprep.subr.bf16.mxu0 %v7493
  %10501 = vmatpush1.bf16.msra.mxu0 %v7492
  %10502 = vmatprep.subr.bf16.mxu0 %v7501
  %10503 = vmatpush1.bf16.msra.mxu0 %v7500
  %10504 = vmatprep.subr.bf16.mxu0 %v7509
  %10505 = vmatpush1.bf16.msra.mxu0 %v7508
  %10506 = vmatprep.subr.bf16.mxu0 %v7517
  %10507 = vmatpush1.bf16.msra.mxu0 %v7516
  %10508 = vmatprep.subr.bf16.mxu0 %v7525
  %10509 = vmatpush1.bf16.msra.mxu0 %v7524
  %10510 = vmatprep.subr.bf16.mxu0 %v7533
  %10511 = vmatpush1.bf16.msra.mxu0 %v7532
  %10512 = vmatprep.subr.bf16.mxu0 %v7541
  %10513 = vmatpush1.bf16.msra.mxu0 %v7540
  %10514 = vmatprep.mubr.bf16.mxu0 %v1730
  %10515 = vmatmul.mubr.bf16.gmra.mrb[0].mxu0 %v1728
  %v10516 = vpop.f32.mrb[0].mxu0
  %v10517 = vadd.f32 %v10476, %v10516
  %v10518 = vpop.f32.mrb[0].mxu0
  %v10519 = vadd.f32 %v10478, %v10518
  %v10520 = vpop.f32.mrb[0].mxu0
  %v10521 = vpop.f32.mrb[0].mxu0
  %10522 = vdwg.mxu0
  %10523 = vmatprep.subr.bf16.mxu0 %v7549
  %10524 = vmatpush1.bf16.msra.mxu0 %v7548
  %10525 = vmatprep.subr.bf16.mxu0 %v7557
  %10526 = vmatpush1.bf16.msra.mxu0 %v7556
  %10527 = vmatprep.subr.bf16.mxu0 %v7565
  %10528 = vmatpush1.bf16.msra.mxu0 %v7564
  %10529 = vmatprep.subr.bf16.mxu0 %v7573
  %10530 = vmatpush1.bf16.msra.mxu0 %v7572
  %10531 = vmatprep.subr.bf16.mxu0 %v7581
  %10532 = vmatpush1.bf16.msra.mxu0 %v7580
  %10533 = vmatprep.subr.bf16.mxu0 %v7589
  %10534 = vmatpush1.bf16.msra.mxu0 %v7588
  %10535 = vmatprep.subr.bf16.mxu0 %v7597
  %10536 = vmatpush1.bf16.msra.mxu0 %v7596
  %10537 = vmatprep.subr.bf16.mxu0 %v7605
  %10538 = vmatpush1.bf16.msra.mxu0 %v7604
  %10539 = vmatprep.subr.bf16.mxu0 %v7613
  %10540 = vmatpush1.bf16.msra.mxu0 %v7612
  %10541 = vmatprep.subr.bf16.mxu0 %v7621
  %10542 = vmatpush1.bf16.msra.mxu0 %v7620
  %10543 = vmatprep.subr.bf16.mxu0 %v7629
  %10544 = vmatpush1.bf16.msra.mxu0 %v7628
  %10545 = vmatprep.subr.bf16.mxu0 %v7637
  %10546 = vmatpush1.bf16.msra.mxu0 %v7636
  %10547 = vmatprep.subr.bf16.mxu0 %v7645
  %10548 = vmatpush1.bf16.msra.mxu0 %v7644
  %10549 = vmatprep.subr.bf16.mxu0 %v7653
  %10550 = vmatpush1.bf16.msra.mxu0 %v7652
  %10551 = vmatprep.subr.bf16.mxu0 %v7661
  %10552 = vmatpush1.bf16.msra.mxu0 %v7660
  %10553 = vmatprep.subr.bf16.mxu0 %v7669
  %10554 = vmatpush1.bf16.msra.mxu0 %v7668
  %10555 = vmatprep.mubr.bf16.mxu0 %v1768
  %10556 = vmatmul.mubr.bf16.gmra.mrb[0].mxu0 %v1754
  %v10557 = vpop.f32.mrb[0].mxu0
  %v10558 = vadd.f32 %v10517, %v10557
  %v10559 = vpop.f32.mrb[0].mxu0
  %v10560 = vadd.f32 %v10519, %v10559
  %v10561 = vpop.f32.mrb[0].mxu0
  %v10562 = vpop.f32.mrb[0].mxu0
  %10563 = vdwg.mxu0
  %10564 = vmatprep.subr.bf16.mxu0 %v7677
  %10565 = vmatpush1.bf16.msra.mxu0 %v7676
  %10566 = vmatprep.subr.bf16.mxu0 %v7685
  %10567 = vmatpush1.bf16.msra.mxu0 %v7684
  %10568 = vmatprep.subr.bf16.mxu0 %v7693
  %10569 = vmatpush1.bf16.msra.mxu0 %v7692
  %10570 = vmatprep.subr.bf16.mxu0 %v7701
  %10571 = vmatpush1.bf16.msra.mxu0 %v7700
  %10572 = vmatprep.subr.bf16.mxu0 %v7709
  %10573 = vmatpush1.bf16.msra.mxu0 %v7708
  %10574 = vmatprep.subr.bf16.mxu0 %v7717
  %10575 = vmatpush1.bf16.msra.mxu0 %v7716
  %10576 = vmatprep.subr.bf16.mxu0 %v7725
  %10577 = vmatpush1.bf16.msra.mxu0 %v7724
  %10578 = vmatprep.subr.bf16.mxu0 %v7733
  %10579 = vmatpush1.bf16.msra.mxu0 %v7732
  %10580 = vmatprep.subr.bf16.mxu0 %v7741
  %10581 = vmatpush1.bf16.msra.mxu0 %v7740
  %10582 = vmatprep.subr.bf16.mxu0 %v7749
  %10583 = vmatpush1.bf16.msra.mxu0 %v7748
  %10584 = vmatprep.subr.bf16.mxu0 %v7757
  %10585 = vmatpush1.bf16.msra.mxu0 %v7756
  %10586 = vmatprep.subr.bf16.mxu0 %v7765
  %10587 = vmatpush1.bf16.msra.mxu0 %v7764
  %10588 = vmatprep.subr.bf16.mxu0 %v7773
  %10589 = vmatpush1.bf16.msra.mxu0 %v7772
  %10590 = vmatprep.subr.bf16.mxu0 %v7781
  %10591 = vmatpush1.bf16.msra.mxu0 %v7780
  %10592 = vmatprep.subr.bf16.mxu0 %v7789
  %10593 = vmatpush1.bf16.msra.mxu0 %v7788
  %10594 = vmatprep.subr.bf16.mxu0 %v7797
  %10595 = vmatpush1.bf16.msra.mxu0 %v7796
  %10596 = vmatprep.mubr.bf16.mxu0 %v1778
  %10597 = vmatmul.mubr.bf16.gmra.mrb[0].mxu0 %v1776
  %v10598 = vpop.f32.mrb[0].mxu0
  %v10599 = vadd.f32 %v10558, %v10598
  %v10600 = vpop.f32.mrb[0].mxu0
  %v10601 = vadd.f32 %v10560, %v10600
  %v10602 = vpop.f32.mrb[0].mxu0
  %v10603 = vpop.f32.mrb[0].mxu0
  %10604 = vdwg.mxu0
  %10605 = vmatprep.subr.bf16.mxu0 %v7805
  %10606 = vmatpush1.bf16.msra.mxu0 %v7804
  %10607 = vmatprep.subr.bf16.mxu0 %v7813
  %10608 = vmatpush1.bf16.msra.mxu0 %v7812
  %10609 = vmatprep.subr.bf16.mxu0 %v7821
  %10610 = vmatpush1.bf16.msra.mxu0 %v7820
  %10611 = vmatprep.subr.bf16.mxu0 %v7829
  %10612 = vmatpush1.bf16.msra.mxu0 %v7828
  %10613 = vmatprep.subr.bf16.mxu0 %v7837
  %10614 = vmatpush1.bf16.msra.mxu0 %v7836
  %10615 = vmatprep.subr.bf16.mxu0 %v7845
  %10616 = vmatpush1.bf16.msra.mxu0 %v7844
  %10617 = vmatprep.subr.bf16.mxu0 %v7853
  %10618 = vmatpush1.bf16.msra.mxu0 %v7852
  %10619 = vmatprep.subr.bf16.mxu0 %v7861
  %10620 = vmatpush1.bf16.msra.mxu0 %v7860
  %10621 = vmatprep.subr.bf16.mxu0 %v7869
  %10622 = vmatpush1.bf16.msra.mxu0 %v7868
  %10623 = vmatprep.subr.bf16.mxu0 %v7877
  %10624 = vmatpush1.bf16.msra.mxu0 %v7876
  %10625 = vmatprep.subr.bf16.mxu0 %v7885
  %10626 = vmatpush1.bf16.msra.mxu0 %v7884
  %10627 = vmatprep.subr.bf16.mxu0 %v7893
  %10628 = vmatpush1.bf16.msra.mxu0 %v7892
  %10629 = vmatprep.subr.bf16.mxu0 %v7901
  %10630 = vmatpush1.bf16.msra.mxu0 %v7900
  %10631 = vmatprep.subr.bf16.mxu0 %v7909
  %10632 = vmatpush1.bf16.msra.mxu0 %v7908
  %10633 = vmatprep.subr.bf16.mxu0 %v7917
  %10634 = vmatpush1.bf16.msra.mxu0 %v7916
  %10635 = vmatprep.subr.bf16.mxu0 %v7925
  %10636 = vmatpush1.bf16.msra.mxu0 %v7924
  %10637 = vmatprep.mubr.bf16.mxu0 %v1775
  %10638 = vmatmul.mubr.bf16.gmra.mrb[0].mxu0 %v1761
  %v10639 = vpop.f32.mrb[0].mxu0
  %v10640 = vadd.f32 %v10599, %v10639
  %v10641 = vpop.f32.mrb[0].mxu0
  %v10642 = vadd.f32 %v10601, %v10641
  %v10643 = vpop.f32.mrb[0].mxu0
  %v10644 = vpop.f32.mrb[0].mxu0
  %10645 = vdwg.mxu0
  %10646 = vmatprep.subr.bf16.mxu0 %v7933
  %10647 = vmatpush1.bf16.msra.mxu0 %v7932
  %10648 = vmatprep.subr.bf16.mxu0 %v7941
  %10649 = vmatpush1.bf16.msra.mxu0 %v7940
  %10650 = vmatprep.subr.bf16.mxu0 %v7949
  %10651 = vmatpush1.bf16.msra.mxu0 %v7948
  %10652 = vmatprep.subr.bf16.mxu0 %v7957
  %10653 = vmatpush1.bf16.msra.mxu0 %v7956
  %10654 = vmatprep.subr.bf16.mxu0 %v7965
  %10655 = vmatpush1.bf16.msra.mxu0 %v7964
  %10656 = vmatprep.subr.bf16.mxu0 %v7973
  %10657 = vmatpush1.bf16.msra.mxu0 %v7972
  %10658 = vmatprep.subr.bf16.mxu0 %v7981
  %10659 = vmatpush1.bf16.msra.mxu0 %v7980
  %10660 = vmatprep.subr.bf16.mxu0 %v7989
  %10661 = vmatpush1.bf16.msra.mxu0 %v7988
  %10662 = vmatprep.subr.bf16.mxu0 %v7997
  %10663 = vmatpush1.bf16.msra.mxu0 %v7996
  %10664 = vmatprep.subr.bf16.mxu0 %v8005
  %10665 = vmatpush1.bf16.msra.mxu0 %v8004
  %10666 = vmatprep.subr.bf16.mxu0 %v8013
  %10667 = vmatpush1.bf16.msra.mxu0 %v8012
  %10668 = vmatprep.subr.bf16.mxu0 %v8021
  %10669 = vmatpush1.bf16.msra.mxu0 %v8020
  %10670 = vmatprep.subr.bf16.mxu0 %v8029
  %10671 = vmatpush1.bf16.msra.mxu0 %v8028
  %10672 = vmatprep.subr.bf16.mxu0 %v8037
  %10673 = vmatpush1.bf16.msra.mxu0 %v8036
  %10674 = vmatprep.subr.bf16.mxu0 %v8045
  %10675 = vmatpush1.bf16.msra.mxu0 %v8044
  %10676 = vmatprep.subr.bf16.mxu0 %v8053
  %10677 = vmatpush1.bf16.msra.mxu0 %v8052
  %10678 = vmatprep.mubr.bf16.mxu0 %v1779
  %10679 = vmatmul.mubr.bf16.gmra.mrb[0].mxu0 %v1777
  %v10680 = vpop.f32.mrb[0].mxu0
  %v10681 = vadd.f32 %v10640, %v10680
  %v10682 = vpop.f32.mrb[0].mxu0
  %v10683 = vadd.f32 %v10642, %v10682
  %v10684 = vpop.f32.mrb[0].mxu0
  %v10685 = vpop.f32.mrb[0].mxu0
  %10686 = vdwg.mxu0
  %10687 = vmatprep.subr.bf16.mxu0 %v8061
  %10688 = vmatpush1.bf16.msra.mxu0 %v8060
  %10689 = vmatprep.subr.bf16.mxu0 %v8069
  %10690 = vmatpush1.bf16.msra.mxu0 %v8068
  %10691 = vmatprep.subr.bf16.mxu0 %v8077
  %10692 = vmatpush1.bf16.msra.mxu0 %v8076
  %10693 = vmatprep.subr.bf16.mxu0 %v8085
  %10694 = vmatpush1.bf16.msra.mxu0 %v8084
  %10695 = vmatprep.subr.bf16.mxu0 0
  %10696 = vmatpush1.bf16.msra.mxu0 0
  %10697 = vmatprep.subr.bf16.mxu0 0
  %10698 = vmatpush1.bf16.msra.mxu0 0
  %10699 = vmatprep.subr.bf16.mxu0 0
  %10700 = vmatpush1.bf16.msra.mxu0 0
  %10701 = vmatprep.subr.bf16.mxu0 0
  %10702 = vmatpush1.bf16.msra.mxu0 0
  %10703 = vmatprep.subr.bf16.mxu0 0
  %10704 = vmatpush1.bf16.msra.mxu0 0
  %10705 = vmatprep.subr.bf16.mxu0 0
  %10706 = vmatpush1.bf16.msra.mxu0 0
  %10707 = vmatprep.subr.bf16.mxu0 0
  %10708 = vmatpush1.bf16.msra.mxu0 0
  %10709 = vmatprep.subr.bf16.mxu0 0
  %10710 = vmatpush1.bf16.msra.mxu0 0
  %10711 = vmatprep.subr.bf16.mxu0 0
  %10712 = vmatpush1.bf16.msra.mxu0 0
  %10713 = vmatprep.subr.bf16.mxu0 0
  %10714 = vmatpush1.bf16.msra.mxu0 0
  %10715 = vmatprep.subr.bf16.mxu0 0
  %10716 = vmatpush1.bf16.msra.mxu0 0
  %10717 = vmatprep.subr.bf16.mxu0 0
  %10718 = vmatpush1.bf16.msra.mxu0 0
  %10719 = vmatprep.mubr.bf16.mxu0 0
  %10720 = vmatmul.mubr.bf16.gmra.mrb[0].mxu0 %v9660
  %v10721 = vpop.f32.mrb[0].mxu0
  %v10722 = vadd.f32 %v10681, %v10721
  %v10723 = vpop.f32.mrb[0].mxu0
  %v10724 = vadd.f32 %v10683, %v10723
  %v10725 = vpop.f32.mrb[0].mxu0
  %v10726 = vpop.f32.mrb[0].mxu0
  %10727 = vdwg.mxu0
  %10728 = vmatprep.subr.bf16.mxu0 %v6527
  %10729 = vmatpush1.bf16.msra.mxu0 %v6526
  %10730 = vmatprep.subr.bf16.mxu0 %v6535
  %10731 = vmatpush1.bf16.msra.mxu0 %v6534
  %10732 = vmatprep.subr.bf16.mxu0 %v6543
  %10733 = vmatpush1.bf16.msra.mxu0 %v6542
  %10734 = vmatprep.subr.bf16.mxu0 %v6551
  %10735 = vmatpush1.bf16.msra.mxu0 %v6550
  %10736 = vmatprep.subr.bf16.mxu0 %v6559
  %10737 = vmatpush1.bf16.msra.mxu0 %v6558
  %10738 = vmatprep.subr.bf16.mxu0 %v6567
  %10739 = vmatpush1.bf16.msra.mxu0 %v6566
  %10740 = vmatprep.subr.bf16.mxu0 %v6575
  %10741 = vmatpush1.bf16.msra.mxu0 %v6574
  %10742 = vmatprep.subr.bf16.mxu0 %v6583
  %10743 = vmatpush1.bf16.msra.mxu0 %v6582
  %10744 = vmatprep.subr.bf16.mxu0 %v6591
  %10745 = vmatpush1.bf16.msra.mxu0 %v6590
  %10746 = vmatprep.subr.bf16.mxu0 %v6599
  %10747 = vmatpush1.bf16.msra.mxu0 %v6598
  %10748 = vmatprep.subr.bf16.mxu0 %v6607
  %10749 = vmatpush1.bf16.msra.mxu0 %v6606
  %10750 = vmatprep.subr.bf16.mxu0 %v6615
  %10751 = vmatpush1.bf16.msra.mxu0 %v6614
  %10752 = vmatprep.subr.bf16.mxu0 %v6623
  %10753 = vmatpush1.bf16.msra.mxu0 %v6622
  %10754 = vmatprep.subr.bf16.mxu0 %v6631
  %10755 = vmatpush1.bf16.msra.mxu0 %v6630
  %10756 = vmatprep.subr.bf16.mxu0 %v6639
  %10757 = vmatpush1.bf16.msra.mxu0 %v6638
  %10758 = vmatprep.subr.bf16.mxu0 %v6647
  %10759 = vmatpush1.bf16.msra.mxu0 %v6646
  %10760 = vmatprep.mubr.bf16.mxu0 %v1670
  %10761 = vmatmul.mubr.bf16.gmra.mrb[0].mxu0 %v1656
  %v10762 = vpop.f32.mrb[0].mxu0
  %v10763 = vadd.f32 %v1608, %v10762
  %v10764 = vpop.f32.mrb[0].mxu0
  %v10765 = vadd.f32 %v1612, %v10764
  %v10766 = vpop.f32.mrb[0].mxu0
  %v10767 = vpop.f32.mrb[0].mxu0
  %10768 = vdwg.mxu0
  %10769 = vmatprep.subr.bf16.mxu0 %v6655
  %10770 = vmatpush1.bf16.msra.mxu0 %v6654
  %10771 = vmatprep.subr.bf16.mxu0 %v6663
  %10772 = vmatpush1.bf16.msra.mxu0 %v6662
  %10773 = vmatprep.subr.bf16.mxu0 %v6671
  %10774 = vmatpush1.bf16.msra.mxu0 %v6670
  %10775 = vmatprep.subr.bf16.mxu0 %v6679
  %10776 = vmatpush1.bf16.msra.mxu0 %v6678
  %10777 = vmatprep.subr.bf16.mxu0 %v6687
  %10778 = vmatpush1.bf16.msra.mxu0 %v6686
  %10779 = vmatprep.subr.bf16.mxu0 %v6695
  %10780 = vmatpush1.bf16.msra.mxu0 %v6694
  %10781 = vmatprep.subr.bf16.mxu0 %v6703
  %10782 = vmatpush1.bf16.msra.mxu0 %v6702
  %10783 = vmatprep.subr.bf16.mxu0 %v6711
  %10784 = vmatpush1.bf16.msra.mxu0 %v6710
  %10785 = vmatprep.subr.bf16.mxu0 %v6719
  %10786 = vmatpush1.bf16.msra.mxu0 %v6718
  %10787 = vmatprep.subr.bf16.mxu0 %v6727
  %10788 = vmatpush1.bf16.msra.mxu0 %v6726
  %10789 = vmatprep.subr.bf16.mxu0 %v6735
  %10790 = vmatpush1.bf16.msra.mxu0 %v6734
  %10791 = vmatprep.subr.bf16.mxu0 %v6743
  %10792 = vmatpush1.bf16.msra.mxu0 %v6742
  %10793 = vmatprep.subr.bf16.mxu0 %v6751
  %10794 = vmatpush1.bf16.msra.mxu0 %v6750
  %10795 = vmatprep.subr.bf16.mxu0 %v6759
  %10796 = vmatpush1.bf16.msra.mxu0 %v6758
  %10797 = vmatprep.subr.bf16.mxu0 %v6767
  %10798 = vmatpush1.bf16.msra.mxu0 %v6766
  %10799 = vmatprep.subr.bf16.mxu0 %v6775
  %10800 = vmatpush1.bf16.msra.mxu0 %v6774
  %10801 = vmatprep.mubr.bf16.mxu0 %v1680
  %10802 = vmatmul.mubr.bf16.gmra.mrb[0].mxu0 %v1678
  %v10803 = vpop.f32.mrb[0].mxu0
  %v10804 = vadd.f32 %v10763, %v10803
  %v10805 = vpop.f32.mrb[0].mxu0
  %v10806 = vadd.f32 %v10765, %v10805
  %v10807 = vpop.f32.mrb[0].mxu0
  %v10808 = vpop.f32.mrb[0].mxu0
  %10809 = vdwg.mxu0
  %10810 = vmatprep.subr.bf16.mxu0 %v6783
  %10811 = vmatpush1.bf16.msra.mxu0 %v6782
  %10812 = vmatprep.subr.bf16.mxu0 %v6791
  %10813 = vmatpush1.bf16.msra.mxu0 %v6790
  %10814 = vmatprep.subr.bf16.mxu0 %v6799
  %10815 = vmatpush1.bf16.msra.mxu0 %v6798
  %10816 = vmatprep.subr.bf16.mxu0 %v6807
  %10817 = vmatpush1.bf16.msra.mxu0 %v6806
  %10818 = vmatprep.subr.bf16.mxu0 %v6815
  %10819 = vmatpush1.bf16.msra.mxu0 %v6814
  %10820 = vmatprep.subr.bf16.mxu0 %v6823
  %10821 = vmatpush1.bf16.msra.mxu0 %v6822
  %10822 = vmatprep.subr.bf16.mxu0 %v6831
  %10823 = vmatpush1.bf16.msra.mxu0 %v6830
  %10824 = vmatprep.subr.bf16.mxu0 %v6839
  %10825 = vmatpush1.bf16.msra.mxu0 %v6838
  %10826 = vmatprep.subr.bf16.mxu0 %v6847
  %10827 = vmatpush1.bf16.msra.mxu0 %v6846
  %10828 = vmatprep.subr.bf16.mxu0 %v6855
  %10829 = vmatpush1.bf16.msra.mxu0 %v6854
  %10830 = vmatprep.subr.bf16.mxu0 %v6863
  %10831 = vmatpush1.bf16.msra.mxu0 %v6862
  %10832 = vmatprep.subr.bf16.mxu0 %v6871
  %10833 = vmatpush1.bf16.msra.mxu0 %v6870
  %10834 = vmatprep.subr.bf16.mxu0 %v6879
  %10835 = vmatpush1.bf16.msra.mxu0 %v6878
  %10836 = vmatprep.subr.bf16.mxu0 %v6887
  %10837 = vmatpush1.bf16.msra.mxu0 %v6886
  %10838 = vmatprep.subr.bf16.mxu0 %v6895
  %10839 = vmatpush1.bf16.msra.mxu0 %v6894
  %10840 = vmatprep.subr.bf16.mxu0 %v6903
  %10841 = vmatpush1.bf16.msra.mxu0 %v6902
  %10842 = vmatprep.mubr.bf16.mxu0 %v1677
  %10843 = vmatmul.mubr.bf16.gmra.mrb[0].mxu0 %v1663
  %v10844 = vpop.f32.mrb[0].mxu0
  %v10845 = vadd.f32 %v10804, %v10844
  %v10846 = vpop.f32.mrb[0].mxu0
  %v10847 = vadd.f32 %v10806, %v10846
  %v10848 = vpop.f32.mrb[0].mxu0
  %v10849 = vpop.f32.mrb[0].mxu0
  %10850 = vdwg.mxu0
  %10851 = vmatprep.subr.bf16.mxu0 %v6911
  %10852 = vmatpush1.bf16.msra.mxu0 %v6910
  %10853 = vmatprep.subr.bf16.mxu0 %v6919
  %10854 = vmatpush1.bf16.msra.mxu0 %v6918
  %10855 = vmatprep.subr.bf16.mxu0 %v6927
  %10856 = vmatpush1.bf16.msra.mxu0 %v6926
  %10857 = vmatprep.subr.bf16.mxu0 %v6935
  %10858 = vmatpush1.bf16.msra.mxu0 %v6934
  %10859 = vmatprep.subr.bf16.mxu0 %v6943
  %10860 = vmatpush1.bf16.msra.mxu0 %v6942
  %10861 = vmatprep.subr.bf16.mxu0 %v6951
  %10862 = vmatpush1.bf16.msra.mxu0 %v6950
  %10863 = vmatprep.subr.bf16.mxu0 %v6959
  %10864 = vmatpush1.bf16.msra.mxu0 %v6958
  %10865 = vmatprep.subr.bf16.mxu0 %v6967
  %10866 = vmatpush1.bf16.msra.mxu0 %v6966
  %10867 = vmatprep.subr.bf16.mxu0 %v6975
  %10868 = vmatpush1.bf16.msra.mxu0 %v6974
  %10869 = vmatprep.subr.bf16.mxu0 %v6983
  %10870 = vmatpush1.bf16.msra.mxu0 %v6982
  %10871 = vmatprep.subr.bf16.mxu0 %v6991
  %10872 = vmatpush1.bf16.msra.mxu0 %v6990
  %10873 = vmatprep.subr.bf16.mxu0 %v6999
  %10874 = vmatpush1.bf16.msra.mxu0 %v6998
  %10875 = vmatprep.subr.bf16.mxu0 %v7007
  %10876 = vmatpush1.bf16.msra.mxu0 %v7006
  %10877 = vmatprep.subr.bf16.mxu0 %v7015
  %10878 = vmatpush1.bf16.msra.mxu0 %v7014
  %10879 = vmatprep.subr.bf16.mxu0 %v7023
  %10880 = vmatpush1.bf16.msra.mxu0 %v7022
  %10881 = vmatprep.subr.bf16.mxu0 %v7031
  %10882 = vmatpush1.bf16.msra.mxu0 %v7030
  %10883 = vmatprep.mubr.bf16.mxu0 %v1681
  %10884 = vmatmul.mubr.bf16.gmra.mrb[0].mxu0 %v1679
  %v10885 = vpop.f32.mrb[0].mxu0
  %v10886 = vadd.f32 %v10845, %v10885
  %v10887 = vpop.f32.mrb[0].mxu0
  %v10888 = vadd.f32 %v10847, %v10887
  %v10889 = vpop.f32.mrb[0].mxu0
  %v10890 = vpop.f32.mrb[0].mxu0
  %10891 = vdwg.mxu0
  %10892 = vmatprep.subr.bf16.mxu0 %v7039
  %10893 = vmatpush1.bf16.msra.mxu0 %v7038
  %10894 = vmatprep.subr.bf16.mxu0 %v7047
  %10895 = vmatpush1.bf16.msra.mxu0 %v7046
  %10896 = vmatprep.subr.bf16.mxu0 %v7055
  %10897 = vmatpush1.bf16.msra.mxu0 %v7054
  %10898 = vmatprep.subr.bf16.mxu0 %v7063
  %10899 = vmatpush1.bf16.msra.mxu0 %v7062
  %10900 = vmatprep.subr.bf16.mxu0 %v7071
  %10901 = vmatpush1.bf16.msra.mxu0 %v7070
  %10902 = vmatprep.subr.bf16.mxu0 %v7079
  %10903 = vmatpush1.bf16.msra.mxu0 %v7078
  %10904 = vmatprep.subr.bf16.mxu0 %v7087
  %10905 = vmatpush1.bf16.msra.mxu0 %v7086
  %10906 = vmatprep.subr.bf16.mxu0 %v7095
  %10907 = vmatpush1.bf16.msra.mxu0 %v7094
  %10908 = vmatprep.subr.bf16.mxu0 %v7103
  %10909 = vmatpush1.bf16.msra.mxu0 %v7102
  %10910 = vmatprep.subr.bf16.mxu0 %v7111
  %10911 = vmatpush1.bf16.msra.mxu0 %v7110
  %10912 = vmatprep.subr.bf16.mxu0 %v7119
  %10913 = vmatpush1.bf16.msra.mxu0 %v7118
  %10914 = vmatprep.subr.bf16.mxu0 %v7127
  %10915 = vmatpush1.bf16.msra.mxu0 %v7126
  %10916 = vmatprep.subr.bf16.mxu0 %v7135
  %10917 = vmatpush1.bf16.msra.mxu0 %v7134
  %10918 = vmatprep.subr.bf16.mxu0 %v7143
  %10919 = vmatpush1.bf16.msra.mxu0 %v7142
  %10920 = vmatprep.subr.bf16.mxu0 %v7151
  %10921 = vmatpush1.bf16.msra.mxu0 %v7150
  %10922 = vmatprep.subr.bf16.mxu0 %v7159
  %10923 = vmatpush1.bf16.msra.mxu0 %v7158
  %10924 = vmatprep.mubr.bf16.mxu0 %v1719
  %10925 = vmatmul.mubr.bf16.gmra.mrb[0].mxu0 %v1705
  %v10926 = vpop.f32.mrb[0].mxu0
  %v10927 = vadd.f32 %v10886, %v10926
  %v10928 = vpop.f32.mrb[0].mxu0
  %v10929 = vadd.f32 %v10888, %v10928
  %v10930 = vpop.f32.mrb[0].mxu0
  %v10931 = vpop.f32.mrb[0].mxu0
  %10932 = vdwg.mxu0
  %10933 = vmatprep.subr.bf16.mxu0 %v7167
  %10934 = vmatpush1.bf16.msra.mxu0 %v7166
  %10935 = vmatprep.subr.bf16.mxu0 %v7175
  %10936 = vmatpush1.bf16.msra.mxu0 %v7174
  %10937 = vmatprep.subr.bf16.mxu0 %v7183
  %10938 = vmatpush1.bf16.msra.mxu0 %v7182
  %10939 = vmatprep.subr.bf16.mxu0 %v7191
  %10940 = vmatpush1.bf16.msra.mxu0 %v7190
  %10941 = vmatprep.subr.bf16.mxu0 %v7199
  %10942 = vmatpush1.bf16.msra.mxu0 %v7198
  %10943 = vmatprep.subr.bf16.mxu0 %v7207
  %10944 = vmatpush1.bf16.msra.mxu0 %v7206
  %10945 = vmatprep.subr.bf16.mxu0 %v7215
  %10946 = vmatpush1.bf16.msra.mxu0 %v7214
  %10947 = vmatprep.subr.bf16.mxu0 %v7223
  %10948 = vmatpush1.bf16.msra.mxu0 %v7222
  %10949 = vmatprep.subr.bf16.mxu0 %v7231
  %10950 = vmatpush1.bf16.msra.mxu0 %v7230
  %10951 = vmatprep.subr.bf16.mxu0 %v7239
  %10952 = vmatpush1.bf16.msra.mxu0 %v7238
  %10953 = vmatprep.subr.bf16.mxu0 %v7247
  %10954 = vmatpush1.bf16.msra.mxu0 %v7246
  %10955 = vmatprep.subr.bf16.mxu0 %v7255
  %10956 = vmatpush1.bf16.msra.mxu0 %v7254
  %10957 = vmatprep.subr.bf16.mxu0 %v7263
  %10958 = vmatpush1.bf16.msra.mxu0 %v7262
  %10959 = vmatprep.subr.bf16.mxu0 %v7271
  %10960 = vmatpush1.bf16.msra.mxu0 %v7270
  %10961 = vmatprep.subr.bf16.mxu0 %v7279
  %10962 = vmatpush1.bf16.msra.mxu0 %v7278
  %10963 = vmatprep.subr.bf16.mxu0 %v7287
  %10964 = vmatpush1.bf16.msra.mxu0 %v7286
  %10965 = vmatprep.mubr.bf16.mxu0 %v1729
  %10966 = vmatmul.mubr.bf16.gmra.mrb[0].mxu0 %v1727
  %v10967 = vpop.f32.mrb[0].mxu0
  %v10968 = vadd.f32 %v10927, %v10967
  %v10969 = vpop.f32.mrb[0].mxu0
  %v10970 = vadd.f32 %v10929, %v10969
  %v10971 = vpop.f32.mrb[0].mxu0
  %v10972 = vpop.f32.mrb[0].mxu0
  %10973 = vdwg.mxu0
  %10974 = vmatprep.subr.bf16.mxu0 %v7295
  %10975 = vmatpush1.bf16.msra.mxu0 %v7294
  %10976 = vmatprep.subr.bf16.mxu0 %v7303
  %10977 = vmatpush1.bf16.msra.mxu0 %v7302
  %10978 = vmatprep.subr.bf16.mxu0 %v7311
  %10979 = vmatpush1.bf16.msra.mxu0 %v7310
  %10980 = vmatprep.subr.bf16.mxu0 %v7319
  %10981 = vmatpush1.bf16.msra.mxu0 %v7318
  %10982 = vmatprep.subr.bf16.mxu0 %v7327
  %10983 = vmatpush1.bf16.msra.mxu0 %v7326
  %10984 = vmatprep.subr.bf16.mxu0 %v7335
  %10985 = vmatpush1.bf16.msra.mxu0 %v7334
  %10986 = vmatprep.subr.bf16.mxu0 %v7343
  %10987 = vmatpush1.bf16.msra.mxu0 %v7342
  %10988 = vmatprep.subr.bf16.mxu0 %v7351
  %10989 = vmatpush1.bf16.msra.mxu0 %v7350
  %10990 = vmatprep.subr.bf16.mxu0 %v7359
  %10991 = vmatpush1.bf16.msra.mxu0 %v7358
  %10992 = vmatprep.subr.bf16.mxu0 %v7367
  %10993 = vmatpush1.bf16.msra.mxu0 %v7366
  %10994 = vmatprep.subr.bf16.mxu0 %v7375
  %10995 = vmatpush1.bf16.msra.mxu0 %v7374
  %10996 = vmatprep.subr.bf16.mxu0 %v7383
  %10997 = vmatpush1.bf16.msra.mxu0 %v7382
  %10998 = vmatprep.subr.bf16.mxu0 %v7391
  %10999 = vmatpush1.bf16.msra.mxu0 %v7390
  %11000 = vmatprep.subr.bf16.mxu0 %v7399
  %11001 = vmatpush1.bf16.msra.mxu0 %v7398
  %11002 = vmatprep.subr.bf16.mxu0 %v7407
  %11003 = vmatpush1.bf16.msra.mxu0 %v7406
  %11004 = vmatprep.subr.bf16.mxu0 %v7415
  %11005 = vmatpush1.bf16.msra.mxu0 %v7414
  %11006 = vmatprep.mubr.bf16.mxu0 %v1726
  %11007 = vmatmul.mubr.bf16.gmra.mrb[0].mxu0 %v1712
  %v11008 = vpop.f32.mrb[0].mxu0
  %v11009 = vadd.f32 %v10968, %v11008
  %v11010 = vpop.f32.mrb[0].mxu0
  %v11011 = vadd.f32 %v10970, %v11010
  %v11012 = vpop.f32.mrb[0].mxu0
  %v11013 = vpop.f32.mrb[0].mxu0
  %11014 = vdwg.mxu0
  %11015 = vmatprep.subr.bf16.mxu0 %v7423
  %11016 = vmatpush1.bf16.msra.mxu0 %v7422
  %11017 = vmatprep.subr.bf16.mxu0 %v7431
  %11018 = vmatpush1.bf16.msra.mxu0 %v7430
  %11019 = vmatprep.subr.bf16.mxu0 %v7439
  %11020 = vmatpush1.bf16.msra.mxu0 %v7438
  %11021 = vmatprep.subr.bf16.mxu0 %v7447
  %11022 = vmatpush1.bf16.msra.mxu0 %v7446
  %11023 = vmatprep.subr.bf16.mxu0 %v7455
  %11024 = vmatpush1.bf16.msra.mxu0 %v7454
  %11025 = vmatprep.subr.bf16.mxu0 %v7463
  %11026 = vmatpush1.bf16.msra.mxu0 %v7462
  %11027 = vmatprep.subr.bf16.mxu0 %v7471
  %11028 = vmatpush1.bf16.msra.mxu0 %v7470
  %11029 = vmatprep.subr.bf16.mxu0 %v7479
  %11030 = vmatpush1.bf16.msra.mxu0 %v7478
  %11031 = vmatprep.subr.bf16.mxu0 %v7487
  %11032 = vmatpush1.bf16.msra.mxu0 %v7486
  %11033 = vmatprep.subr.bf16.mxu0 %v7495
  %11034 = vmatpush1.bf16.msra.mxu0 %v7494
  %11035 = vmatprep.subr.bf16.mxu0 %v7503
  %11036 = vmatpush1.bf16.msra.mxu0 %v7502
  %11037 = vmatprep.subr.bf16.mxu0 %v7511
  %11038 = vmatpush1.bf16.msra.mxu0 %v7510
  %11039 = vmatprep.subr.bf16.mxu0 %v7519
  %11040 = vmatpush1.bf16.msra.mxu0 %v7518
  %11041 = vmatprep.subr.bf16.mxu0 %v7527
  %11042 = vmatpush1.bf16.msra.mxu0 %v7526
  %11043 = vmatprep.subr.bf16.mxu0 %v7535
  %11044 = vmatpush1.bf16.msra.mxu0 %v7534
  %11045 = vmatprep.subr.bf16.mxu0 %v7543
  %11046 = vmatpush1.bf16.msra.mxu0 %v7542
  %11047 = vmatprep.mubr.bf16.mxu0 %v1730
  %11048 = vmatmul.mubr.bf16.gmra.mrb[0].mxu0 %v1728
  %v11049 = vpop.f32.mrb[0].mxu0
  %v11050 = vadd.f32 %v11009, %v11049
  %v11051 = vpop.f32.mrb[0].mxu0
  %v11052 = vadd.f32 %v11011, %v11051
  %v11053 = vpop.f32.mrb[0].mxu0
  %v11054 = vpop.f32.mrb[0].mxu0
  %11055 = vdwg.mxu0
  %11056 = vmatprep.subr.bf16.mxu0 %v7551
  %11057 = vmatpush1.bf16.msra.mxu0 %v7550
  %11058 = vmatprep.subr.bf16.mxu0 %v7559
  %11059 = vmatpush1.bf16.msra.mxu0 %v7558
  %11060 = vmatprep.subr.bf16.mxu0 %v7567
  %11061 = vmatpush1.bf16.msra.mxu0 %v7566
  %11062 = vmatprep.subr.bf16.mxu0 %v7575
  %11063 = vmatpush1.bf16.msra.mxu0 %v7574
  %11064 = vmatprep.subr.bf16.mxu0 %v7583
  %11065 = vmatpush1.bf16.msra.mxu0 %v7582
  %11066 = vmatprep.subr.bf16.mxu0 %v7591
  %11067 = vmatpush1.bf16.msra.mxu0 %v7590
  %11068 = vmatprep.subr.bf16.mxu0 %v7599
  %11069 = vmatpush1.bf16.msra.mxu0 %v7598
  %11070 = vmatprep.subr.bf16.mxu0 %v7607
  %11071 = vmatpush1.bf16.msra.mxu0 %v7606
  %11072 = vmatprep.subr.bf16.mxu0 %v7615
  %11073 = vmatpush1.bf16.msra.mxu0 %v7614
  %11074 = vmatprep.subr.bf16.mxu0 %v7623
  %11075 = vmatpush1.bf16.msra.mxu0 %v7622
  %11076 = vmatprep.subr.bf16.mxu0 %v7631
  %11077 = vmatpush1.bf16.msra.mxu0 %v7630
  %11078 = vmatprep.subr.bf16.mxu0 %v7639
  %11079 = vmatpush1.bf16.msra.mxu0 %v7638
  %11080 = vmatprep.subr.bf16.mxu0 %v7647
  %11081 = vmatpush1.bf16.msra.mxu0 %v7646
  %11082 = vmatprep.subr.bf16.mxu0 %v7655
  %11083 = vmatpush1.bf16.msra.mxu0 %v7654
  %11084 = vmatprep.subr.bf16.mxu0 %v7663
  %11085 = vmatpush1.bf16.msra.mxu0 %v7662
  %11086 = vmatprep.subr.bf16.mxu0 %v7671
  %11087 = vmatpush1.bf16.msra.mxu0 %v7670
  %11088 = vmatprep.mubr.bf16.mxu0 %v1768
  %11089 = vmatmul.mubr.bf16.gmra.mrb[0].mxu0 %v1754
  %v11090 = vpop.f32.mrb[0].mxu0
  %v11091 = vadd.f32 %v11050, %v11090
  %v11092 = vpop.f32.mrb[0].mxu0
  %v11093 = vadd.f32 %v11052, %v11092
  %v11094 = vpop.f32.mrb[0].mxu0
  %v11095 = vpop.f32.mrb[0].mxu0
  %11096 = vdwg.mxu0
  %11097 = vmatprep.subr.bf16.mxu0 %v7679
  %11098 = vmatpush1.bf16.msra.mxu0 %v7678
  %11099 = vmatprep.subr.bf16.mxu0 %v7687
  %11100 = vmatpush1.bf16.msra.mxu0 %v7686
  %11101 = vmatprep.subr.bf16.mxu0 %v7695
  %11102 = vmatpush1.bf16.msra.mxu0 %v7694
  %11103 = vmatprep.subr.bf16.mxu0 %v7703
  %11104 = vmatpush1.bf16.msra.mxu0 %v7702
  %11105 = vmatprep.subr.bf16.mxu0 %v7711
  %11106 = vmatpush1.bf16.msra.mxu0 %v7710
  %11107 = vmatprep.subr.bf16.mxu0 %v7719
  %11108 = vmatpush1.bf16.msra.mxu0 %v7718
  %11109 = vmatprep.subr.bf16.mxu0 %v7727
  %11110 = vmatpush1.bf16.msra.mxu0 %v7726
  %11111 = vmatprep.subr.bf16.mxu0 %v7735
  %11112 = vmatpush1.bf16.msra.mxu0 %v7734
  %11113 = vmatprep.subr.bf16.mxu0 %v7743
  %11114 = vmatpush1.bf16.msra.mxu0 %v7742
  %11115 = vmatprep.subr.bf16.mxu0 %v7751
  %11116 = vmatpush1.bf16.msra.mxu0 %v7750
  %11117 = vmatprep.subr.bf16.mxu0 %v7759
  %11118 = vmatpush1.bf16.msra.mxu0 %v7758
  %11119 = vmatprep.subr.bf16.mxu0 %v7767
  %11120 = vmatpush1.bf16.msra.mxu0 %v7766
  %11121 = vmatprep.subr.bf16.mxu0 %v7775
  %11122 = vmatpush1.bf16.msra.mxu0 %v7774
  %11123 = vmatprep.subr.bf16.mxu0 %v7783
  %11124 = vmatpush1.bf16.msra.mxu0 %v7782
  %11125 = vmatprep.subr.bf16.mxu0 %v7791
  %11126 = vmatpush1.bf16.msra.mxu0 %v7790
  %11127 = vmatprep.subr.bf16.mxu0 %v7799
  %11128 = vmatpush1.bf16.msra.mxu0 %v7798
  %11129 = vmatprep.mubr.bf16.mxu0 %v1778
  %11130 = vmatmul.mubr.bf16.gmra.mrb[0].mxu0 %v1776
  %v11131 = vpop.f32.mrb[0].mxu0
  %v11132 = vadd.f32 %v11091, %v11131
  %v11133 = vpop.f32.mrb[0].mxu0
  %v11134 = vadd.f32 %v11093, %v11133
  %v11135 = vpop.f32.mrb[0].mxu0
  %v11136 = vpop.f32.mrb[0].mxu0
  %11137 = vdwg.mxu0
  %11138 = vmatprep.subr.bf16.mxu0 %v7807
  %11139 = vmatpush1.bf16.msra.mxu0 %v7806
  %11140 = vmatprep.subr.bf16.mxu0 %v7815
  %11141 = vmatpush1.bf16.msra.mxu0 %v7814
  %11142 = vmatprep.subr.bf16.mxu0 %v7823
  %11143 = vmatpush1.bf16.msra.mxu0 %v7822
  %11144 = vmatprep.subr.bf16.mxu0 %v7831
  %11145 = vmatpush1.bf16.msra.mxu0 %v7830
  %11146 = vmatprep.subr.bf16.mxu0 %v7839
  %11147 = vmatpush1.bf16.msra.mxu0 %v7838
  %11148 = vmatprep.subr.bf16.mxu0 %v7847
  %11149 = vmatpush1.bf16.msra.mxu0 %v7846
  %11150 = vmatprep.subr.bf16.mxu0 %v7855
  %11151 = vmatpush1.bf16.msra.mxu0 %v7854
  %11152 = vmatprep.subr.bf16.mxu0 %v7863
  %11153 = vmatpush1.bf16.msra.mxu0 %v7862
  %11154 = vmatprep.subr.bf16.mxu0 %v7871
  %11155 = vmatpush1.bf16.msra.mxu0 %v7870
  %11156 = vmatprep.subr.bf16.mxu0 %v7879
  %11157 = vmatpush1.bf16.msra.mxu0 %v7878
  %11158 = vmatprep.subr.bf16.mxu0 %v7887
  %11159 = vmatpush1.bf16.msra.mxu0 %v7886
  %11160 = vmatprep.subr.bf16.mxu0 %v7895
  %11161 = vmatpush1.bf16.msra.mxu0 %v7894
  %11162 = vmatprep.subr.bf16.mxu0 %v7903
  %11163 = vmatpush1.bf16.msra.mxu0 %v7902
  %11164 = vmatprep.subr.bf16.mxu0 %v7911
  %11165 = vmatpush1.bf16.msra.mxu0 %v7910
  %11166 = vmatprep.subr.bf16.mxu0 %v7919
  %11167 = vmatpush1.bf16.msra.mxu0 %v7918
  %11168 = vmatprep.subr.bf16.mxu0 %v7927
  %11169 = vmatpush1.bf16.msra.mxu0 %v7926
  %11170 = vmatprep.mubr.bf16.mxu0 %v1775
  %11171 = vmatmul.mubr.bf16.gmra.mrb[0].mxu0 %v1761
  %v11172 = vpop.f32.mrb[0].mxu0
  %v11173 = vadd.f32 %v11132, %v11172
  %v11174 = vpop.f32.mrb[0].mxu0
  %v11175 = vadd.f32 %v11134, %v11174
  %v11176 = vpop.f32.mrb[0].mxu0
  %v11177 = vpop.f32.mrb[0].mxu0
  %11178 = vdwg.mxu0
  %11179 = vmatprep.subr.bf16.mxu0 %v7935
  %11180 = vmatpush1.bf16.msra.mxu0 %v7934
  %11181 = vmatprep.subr.bf16.mxu0 %v7943
  %11182 = vmatpush1.bf16.msra.mxu0 %v7942
  %11183 = vmatprep.subr.bf16.mxu0 %v7951
  %11184 = vmatpush1.bf16.msra.mxu0 %v7950
  %11185 = vmatprep.subr.bf16.mxu0 %v7959
  %11186 = vmatpush1.bf16.msra.mxu0 %v7958
  %11187 = vmatprep.subr.bf16.mxu0 %v7967
  %11188 = vmatpush1.bf16.msra.mxu0 %v7966
  %11189 = vmatprep.subr.bf16.mxu0 %v7975
  %11190 = vmatpush1.bf16.msra.mxu0 %v7974
  %11191 = vmatprep.subr.bf16.mxu0 %v7983
  %11192 = vmatpush1.bf16.msra.mxu0 %v7982
  %11193 = vmatprep.subr.bf16.mxu0 %v7991
  %11194 = vmatpush1.bf16.msra.mxu0 %v7990
  %11195 = vmatprep.subr.bf16.mxu0 %v7999
  %11196 = vmatpush1.bf16.msra.mxu0 %v7998
  %11197 = vmatprep.subr.bf16.mxu0 %v8007
  %11198 = vmatpush1.bf16.msra.mxu0 %v8006
  %11199 = vmatprep.subr.bf16.mxu0 %v8015
  %11200 = vmatpush1.bf16.msra.mxu0 %v8014
  %11201 = vmatprep.subr.bf16.mxu0 %v8023
  %11202 = vmatpush1.bf16.msra.mxu0 %v8022
  %11203 = vmatprep.subr.bf16.mxu0 %v8031
  %11204 = vmatpush1.bf16.msra.mxu0 %v8030
  %11205 = vmatprep.subr.bf16.mxu0 %v8039
  %11206 = vmatpush1.bf16.msra.mxu0 %v8038
  %11207 = vmatprep.subr.bf16.mxu0 %v8047
  %11208 = vmatpush1.bf16.msra.mxu0 %v8046
  %11209 = vmatprep.subr.bf16.mxu0 %v8055
  %11210 = vmatpush1.bf16.msra.mxu0 %v8054
  %11211 = vmatprep.mubr.bf16.mxu0 %v1779
  %11212 = vmatmul.mubr.bf16.gmra.mrb[0].mxu0 %v1777
  %v11213 = vpop.f32.mrb[0].mxu0
  %v11214 = vadd.f32 %v11173, %v11213
  %v11215 = vpop.f32.mrb[0].mxu0
  %v11216 = vadd.f32 %v11175, %v11215
  %v11217 = vpop.f32.mrb[0].mxu0
  %v11218 = vpop.f32.mrb[0].mxu0
  %11219 = vdwg.mxu0
  %11220 = vmatprep.subr.bf16.mxu0 %v8063
  %11221 = vmatpush1.bf16.msra.mxu0 %v8062
  %11222 = vmatprep.subr.bf16.mxu0 %v8071
  %11223 = vmatpush1.bf16.msra.mxu0 %v8070
  %11224 = vmatprep.subr.bf16.mxu0 %v8079
  %11225 = vmatpush1.bf16.msra.mxu0 %v8078
  %11226 = vmatprep.subr.bf16.mxu0 %v8087
  %11227 = vmatpush1.bf16.msra.mxu0 %v8086
  %11228 = vmatprep.subr.bf16.mxu0 0
  %11229 = vmatpush1.bf16.msra.mxu0 0
  %11230 = vmatprep.subr.bf16.mxu0 0
  %11231 = vmatpush1.bf16.msra.mxu0 0
  %11232 = vmatprep.subr.bf16.mxu0 0
  %11233 = vmatpush1.bf16.msra.mxu0 0
  %11234 = vmatprep.subr.bf16.mxu0 0
  %11235 = vmatpush1.bf16.msra.mxu0 0
  %11236 = vmatprep.subr.bf16.mxu0 0
  %11237 = vmatpush1.bf16.msra.mxu0 0
  %11238 = vmatprep.subr.bf16.mxu0 0
  %11239 = vmatpush1.bf16.msra.mxu0 0
  %11240 = vmatprep.subr.bf16.mxu0 0
  %11241 = vmatpush1.bf16.msra.mxu0 0
  %11242 = vmatprep.subr.bf16.mxu0 0
  %11243 = vmatpush1.bf16.msra.mxu0 0
  %11244 = vmatprep.subr.bf16.mxu0 0
  %11245 = vmatpush1.bf16.msra.mxu0 0
  %11246 = vmatprep.subr.bf16.mxu0 0
  %11247 = vmatpush1.bf16.msra.mxu0 0
  %11248 = vmatprep.subr.bf16.mxu0 0
  %11249 = vmatpush1.bf16.msra.mxu0 0
  %11250 = vmatprep.subr.bf16.mxu0 0
  %11251 = vmatpush1.bf16.msra.mxu0 0
  %11252 = vmatprep.mubr.bf16.mxu0 0
  %11253 = vmatmul.mubr.bf16.gmra.mrb[0].mxu0 %v9660
  %v11254 = vpop.f32.mrb[0].mxu0
  %v11255 = vadd.f32 %v11214, %v11254
  %v11256 = vpop.f32.mrb[0].mxu0
  %v11257 = vadd.f32 %v11216, %v11256
  %v11258 = vpop.f32.mrb[0].mxu0
  %v11259 = vpop.f32.mrb[0].mxu0
  %11260 = vdwg.mxu0
  %11261 = vmatprep.subr.bf16.mxu0 %v6529
  %11262 = vmatpush1.bf16.msra.mxu0 %v6528
  %11263 = vmatprep.subr.bf16.mxu0 %v6537
  %11264 = vmatpush1.bf16.msra.mxu0 %v6536
  %11265 = vmatprep.subr.bf16.mxu0 %v6545
  %11266 = vmatpush1.bf16.msra.mxu0 %v6544
  %11267 = vmatprep.subr.bf16.mxu0 %v6553
  %11268 = vmatpush1.bf16.msra.mxu0 %v6552
  %11269 = vmatprep.subr.bf16.mxu0 %v6561
  %11270 = vmatpush1.bf16.msra.mxu0 %v6560
  %11271 = vmatprep.subr.bf16.mxu0 %v6569
  %11272 = vmatpush1.bf16.msra.mxu0 %v6568
  %11273 = vmatprep.subr.bf16.mxu0 %v6577
  %11274 = vmatpush1.bf16.msra.mxu0 %v6576
  %11275 = vmatprep.subr.bf16.mxu0 %v6585
  %11276 = vmatpush1.bf16.msra.mxu0 %v6584
  %11277 = vmatprep.subr.bf16.mxu0 %v6593
  %11278 = vmatpush1.bf16.msra.mxu0 %v6592
  %11279 = vmatprep.subr.bf16.mxu0 %v6601
  %11280 = vmatpush1.bf16.msra.mxu0 %v6600
  %11281 = vmatprep.subr.bf16.mxu0 %v6609
  %11282 = vmatpush1.bf16.msra.mxu0 %v6608
  %11283 = vmatprep.subr.bf16.mxu0 %v6617
  %11284 = vmatpush1.bf16.msra.mxu0 %v6616
  %11285 = vmatprep.subr.bf16.mxu0 %v6625
  %11286 = vmatpush1.bf16.msra.mxu0 %v6624
  %11287 = vmatprep.subr.bf16.mxu0 %v6633
  %11288 = vmatpush1.bf16.msra.mxu0 %v6632
  %11289 = vmatprep.subr.bf16.mxu0 %v6641
  %11290 = vmatpush1.bf16.msra.mxu0 %v6640
  %11291 = vmatprep.subr.bf16.mxu0 %v6649
  %11292 = vmatpush1.bf16.msra.mxu0 %v6648
  %11293 = vmatprep.mubr.bf16.mxu0 %v1670
  %11294 = vmatmul.mubr.bf16.gmra.mrb[0].mxu0 %v1656
  %v11295 = vpop.f32.mrb[0].mxu0
  %v11296 = vadd.f32 %v1616, %v11295
  %v11297 = vpop.f32.mrb[0].mxu0
  %v11298 = vadd.f32 %v1620, %v11297
  %v11299 = vpop.f32.mrb[0].mxu0
  %v11300 = vpop.f32.mrb[0].mxu0
  %11301 = vdwg.mxu0
  %11302 = vmatprep.subr.bf16.mxu0 %v6657
  %11303 = vmatpush1.bf16.msra.mxu0 %v6656
  %11304 = vmatprep.subr.bf16.mxu0 %v6665
  %11305 = vmatpush1.bf16.msra.mxu0 %v6664
  %11306 = vmatprep.subr.bf16.mxu0 %v6673
  %11307 = vmatpush1.bf16.msra.mxu0 %v6672
  %11308 = vmatprep.subr.bf16.mxu0 %v6681
  %11309 = vmatpush1.bf16.msra.mxu0 %v6680
  %11310 = vmatprep.subr.bf16.mxu0 %v6689
  %11311 = vmatpush1.bf16.msra.mxu0 %v6688
  %11312 = vmatprep.subr.bf16.mxu0 %v6697
  %11313 = vmatpush1.bf16.msra.mxu0 %v6696
  %11314 = vmatprep.subr.bf16.mxu0 %v6705
  %11315 = vmatpush1.bf16.msra.mxu0 %v6704
  %11316 = vmatprep.subr.bf16.mxu0 %v6713
  %11317 = vmatpush1.bf16.msra.mxu0 %v6712
  %11318 = vmatprep.subr.bf16.mxu0 %v6721
  %11319 = vmatpush1.bf16.msra.mxu0 %v6720
  %11320 = vmatprep.subr.bf16.mxu0 %v6729
  %11321 = vmatpush1.bf16.msra.mxu0 %v6728
  %11322 = vmatprep.subr.bf16.mxu0 %v6737
  %11323 = vmatpush1.bf16.msra.mxu0 %v6736
  %11324 = vmatprep.subr.bf16.mxu0 %v6745
  %11325 = vmatpush1.bf16.msra.mxu0 %v6744
  %11326 = vmatprep.subr.bf16.mxu0 %v6753
  %11327 = vmatpush1.bf16.msra.mxu0 %v6752
  %11328 = vmatprep.subr.bf16.mxu0 %v6761
  %11329 = vmatpush1.bf16.msra.mxu0 %v6760
  %11330 = vmatprep.subr.bf16.mxu0 %v6769
  %11331 = vmatpush1.bf16.msra.mxu0 %v6768
  %11332 = vmatprep.subr.bf16.mxu0 %v6777
  %11333 = vmatpush1.bf16.msra.mxu0 %v6776
  %11334 = vmatprep.mubr.bf16.mxu0 %v1680
  %11335 = vmatmul.mubr.bf16.gmra.mrb[0].mxu0 %v1678
  %v11336 = vpop.f32.mrb[0].mxu0
  %v11337 = vadd.f32 %v11296, %v11336
  %v11338 = vpop.f32.mrb[0].mxu0
  %v11339 = vadd.f32 %v11298, %v11338
  %v11340 = vpop.f32.mrb[0].mxu0
  %v11341 = vpop.f32.mrb[0].mxu0
  %11342 = vdwg.mxu0
  %11343 = vmatprep.subr.bf16.mxu0 %v6785
  %11344 = vmatpush1.bf16.msra.mxu0 %v6784
  %11345 = vmatprep.subr.bf16.mxu0 %v6793
  %11346 = vmatpush1.bf16.msra.mxu0 %v6792
  %11347 = vmatprep.subr.bf16.mxu0 %v6801
  %11348 = vmatpush1.bf16.msra.mxu0 %v6800
  %11349 = vmatprep.subr.bf16.mxu0 %v6809
  %11350 = vmatpush1.bf16.msra.mxu0 %v6808
  %11351 = vmatprep.subr.bf16.mxu0 %v6817
  %11352 = vmatpush1.bf16.msra.mxu0 %v6816
  %11353 = vmatprep.subr.bf16.mxu0 %v6825
  %11354 = vmatpush1.bf16.msra.mxu0 %v6824
  %11355 = vmatprep.subr.bf16.mxu0 %v6833
  %11356 = vmatpush1.bf16.msra.mxu0 %v6832
  %11357 = vmatprep.subr.bf16.mxu0 %v6841
  %11358 = vmatpush1.bf16.msra.mxu0 %v6840
  %11359 = vmatprep.subr.bf16.mxu0 %v6849
  %11360 = vmatpush1.bf16.msra.mxu0 %v6848
  %11361 = vmatprep.subr.bf16.mxu0 %v6857
  %11362 = vmatpush1.bf16.msra.mxu0 %v6856
  %11363 = vmatprep.subr.bf16.mxu0 %v6865
  %11364 = vmatpush1.bf16.msra.mxu0 %v6864
  %11365 = vmatprep.subr.bf16.mxu0 %v6873
  %11366 = vmatpush1.bf16.msra.mxu0 %v6872
  %11367 = vmatprep.subr.bf16.mxu0 %v6881
  %11368 = vmatpush1.bf16.msra.mxu0 %v6880
  %11369 = vmatprep.subr.bf16.mxu0 %v6889
  %11370 = vmatpush1.bf16.msra.mxu0 %v6888
  %11371 = vmatprep.subr.bf16.mxu0 %v6897
  %11372 = vmatpush1.bf16.msra.mxu0 %v6896
  %11373 = vmatprep.subr.bf16.mxu0 %v6905
  %11374 = vmatpush1.bf16.msra.mxu0 %v6904
  %11375 = vmatprep.mubr.bf16.mxu0 %v1677
  %11376 = vmatmul.mubr.bf16.gmra.mrb[0].mxu0 %v1663
  %v11377 = vpop.f32.mrb[0].mxu0
  %v11378 = vadd.f32 %v11337, %v11377
  %v11379 = vpop.f32.mrb[0].mxu0
  %v11380 = vadd.f32 %v11339, %v11379
  %v11381 = vpop.f32.mrb[0].mxu0
  %v11382 = vpop.f32.mrb[0].mxu0
  %11383 = vdwg.mxu0
  %11384 = vmatprep.subr.bf16.mxu0 %v6913
  %11385 = vmatpush1.bf16.msra.mxu0 %v6912
  %11386 = vmatprep.subr.bf16.mxu0 %v6921
  %11387 = vmatpush1.bf16.msra.mxu0 %v6920
  %11388 = vmatprep.subr.bf16.mxu0 %v6929
  %11389 = vmatpush1.bf16.msra.mxu0 %v6928
  %11390 = vmatprep.subr.bf16.mxu0 %v6937
  %11391 = vmatpush1.bf16.msra.mxu0 %v6936
  %11392 = vmatprep.subr.bf16.mxu0 %v6945
  %11393 = vmatpush1.bf16.msra.mxu0 %v6944
  %11394 = vmatprep.subr.bf16.mxu0 %v6953
  %11395 = vmatpush1.bf16.msra.mxu0 %v6952
  %11396 = vmatprep.subr.bf16.mxu0 %v6961
  %11397 = vmatpush1.bf16.msra.mxu0 %v6960
  %11398 = vmatprep.subr.bf16.mxu0 %v6969
  %11399 = vmatpush1.bf16.msra.mxu0 %v6968
  %11400 = vmatprep.subr.bf16.mxu0 %v6977
  %11401 = vmatpush1.bf16.msra.mxu0 %v6976
  %11402 = vmatprep.subr.bf16.mxu0 %v6985
  %11403 = vmatpush1.bf16.msra.mxu0 %v6984
  %11404 = vmatprep.subr.bf16.mxu0 %v6993
  %11405 = vmatpush1.bf16.msra.mxu0 %v6992
  %11406 = vmatprep.subr.bf16.mxu0 %v7001
  %11407 = vmatpush1.bf16.msra.mxu0 %v7000
  %11408 = vmatprep.subr.bf16.mxu0 %v7009
  %11409 = vmatpush1.bf16.msra.mxu0 %v7008
  %11410 = vmatprep.subr.bf16.mxu0 %v7017
  %11411 = vmatpush1.bf16.msra.mxu0 %v7016
  %11412 = vmatprep.subr.bf16.mxu0 %v7025
  %11413 = vmatpush1.bf16.msra.mxu0 %v7024
  %11414 = vmatprep.subr.bf16.mxu0 %v7033
  %11415 = vmatpush1.bf16.msra.mxu0 %v7032
  %11416 = vmatprep.mubr.bf16.mxu0 %v1681
  %11417 = vmatmul.mubr.bf16.gmra.mrb[0].mxu0 %v1679
  %v11418 = vpop.f32.mrb[0].mxu0
  %v11419 = vadd.f32 %v11378, %v11418
  %v11420 = vpop.f32.mrb[0].mxu0
  %v11421 = vadd.f32 %v11380, %v11420
  %v11422 = vpop.f32.mrb[0].mxu0
  %v11423 = vpop.f32.mrb[0].mxu0
  %11424 = vdwg.mxu0
  %11425 = vmatprep.subr.bf16.mxu0 %v7041
  %11426 = vmatpush1.bf16.msra.mxu0 %v7040
  %11427 = vmatprep.subr.bf16.mxu0 %v7049
  %11428 = vmatpush1.bf16.msra.mxu0 %v7048
  %11429 = vmatprep.subr.bf16.mxu0 %v7057
  %11430 = vmatpush1.bf16.msra.mxu0 %v7056
  %11431 = vmatprep.subr.bf16.mxu0 %v7065
  %11432 = vmatpush1.bf16.msra.mxu0 %v7064
  %11433 = vmatprep.subr.bf16.mxu0 %v7073
  %11434 = vmatpush1.bf16.msra.mxu0 %v7072
  %11435 = vmatprep.subr.bf16.mxu0 %v7081
  %11436 = vmatpush1.bf16.msra.mxu0 %v7080
  %11437 = vmatprep.subr.bf16.mxu0 %v7089
  %11438 = vmatpush1.bf16.msra.mxu0 %v7088
  %11439 = vmatprep.subr.bf16.mxu0 %v7097
  %11440 = vmatpush1.bf16.msra.mxu0 %v7096
  %11441 = vmatprep.subr.bf16.mxu0 %v7105
  %11442 = vmatpush1.bf16.msra.mxu0 %v7104
  %11443 = vmatprep.subr.bf16.mxu0 %v7113
  %11444 = vmatpush1.bf16.msra.mxu0 %v7112
  %11445 = vmatprep.subr.bf16.mxu0 %v7121
  %11446 = vmatpush1.bf16.msra.mxu0 %v7120
  %11447 = vmatprep.subr.bf16.mxu0 %v7129
  %11448 = vmatpush1.bf16.msra.mxu0 %v7128
  %11449 = vmatprep.subr.bf16.mxu0 %v7137
  %11450 = vmatpush1.bf16.msra.mxu0 %v7136
  %11451 = vmatprep.subr.bf16.mxu0 %v7145
  %11452 = vmatpush1.bf16.msra.mxu0 %v7144
  %11453 = vmatprep.subr.bf16.mxu0 %v7153
  %11454 = vmatpush1.bf16.msra.mxu0 %v7152
  %11455 = vmatprep.subr.bf16.mxu0 %v7161
  %11456 = vmatpush1.bf16.msra.mxu0 %v7160
  %11457 = vmatprep.mubr.bf16.mxu0 %v1719
  %11458 = vmatmul.mubr.bf16.gmra.mrb[0].mxu0 %v1705
  %v11459 = vpop.f32.mrb[0].mxu0
  %v11460 = vadd.f32 %v11419, %v11459
  %v11461 = vpop.f32.mrb[0].mxu0
  %v11462 = vadd.f32 %v11421, %v11461
  %v11463 = vpop.f32.mrb[0].mxu0
  %v11464 = vpop.f32.mrb[0].mxu0
  %11465 = vdwg.mxu0
  %11466 = vmatprep.subr.bf16.mxu0 %v7169
  %11467 = vmatpush1.bf16.msra.mxu0 %v7168
  %11468 = vmatprep.subr.bf16.mxu0 %v7177
  %11469 = vmatpush1.bf16.msra.mxu0 %v7176
  %11470 = vmatprep.subr.bf16.mxu0 %v7185
  %11471 = vmatpush1.bf16.msra.mxu0 %v7184
  %11472 = vmatprep.subr.bf16.mxu0 %v7193
  %11473 = vmatpush1.bf16.msra.mxu0 %v7192
  %11474 = vmatprep.subr.bf16.mxu0 %v7201
  %11475 = vmatpush1.bf16.msra.mxu0 %v7200
  %11476 = vmatprep.subr.bf16.mxu0 %v7209
  %11477 = vmatpush1.bf16.msra.mxu0 %v7208
  %11478 = vmatprep.subr.bf16.mxu0 %v7217
  %11479 = vmatpush1.bf16.msra.mxu0 %v7216
  %11480 = vmatprep.subr.bf16.mxu0 %v7225
  %11481 = vmatpush1.bf16.msra.mxu0 %v7224
  %11482 = vmatprep.subr.bf16.mxu0 %v7233
  %11483 = vmatpush1.bf16.msra.mxu0 %v7232
  %11484 = vmatprep.subr.bf16.mxu0 %v7241
  %11485 = vmatpush1.bf16.msra.mxu0 %v7240
  %11486 = vmatprep.subr.bf16.mxu0 %v7249
  %11487 = vmatpush1.bf16.msra.mxu0 %v7248
  %11488 = vmatprep.subr.bf16.mxu0 %v7257
  %11489 = vmatpush1.bf16.msra.mxu0 %v7256
  %11490 = vmatprep.subr.bf16.mxu0 %v7265
  %11491 = vmatpush1.bf16.msra.mxu0 %v7264
  %11492 = vmatprep.subr.bf16.mxu0 %v7273
  %11493 = vmatpush1.bf16.msra.mxu0 %v7272
  %11494 = vmatprep.subr.bf16.mxu0 %v7281
  %11495 = vmatpush1.bf16.msra.mxu0 %v7280
  %11496 = vmatprep.subr.bf16.mxu0 %v7289
  %11497 = vmatpush1.bf16.msra.mxu0 %v7288
  %11498 = vmatprep.mubr.bf16.mxu0 %v1729
  %11499 = vmatmul.mubr.bf16.gmra.mrb[0].mxu0 %v1727
  %v11500 = vpop.f32.mrb[0].mxu0
  %v11501 = vadd.f32 %v11460, %v11500
  %v11502 = vpop.f32.mrb[0].mxu0
  %v11503 = vadd.f32 %v11462, %v11502
  %v11504 = vpop.f32.mrb[0].mxu0
  %v11505 = vpop.f32.mrb[0].mxu0
  %11506 = vdwg.mxu0
  %11507 = vmatprep.subr.bf16.mxu0 %v7297
  %11508 = vmatpush1.bf16.msra.mxu0 %v7296
  %11509 = vmatprep.subr.bf16.mxu0 %v7305
  %11510 = vmatpush1.bf16.msra.mxu0 %v7304
  %11511 = vmatprep.subr.bf16.mxu0 %v7313
  %11512 = vmatpush1.bf16.msra.mxu0 %v7312
  %11513 = vmatprep.subr.bf16.mxu0 %v7321
  %11514 = vmatpush1.bf16.msra.mxu0 %v7320
  %11515 = vmatprep.subr.bf16.mxu0 %v7329
  %11516 = vmatpush1.bf16.msra.mxu0 %v7328
  %11517 = vmatprep.subr.bf16.mxu0 %v7337
  %11518 = vmatpush1.bf16.msra.mxu0 %v7336
  %11519 = vmatprep.subr.bf16.mxu0 %v7345
  %11520 = vmatpush1.bf16.msra.mxu0 %v7344
  %11521 = vmatprep.subr.bf16.mxu0 %v7353
  %11522 = vmatpush1.bf16.msra.mxu0 %v7352
  %11523 = vmatprep.subr.bf16.mxu0 %v7361
  %11524 = vmatpush1.bf16.msra.mxu0 %v7360
  %11525 = vmatprep.subr.bf16.mxu0 %v7369
  %11526 = vmatpush1.bf16.msra.mxu0 %v7368
  %11527 = vmatprep.subr.bf16.mxu0 %v7377
  %11528 = vmatpush1.bf16.msra.mxu0 %v7376
  %11529 = vmatprep.subr.bf16.mxu0 %v7385
  %11530 = vmatpush1.bf16.msra.mxu0 %v7384
  %11531 = vmatprep.subr.bf16.mxu0 %v7393
  %11532 = vmatpush1.bf16.msra.mxu0 %v7392
  %11533 = vmatprep.subr.bf16.mxu0 %v7401
  %11534 = vmatpush1.bf16.msra.mxu0 %v7400
  %11535 = vmatprep.subr.bf16.mxu0 %v7409
  %11536 = vmatpush1.bf16.msra.mxu0 %v7408
  %11537 = vmatprep.subr.bf16.mxu0 %v7417
  %11538 = vmatpush1.bf16.msra.mxu0 %v7416
  %11539 = vmatprep.mubr.bf16.mxu0 %v1726
  %11540 = vmatmul.mubr.bf16.gmra.mrb[0].mxu0 %v1712
  %v11541 = vpop.f32.mrb[0].mxu0
  %v11542 = vadd.f32 %v11501, %v11541
  %v11543 = vpop.f32.mrb[0].mxu0
  %v11544 = vadd.f32 %v11503, %v11543
  %v11545 = vpop.f32.mrb[0].mxu0
  %v11546 = vpop.f32.mrb[0].mxu0
  %11547 = vdwg.mxu0
  %11548 = vmatprep.subr.bf16.mxu0 %v7425
  %11549 = vmatpush1.bf16.msra.mxu0 %v7424
  %11550 = vmatprep.subr.bf16.mxu0 %v7433
  %11551 = vmatpush1.bf16.msra.mxu0 %v7432
  %11552 = vmatprep.subr.bf16.mxu0 %v7441
  %11553 = vmatpush1.bf16.msra.mxu0 %v7440
  %11554 = vmatprep.subr.bf16.mxu0 %v7449
  %11555 = vmatpush1.bf16.msra.mxu0 %v7448
  %11556 = vmatprep.subr.bf16.mxu0 %v7457
  %11557 = vmatpush1.bf16.msra.mxu0 %v7456
  %11558 = vmatprep.subr.bf16.mxu0 %v7465
  %11559 = vmatpush1.bf16.msra.mxu0 %v7464
  %11560 = vmatprep.subr.bf16.mxu0 %v7473
  %11561 = vmatpush1.bf16.msra.mxu0 %v7472
  %11562 = vmatprep.subr.bf16.mxu0 %v7481
  %11563 = vmatpush1.bf16.msra.mxu0 %v7480
  %11564 = vmatprep.subr.bf16.mxu0 %v7489
  %11565 = vmatpush1.bf16.msra.mxu0 %v7488
  %11566 = vmatprep.subr.bf16.mxu0 %v7497
  %11567 = vmatpush1.bf16.msra.mxu0 %v7496
  %11568 = vmatprep.subr.bf16.mxu0 %v7505
  %11569 = vmatpush1.bf16.msra.mxu0 %v7504
  %11570 = vmatprep.subr.bf16.mxu0 %v7513
  %11571 = vmatpush1.bf16.msra.mxu0 %v7512
  %11572 = vmatprep.subr.bf16.mxu0 %v7521
  %11573 = vmatpush1.bf16.msra.mxu0 %v7520
  %11574 = vmatprep.subr.bf16.mxu0 %v7529
  %11575 = vmatpush1.bf16.msra.mxu0 %v7528
  %11576 = vmatprep.subr.bf16.mxu0 %v7537
  %11577 = vmatpush1.bf16.msra.mxu0 %v7536
  %11578 = vmatprep.subr.bf16.mxu0 %v7545
  %11579 = vmatpush1.bf16.msra.mxu0 %v7544
  %11580 = vmatprep.mubr.bf16.mxu0 %v1730
  %11581 = vmatmul.mubr.bf16.gmra.mrb[0].mxu0 %v1728
  %v11582 = vpop.f32.mrb[0].mxu0
  %v11583 = vadd.f32 %v11542, %v11582
  %v11584 = vpop.f32.mrb[0].mxu0
  %v11585 = vadd.f32 %v11544, %v11584
  %v11586 = vpop.f32.mrb[0].mxu0
  %v11587 = vpop.f32.mrb[0].mxu0
  %11588 = vdwg.mxu0
  %11589 = vmatprep.subr.bf16.mxu0 %v7553
  %11590 = vmatpush1.bf16.msra.mxu0 %v7552
  %11591 = vmatprep.subr.bf16.mxu0 %v7561
  %11592 = vmatpush1.bf16.msra.mxu0 %v7560
  %11593 = vmatprep.subr.bf16.mxu0 %v7569
  %11594 = vmatpush1.bf16.msra.mxu0 %v7568
  %11595 = vmatprep.subr.bf16.mxu0 %v7577
  %11596 = vmatpush1.bf16.msra.mxu0 %v7576
  %11597 = vmatprep.subr.bf16.mxu0 %v7585
  %11598 = vmatpush1.bf16.msra.mxu0 %v7584
  %11599 = vmatprep.subr.bf16.mxu0 %v7593
  %11600 = vmatpush1.bf16.msra.mxu0 %v7592
  %11601 = vmatprep.subr.bf16.mxu0 %v7601
  %11602 = vmatpush1.bf16.msra.mxu0 %v7600
  %11603 = vmatprep.subr.bf16.mxu0 %v7609
  %11604 = vmatpush1.bf16.msra.mxu0 %v7608
  %11605 = vmatprep.subr.bf16.mxu0 %v7617
  %11606 = vmatpush1.bf16.msra.mxu0 %v7616
  %11607 = vmatprep.subr.bf16.mxu0 %v7625
  %11608 = vmatpush1.bf16.msra.mxu0 %v7624
  %11609 = vmatprep.subr.bf16.mxu0 %v7633
  %11610 = vmatpush1.bf16.msra.mxu0 %v7632
  %11611 = vmatprep.subr.bf16.mxu0 %v7641
  %11612 = vmatpush1.bf16.msra.mxu0 %v7640
  %11613 = vmatprep.subr.bf16.mxu0 %v7649
  %11614 = vmatpush1.bf16.msra.mxu0 %v7648
  %11615 = vmatprep.subr.bf16.mxu0 %v7657
  %11616 = vmatpush1.bf16.msra.mxu0 %v7656
  %11617 = vmatprep.subr.bf16.mxu0 %v7665
  %11618 = vmatpush1.bf16.msra.mxu0 %v7664
  %11619 = vmatprep.subr.bf16.mxu0 %v7673
  %11620 = vmatpush1.bf16.msra.mxu0 %v7672
  %11621 = vmatprep.mubr.bf16.mxu0 %v1768
  %11622 = vmatmul.mubr.bf16.gmra.mrb[0].mxu0 %v1754
  %v11623 = vpop.f32.mrb[0].mxu0
  %v11624 = vadd.f32 %v11583, %v11623
  %v11625 = vpop.f32.mrb[0].mxu0
  %v11626 = vadd.f32 %v11585, %v11625
  %v11627 = vpop.f32.mrb[0].mxu0
  %v11628 = vpop.f32.mrb[0].mxu0
  %11629 = vdwg.mxu0
  %11630 = vmatprep.subr.bf16.mxu0 %v7681
  %11631 = vmatpush1.bf16.msra.mxu0 %v7680
  %11632 = vmatprep.subr.bf16.mxu0 %v7689
  %11633 = vmatpush1.bf16.msra.mxu0 %v7688
  %11634 = vmatprep.subr.bf16.mxu0 %v7697
  %11635 = vmatpush1.bf16.msra.mxu0 %v7696
  %11636 = vmatprep.subr.bf16.mxu0 %v7705
  %11637 = vmatpush1.bf16.msra.mxu0 %v7704
  %11638 = vmatprep.subr.bf16.mxu0 %v7713
  %11639 = vmatpush1.bf16.msra.mxu0 %v7712
  %11640 = vmatprep.subr.bf16.mxu0 %v7721
  %11641 = vmatpush1.bf16.msra.mxu0 %v7720
  %11642 = vmatprep.subr.bf16.mxu0 %v7729
  %11643 = vmatpush1.bf16.msra.mxu0 %v7728
  %11644 = vmatprep.subr.bf16.mxu0 %v7737
  %11645 = vmatpush1.bf16.msra.mxu0 %v7736
  %11646 = vmatprep.subr.bf16.mxu0 %v7745
  %11647 = vmatpush1.bf16.msra.mxu0 %v7744
  %11648 = vmatprep.subr.bf16.mxu0 %v7753
  %11649 = vmatpush1.bf16.msra.mxu0 %v7752
  %11650 = vmatprep.subr.bf16.mxu0 %v7761
  %11651 = vmatpush1.bf16.msra.mxu0 %v7760
  %11652 = vmatprep.subr.bf16.mxu0 %v7769
  %11653 = vmatpush1.bf16.msra.mxu0 %v7768
  %11654 = vmatprep.subr.bf16.mxu0 %v7777
  %11655 = vmatpush1.bf16.msra.mxu0 %v7776
  %11656 = vmatprep.subr.bf16.mxu0 %v7785
  %11657 = vmatpush1.bf16.msra.mxu0 %v7784
  %11658 = vmatprep.subr.bf16.mxu0 %v7793
  %11659 = vmatpush1.bf16.msra.mxu0 %v7792
  %11660 = vmatprep.subr.bf16.mxu0 %v7801
  %11661 = vmatpush1.bf16.msra.mxu0 %v7800
  %11662 = vmatprep.mubr.bf16.mxu0 %v1778
  %11663 = vmatmul.mubr.bf16.gmra.mrb[0].mxu0 %v1776
  %v11664 = vpop.f32.mrb[0].mxu0
  %v11665 = vadd.f32 %v11624, %v11664
  %v11666 = vpop.f32.mrb[0].mxu0
  %v11667 = vadd.f32 %v11626, %v11666
  %v11668 = vpop.f32.mrb[0].mxu0
  %v11669 = vpop.f32.mrb[0].mxu0
  %11670 = vdwg.mxu0
  %11671 = vmatprep.subr.bf16.mxu0 %v7809
  %11672 = vmatpush1.bf16.msra.mxu0 %v7808
  %11673 = vmatprep.subr.bf16.mxu0 %v7817
  %11674 = vmatpush1.bf16.msra.mxu0 %v7816
  %11675 = vmatprep.subr.bf16.mxu0 %v7825
  %11676 = vmatpush1.bf16.msra.mxu0 %v7824
  %11677 = vmatprep.subr.bf16.mxu0 %v7833
  %11678 = vmatpush1.bf16.msra.mxu0 %v7832
  %11679 = vmatprep.subr.bf16.mxu0 %v7841
  %11680 = vmatpush1.bf16.msra.mxu0 %v7840
  %11681 = vmatprep.subr.bf16.mxu0 %v7849
  %11682 = vmatpush1.bf16.msra.mxu0 %v7848
  %11683 = vmatprep.subr.bf16.mxu0 %v7857
  %11684 = vmatpush1.bf16.msra.mxu0 %v7856
  %11685 = vmatprep.subr.bf16.mxu0 %v7865
  %11686 = vmatpush1.bf16.msra.mxu0 %v7864
  %11687 = vmatprep.subr.bf16.mxu0 %v7873
  %11688 = vmatpush1.bf16.msra.mxu0 %v7872
  %11689 = vmatprep.subr.bf16.mxu0 %v7881
  %11690 = vmatpush1.bf16.msra.mxu0 %v7880
  %11691 = vmatprep.subr.bf16.mxu0 %v7889
  %11692 = vmatpush1.bf16.msra.mxu0 %v7888
  %11693 = vmatprep.subr.bf16.mxu0 %v7897
  %11694 = vmatpush1.bf16.msra.mxu0 %v7896
  %11695 = vmatprep.subr.bf16.mxu0 %v7905
  %11696 = vmatpush1.bf16.msra.mxu0 %v7904
  %11697 = vmatprep.subr.bf16.mxu0 %v7913
  %11698 = vmatpush1.bf16.msra.mxu0 %v7912
  %11699 = vmatprep.subr.bf16.mxu0 %v7921
  %11700 = vmatpush1.bf16.msra.mxu0 %v7920
  %11701 = vmatprep.subr.bf16.mxu0 %v7929
  %11702 = vmatpush1.bf16.msra.mxu0 %v7928
  %11703 = vmatprep.mubr.bf16.mxu0 %v1775
  %11704 = vmatmul.mubr.bf16.gmra.mrb[0].mxu0 %v1761
  %v11705 = vpop.f32.mrb[0].mxu0
  %v11706 = vadd.f32 %v11665, %v11705
  %v11707 = vpop.f32.mrb[0].mxu0
  %v11708 = vadd.f32 %v11667, %v11707
  %v11709 = vpop.f32.mrb[0].mxu0
  %v11710 = vpop.f32.mrb[0].mxu0
  %11711 = vdwg.mxu0
  %11712 = vmatprep.subr.bf16.mxu0 %v7937
  %11713 = vmatpush1.bf16.msra.mxu0 %v7936
  %11714 = vmatprep.subr.bf16.mxu0 %v7945
  %11715 = vmatpush1.bf16.msra.mxu0 %v7944
  %11716 = vmatprep.subr.bf16.mxu0 %v7953
  %11717 = vmatpush1.bf16.msra.mxu0 %v7952
  %11718 = vmatprep.subr.bf16.mxu0 %v7961
  %11719 = vmatpush1.bf16.msra.mxu0 %v7960
  %11720 = vmatprep.subr.bf16.mxu0 %v7969
  %11721 = vmatpush1.bf16.msra.mxu0 %v7968
  %11722 = vmatprep.subr.bf16.mxu0 %v7977
  %11723 = vmatpush1.bf16.msra.mxu0 %v7976
  %11724 = vmatprep.subr.bf16.mxu0 %v7985
  %11725 = vmatpush1.bf16.msra.mxu0 %v7984
  %11726 = vmatprep.subr.bf16.mxu0 %v7993
  %11727 = vmatpush1.bf16.msra.mxu0 %v7992
  %11728 = vmatprep.subr.bf16.mxu0 %v8001
  %11729 = vmatpush1.bf16.msra.mxu0 %v8000
  %11730 = vmatprep.subr.bf16.mxu0 %v8009
  %11731 = vmatpush1.bf16.msra.mxu0 %v8008
  %11732 = vmatprep.subr.bf16.mxu0 %v8017
  %11733 = vmatpush1.bf16.msra.mxu0 %v8016
  %11734 = vmatprep.subr.bf16.mxu0 %v8025
  %11735 = vmatpush1.bf16.msra.mxu0 %v8024
  %11736 = vmatprep.subr.bf16.mxu0 %v8033
  %11737 = vmatpush1.bf16.msra.mxu0 %v8032
  %11738 = vmatprep.subr.bf16.mxu0 %v8041
  %11739 = vmatpush1.bf16.msra.mxu0 %v8040
  %11740 = vmatprep.subr.bf16.mxu0 %v8049
  %11741 = vmatpush1.bf16.msra.mxu0 %v8048
  %11742 = vmatprep.subr.bf16.mxu0 %v8057
  %11743 = vmatpush1.bf16.msra.mxu0 %v8056
  %11744 = vmatprep.mubr.bf16.mxu0 %v1779
  %11745 = vmatmul.mubr.bf16.gmra.mrb[0].mxu0 %v1777
  %v11746 = vpop.f32.mrb[0].mxu0
  %v11747 = vadd.f32 %v11706, %v11746
  %v11748 = vpop.f32.mrb[0].mxu0
  %v11749 = vadd.f32 %v11708, %v11748
  %v11750 = vpop.f32.mrb[0].mxu0
  %v11751 = vpop.f32.mrb[0].mxu0
  %11752 = vdwg.mxu0
  %11753 = vmatprep.subr.bf16.mxu0 %v8065
  %11754 = vmatpush1.bf16.msra.mxu0 %v8064
  %11755 = vmatprep.subr.bf16.mxu0 %v8073
  %11756 = vmatpush1.bf16.msra.mxu0 %v8072
  %11757 = vmatprep.subr.bf16.mxu0 %v8081
  %11758 = vmatpush1.bf16.msra.mxu0 %v8080
  %11759 = vmatprep.subr.bf16.mxu0 %v8089
  %11760 = vmatpush1.bf16.msra.mxu0 %v8088
  %11761 = vmatprep.subr.bf16.mxu0 0
  %11762 = vmatpush1.bf16.msra.mxu0 0
  %11763 = vmatprep.subr.bf16.mxu0 0
  %11764 = vmatpush1.bf16.msra.mxu0 0
  %11765 = vmatprep.subr.bf16.mxu0 0
  %11766 = vmatpush1.bf16.msra.mxu0 0
  %11767 = vmatprep.subr.bf16.mxu0 0
  %11768 = vmatpush1.bf16.msra.mxu0 0
  %11769 = vmatprep.subr.bf16.mxu0 0
  %11770 = vmatpush1.bf16.msra.mxu0 0
  %11771 = vmatprep.subr.bf16.mxu0 0
  %11772 = vmatpush1.bf16.msra.mxu0 0
  %11773 = vmatprep.subr.bf16.mxu0 0
  %11774 = vmatpush1.bf16.msra.mxu0 0
  %11775 = vmatprep.subr.bf16.mxu0 0
  %11776 = vmatpush1.bf16.msra.mxu0 0
  %11777 = vmatprep.subr.bf16.mxu0 0
  %11778 = vmatpush1.bf16.msra.mxu0 0
  %11779 = vmatprep.subr.bf16.mxu0 0
  %11780 = vmatpush1.bf16.msra.mxu0 0
  %11781 = vmatprep.subr.bf16.mxu0 0
  %11782 = vmatpush1.bf16.msra.mxu0 0
  %11783 = vmatprep.subr.bf16.mxu0 0
  %11784 = vmatpush1.bf16.msra.mxu0 0
  %11785 = vmatprep.mubr.bf16.mxu0 0
  %11786 = vmatmul.mubr.bf16.gmra.mrb[0].mxu0 %v9660
  %v11787 = vpop.f32.mrb[0].mxu0
  %v11788 = vadd.f32 %v11747, %v11787
  %v11789 = vpop.f32.mrb[0].mxu0
  %v11790 = vadd.f32 %v11749, %v11789
  %v11791 = vpop.f32.mrb[0].mxu0
  %v11792 = vpop.f32.mrb[0].mxu0
  %11793 = vdwg.mxu0
  %v11794 = vmax.f32 %v10189, 0.0
  %v11795 = vmax.f32 %v10191, 0.0
  %v11796 = vmax.f32 %v10722, 0.0
  %v11797 = vmax.f32 %v10724, 0.0
  %v11798 = vmax.f32 %v11255, 0.0
  %v11799 = vmax.f32 %v11257, 0.0
  %v11800 = vmax.f32 %v11788, 0.0
  %v11801 = vmax.f32 %v11790, 0.0
  %v11802 = vpack.c.bf16 %v11794, %v11794
  %v11803 = vpack.c.bf16 %v11795, %v11795
  %v11804 = vpack.c.bf16 %v11796, %v11796
  %v11805 = vpack.c.bf16 %v11797, %v11797
  %v11806 = vpack.c.bf16 %v11798, %v11798
  %v11807 = vpack.c.bf16 %v11799, %v11799
  %v11808 = vpack.c.bf16 %v11800, %v11800
  %v11809 = vpack.c.bf16 %v11801, %v11801
  %v11818 = vcombine.low %v11802, %v11803
  %v11819 = vcombine.low %v11804, %v11805
  %v11820 = vcombine.low %v11806, %v11807
  %v11821 = vcombine.low %v11808, %v11809
  %v11823 = vunpack.c.l.s4 1966171168
  %v11824 = vunpack.c.0.s8 %v11823
  %v11825 = vlaneseq
  %v11826 = vshrl.u32 %v11825, 7
  %v11827 = vsub.s32 %v11824, %v11826
  %v11828 = vrot.slane %v11818, %v11827
  %v11830 = vunpack.c.l.s4 1966171168
  %v11831 = vunpack.c.0.s8 %v11830
  %v11832 = vlaneseq
  %v11833 = vshrl.u32 %v11832, 7
  %v11834 = vsub.s32 %v11831, %v11833
  %v11835 = vrot.slane %v11819, %v11834
  %v11837 = vunpack.c.l.s4 1966171168
  %v11838 = vunpack.c.0.s8 %v11837
  %v11839 = vlaneseq
  %v11840 = vshrl.u32 %v11839, 7
  %v11841 = vsub.s32 %v11838, %v11840
  %v11842 = vrot.slane %v11820, %v11841
  %v11844 = vunpack.c.l.s4 1966171168
  %v11845 = vunpack.c.0.s8 %v11844
  %v11846 = vlaneseq
  %v11847 = vshrl.u32 %v11846, 7
  %v11848 = vsub.s32 %v11845, %v11847
  %v11849 = vrot.slane %v11821, %v11848
  %v11850 = vcombine.low %v11828, %v11835
  %v11851 = vcombine.low %v11842, %v11849
  %v11853 = vunpack.c.l.s4 1966171168
  %v11854 = vunpack.c.0.s8 %v11853
  %v11855 = vlaneseq
  %v11856 = vshrl.u32 %v11855, 7
  %v11857 = vsub.s32 %v11854, %v11856
  %v11858 = vrot.slane %v11850, %v11857
  %v11860 = vunpack.c.l.s4 1966171168
  %v11861 = vunpack.c.0.s8 %v11860
  %v11862 = vlaneseq
  %v11863 = vshrl.u32 %v11862, 7
  %v11864 = vsub.s32 %v11861, %v11863
  %v11865 = vrot.slane %v11851, %v11864
  %v11866 = vcombine.low %v11858, %v11865
  %11868 = vst [vmem:[%s3] sm:$0xff] %v11866
  // Predicated region
  $region14: #{cnn_deepmind_multihead_forward.8} parent=0 // pred_check
    _
  $region15: #{cnn_deepmind_multihead_forward.8} parent=0 // pred_check_branch
    %11870 = sbr.rel (0) target = $region17
  $region16: #{cnn_deepmind_multihead_forward.8} parent=0 // pred_region
    _
  $region17: #{cnn_deepmind_multihead_forward.8} parent=0 // pred_fallthru
    _
  // Predicated region
  $region18: #{cnn_deepmind_multihead_forward.8} parent=0 // pred_check
    _
  $region19: #{cnn_deepmind_multihead_forward.8} parent=0 // pred_check_branch
    %11872 = sbr.rel (0) target = $region21
  $region20: #{cnn_deepmind_multihead_forward.8} parent=0 // pred_region
    _
  $region21: #{cnn_deepmind_multihead_forward.8} parent=0 // pred_fallthru
    _

</llo_original>
